<compile_context>
chip_gen: v7x
topology: tpu7x:2x2x1
jax: 0.10.0
libtpu: 0.0.40
codegen_flags: <defaults>
</compile_context>

<pallas_src>
import math

import jax
import jax.numpy as jnp
from jax.experimental import pallas as pl
from jax.experimental.pallas import tpu as pltpu

HIGHEST = jax.lax.Precision.HIGHEST


# ---------------------------------------------------------------------------
# Fused Pallas kernel (one grid step == one batch element)
# ---------------------------------------------------------------------------
def _make_block_kernel(h, w, c, hidden, cpad):
    hw = h * w
    inv_sqrt2 = 1.0 / math.sqrt(2.0)
    f32 = jnp.float32

    def ln_t(t, w_ref, b_ref):
        # LayerNorm over the channel axis; t is channel-major (C, hw).
        mu = jnp.mean(t, axis=0, keepdims=True)
        var = jnp.mean((t - mu) ** 2, axis=0, keepdims=True)
        return (t - mu) * jax.lax.rsqrt(var + 1e-5) * w_ref[...] + b_ref[...]

    def dg(a, b, dims):
        # MXU matmul at DEFAULT precision (single-pass bf16), f32 accumulate.
        return jax.lax.dot_general(a, b, (dims, ((), ())),
                                   preferred_element_type=f32)

    def dwconv3x3(pad_ref, t, wd_ref, bd_ref):
        # Depthwise 3x3, stride 1, SAME padding, over all `cpad` lanes.
        # pad_ref: shared (h+2, w+16, cpad) VMEM scratch whose 1-px halo border
        # is kept zero; the interior is written at column offset 8 so the store
        # is sublane-tile aligned.  The 9 taps are shifted window reads.
        pad_ref[1:h + 1, 8:w + 8, :] = t.reshape(h, w, cpad)
        acc = jnp.zeros((h, w, cpad), f32)
        for dy in range(3):
            for dx in range(3):
                acc = acc + (pad_ref[dy:dy + h, 7 + dx:7 + dx + w, :]
                             * wd_ref[dy * 3 + dx, :])
        return (acc + bd_ref[0, :]).reshape(hw, cpad)

    def kernel(x_ref, r_ref,
               ln1w, ln1b, ln2w, ln2b, ln3w, ln3b,
               wqkv_x, wqkv_r, bqkv, wdqkv, bdqkv,
               temp, mask,
               wpoa_t, bpoa,
               wpi, bpi, wffd, bffd,
               wpof_t, bpof,
               o_ref, pad_ref):
        # Zero only the 1-px halo border of the shared conv scratch (interior
        # is fully rewritten by every dwconv3x3 call). Safe under megacore.
        pad_ref[0] = jnp.zeros((w + 16, cpad), f32)
        pad_ref[h + 1] = jnp.zeros((w + 16, cpad), f32)
        pad_ref[1:h + 1, 0:8, :] = jnp.zeros((h, 8, cpad), f32)
        pad_ref[1:h + 1, w + 8:w + 16, :] = jnp.zeros((h, 8, cpad), f32)

        x_t = x_ref[0]          # (c, hw)  channel-major
        r_t = r_ref[0]          # (c, hw)

        # -------------------- attention branch --------------------
        xn1 = ln_t(x_t, ln1w, ln1b)
        rn3 = ln_t(r_t, ln3w, ln3b)

        # 1x1 convs (channel contraction) for K,V (from x) and Q (from ref);
        # their outputs occupy disjoint column ranges of one (hw, cpad) buffer.
        qkv_pre = (dg(xn1, wqkv_x[...], ((0,), (0,)))
                   + dg(rn3, wqkv_r[...], ((0,), (0,)))
                   + bqkv[0])                                  # (hw, cpad)
        qkv = dwconv3x3(pad_ref, qkv_pre, wdqkv, bdqkv)        # (hw, cpad)
        k_img = qkv[:, :c]
        v_img = qkv[:, c:2 * c]
        q_img = qkv[:, 2 * c:3 * c]

        # L2-normalize each (head, channel) column over the spatial axis.
        q_n = q_img * jax.lax.rsqrt(
            jnp.maximum(jnp.sum(q_img * q_img, axis=0, keepdims=True), 1e-24))
        k_n = k_img * jax.lax.rsqrt(
            jnp.maximum(jnp.sum(k_img * k_img, axis=0, keepdims=True), 1e-24))

        # Full (c, c) channel attention; off-head blocks masked to ~-inf so one
        # softmax reproduces the per-head softmax exactly.
        att = dg(q_n, k_n, ((0,), (0,)))                       # (c, c)
        att = att * temp[...] + mask[...]
        att = att - jnp.max(att, axis=-1, keepdims=True)
        e = jnp.exp(att)
        att = e / jnp.sum(e, axis=-1, keepdims=True)

        out_all = dg(v_img, att, ((1,), (1,)))                 # (hw, c)
        proj_t = dg(wpoa_t[...], out_all, ((1,), (1,)))        # (c, hw)
        x2_t = x_t + proj_t + bpoa[...]

        # -------------------- feed-forward branch --------------------
        xn2 = ln_t(x2_t, ln2w, ln2b)
        f_pre = dg(xn2, wpi[...], ((0,), (0,))) + bpi[0]       # (hw, cpad)
        f = dwconv3x3(pad_ref, f_pre, wffd, bffd)              # (hw, cpad)
        f1 = f[:, :hidden]
        f2 = f[:, hidden:2 * hidden]
        g = 0.5 * f1 * (1.0 + jax.lax.erf(f1 * inv_sqrt2)) * f2   # (hw, hidden)
        ffn_t = dg(wpof_t[...], g, ((1,), (1,)))               # (c, hw)
        o_ref[0] = (x2_t + ffn_t + bpof[...]).astype(o_ref.dtype)

    return kernel


# ---------------------------------------------------------------------------
# TransformerBlock forward (Pallas wrapper)
# ---------------------------------------------------------------------------
def pallas_transformer_block(x_nchw, ref_nchw, p, num_heads):
    b, c, h, w = x_nchw.shape
    hw = h * w
    ch = c // num_heads
    hidden = p['Wpo_ffn'].shape[0]
    cpad = -(-max(3 * c, 2 * hidden) // 128) * 128   # lane-padded conv width

    # Channel-major activations: a FREE reshape of NCHW (no transpose).
    x = x_nchw.reshape(b, c, hw)
    r = ref_nchw.reshape(b, c, hw)

    def pad_cols(a, total):
        return jnp.pad(a, ((0, 0), (0, total - a.shape[1])))

    def pad_vec(a, total):
        return jnp.pad(a, (0, total - a.shape[0])).reshape(1, total)

    # One-time weight reorganization (tiny, done once by XLA).
    wqkv_x = pad_cols(p['Wkv'], cpad)                            # K,V cols 0:2c
    wqkv_r = jnp.pad(p['Wq'], ((0, 0), (2 * c, cpad - 3 * c)))   # Q cols 2c:3c
    bqkv = pad_vec(jnp.concatenate([p['bkv'], p['bq']]), cpad)
    wdqkv = pad_cols(jnp.concatenate(
        [p['Wkv_dw'].reshape(9, 2 * c), p['Wq_dw'].reshape(9, c)], axis=1), cpad)
    bdqkv = pad_vec(jnp.concatenate([p['bkv_dw'], p['bq_dw']]), cpad)

    head_id = jnp.arange(c) // ch
    mask = jnp.where(head_id[:, None] == head_id[None, :],
                     0.0, -1e30).astype(jnp.float32)             # (c, c)
    temp_col = jnp.repeat(p['temp'], ch).reshape(c, 1)           # (c, 1)

    weights = [
        p['ln1_w'].reshape(c, 1), p['ln1_b'].reshape(c, 1),
        p['ln2_w'].reshape(c, 1), p['ln2_b'].reshape(c, 1),
        p['ln3_w'].reshape(c, 1), p['ln3_b'].reshape(c, 1),
        wqkv_x, wqkv_r, bqkv, wdqkv, bdqkv,
        temp_col, mask,
        p['Wpo_attn'].T, p['bpo_attn'].reshape(c, 1),
        pad_cols(p['Wpi'], cpad), pad_vec(p['bpi'], cpad),
        pad_cols(p['Wff_dw'].reshape(9, 2 * hidden), cpad),
        pad_vec(p['bff_dw'], cpad),
        p['Wpo_ffn'].T, p['bpo_ffn'].reshape(c, 1),
    ]

    kernel = _make_block_kernel(h, w, c, hidden, cpad)

    act_spec = pl.BlockSpec((1, c, hw), lambda i: (i, 0, 0))
    w_specs = [pl.BlockSpec(a.shape, lambda i, nd=a.ndim: (0,) * nd)
               for a in weights]

    out = pl.pallas_call(
        kernel,
        out_shape=jax.ShapeDtypeStruct((b, c, hw), x.dtype),
        grid=(b,),
        in_specs=[act_spec, act_spec] + w_specs,
        out_specs=act_spec,
        scratch_shapes=[
            pltpu.VMEM((h + 2, w + 16, cpad), jnp.float32),   # shared conv halo
        ],
        compiler_params=pltpu.CompilerParams(
            dimension_semantics=("parallel",)),
    )(x, r, *weights)

    return [out.reshape(b, c, h, w), ref_nchw]


# ---------------------------------------------------------------------------
# Pure-JAX reference (for correctness check)
# ---------------------------------------------------------------------------
def ref_transformer_block(x_nchw, ref_nchw, p, num_heads):
    b, c, h, w = x_nchw.shape
    hw = h * w
    ch = c // num_heads
    x = jnp.transpose(x_nchw, (0, 2, 3, 1))
    r = jnp.transpose(ref_nchw, (0, 2, 3, 1))

    def ln(t, wgt, bias):
        mu = t.mean(-1, keepdims=True)
        var = ((t - mu) ** 2).mean(-1, keepdims=True)
        return (t - mu) / jnp.sqrt(var + 1e-5) * wgt + bias

    def conv1x1(t, W, bvec):
        return jnp.einsum('bhwi,io->bhwo', t, W, precision=HIGHEST) + bvec

    def dwc(t, Wd, bvec):
        C = t.shape[-1]
        out = jax.lax.conv_general_dilated(
            t, Wd.reshape(3, 3, 1, C), (1, 1), 'SAME',
            dimension_numbers=('NHWC', 'HWIO', 'NHWC'),
            feature_group_count=C, precision=HIGHEST)
        return out + bvec

    xn = ln(x, p['ln1_w'], p['ln1_b'])
    rn = ln(r, p['ln3_w'], p['ln3_b'])
    kv = dwc(conv1x1(xn, p['Wkv'], p['bkv']), p['Wkv_dw'], p['bkv_dw'])
    k_, v_ = kv[..., :c], kv[..., c:]
    q_ = dwc(conv1x1(rn, p['Wq'], p['bq']), p['Wq_dw'], p['bq_dw'])

    def to_heads(t):
        return t.reshape(b, hw, num_heads, ch).transpose(0, 2, 3, 1)

    qh, kh, vh = to_heads(q_), to_heads(k_), to_heads(v_)
    qh = qh / jnp.maximum(jnp.linalg.norm(qh, axis=-1, keepdims=True), 1e-12)
    kh = kh / jnp.maximum(jnp.linalg.norm(kh, axis=-1, keepdims=True), 1e-12)
    attn = jnp.einsum('bncd,bned->bnce', qh, kh, precision=HIGHEST)
    attn = attn * p['temp'][None, :, None, None]
    attn = jax.nn.softmax(attn, axis=-1)
    out = jnp.einsum('bnce,bned->bncd', attn, vh, precision=HIGHEST)
    out = out.transpose(0, 3, 1, 2).reshape(b, h, w, c)
    x2 = x + conv1x1(out, p['Wpo_attn'], p['bpo_attn'])

    xn2 = ln(x2, p['ln2_w'], p['ln2_b'])
    f = dwc(conv1x1(xn2, p['Wpi'], p['bpi']), p['Wff_dw'], p['bff_dw'])
    hid = p['Wpi'].shape[1] // 2
    x1_, x2_ = f[..., :hid], f[..., hid:]
    g = 0.5 * x1_ * (1.0 + jax.lax.erf(x1_ / jnp.sqrt(2.0)))
    xo = x2 + conv1x1(g * x2_, p['Wpo_ffn'], p['bpo_ffn'])
    return [jnp.transpose(xo, (0, 3, 1, 2)), ref_nchw]


# ---------------------------------------------------------------------------
# Deterministic parameter init (shapes from the PyTorch __init__)
# ---------------------------------------------------------------------------
def init_params(key, dim, num_heads, ffn_expansion_factor):
    hidden = int(dim * ffn_expansion_factor)
    ks = jax.random.split(key, 16)

    def w(k, shape, scale=0.05):
        return scale * jax.random.normal(k, shape, jnp.float32)

    return dict(
        ln1_w=jnp.ones((dim,), jnp.float32), ln1_b=jnp.zeros((dim,), jnp.float32),
        ln2_w=jnp.ones((dim,), jnp.float32), ln2_b=jnp.zeros((dim,), jnp.float32),
        ln3_w=jnp.ones((dim,), jnp.float32), ln3_b=jnp.zeros((dim,), jnp.float32),
        temp=jnp.ones((num_heads,), jnp.float32),
        Wkv=w(ks[0], (dim, 2 * dim)), bkv=w(ks[1], (2 * dim,), 0.01),
        Wkv_dw=w(ks[2], (3, 3, 2 * dim)), bkv_dw=w(ks[3], (2 * dim,), 0.01),
        Wq=w(ks[4], (dim, dim)), bq=w(ks[5], (dim,), 0.01),
        Wq_dw=w(ks[6], (3, 3, dim)), bq_dw=w(ks[7], (dim,), 0.01),
        Wpo_attn=w(ks[8], (dim, dim)), bpo_attn=w(ks[9], (dim,), 0.01),
        Wpi=w(ks[10], (dim, 2 * hidden)), bpi=w(ks[11], (2 * hidden,), 0.01),
        Wff_dw=w(ks[12], (3, 3, 2 * hidden)), bff_dw=w(ks[13], (2 * hidden,), 0.01),
        Wpo_ffn=w(ks[14], (hidden, dim)), bpo_ffn=w(ks[15], (dim,), 0.01),
    )


if __name__ == "__main__":
    b, dim, h, w = 2, 32, 16, 16
    num_heads, ffn_exp = 4, 2.0

    key = jax.random.PRNGKey(0)
    kx, kr, kp = jax.random.split(key, 3)
    x = jax.random.normal(kx, (b, dim, h, w), jnp.float32)
    ref = jax.random.normal(kr, (b, dim, h, w), jnp.float32)
    params = init_params(kp, dim, num_heads, ffn_exp)

    out = pallas_transformer_block(x, ref, params, num_heads)
    out = [jax.block_until_ready(o) for o in out]

    want = ref_transformer_block(x, ref, params, num_heads)
    err = float(jnp.max(jnp.abs(out[0] - want[0])))
    assert jnp.allclose(out[0], want[0], atol=2e-3, rtol=2e-3), f"max abs err {err}"
    assert jnp.array_equal(out[1], ref)

    print("KERNEL_OK")
</pallas_src>

<mosaic_0001>
module attributes {stable_mosaic.version = 11 : i64} {
  func.func @kernel(%arg0: i32, %arg1: memref<1x32x256xf32, #tpu.memory_space<vmem>>, %arg2: memref<1x32x256xf32, #tpu.memory_space<vmem>>, %arg3: memref<32x1xf32, #tpu.memory_space<vmem>>, %arg4: memref<32x1xf32, #tpu.memory_space<vmem>>, %arg5: memref<32x1xf32, #tpu.memory_space<vmem>>, %arg6: memref<32x1xf32, #tpu.memory_space<vmem>>, %arg7: memref<32x1xf32, #tpu.memory_space<vmem>>, %arg8: memref<32x1xf32, #tpu.memory_space<vmem>>, %arg9: memref<32x128xf32, #tpu.memory_space<vmem>>, %arg10: memref<32x128xf32, #tpu.memory_space<vmem>>, %arg11: memref<1x128xf32, #tpu.memory_space<vmem>>, %arg12: memref<9x128xf32, #tpu.memory_space<vmem>>, %arg13: memref<1x128xf32, #tpu.memory_space<vmem>>, %arg14: memref<32x1xf32, #tpu.memory_space<vmem>>, %arg15: memref<32x32xf32, #tpu.memory_space<vmem>>, %arg16: memref<32x32xf32, #tpu.memory_space<vmem>>, %arg17: memref<32x1xf32, #tpu.memory_space<vmem>>, %arg18: memref<32x128xf32, #tpu.memory_space<vmem>>, %arg19: memref<1x128xf32, #tpu.memory_space<vmem>>, %arg20: memref<9x128xf32, #tpu.memory_space<vmem>>, %arg21: memref<1x128xf32, #tpu.memory_space<vmem>>, %arg22: memref<32x64xf32, #tpu.memory_space<vmem>>, %arg23: memref<32x1xf32, #tpu.memory_space<vmem>>, %arg24: memref<1x32x256xf32, #tpu.memory_space<vmem>>, %arg25: memref<18x32x128xf32, #tpu.memory_space<vmem>>) attributes {dimension_semantics = [#tpu.dimension_semantics<parallel>], iteration_bounds = array<i64: 2>, scalar_prefetch = 0 : i64, scratch_operands = 1 : i64, tpu.core_type = #tpu.core_type<tc>, window_params = [{transform_indices = @transform_0, window_bounds = array<i64: 1, 32, 256>}, {transform_indices = @transform_1, window_bounds = array<i64: 1, 32, 256>}, {pipeline_mode = #tpu.pipeline_mode<synchronous>, transform_indices = @transform_2, window_bounds = array<i64: 32, 1>}, {pipeline_mode = #tpu.pipeline_mode<synchronous>, transform_indices = @transform_3, window_bounds = array<i64: 32, 1>}, {pipeline_mode = #tpu.pipeline_mode<synchronous>, transform_indices = @transform_4, window_bounds = array<i64: 32, 1>}, {pipeline_mode = #tpu.pipeline_mode<synchronous>, transform_indices = @transform_5, window_bounds = array<i64: 32, 1>}, {pipeline_mode = #tpu.pipeline_mode<synchronous>, transform_indices = @transform_6, window_bounds = array<i64: 32, 1>}, {pipeline_mode = #tpu.pipeline_mode<synchronous>, transform_indices = @transform_7, window_bounds = array<i64: 32, 1>}, {pipeline_mode = #tpu.pipeline_mode<synchronous>, transform_indices = @transform_8, window_bounds = array<i64: 32, 128>}, {pipeline_mode = #tpu.pipeline_mode<synchronous>, transform_indices = @transform_9, window_bounds = array<i64: 32, 128>}, {pipeline_mode = #tpu.pipeline_mode<synchronous>, transform_indices = @transform_10, window_bounds = array<i64: 1, 128>}, {pipeline_mode = #tpu.pipeline_mode<synchronous>, transform_indices = @transform_11, window_bounds = array<i64: 9, 128>}, {pipeline_mode = #tpu.pipeline_mode<synchronous>, transform_indices = @transform_12, window_bounds = array<i64: 1, 128>}, {pipeline_mode = #tpu.pipeline_mode<synchronous>, transform_indices = @transform_13, window_bounds = array<i64: 32, 1>}, {pipeline_mode = #tpu.pipeline_mode<synchronous>, transform_indices = @transform_14, window_bounds = array<i64: 32, 32>}, {pipeline_mode = #tpu.pipeline_mode<synchronous>, transform_indices = @transform_15, window_bounds = array<i64: 32, 32>}, {pipeline_mode = #tpu.pipeline_mode<synchronous>, transform_indices = @transform_16, window_bounds = array<i64: 32, 1>}, {pipeline_mode = #tpu.pipeline_mode<synchronous>, transform_indices = @transform_17, window_bounds = array<i64: 32, 128>}, {pipeline_mode = #tpu.pipeline_mode<synchronous>, transform_indices = @transform_18, window_bounds = array<i64: 1, 128>}, {pipeline_mode = #tpu.pipeline_mode<synchronous>, transform_indices = @transform_19, window_bounds = array<i64: 9, 128>}, {pipeline_mode = #tpu.pipeline_mode<synchronous>, transform_indices = @transform_20, window_bounds = array<i64: 1, 128>}, {pipeline_mode = #tpu.pipeline_mode<synchronous>, transform_indices = @transform_21, window_bounds = array<i64: 32, 64>}, {pipeline_mode = #tpu.pipeline_mode<synchronous>, transform_indices = @transform_22, window_bounds = array<i64: 32, 1>}, {transform_indices = @transform_23, window_bounds = array<i64: 1, 32, 256>}]} {
    %cst = arith.constant 0.000000e+00 : f32
    %0 = vector.broadcast %cst : f32 to vector<32x128xf32>
    %c0 = arith.constant 0 : index
    %c0_0 = arith.constant 0 : index
    %c0_1 = arith.constant 0 : index
    %1 = vector.load %arg25[%c0, %c0_0, %c0_1] : memref<18x32x128xf32, #tpu.memory_space<vmem>>, vector<1x32x128xf32>
    %2 = vector.shape_cast %1 : vector<1x32x128xf32> to vector<32x128xf32>
    %3 = vector.shape_cast %0 : vector<32x128xf32> to vector<1x32x128xf32>
    tpu.vector_store %arg25[%c0, %c0_0, %c0_1], %3 {strides = array<i32>} : memref<18x32x128xf32, #tpu.memory_space<vmem>>, vector<1x32x128xf32>,
    %cst_2 = arith.constant 0.000000e+00 : f32
    %4 = vector.broadcast %cst_2 : f32 to vector<32x128xf32>
    %c17 = arith.constant 17 : index
    %c0_3 = arith.constant 0 : index
    %c0_4 = arith.constant 0 : index
    %5 = vector.load %arg25[%c17, %c0_3, %c0_4] : memref<18x32x128xf32, #tpu.memory_space<vmem>>, vector<1x32x128xf32>
    %6 = vector.shape_cast %5 : vector<1x32x128xf32> to vector<32x128xf32>
    %7 = vector.shape_cast %4 : vector<32x128xf32> to vector<1x32x128xf32>
    tpu.vector_store %arg25[%c17, %c0_3, %c0_4], %7 {strides = array<i32>} : memref<18x32x128xf32, #tpu.memory_space<vmem>>, vector<1x32x128xf32>,
    %cst_5 = arith.constant 0.000000e+00 : f32
    %8 = vector.broadcast %cst_5 : f32 to vector<16x8x128xf32>
    %c1 = arith.constant 1 : index
    %c0_6 = arith.constant 0 : index
    %c0_7 = arith.constant 0 : index
    %9 = vector.load %arg25[%c1, %c0_6, %c0_7] : memref<18x32x128xf32, #tpu.memory_space<vmem>>, vector<16x8x128xf32>
    tpu.vector_store %arg25[%c1, %c0_6, %c0_7], %8 {strides = array<i32>} : memref<18x32x128xf32, #tpu.memory_space<vmem>>, vector<16x8x128xf32>,
    %cst_8 = arith.constant 0.000000e+00 : f32
    %10 = vector.broadcast %cst_8 : f32 to vector<16x8x128xf32>
    %c1_9 = arith.constant 1 : index
    %c24 = arith.constant 24 : index
    %c0_10 = arith.constant 0 : index
    %11 = vector.load %arg25[%c1_9, %c24, %c0_10] : memref<18x32x128xf32, #tpu.memory_space<vmem>>, vector<16x8x128xf32>
    tpu.vector_store %arg25[%c1_9, %c24, %c0_10], %10 {strides = array<i32>} : memref<18x32x128xf32, #tpu.memory_space<vmem>>, vector<16x8x128xf32>,
    %c0_11 = arith.constant 0 : index
    %c0_12 = arith.constant 0 : index
    %c0_13 = arith.constant 0 : index
    %12 = vector.load %arg1[%c0_11, %c0_12, %c0_13] : memref<1x32x256xf32, #tpu.memory_space<vmem>>, vector<1x32x256xf32>
    %13 = vector.shape_cast %12 : vector<1x32x256xf32> to vector<32x256xf32>
    %c0_14 = arith.constant 0 : index
    %c0_15 = arith.constant 0 : index
    %c0_16 = arith.constant 0 : index
    %14 = vector.load %arg2[%c0_14, %c0_15, %c0_16] : memref<1x32x256xf32, #tpu.memory_space<vmem>>, vector<1x32x256xf32>
    %15 = vector.shape_cast %14 : vector<1x32x256xf32> to vector<32x256xf32>
    %cst_17 = arith.constant dense<0.000000e+00> : vector<256xf32>
    %16 = vector.multi_reduction <add>, %13, %cst_17 [0] : vector<32x256xf32> to vector<256xf32>
    %17 = vector.shape_cast %16 : vector<256xf32> to vector<1x256xf32>
    %cst_18 = arith.constant 3.200000e+01 : f32
    %18 = vector.broadcast %cst_18 : f32 to vector<1x256xf32>
    %19 = arith.divf %17, %18 : vector<1x256xf32>
    %20 = vector.broadcast %19 : vector<1x256xf32> to vector<32x256xf32>
    %21 = arith.subf %13, %20 : vector<32x256xf32>
    %22 = arith.mulf %21, %21 : vector<32x256xf32>
    %cst_19 = arith.constant dense<0.000000e+00> : vector<256xf32>
    %23 = vector.multi_reduction <add>, %22, %cst_19 [0] : vector<32x256xf32> to vector<256xf32>
    %24 = vector.shape_cast %23 : vector<256xf32> to vector<1x256xf32>
    %cst_20 = arith.constant 3.200000e+01 : f32
    %25 = vector.broadcast %cst_20 : f32 to vector<1x256xf32>
    %26 = arith.divf %24, %25 : vector<1x256xf32>
    %27 = vector.broadcast %19 : vector<1x256xf32> to vector<32x256xf32>
    %28 = arith.subf %13, %27 : vector<32x256xf32>
    %cst_21 = arith.constant 9.99999974E-6 : f32
    %29 = vector.broadcast %cst_21 : f32 to vector<1x256xf32>
    %30 = arith.addf %26, %29 : vector<1x256xf32>
    %31 = math.rsqrt %30 : vector<1x256xf32>
    %32 = vector.broadcast %31 : vector<1x256xf32> to vector<32x256xf32>
    %33 = arith.mulf %28, %32 : vector<32x256xf32>
    %c0_22 = arith.constant 0 : index
    %c0_23 = arith.constant 0 : index
    %34 = vector.load %arg3[%c0_22, %c0_23] : memref<32x1xf32, #tpu.memory_space<vmem>>, vector<32x1xf32>
    %35 = vector.broadcast %34 : vector<32x1xf32> to vector<32x256xf32>
    %36 = arith.mulf %33, %35 : vector<32x256xf32>
    %c0_24 = arith.constant 0 : index
    %c0_25 = arith.constant 0 : index
    %37 = vector.load %arg4[%c0_24, %c0_25] : memref<32x1xf32, #tpu.memory_space<vmem>>, vector<32x1xf32>
    %38 = vector.broadcast %37 : vector<32x1xf32> to vector<32x256xf32>
    %39 = arith.addf %36, %38 : vector<32x256xf32>
    %cst_26 = arith.constant dense<0.000000e+00> : vector<256xf32>
    %40 = vector.multi_reduction <add>, %15, %cst_26 [0] : vector<32x256xf32> to vector<256xf32>
    %41 = vector.shape_cast %40 : vector<256xf32> to vector<1x256xf32>
    %cst_27 = arith.constant 3.200000e+01 : f32
    %42 = vector.broadcast %cst_27 : f32 to vector<1x256xf32>
    %43 = arith.divf %41, %42 : vector<1x256xf32>
    %44 = vector.broadcast %43 : vector<1x256xf32> to vector<32x256xf32>
    %45 = arith.subf %15, %44 : vector<32x256xf32>
    %46 = arith.mulf %45, %45 : vector<32x256xf32>
    %cst_28 = arith.constant dense<0.000000e+00> : vector<256xf32>
    %47 = vector.multi_reduction <add>, %46, %cst_28 [0] : vector<32x256xf32> to vector<256xf32>
    %48 = vector.shape_cast %47 : vector<256xf32> to vector<1x256xf32>
    %cst_29 = arith.constant 3.200000e+01 : f32
    %49 = vector.broadcast %cst_29 : f32 to vector<1x256xf32>
    %50 = arith.divf %48, %49 : vector<1x256xf32>
    %51 = vector.broadcast %43 : vector<1x256xf32> to vector<32x256xf32>
    %52 = arith.subf %15, %51 : vector<32x256xf32>
    %cst_30 = arith.constant 9.99999974E-6 : f32
    %53 = vector.broadcast %cst_30 : f32 to vector<1x256xf32>
    %54 = arith.addf %50, %53 : vector<1x256xf32>
    %55 = math.rsqrt %54 : vector<1x256xf32>
    %56 = vector.broadcast %55 : vector<1x256xf32> to vector<32x256xf32>
    %57 = arith.mulf %52, %56 : vector<32x256xf32>
    %c0_31 = arith.constant 0 : index
    %c0_32 = arith.constant 0 : index
    %58 = vector.load %arg7[%c0_31, %c0_32] : memref<32x1xf32, #tpu.memory_space<vmem>>, vector<32x1xf32>
    %59 = vector.broadcast %58 : vector<32x1xf32> to vector<32x256xf32>
    %60 = arith.mulf %57, %59 : vector<32x256xf32>
    %c0_33 = arith.constant 0 : index
    %c0_34 = arith.constant 0 : index
    %61 = vector.load %arg8[%c0_33, %c0_34] : memref<32x1xf32, #tpu.memory_space<vmem>>, vector<32x1xf32>
    %62 = vector.broadcast %61 : vector<32x1xf32> to vector<32x256xf32>
    %63 = arith.addf %60, %62 : vector<32x256xf32>
    %c0_35 = arith.constant 0 : index
    %c0_36 = arith.constant 0 : index
    %64 = vector.load %arg9[%c0_35, %c0_36] : memref<32x128xf32, #tpu.memory_space<vmem>>, vector<32x128xf32>
    %cst_37 = arith.constant dense<0.000000e+00> : vector<256x128xf32>
    %65 = tpu.matmul %39, %64, %cst_37 {dimension_numbers = #tpu.dot_dimension_numbers<[0], [0], [1], [1], [0, 1, 1, 1], [], []>} : vector<32x256xf32>, vector<32x128xf32>, vector<256x128xf32> -> vector<256x128xf32>
    %c0_38 = arith.constant 0 : index
    %c0_39 = arith.constant 0 : index
    %66 = vector.load %arg10[%c0_38, %c0_39] : memref<32x128xf32, #tpu.memory_space<vmem>>, vector<32x128xf32>
    %cst_40 = arith.constant dense<0.000000e+00> : vector<256x128xf32>
    %67 = tpu.matmul %63, %66, %cst_40 {dimension_numbers = #tpu.dot_dimension_numbers<[0], [0], [1], [1], [0, 1, 1, 1], [], []>} : vector<32x256xf32>, vector<32x128xf32>, vector<256x128xf32> -> vector<256x128xf32>
    %68 = arith.addf %65, %67 : vector<256x128xf32>
    %c0_41 = arith.constant 0 : index
    %c0_42 = arith.constant 0 : index
    %69 = vector.load %arg11[%c0_41, %c0_42] : memref<1x128xf32, #tpu.memory_space<vmem>>, vector<1x128xf32>
    %70 = vector.shape_cast %69 : vector<1x128xf32> to vector<128xf32>
    %71 = vector.shape_cast %70 : vector<128xf32> to vector<1x128xf32>
    %72 = vector.broadcast %71 : vector<1x128xf32> to vector<256x128xf32>
    %73 = arith.addf %68, %72 : vector<256x128xf32>
    %74 = vector.shape_cast %73 : vector<256x128xf32> to vector<16x16x128xf32>
    %c1_43 = arith.constant 1 : index
    %c8 = arith.constant 8 : index
    %c0_44 = arith.constant 0 : index
    %75 = vector.load %arg25[%c1_43, %c8, %c0_44] : memref<18x32x128xf32, #tpu.memory_space<vmem>>, vector<16x16x128xf32>
    tpu.vector_store %arg25[%c1_43, %c8, %c0_44], %74 {strides = array<i32>} : memref<18x32x128xf32, #tpu.memory_space<vmem>>, vector<16x16x128xf32>,
    %cst_45 = arith.constant 0.000000e+00 : f32
    %76 = vector.broadcast %cst_45 : f32 to vector<16x16x128xf32>
    %c0_46 = arith.constant 0 : index
    %c7 = arith.constant 7 : index
    %c0_47 = arith.constant 0 : index
    %77 = vector.load %arg25[%c0_46, %c7, %c0_47] : memref<18x32x128xf32, #tpu.memory_space<vmem>>, vector<16x16x128xf32>
    %c0_48 = arith.constant 0 : index
    %c0_49 = arith.constant 0 : index
    %78 = vector.load %arg12[%c0_48, %c0_49] : memref<9x128xf32, #tpu.memory_space<vmem>>, vector<1x128xf32>
    %79 = vector.shape_cast %78 : vector<1x128xf32> to vector<128xf32>
    %80 = vector.shape_cast %79 : vector<128xf32> to vector<1x1x128xf32>
    %81 = vector.broadcast %80 : vector<1x1x128xf32> to vector<16x16x128xf32>
    %82 = arith.mulf %77, %81 : vector<16x16x128xf32>
    %83 = arith.addf %76, %82 : vector<16x16x128xf32>
    %c0_50 = arith.constant 0 : index
    %c8_51 = arith.constant 8 : index
    %c0_52 = arith.constant 0 : index
    %84 = vector.load %arg25[%c0_50, %c8_51, %c0_52] : memref<18x32x128xf32, #tpu.memory_space<vmem>>, vector<16x16x128xf32>
    %c1_53 = arith.constant 1 : index
    %c0_54 = arith.constant 0 : index
    %85 = vector.load %arg12[%c1_53, %c0_54] : memref<9x128xf32, #tpu.memory_space<vmem>>, vector<1x128xf32>
    %86 = vector.shape_cast %85 : vector<1x128xf32> to vector<128xf32>
    %87 = vector.shape_cast %86 : vector<128xf32> to vector<1x1x128xf32>
    %88 = vector.broadcast %87 : vector<1x1x128xf32> to vector<16x16x128xf32>
    %89 = arith.mulf %84, %88 : vector<16x16x128xf32>
    %90 = arith.addf %83, %89 : vector<16x16x128xf32>
    %c0_55 = arith.constant 0 : index
    %c9 = arith.constant 9 : index
    %c0_56 = arith.constant 0 : index
    %91 = vector.load %arg25[%c0_55, %c9, %c0_56] : memref<18x32x128xf32, #tpu.memory_space<vmem>>, vector<16x16x128xf32>
    %c2 = arith.constant 2 : index
    %c0_57 = arith.constant 0 : index
    %92 = vector.load %arg12[%c2, %c0_57] : memref<9x128xf32, #tpu.memory_space<vmem>>, vector<1x128xf32>
    %93 = vector.shape_cast %92 : vector<1x128xf32> to vector<128xf32>
    %94 = vector.shape_cast %93 : vector<128xf32> to vector<1x1x128xf32>
    %95 = vector.broadcast %94 : vector<1x1x128xf32> to vector<16x16x128xf32>
    %96 = arith.mulf %91, %95 : vector<16x16x128xf32>
    %97 = arith.addf %90, %96 : vector<16x16x128xf32>
    %c1_58 = arith.constant 1 : index
    %c7_59 = arith.constant 7 : index
    %c0_60 = arith.constant 0 : index
    %98 = vector.load %arg25[%c1_58, %c7_59, %c0_60] : memref<18x32x128xf32, #tpu.memory_space<vmem>>, vector<16x16x128xf32>
    %c3 = arith.constant 3 : index
    %c0_61 = arith.constant 0 : index
    %99 = vector.load %arg12[%c3, %c0_61] : memref<9x128xf32, #tpu.memory_space<vmem>>, vector<1x128xf32>
    %100 = vector.shape_cast %99 : vector<1x128xf32> to vector<128xf32>
    %101 = vector.shape_cast %100 : vector<128xf32> to vector<1x1x128xf32>
    %102 = vector.broadcast %101 : vector<1x1x128xf32> to vector<16x16x128xf32>
    %103 = arith.mulf %98, %102 : vector<16x16x128xf32>
    %104 = arith.addf %97, %103 : vector<16x16x128xf32>
    %c1_62 = arith.constant 1 : index
    %c8_63 = arith.constant 8 : index
    %c0_64 = arith.constant 0 : index
    %105 = vector.load %arg25[%c1_62, %c8_63, %c0_64] : memref<18x32x128xf32, #tpu.memory_space<vmem>>, vector<16x16x128xf32>
    %c4 = arith.constant 4 : index
    %c0_65 = arith.constant 0 : index
    %106 = vector.load %arg12[%c4, %c0_65] : memref<9x128xf32, #tpu.memory_space<vmem>>, vector<1x128xf32>
    %107 = vector.shape_cast %106 : vector<1x128xf32> to vector<128xf32>
    %108 = vector.shape_cast %107 : vector<128xf32> to vector<1x1x128xf32>
    %109 = vector.broadcast %108 : vector<1x1x128xf32> to vector<16x16x128xf32>
    %110 = arith.mulf %105, %109 : vector<16x16x128xf32>
    %111 = arith.addf %104, %110 : vector<16x16x128xf32>
    %c1_66 = arith.constant 1 : index
    %c9_67 = arith.constant 9 : index
    %c0_68 = arith.constant 0 : index
    %112 = vector.load %arg25[%c1_66, %c9_67, %c0_68] : memref<18x32x128xf32, #tpu.memory_space<vmem>>, vector<16x16x128xf32>
    %c5 = arith.constant 5 : index
    %c0_69 = arith.constant 0 : index
    %113 = vector.load %arg12[%c5, %c0_69] : memref<9x128xf32, #tpu.memory_space<vmem>>, vector<1x128xf32>
    %114 = vector.shape_cast %113 : vector<1x128xf32> to vector<128xf32>
    %115 = vector.shape_cast %114 : vector<128xf32> to vector<1x1x128xf32>
    %116 = vector.broadcast %115 : vector<1x1x128xf32> to vector<16x16x128xf32>
    %117 = arith.mulf %112, %116 : vector<16x16x128xf32>
    %118 = arith.addf %111, %117 : vector<16x16x128xf32>
    %c2_70 = arith.constant 2 : index
    %c7_71 = arith.constant 7 : index
    %c0_72 = arith.constant 0 : index
    %119 = vector.load %arg25[%c2_70, %c7_71, %c0_72] : memref<18x32x128xf32, #tpu.memory_space<vmem>>, vector<16x16x128xf32>
    %c6 = arith.constant 6 : index
    %c0_73 = arith.constant 0 : index
    %120 = vector.load %arg12[%c6, %c0_73] : memref<9x128xf32, #tpu.memory_space<vmem>>, vector<1x128xf32>
    %121 = vector.shape_cast %120 : vector<1x128xf32> to vector<128xf32>
    %122 = vector.shape_cast %121 : vector<128xf32> to vector<1x1x128xf32>
    %123 = vector.broadcast %122 : vector<1x1x128xf32> to vector<16x16x128xf32>
    %124 = arith.mulf %119, %123 : vector<16x16x128xf32>
    %125 = arith.addf %118, %124 : vector<16x16x128xf32>
    %c2_74 = arith.constant 2 : index
    %c8_75 = arith.constant 8 : index
    %c0_76 = arith.constant 0 : index
    %126 = vector.load %arg25[%c2_74, %c8_75, %c0_76] : memref<18x32x128xf32, #tpu.memory_space<vmem>>, vector<16x16x128xf32>
    %c7_77 = arith.constant 7 : index
    %c0_78 = arith.constant 0 : index
    %127 = vector.load %arg12[%c7_77, %c0_78] : memref<9x128xf32, #tpu.memory_space<vmem>>, vector<1x128xf32>
    %128 = vector.shape_cast %127 : vector<1x128xf32> to vector<128xf32>
    %129 = vector.shape_cast %128 : vector<128xf32> to vector<1x1x128xf32>
    %130 = vector.broadcast %129 : vector<1x1x128xf32> to vector<16x16x128xf32>
    %131 = arith.mulf %126, %130 : vector<16x16x128xf32>
    %132 = arith.addf %125, %131 : vector<16x16x128xf32>
    %c2_79 = arith.constant 2 : index
    %c9_80 = arith.constant 9 : index
    %c0_81 = arith.constant 0 : index
    %133 = vector.load %arg25[%c2_79, %c9_80, %c0_81] : memref<18x32x128xf32, #tpu.memory_space<vmem>>, vector<16x16x128xf32>
    %c8_82 = arith.constant 8 : index
    %c0_83 = arith.constant 0 : index
    %134 = vector.load %arg12[%c8_82, %c0_83] : memref<9x128xf32, #tpu.memory_space<vmem>>, vector<1x128xf32>
    %135 = vector.shape_cast %134 : vector<1x128xf32> to vector<128xf32>
    %136 = vector.shape_cast %135 : vector<128xf32> to vector<1x1x128xf32>
    %137 = vector.broadcast %136 : vector<1x1x128xf32> to vector<16x16x128xf32>
    %138 = arith.mulf %133, %137 : vector<16x16x128xf32>
    %139 = arith.addf %132, %138 : vector<16x16x128xf32>
    %c0_84 = arith.constant 0 : index
    %c0_85 = arith.constant 0 : index
    %140 = vector.load %arg13[%c0_84, %c0_85] : memref<1x128xf32, #tpu.memory_space<vmem>>, vector<1x128xf32>
    %141 = vector.shape_cast %140 : vector<1x128xf32> to vector<128xf32>
    %142 = vector.shape_cast %141 : vector<128xf32> to vector<1x1x128xf32>
    %143 = vector.broadcast %142 : vector<1x1x128xf32> to vector<16x16x128xf32>
    %144 = arith.addf %139, %143 : vector<16x16x128xf32>
    %145 = vector.shape_cast %144 : vector<16x16x128xf32> to vector<256x128xf32>
    %146 = vector.extract_strided_slice %145 {offsets = [0, 0], sizes = [256, 32], strides = [1, 1]} : vector<256x128xf32> to vector<256x32xf32>
    %147 = vector.extract_strided_slice %145 {offsets = [0, 32], sizes = [256, 32], strides = [1, 1]} : vector<256x128xf32> to vector<256x32xf32>
    %148 = vector.extract_strided_slice %145 {offsets = [0, 64], sizes = [256, 32], strides = [1, 1]} : vector<256x128xf32> to vector<256x32xf32>
    %149 = arith.mulf %148, %148 : vector<256x32xf32>
    %cst_86 = arith.constant dense<0.000000e+00> : vector<32xf32>
    %150 = vector.multi_reduction <add>, %149, %cst_86 [0] : vector<256x32xf32> to vector<32xf32>
    %151 = vector.shape_cast %150 : vector<32xf32> to vector<1x32xf32>
    %cst_87 = arith.constant 1.000000e-24 : f32
    %152 = vector.broadcast %cst_87 : f32 to vector<1x32xf32>
    %153 = arith.maximumf %151, %152 : vector<1x32xf32>
    %154 = math.rsqrt %153 : vector<1x32xf32>
    %155 = vector.broadcast %154 : vector<1x32xf32> to vector<256x32xf32>
    %156 = arith.mulf %148, %155 : vector<256x32xf32>
    %157 = arith.mulf %146, %146 : vector<256x32xf32>
    %cst_88 = arith.constant dense<0.000000e+00> : vector<32xf32>
    %158 = vector.multi_reduction <add>, %157, %cst_88 [0] : vector<256x32xf32> to vector<32xf32>
    %159 = vector.shape_cast %158 : vector<32xf32> to vector<1x32xf32>
    %cst_89 = arith.constant 1.000000e-24 : f32
    %160 = vector.broadcast %cst_89 : f32 to vector<1x32xf32>
    %161 = arith.maximumf %159, %160 : vector<1x32xf32>
    %162 = math.rsqrt %161 : vector<1x32xf32>
    %163 = vector.broadcast %162 : vector<1x32xf32> to vector<256x32xf32>
    %164 = arith.mulf %146, %163 : vector<256x32xf32>
    %cst_90 = arith.constant dense<0.000000e+00> : vector<32x32xf32>
    %165 = tpu.matmul %156, %164, %cst_90 {dimension_numbers = #tpu.dot_dimension_numbers<[0], [0], [1], [1], [0, 1, 1, 1], [], []>} : vector<256x32xf32>, vector<256x32xf32>, vector<32x32xf32> -> vector<32x32xf32>
    %c0_91 = arith.constant 0 : index
    %c0_92 = arith.constant 0 : index
    %166 = vector.load %arg14[%c0_91, %c0_92] : memref<32x1xf32, #tpu.memory_space<vmem>>, vector<32x1xf32>
    %167 = vector.broadcast %166 : vector<32x1xf32> to vector<32x32xf32>
    %168 = arith.mulf %165, %167 : vector<32x32xf32>
    %c0_93 = arith.constant 0 : index
    %c0_94 = arith.constant 0 : index
    %169 = vector.load %arg15[%c0_93, %c0_94] : memref<32x32xf32, #tpu.memory_space<vmem>>, vector<32x32xf32>
    %170 = arith.addf %168, %169 : vector<32x32xf32>
    %cst_95 = arith.constant dense<0xFF800000> : vector<32xf32>
    %171 = vector.multi_reduction <maximumf>, %170, %cst_95 [1] : vector<32x32xf32> to vector<32xf32>
    %172 = vector.shape_cast %171 : vector<32xf32> to vector<32x1xf32>
    %173 = vector.broadcast %172 : vector<32x1xf32> to vector<32x32xf32>
    %174 = arith.subf %170, %173 : vector<32x32xf32>
    %175 = math.exp %174 : vector<32x32xf32>
    %cst_96 = arith.constant dense<0.000000e+00> : vector<32xf32>
    %176 = vector.multi_reduction <add>, %175, %cst_96 [1] : vector<32x32xf32> to vector<32xf32>
    %177 = vector.shape_cast %176 : vector<32xf32> to vector<32x1xf32>
    %178 = vector.broadcast %177 : vector<32x1xf32> to vector<32x32xf32>
    %179 = arith.divf %175, %178 : vector<32x32xf32>
    %cst_97 = arith.constant dense<0.000000e+00> : vector<256x32xf32>
    %180 = tpu.matmul %147, %179, %cst_97 {dimension_numbers = #tpu.dot_dimension_numbers<[1], [1], [0], [0], [0, 0, 1, 0], [], []>} : vector<256x32xf32>, vector<32x32xf32>, vector<256x32xf32> -> vector<256x32xf32>
    %c0_98 = arith.constant 0 : index
    %c0_99 = arith.constant 0 : index
    %181 = vector.load %arg16[%c0_98, %c0_99] : memref<32x32xf32, #tpu.memory_space<vmem>>, vector<32x32xf32>
    %cst_100 = arith.constant dense<0.000000e+00> : vector<32x256xf32>
    %182 = tpu.matmul %181, %180, %cst_100 {dimension_numbers = #tpu.dot_dimension_numbers<[1], [1], [0], [0], [0, 0, 1, 0], [], []>} : vector<32x32xf32>, vector<256x32xf32>, vector<32x256xf32> -> vector<32x256xf32>
    %183 = arith.addf %13, %182 : vector<32x256xf32>
    %c0_101 = arith.constant 0 : index
    %c0_102 = arith.constant 0 : index
    %184 = vector.load %arg17[%c0_101, %c0_102] : memref<32x1xf32, #tpu.memory_space<vmem>>, vector<32x1xf32>
    %185 = vector.broadcast %184 : vector<32x1xf32> to vector<32x256xf32>
    %186 = arith.addf %183, %185 : vector<32x256xf32>
    %cst_103 = arith.constant dense<0.000000e+00> : vector<256xf32>
    %187 = vector.multi_reduction <add>, %186, %cst_103 [0] : vector<32x256xf32> to vector<256xf32>
    %188 = vector.shape_cast %187 : vector<256xf32> to vector<1x256xf32>
    %cst_104 = arith.constant 3.200000e+01 : f32
    %189 = vector.broadcast %cst_104 : f32 to vector<1x256xf32>
    %190 = arith.divf %188, %189 : vector<1x256xf32>
    %191 = vector.broadcast %190 : vector<1x256xf32> to vector<32x256xf32>
    %192 = arith.subf %186, %191 : vector<32x256xf32>
    %193 = arith.mulf %192, %192 : vector<32x256xf32>
    %cst_105 = arith.constant dense<0.000000e+00> : vector<256xf32>
    %194 = vector.multi_reduction <add>, %193, %cst_105 [0] : vector<32x256xf32> to vector<256xf32>
    %195 = vector.shape_cast %194 : vector<256xf32> to vector<1x256xf32>
    %cst_106 = arith.constant 3.200000e+01 : f32
    %196 = vector.broadcast %cst_106 : f32 to vector<1x256xf32>
    %197 = arith.divf %195, %196 : vector<1x256xf32>
    %198 = vector.broadcast %190 : vector<1x256xf32> to vector<32x256xf32>
    %199 = arith.subf %186, %198 : vector<32x256xf32>
    %cst_107 = arith.constant 9.99999974E-6 : f32
    %200 = vector.broadcast %cst_107 : f32 to vector<1x256xf32>
    %201 = arith.addf %197, %200 : vector<1x256xf32>
    %202 = math.rsqrt %201 : vector<1x256xf32>
    %203 = vector.broadcast %202 : vector<1x256xf32> to vector<32x256xf32>
    %204 = arith.mulf %199, %203 : vector<32x256xf32>
    %c0_108 = arith.constant 0 : index
    %c0_109 = arith.constant 0 : index
    %205 = vector.load %arg5[%c0_108, %c0_109] : memref<32x1xf32, #tpu.memory_space<vmem>>, vector<32x1xf32>
    %206 = vector.broadcast %205 : vector<32x1xf32> to vector<32x256xf32>
    %207 = arith.mulf %204, %206 : vector<32x256xf32>
    %c0_110 = arith.constant 0 : index
    %c0_111 = arith.constant 0 : index
    %208 = vector.load %arg6[%c0_110, %c0_111] : memref<32x1xf32, #tpu.memory_space<vmem>>, vector<32x1xf32>
    %209 = vector.broadcast %208 : vector<32x1xf32> to vector<32x256xf32>
    %210 = arith.addf %207, %209 : vector<32x256xf32>
    %c0_112 = arith.constant 0 : index
    %c0_113 = arith.constant 0 : index
    %211 = vector.load %arg18[%c0_112, %c0_113] : memref<32x128xf32, #tpu.memory_space<vmem>>, vector<32x128xf32>
    %cst_114 = arith.constant dense<0.000000e+00> : vector<256x128xf32>
    %212 = tpu.matmul %210, %211, %cst_114 {dimension_numbers = #tpu.dot_dimension_numbers<[0], [0], [1], [1], [0, 1, 1, 1], [], []>} : vector<32x256xf32>, vector<32x128xf32>, vector<256x128xf32> -> vector<256x128xf32>
    %c0_115 = arith.constant 0 : index
    %c0_116 = arith.constant 0 : index
    %213 = vector.load %arg19[%c0_115, %c0_116] : memref<1x128xf32, #tpu.memory_space<vmem>>, vector<1x128xf32>
    %214 = vector.shape_cast %213 : vector<1x128xf32> to vector<128xf32>
    %215 = vector.shape_cast %214 : vector<128xf32> to vector<1x128xf32>
    %216 = vector.broadcast %215 : vector<1x128xf32> to vector<256x128xf32>
    %217 = arith.addf %212, %216 : vector<256x128xf32>
    %218 = vector.shape_cast %217 : vector<256x128xf32> to vector<16x16x128xf32>
    %c1_117 = arith.constant 1 : index
    %c8_118 = arith.constant 8 : index
    %c0_119 = arith.constant 0 : index
    %219 = vector.load %arg25[%c1_117, %c8_118, %c0_119] : memref<18x32x128xf32, #tpu.memory_space<vmem>>, vector<16x16x128xf32>
    tpu.vector_store %arg25[%c1_117, %c8_118, %c0_119], %218 {strides = array<i32>} : memref<18x32x128xf32, #tpu.memory_space<vmem>>, vector<16x16x128xf32>,
    %cst_120 = arith.constant 0.000000e+00 : f32
    %220 = vector.broadcast %cst_120 : f32 to vector<16x16x128xf32>
    %c0_121 = arith.constant 0 : index
    %c7_122 = arith.constant 7 : index
    %c0_123 = arith.constant 0 : index
    %221 = vector.load %arg25[%c0_121, %c7_122, %c0_123] : memref<18x32x128xf32, #tpu.memory_space<vmem>>, vector<16x16x128xf32>
    %c0_124 = arith.constant 0 : index
    %c0_125 = arith.constant 0 : index
    %222 = vector.load %arg20[%c0_124, %c0_125] : memref<9x128xf32, #tpu.memory_space<vmem>>, vector<1x128xf32>
    %223 = vector.shape_cast %222 : vector<1x128xf32> to vector<128xf32>
    %224 = vector.shape_cast %223 : vector<128xf32> to vector<1x1x128xf32>
    %225 = vector.broadcast %224 : vector<1x1x128xf32> to vector<16x16x128xf32>
    %226 = arith.mulf %221, %225 : vector<16x16x128xf32>
    %227 = arith.addf %220, %226 : vector<16x16x128xf32>
    %c0_126 = arith.constant 0 : index
    %c8_127 = arith.constant 8 : index
    %c0_128 = arith.constant 0 : index
    %228 = vector.load %arg25[%c0_126, %c8_127, %c0_128] : memref<18x32x128xf32, #tpu.memory_space<vmem>>, vector<16x16x128xf32>
    %c1_129 = arith.constant 1 : index
    %c0_130 = arith.constant 0 : index
    %229 = vector.load %arg20[%c1_129, %c0_130] : memref<9x128xf32, #tpu.memory_space<vmem>>, vector<1x128xf32>
    %230 = vector.shape_cast %229 : vector<1x128xf32> to vector<128xf32>
    %231 = vector.shape_cast %230 : vector<128xf32> to vector<1x1x128xf32>
    %232 = vector.broadcast %231 : vector<1x1x128xf32> to vector<16x16x128xf32>
    %233 = arith.mulf %228, %232 : vector<16x16x128xf32>
    %234 = arith.addf %227, %233 : vector<16x16x128xf32>
    %c0_131 = arith.constant 0 : index
    %c9_132 = arith.constant 9 : index
    %c0_133 = arith.constant 0 : index
    %235 = vector.load %arg25[%c0_131, %c9_132, %c0_133] : memref<18x32x128xf32, #tpu.memory_space<vmem>>, vector<16x16x128xf32>
    %c2_134 = arith.constant 2 : index
    %c0_135 = arith.constant 0 : index
    %236 = vector.load %arg20[%c2_134, %c0_135] : memref<9x128xf32, #tpu.memory_space<vmem>>, vector<1x128xf32>
    %237 = vector.shape_cast %236 : vector<1x128xf32> to vector<128xf32>
    %238 = vector.shape_cast %237 : vector<128xf32> to vector<1x1x128xf32>
    %239 = vector.broadcast %238 : vector<1x1x128xf32> to vector<16x16x128xf32>
    %240 = arith.mulf %235, %239 : vector<16x16x128xf32>
    %241 = arith.addf %234, %240 : vector<16x16x128xf32>
    %c1_136 = arith.constant 1 : index
    %c7_137 = arith.constant 7 : index
    %c0_138 = arith.constant 0 : index
    %242 = vector.load %arg25[%c1_136, %c7_137, %c0_138] : memref<18x32x128xf32, #tpu.memory_space<vmem>>, vector<16x16x128xf32>
    %c3_139 = arith.constant 3 : index
    %c0_140 = arith.constant 0 : index
    %243 = vector.load %arg20[%c3_139, %c0_140] : memref<9x128xf32, #tpu.memory_space<vmem>>, vector<1x128xf32>
    %244 = vector.shape_cast %243 : vector<1x128xf32> to vector<128xf32>
    %245 = vector.shape_cast %244 : vector<128xf32> to vector<1x1x128xf32>
    %246 = vector.broadcast %245 : vector<1x1x128xf32> to vector<16x16x128xf32>
    %247 = arith.mulf %242, %246 : vector<16x16x128xf32>
    %248 = arith.addf %241, %247 : vector<16x16x128xf32>
    %c1_141 = arith.constant 1 : index
    %c8_142 = arith.constant 8 : index
    %c0_143 = arith.constant 0 : index
    %249 = vector.load %arg25[%c1_141, %c8_142, %c0_143] : memref<18x32x128xf32, #tpu.memory_space<vmem>>, vector<16x16x128xf32>
    %c4_144 = arith.constant 4 : index
    %c0_145 = arith.constant 0 : index
    %250 = vector.load %arg20[%c4_144, %c0_145] : memref<9x128xf32, #tpu.memory_space<vmem>>, vector<1x128xf32>
    %251 = vector.shape_cast %250 : vector<1x128xf32> to vector<128xf32>
    %252 = vector.shape_cast %251 : vector<128xf32> to vector<1x1x128xf32>
    %253 = vector.broadcast %252 : vector<1x1x128xf32> to vector<16x16x128xf32>
    %254 = arith.mulf %249, %253 : vector<16x16x128xf32>
    %255 = arith.addf %248, %254 : vector<16x16x128xf32>
    %c1_146 = arith.constant 1 : index
    %c9_147 = arith.constant 9 : index
    %c0_148 = arith.constant 0 : index
    %256 = vector.load %arg25[%c1_146, %c9_147, %c0_148] : memref<18x32x128xf32, #tpu.memory_space<vmem>>, vector<16x16x128xf32>
    %c5_149 = arith.constant 5 : index
    %c0_150 = arith.constant 0 : index
    %257 = vector.load %arg20[%c5_149, %c0_150] : memref<9x128xf32, #tpu.memory_space<vmem>>, vector<1x128xf32>
    %258 = vector.shape_cast %257 : vector<1x128xf32> to vector<128xf32>
    %259 = vector.shape_cast %258 : vector<128xf32> to vector<1x1x128xf32>
    %260 = vector.broadcast %259 : vector<1x1x128xf32> to vector<16x16x128xf32>
    %261 = arith.mulf %256, %260 : vector<16x16x128xf32>
    %262 = arith.addf %255, %261 : vector<16x16x128xf32>
    %c2_151 = arith.constant 2 : index
    %c7_152 = arith.constant 7 : index
    %c0_153 = arith.constant 0 : index
    %263 = vector.load %arg25[%c2_151, %c7_152, %c0_153] : memref<18x32x128xf32, #tpu.memory_space<vmem>>, vector<16x16x128xf32>
    %c6_154 = arith.constant 6 : index
    %c0_155 = arith.constant 0 : index
    %264 = vector.load %arg20[%c6_154, %c0_155] : memref<9x128xf32, #tpu.memory_space<vmem>>, vector<1x128xf32>
    %265 = vector.shape_cast %264 : vector<1x128xf32> to vector<128xf32>
    %266 = vector.shape_cast %265 : vector<128xf32> to vector<1x1x128xf32>
    %267 = vector.broadcast %266 : vector<1x1x128xf32> to vector<16x16x128xf32>
    %268 = arith.mulf %263, %267 : vector<16x16x128xf32>
    %269 = arith.addf %262, %268 : vector<16x16x128xf32>
    %c2_156 = arith.constant 2 : index
    %c8_157 = arith.constant 8 : index
    %c0_158 = arith.constant 0 : index
    %270 = vector.load %arg25[%c2_156, %c8_157, %c0_158] : memref<18x32x128xf32, #tpu.memory_space<vmem>>, vector<16x16x128xf32>
    %c7_159 = arith.constant 7 : index
    %c0_160 = arith.constant 0 : index
    %271 = vector.load %arg20[%c7_159, %c0_160] : memref<9x128xf32, #tpu.memory_space<vmem>>, vector<1x128xf32>
    %272 = vector.shape_cast %271 : vector<1x128xf32> to vector<128xf32>
    %273 = vector.shape_cast %272 : vector<128xf32> to vector<1x1x128xf32>
    %274 = vector.broadcast %273 : vector<1x1x128xf32> to vector<16x16x128xf32>
    %275 = arith.mulf %270, %274 : vector<16x16x128xf32>
    %276 = arith.addf %269, %275 : vector<16x16x128xf32>
    %c2_161 = arith.constant 2 : index
    %c9_162 = arith.constant 9 : index
    %c0_163 = arith.constant 0 : index
    %277 = vector.load %arg25[%c2_161, %c9_162, %c0_163] : memref<18x32x128xf32, #tpu.memory_space<vmem>>, vector<16x16x128xf32>
    %c8_164 = arith.constant 8 : index
    %c0_165 = arith.constant 0 : index
    %278 = vector.load %arg20[%c8_164, %c0_165] : memref<9x128xf32, #tpu.memory_space<vmem>>, vector<1x128xf32>
    %279 = vector.shape_cast %278 : vector<1x128xf32> to vector<128xf32>
    %280 = vector.shape_cast %279 : vector<128xf32> to vector<1x1x128xf32>
    %281 = vector.broadcast %280 : vector<1x1x128xf32> to vector<16x16x128xf32>
    %282 = arith.mulf %277, %281 : vector<16x16x128xf32>
    %283 = arith.addf %276, %282 : vector<16x16x128xf32>
    %c0_166 = arith.constant 0 : index
    %c0_167 = arith.constant 0 : index
    %284 = vector.load %arg21[%c0_166, %c0_167] : memref<1x128xf32, #tpu.memory_space<vmem>>, vector<1x128xf32>
    %285 = vector.shape_cast %284 : vector<1x128xf32> to vector<128xf32>
    %286 = vector.shape_cast %285 : vector<128xf32> to vector<1x1x128xf32>
    %287 = vector.broadcast %286 : vector<1x1x128xf32> to vector<16x16x128xf32>
    %288 = arith.addf %283, %287 : vector<16x16x128xf32>
    %289 = vector.shape_cast %288 : vector<16x16x128xf32> to vector<256x128xf32>
    %290 = vector.extract_strided_slice %289 {offsets = [0, 0], sizes = [256, 64], strides = [1, 1]} : vector<256x128xf32> to vector<256x64xf32>
    %291 = vector.extract_strided_slice %289 {offsets = [0, 64], sizes = [256, 64], strides = [1, 1]} : vector<256x128xf32> to vector<256x64xf32>
    %cst_168 = arith.constant 5.000000e-01 : f32
    %292 = vector.broadcast %cst_168 : f32 to vector<256x64xf32>
    %293 = arith.mulf %292, %290 : vector<256x64xf32>
    %cst_169 = arith.constant 0.707106769 : f32
    %294 = vector.broadcast %cst_169 : f32 to vector<256x64xf32>
    %295 = arith.mulf %290, %294 : vector<256x64xf32>
    %296 = math.erf %295 : vector<256x64xf32>
    %cst_170 = arith.constant 1.000000e+00 : f32
    %297 = vector.broadcast %cst_170 : f32 to vector<256x64xf32>
    %298 = arith.addf %297, %296 : vector<256x64xf32>
    %299 = arith.mulf %293, %298 : vector<256x64xf32>
    %300 = arith.mulf %299, %291 : vector<256x64xf32>
    %c0_171 = arith.constant 0 : index
    %c0_172 = arith.constant 0 : index
    %301 = vector.load %arg22[%c0_171, %c0_172] : memref<32x64xf32, #tpu.memory_space<vmem>>, vector<32x64xf32>
    %cst_173 = arith.constant dense<0.000000e+00> : vector<32x256xf32>
    %302 = tpu.matmul %301, %300, %cst_173 {dimension_numbers = #tpu.dot_dimension_numbers<[1], [1], [0], [0], [0, 0, 1, 0], [], []>} : vector<32x64xf32>, vector<256x64xf32>, vector<32x256xf32> -> vector<32x256xf32>
    %303 = arith.addf %186, %302 : vector<32x256xf32>
    %c0_174 = arith.constant 0 : index
    %c0_175 = arith.constant 0 : index
    %304 = vector.load %arg23[%c0_174, %c0_175] : memref<32x1xf32, #tpu.memory_space<vmem>>, vector<32x1xf32>
    %305 = vector.broadcast %304 : vector<32x1xf32> to vector<32x256xf32>
    %306 = arith.addf %303, %305 : vector<32x256xf32>
    %c0_176 = arith.constant 0 : index
    %c0_177 = arith.constant 0 : index
    %c0_178 = arith.constant 0 : index
    %307 = vector.load %arg24[%c0_176, %c0_177, %c0_178] : memref<1x32x256xf32, #tpu.memory_space<vmem>>, vector<1x32x256xf32>
    %308 = vector.shape_cast %307 : vector<1x32x256xf32> to vector<32x256xf32>
    %309 = vector.shape_cast %306 : vector<32x256xf32> to vector<1x32x256xf32>
    tpu.vector_store %arg24[%c0_176, %c0_177, %c0_178], %309 {strides = array<i32>} : memref<1x32x256xf32, #tpu.memory_space<vmem>>, vector<1x32x256xf32>,
    return
  }
  func.func @transform_0(%arg0: i32) -> (i32, i32, i32) {
    %c0_i32 = arith.constant 0 : i32
    %c0_i32_0 = arith.constant 0 : i32
    %c0_i32_1 = arith.constant 0 : i32
    return %arg0, %c0_i32, %c0_i32_0 : i32, i32, i32
  }
  func.func @transform_1(%arg0: i32) -> (i32, i32, i32) {
    %c0_i32 = arith.constant 0 : i32
    %c0_i32_0 = arith.constant 0 : i32
    %c0_i32_1 = arith.constant 0 : i32
    return %arg0, %c0_i32, %c0_i32_0 : i32, i32, i32
  }
  func.func @transform_2(%arg0: i32) -> (i32, i32) {
    %c0_i32 = arith.constant 0 : i32
    %c0_i32_0 = arith.constant 0 : i32
    %c0_i32_1 = arith.constant 0 : i32
    return %c0_i32, %c0_i32_0 : i32, i32
  }
  func.func @transform_3(%arg0: i32) -> (i32, i32) {
    %c0_i32 = arith.constant 0 : i32
    %c0_i32_0 = arith.constant 0 : i32
    %c0_i32_1 = arith.constant 0 : i32
    return %c0_i32, %c0_i32_0 : i32, i32
  }
  func.func @transform_4(%arg0: i32) -> (i32, i32) {
    %c0_i32 = arith.constant 0 : i32
    %c0_i32_0 = arith.constant 0 : i32
    %c0_i32_1 = arith.constant 0 : i32
    return %c0_i32, %c0_i32_0 : i32, i32
  }
  func.func @transform_5(%arg0: i32) -> (i32, i32) {
    %c0_i32 = arith.constant 0 : i32
    %c0_i32_0 = arith.constant 0 : i32
    %c0_i32_1 = arith.constant 0 : i32
    return %c0_i32, %c0_i32_0 : i32, i32
  }
  func.func @transform_6(%arg0: i32) -> (i32, i32) {
    %c0_i32 = arith.constant 0 : i32
    %c0_i32_0 = arith.constant 0 : i32
    %c0_i32_1 = arith.constant 0 : i32
    return %c0_i32, %c0_i32_0 : i32, i32
  }
  func.func @transform_7(%arg0: i32) -> (i32, i32) {
    %c0_i32 = arith.constant 0 : i32
    %c0_i32_0 = arith.constant 0 : i32
    %c0_i32_1 = arith.constant 0 : i32
    return %c0_i32, %c0_i32_0 : i32, i32
  }
  func.func @transform_8(%arg0: i32) -> (i32, i32) {
    %c0_i32 = arith.constant 0 : i32
    %c0_i32_0 = arith.constant 0 : i32
    %c0_i32_1 = arith.constant 0 : i32
    return %c0_i32, %c0_i32_0 : i32, i32
  }
  func.func @transform_9(%arg0: i32) -> (i32, i32) {
    %c0_i32 = arith.constant 0 : i32
    %c0_i32_0 = arith.constant 0 : i32
    %c0_i32_1 = arith.constant 0 : i32
    return %c0_i32, %c0_i32_0 : i32, i32
  }
  func.func @transform_10(%arg0: i32) -> (i32, i32) {
    %c0_i32 = arith.constant 0 : i32
    %c0_i32_0 = arith.constant 0 : i32
    %c0_i32_1 = arith.constant 0 : i32
    return %c0_i32, %c0_i32_0 : i32, i32
  }
  func.func @transform_11(%arg0: i32) -> (i32, i32) {
    %c0_i32 = arith.constant 0 : i32
    %c0_i32_0 = arith.constant 0 : i32
    %c0_i32_1 = arith.constant 0 : i32
    return %c0_i32, %c0_i32_0 : i32, i32
  }
  func.func @transform_12(%arg0: i32) -> (i32, i32) {
    %c0_i32 = arith.constant 0 : i32
    %c0_i32_0 = arith.constant 0 : i32
    %c0_i32_1 = arith.constant 0 : i32
    return %c0_i32, %c0_i32_0 : i32, i32
  }
  func.func @transform_13(%arg0: i32) -> (i32, i32) {
    %c0_i32 = arith.constant 0 : i32
    %c0_i32_0 = arith.constant 0 : i32
    %c0_i32_1 = arith.constant 0 : i32
    return %c0_i32, %c0_i32_0 : i32, i32
  }
  func.func @transform_14(%arg0: i32) -> (i32, i32) {
    %c0_i32 = arith.constant 0 : i32
    %c0_i32_0 = arith.constant 0 : i32
    %c0_i32_1 = arith.constant 0 : i32
    return %c0_i32, %c0_i32_0 : i32, i32
  }
  func.func @transform_15(%arg0: i32) -> (i32, i32) {
    %c0_i32 = arith.constant 0 : i32
    %c0_i32_0 = arith.constant 0 : i32
    %c0_i32_1 = arith.constant 0 : i32
    return %c0_i32, %c0_i32_0 : i32, i32
  }
  func.func @transform_16(%arg0: i32) -> (i32, i32) {
    %c0_i32 = arith.constant 0 : i32
    %c0_i32_0 = arith.constant 0 : i32
    %c0_i32_1 = arith.constant 0 : i32
    return %c0_i32, %c0_i32_0 : i32, i32
  }
  func.func @transform_17(%arg0: i32) -> (i32, i32) {
    %c0_i32 = arith.constant 0 : i32
    %c0_i32_0 = arith.constant 0 : i32
    %c0_i32_1 = arith.constant 0 : i32
    return %c0_i32, %c0_i32_0 : i32, i32
  }
  func.func @transform_18(%arg0: i32) -> (i32, i32) {
    %c0_i32 = arith.constant 0 : i32
    %c0_i32_0 = arith.constant 0 : i32
    %c0_i32_1 = arith.constant 0 : i32
    return %c0_i32, %c0_i32_0 : i32, i32
  }
  func.func @transform_19(%arg0: i32) -> (i32, i32) {
    %c0_i32 = arith.constant 0 : i32
    %c0_i32_0 = arith.constant 0 : i32
    %c0_i32_1 = arith.constant 0 : i32
    return %c0_i32, %c0_i32_0 : i32, i32
  }
  func.func @transform_20(%arg0: i32) -> (i32, i32) {
    %c0_i32 = arith.constant 0 : i32
    %c0_i32_0 = arith.constant 0 : i32
    %c0_i32_1 = arith.constant 0 : i32
    return %c0_i32, %c0_i32_0 : i32, i32
  }
  func.func @transform_21(%arg0: i32) -> (i32, i32) {
    %c0_i32 = arith.constant 0 : i32
    %c0_i32_0 = arith.constant 0 : i32
    %c0_i32_1 = arith.constant 0 : i32
    return %c0_i32, %c0_i32_0 : i32, i32
  }
  func.func @transform_22(%arg0: i32) -> (i32, i32) {
    %c0_i32 = arith.constant 0 : i32
    %c0_i32_0 = arith.constant 0 : i32
    %c0_i32_1 = arith.constant 0 : i32
    return %c0_i32, %c0_i32_0 : i32, i32
  }
  func.func @transform_23(%arg0: i32) -> (i32, i32, i32) {
    %c0_i32 = arith.constant 0 : i32
    %c0_i32_0 = arith.constant 0 : i32
    %c0_i32_1 = arith.constant 0 : i32
    return %arg0, %c0_i32, %c0_i32_0 : i32, i32, i32
  }
}

</mosaic_0001>

<llo_original>
// kernel: tpu_custom_call.1
$region0: #{tpu_custom_call.1}
  #allocation0 [shape = 'u32[]', space=smem, size = 0x4, offset = 0x4, fixed_abs, tag = 'smem constant byte address 0x4 - core index']
  #allocation1 [shape = 'u32[144,128]{1,0:T(1,128)}', space=vmem, size = 0x12000, scoped, tag = 'internal scratch']
  #allocation2 [shape = 'f32[18,32,128]{2,1,0:T(8,128)}', space=vmem, size = 0x48000, scoped, tag = 'scratch operand']
  %s0 = inlined_call_operand.vmem [shape: f32[2,32,256], index: 0, kind: input, shape index: {}]
  %s1 = inlined_call_operand.vmem [shape: f32[2,32,256], index: 1, kind: input, shape index: {}]
  %s2 = inlined_call_operand.vmem [shape: f32[32,1], index: 2, kind: input, shape index: {}]
  %s3 = inlined_call_operand.vmem [shape: f32[32,1], index: 3, kind: input, shape index: {}]
  %s4 = inlined_call_operand.vmem [shape: f32[32,1], index: 4, kind: input, shape index: {}]
  %s5 = inlined_call_operand.vmem [shape: f32[32,1], index: 5, kind: input, shape index: {}]
  %s6 = inlined_call_operand.vmem [shape: f32[32,1], index: 6, kind: input, shape index: {}]
  %s7 = inlined_call_operand.vmem [shape: f32[32,1], index: 7, kind: input, shape index: {}]
  %s8 = inlined_call_operand.vmem [shape: f32[32,128], index: 8, kind: input, shape index: {}]
  %s9 = inlined_call_operand.vmem [shape: f32[32,128], index: 9, kind: input, shape index: {}]
  %s10 = inlined_call_operand.hbm [shape: f32[1,128], index: 10, kind: input, shape index: {}]
  %s11 = inlined_call_operand.hbm [shape: f32[9,128], index: 11, kind: input, shape index: {}]
  %s12 = inlined_call_operand.hbm [shape: f32[1,128], index: 12, kind: input, shape index: {}]
  %s13 = inlined_call_operand.vmem [shape: f32[32,1], index: 13, kind: input, shape index: {}]
  %s14 = inlined_call_operand.hbm [shape: f32[32,32], index: 14, kind: input, shape index: {}]
  %s15 = inlined_call_operand.vmem [shape: f32[32,32], index: 15, kind: input, shape index: {}]
  %s16 = inlined_call_operand.vmem [shape: f32[32,1], index: 16, kind: input, shape index: {}]
  %s17 = inlined_call_operand.hbm [shape: f32[32,128], index: 17, kind: input, shape index: {}]
  %s18 = inlined_call_operand.hbm [shape: f32[1,128], index: 18, kind: input, shape index: {}]
  %s19 = inlined_call_operand.vmem [shape: f32[9,128], index: 19, kind: input, shape index: {}]
  %s20 = inlined_call_operand.vmem [shape: f32[1,128], index: 20, kind: input, shape index: {}]
  %s21 = inlined_call_operand.hbm [shape: f32[32,64], index: 21, kind: input, shape index: {}]
  %s22 = inlined_call_operand.vmem [shape: f32[32,1], index: 22, kind: input, shape index: {}]
  %s23 = inlined_call_operand.hbm [shape: f32[2,32,256], index: 23, kind: output, shape index: {}]
  %s24 = sld [smem:[#allocation0]]
  $region153: #{tpu_custom_call.1} parent=0
    _
  %s26 = ssub.s32 1, %s24
  %s27 = scalar_select 0, %s26, %s24
  $region1: #{tpu_custom_call.1} parent=0
    #allocation3 [shape = 'u8[512]{0}', space=vmem, size = 0x400, scoped, tag = 'input window, operand 10, single buffered']
    #allocation4 [shape = 's32[2]{0}', space=sflag, size = 0x8, scoped, tag = 'scoped memory for tpu_custom_call.1']
    #allocation5 [shape = 's32[2]{0}', space=sflag, size = 0x8, scoped, tag = 'scoped memory for tpu_custom_call.1']
    #allocation6 [shape = 'u8[8192]{0}', space=vmem, size = 0x2000, scoped, tag = 'input window, operand 11, single buffered']
    #allocation7 [shape = 's32[1]{0}', space=sflag, size = 0x4, scoped, tag = 'scoped memory for tpu_custom_call.1']
    #allocation8 [shape = 'u8[512]{0}', space=vmem, size = 0x400, scoped, tag = 'input window, operand 12, single buffered']
    #allocation9 [shape = 'u8[16384]{0}', space=vmem, size = 0x4000, scoped, tag = 'input window, operand 14, single buffered']
    #allocation10 [shape = 's32[1]{0}', space=sflag, size = 0x4, scoped, tag = 'scoped memory for tpu_custom_call.1']
    #allocation11 [shape = 'u8[16384]{0}', space=vmem, size = 0x4000, scoped, tag = 'input window, operand 17, single buffered']
    #allocation12 [shape = 'u8[512]{0}', space=vmem, size = 0x400, scoped, tag = 'input window, operand 18, single buffered']
    #allocation13 [shape = 's32[1]{0}', space=sflag, size = 0x4, scoped, tag = 'scoped memory for tpu_custom_call.1']
    #allocation14 [shape = 'u8[16384]{0}', space=vmem, size = 0x4000, scoped, tag = 'input window, operand 21, single buffered']
    #allocation15 [shape = 'u8[65536]{0}', space=vmem, size = 0x10000, scoped, tag = 'output window, operand 0']
    %28 = vsyncpa [#allocation4], 0
    %29 = vsyncpa [#allocation7], 0
    %30 = vsyncpa [#allocation10], 0
    %31 = vsyncpa [#allocation13], 0
    %32 = vsyncpa [#allocation5], 0
    %s33 = scalar_lea.sflag [#allocation5], 1
    %34 = vsyncpa %s33, 0
    loop: start=0, step=1, limit=4
    $region2: #{tpu_custom_call.1} parent=1 // loop_pre_header
      _
    $region3: #{tpu_custom_call.1} parent=1 // loop_header
      %s36 = sphi 0, %s40
      %p37 = scmp.ge.s32.totalorder %s36, 4
      %s46 = sphi 0, %s48
      %s49 = sphi 0, %s46
      %s50 = sphi 0, %s49
      %s66 = sphi 0, %s50
      %s72 = sphi 0, %s74
      %s75 = sphi 0, %s72
      %s76 = sphi 0, %s75
      %s92 = sphi 0, %s76
      %s96 = sphi 0, %s96
      %s98 = sphi 0, %s96
      %s99 = sphi 0, %s98
      %s113 = sphi 0, %s99
      %s117 = sphi 0, %s117
      %s119 = sphi 0, %s117
      %s120 = sphi 0, %s119
      %s134 = sphi 0, %s120
      %s138 = sphi 0, %s138
      %s140 = sphi 0, %s138
      %s141 = sphi 0, %s140
      %s155 = sphi 0, %s141
      %s159 = sphi 0, %s159
      %s161 = sphi 0, %s159
      %s162 = sphi 0, %s161
      %s176 = sphi 0, %s162
      %s180 = sphi 0, %s180
      %s182 = sphi 0, %s180
      %s183 = sphi 0, %s182
      %s197 = sphi 0, %s183
      %s201 = sphi 0, %s201
      %s203 = sphi 0, %s201
      %s204 = sphi 0, %s203
      %s218 = sphi 0, %s204
      %s222 = sphi 0, %s222
      %s224 = sphi 0, %s222
      %s225 = sphi 0, %s224
      %s239 = sphi 0, %s225
      %s243 = sphi 0, %s243
      %s245 = sphi 0, %s243
      %s246 = sphi 0, %s245
      %s260 = sphi 0, %s246
      %s264 = sphi 0, %s264
      %s266 = sphi 0, %s264
      %s267 = sphi 0, %s266
      %s281 = sphi 0, %s267
      %s285 = sphi 0, %s285
      %s287 = sphi 0, %s285
      %s288 = sphi 0, %s287
      %s302 = sphi 0, %s288
      %s306 = sphi 0, %s306
      %s308 = sphi 0, %s306
      %s309 = sphi 0, %s308
      %s323 = sphi 0, %s309
      %s327 = sphi 0, %s327
      %s329 = sphi 0, %s327
      %s330 = sphi 0, %s329
      %s344 = sphi 0, %s330
      %s348 = sphi 0, %s348
      %s350 = sphi 0, %s348
      %s351 = sphi 0, %s350
      %s365 = sphi 0, %s351
      %s369 = sphi 0, %s369
      %s371 = sphi 0, %s369
      %s372 = sphi 0, %s371
      %s386 = sphi 0, %s372
      %s390 = sphi 0, %s390
      %s392 = sphi 0, %s390
      %s393 = sphi 0, %s392
      %s407 = sphi 0, %s393
      %s411 = sphi 0, %s411
      %s413 = sphi 0, %s411
      %s414 = sphi 0, %s413
      %s428 = sphi 0, %s414
      %s432 = sphi 0, %s432
      %s434 = sphi 0, %s432
      %s435 = sphi 0, %s434
      %s449 = sphi 0, %s435
      %s453 = sphi 0, %s453
      %s455 = sphi 0, %s453
      %s456 = sphi 0, %s455
      %s470 = sphi 0, %s456
      %s474 = sphi 0, %s474
      %s476 = sphi 0, %s474
      %s477 = sphi 0, %s476
      %s491 = sphi 0, %s477
      %s495 = sphi 0, %s495
      %s497 = sphi 0, %s495
      %s498 = sphi 0, %s497
      %s512 = sphi 0, %s498
      %s516 = sphi 0, %s516
      %s518 = sphi 0, %s516
      %s519 = sphi 0, %s518
      %s533 = sphi 0, %s519
      %s539 = sphi 0, %s541
      %s542 = sphi 0, %s539
      %s543 = sphi 0, %s542
      %s559 = sphi 0, %s543
    $region4: #{tpu_custom_call.1} parent=1 // loop_header_branch
      %39 = sbr.rel (%p37) target = $region8
    $region5: #{tpu_custom_call.1} parent=1 // loop_body
      %s41 = ssub.s32 %s36, 1
      %s42 = ssub.s32 %s36, 2
      %s43 = sadd.s32 %s36, 1
      %s44 = ssub.s32 %s36, %s43
      %p45 = scmp.eq.s32.totalorder %s44, 0
      %s47 = sadd.s32 %s46, 1
      %s48 = scalar_select %p45, %s46, %s47
      %p51 = pneg %p45
      %p52 = scmp.eq.s32.totalorder %s36, 1
      %p53 = por %p51, %p52
      %p54 = scmp.ne.s32.totalorder %s46, %s49
      %p55 = scmp.eq.s32.totalorder %s36, 0
      %p56 = por %p54, %p55
      %p57 = scmp.ne.s32.totalorder %s46, %s49
      %p58 = scmp.eq.s32.totalorder %s41, 1
      %p59 = por %p57, %p58
      %p60 = scmp.ne.s32.totalorder %s49, %s50
      %p61 = scmp.eq.s32.totalorder %s41, 0
      %p62 = por %p60, %p61
      %p63 = scmp.ne.s32.totalorder %s49, %s50
      %p64 = scmp.eq.s32.totalorder %s42, 1
      %p65 = por %p63, %p64
      %p67 = scmp.ne.s32.totalorder %s50, %s66
      %p68 = scmp.eq.s32.totalorder %s42, 0
      %p69 = por %p67, %p68
      %s70 = ssub.s32 %s36, %s43
      %p71 = scmp.eq.s32.totalorder %s70, 0
      %s73 = sadd.s32 %s72, 1
      %s74 = scalar_select %p71, %s72, %s73
      %p77 = pneg %p71
      %p78 = scmp.eq.s32.totalorder %s36, 1
      %p79 = por %p77, %p78
      %p80 = scmp.ne.s32.totalorder %s72, %s75
      %p81 = scmp.eq.s32.totalorder %s36, 0
      %p82 = por %p80, %p81
      %p83 = scmp.ne.s32.totalorder %s72, %s75
      %p84 = scmp.eq.s32.totalorder %s41, 1
      %p85 = por %p83, %p84
      %p86 = scmp.ne.s32.totalorder %s75, %s76
      %p87 = scmp.eq.s32.totalorder %s41, 0
      %p88 = por %p86, %p87
      %p89 = scmp.ne.s32.totalorder %s75, %s76
      %p90 = scmp.eq.s32.totalorder %s42, 1
      %p91 = por %p89, %p90
      %p93 = scmp.ne.s32.totalorder %s76, %s92
      %p94 = scmp.eq.s32.totalorder %s42, 0
      %p95 = por %p93, %p94
      %s97 = sadd.s32 %s96, 1
      %p100 = scmp.eq.s32.totalorder %s36, 1
      %p101 = scmp.ne.s32.totalorder %s96, %s98
      %p102 = scmp.eq.s32.totalorder %s36, 0
      %p103 = por %p101, %p102
      %p104 = scmp.ne.s32.totalorder %s96, %s98
      %p105 = scmp.eq.s32.totalorder %s41, 1
      %p106 = por %p104, %p105
      %p107 = scmp.ne.s32.totalorder %s98, %s99
      %p108 = scmp.eq.s32.totalorder %s41, 0
      %p109 = por %p107, %p108
      %p110 = scmp.ne.s32.totalorder %s98, %s99
      %p111 = scmp.eq.s32.totalorder %s42, 1
      %p112 = por %p110, %p111
      %p114 = scmp.ne.s32.totalorder %s99, %s113
      %p115 = scmp.eq.s32.totalorder %s42, 0
      %p116 = por %p114, %p115
      %s118 = sadd.s32 %s117, 1
      %p121 = scmp.eq.s32.totalorder %s36, 1
      %p122 = scmp.ne.s32.totalorder %s117, %s119
      %p123 = scmp.eq.s32.totalorder %s36, 0
      %p124 = por %p122, %p123
      %p125 = scmp.ne.s32.totalorder %s117, %s119
      %p126 = scmp.eq.s32.totalorder %s41, 1
      %p127 = por %p125, %p126
      %p128 = scmp.ne.s32.totalorder %s119, %s120
      %p129 = scmp.eq.s32.totalorder %s41, 0
      %p130 = por %p128, %p129
      %p131 = scmp.ne.s32.totalorder %s119, %s120
      %p132 = scmp.eq.s32.totalorder %s42, 1
      %p133 = por %p131, %p132
      %p135 = scmp.ne.s32.totalorder %s120, %s134
      %p136 = scmp.eq.s32.totalorder %s42, 0
      %p137 = por %p135, %p136
      %s139 = sadd.s32 %s138, 1
      %p142 = scmp.eq.s32.totalorder %s36, 1
      %p143 = scmp.ne.s32.totalorder %s138, %s140
      %p144 = scmp.eq.s32.totalorder %s36, 0
      %p145 = por %p143, %p144
      %p146 = scmp.ne.s32.totalorder %s138, %s140
      %p147 = scmp.eq.s32.totalorder %s41, 1
      %p148 = por %p146, %p147
      %p149 = scmp.ne.s32.totalorder %s140, %s141
      %p150 = scmp.eq.s32.totalorder %s41, 0
      %p151 = por %p149, %p150
      %p152 = scmp.ne.s32.totalorder %s140, %s141
      %p153 = scmp.eq.s32.totalorder %s42, 1
      %p154 = por %p152, %p153
      %p156 = scmp.ne.s32.totalorder %s141, %s155
      %p157 = scmp.eq.s32.totalorder %s42, 0
      %p158 = por %p156, %p157
      %s160 = sadd.s32 %s159, 1
      %p163 = scmp.eq.s32.totalorder %s36, 1
      %p164 = scmp.ne.s32.totalorder %s159, %s161
      %p165 = scmp.eq.s32.totalorder %s36, 0
      %p166 = por %p164, %p165
      %p167 = scmp.ne.s32.totalorder %s159, %s161
      %p168 = scmp.eq.s32.totalorder %s41, 1
      %p169 = por %p167, %p168
      %p170 = scmp.ne.s32.totalorder %s161, %s162
      %p171 = scmp.eq.s32.totalorder %s41, 0
      %p172 = por %p170, %p171
      %p173 = scmp.ne.s32.totalorder %s161, %s162
      %p174 = scmp.eq.s32.totalorder %s42, 1
      %p175 = por %p173, %p174
      %p177 = scmp.ne.s32.totalorder %s162, %s176
      %p178 = scmp.eq.s32.totalorder %s42, 0
      %p179 = por %p177, %p178
      %s181 = sadd.s32 %s180, 1
      %p184 = scmp.eq.s32.totalorder %s36, 1
      %p185 = scmp.ne.s32.totalorder %s180, %s182
      %p186 = scmp.eq.s32.totalorder %s36, 0
      %p187 = por %p185, %p186
      %p188 = scmp.ne.s32.totalorder %s180, %s182
      %p189 = scmp.eq.s32.totalorder %s41, 1
      %p190 = por %p188, %p189
      %p191 = scmp.ne.s32.totalorder %s182, %s183
      %p192 = scmp.eq.s32.totalorder %s41, 0
      %p193 = por %p191, %p192
      %p194 = scmp.ne.s32.totalorder %s182, %s183
      %p195 = scmp.eq.s32.totalorder %s42, 1
      %p196 = por %p194, %p195
      %p198 = scmp.ne.s32.totalorder %s183, %s197
      %p199 = scmp.eq.s32.totalorder %s42, 0
      %p200 = por %p198, %p199
      %s202 = sadd.s32 %s201, 1
      %p205 = scmp.eq.s32.totalorder %s36, 1
      %p206 = scmp.ne.s32.totalorder %s201, %s203
      %p207 = scmp.eq.s32.totalorder %s36, 0
      %p208 = por %p206, %p207
      %p209 = scmp.ne.s32.totalorder %s201, %s203
      %p210 = scmp.eq.s32.totalorder %s41, 1
      %p211 = por %p209, %p210
      %p212 = scmp.ne.s32.totalorder %s203, %s204
      %p213 = scmp.eq.s32.totalorder %s41, 0
      %p214 = por %p212, %p213
      %p215 = scmp.ne.s32.totalorder %s203, %s204
      %p216 = scmp.eq.s32.totalorder %s42, 1
      %p217 = por %p215, %p216
      %p219 = scmp.ne.s32.totalorder %s204, %s218
      %p220 = scmp.eq.s32.totalorder %s42, 0
      %p221 = por %p219, %p220
      %s223 = sadd.s32 %s222, 1
      %p226 = scmp.eq.s32.totalorder %s36, 1
      %p227 = scmp.ne.s32.totalorder %s222, %s224
      %p228 = scmp.eq.s32.totalorder %s36, 0
      %p229 = por %p227, %p228
      %p230 = scmp.ne.s32.totalorder %s222, %s224
      %p231 = scmp.eq.s32.totalorder %s41, 1
      %p232 = por %p230, %p231
      %p233 = scmp.ne.s32.totalorder %s224, %s225
      %p234 = scmp.eq.s32.totalorder %s41, 0
      %p235 = por %p233, %p234
      %p236 = scmp.ne.s32.totalorder %s224, %s225
      %p237 = scmp.eq.s32.totalorder %s42, 1
      %p238 = por %p236, %p237
      %p240 = scmp.ne.s32.totalorder %s225, %s239
      %p241 = scmp.eq.s32.totalorder %s42, 0
      %p242 = por %p240, %p241
      %s244 = sadd.s32 %s243, 1
      %p247 = scmp.eq.s32.totalorder %s36, 1
      %p248 = scmp.ne.s32.totalorder %s243, %s245
      %p249 = scmp.eq.s32.totalorder %s36, 0
      %p250 = por %p248, %p249
      %p251 = scmp.ne.s32.totalorder %s243, %s245
      %p252 = scmp.eq.s32.totalorder %s41, 1
      %p253 = por %p251, %p252
      %p254 = scmp.ne.s32.totalorder %s245, %s246
      %p255 = scmp.eq.s32.totalorder %s41, 0
      %p256 = por %p254, %p255
      %p257 = scmp.ne.s32.totalorder %s245, %s246
      %p258 = scmp.eq.s32.totalorder %s42, 1
      %p259 = por %p257, %p258
      %p261 = scmp.ne.s32.totalorder %s246, %s260
      %p262 = scmp.eq.s32.totalorder %s42, 0
      %p263 = por %p261, %p262
      %s265 = sadd.s32 %s264, 1
      %p268 = scmp.eq.s32.totalorder %s36, 1
      %p269 = scmp.ne.s32.totalorder %s264, %s266
      %p270 = scmp.eq.s32.totalorder %s36, 0
      %p271 = por %p269, %p270
      %p272 = scmp.ne.s32.totalorder %s264, %s266
      %p273 = scmp.eq.s32.totalorder %s41, 1
      %p274 = por %p272, %p273
      %p275 = scmp.ne.s32.totalorder %s266, %s267
      %p276 = scmp.eq.s32.totalorder %s41, 0
      %p277 = por %p275, %p276
      %p278 = scmp.ne.s32.totalorder %s266, %s267
      %p279 = scmp.eq.s32.totalorder %s42, 1
      %p280 = por %p278, %p279
      %p282 = scmp.ne.s32.totalorder %s267, %s281
      %p283 = scmp.eq.s32.totalorder %s42, 0
      %p284 = por %p282, %p283
      %s286 = sadd.s32 %s285, 1
      %p289 = scmp.eq.s32.totalorder %s36, 1
      %p290 = scmp.ne.s32.totalorder %s285, %s287
      %p291 = scmp.eq.s32.totalorder %s36, 0
      %p292 = por %p290, %p291
      %p293 = scmp.ne.s32.totalorder %s285, %s287
      %p294 = scmp.eq.s32.totalorder %s41, 1
      %p295 = por %p293, %p294
      %p296 = scmp.ne.s32.totalorder %s287, %s288
      %p297 = scmp.eq.s32.totalorder %s41, 0
      %p298 = por %p296, %p297
      %p299 = scmp.ne.s32.totalorder %s287, %s288
      %p300 = scmp.eq.s32.totalorder %s42, 1
      %p301 = por %p299, %p300
      %p303 = scmp.ne.s32.totalorder %s288, %s302
      %p304 = scmp.eq.s32.totalorder %s42, 0
      %p305 = por %p303, %p304
      %s307 = sadd.s32 %s306, 1
      %p310 = scmp.eq.s32.totalorder %s36, 1
      %p311 = scmp.ne.s32.totalorder %s306, %s308
      %p312 = scmp.eq.s32.totalorder %s36, 0
      %p313 = por %p311, %p312
      %p314 = scmp.ne.s32.totalorder %s306, %s308
      %p315 = scmp.eq.s32.totalorder %s41, 1
      %p316 = por %p314, %p315
      %p317 = scmp.ne.s32.totalorder %s308, %s309
      %p318 = scmp.eq.s32.totalorder %s41, 0
      %p319 = por %p317, %p318
      %p320 = scmp.ne.s32.totalorder %s308, %s309
      %p321 = scmp.eq.s32.totalorder %s42, 1
      %p322 = por %p320, %p321
      %p324 = scmp.ne.s32.totalorder %s309, %s323
      %p325 = scmp.eq.s32.totalorder %s42, 0
      %p326 = por %p324, %p325
      %s328 = sadd.s32 %s327, 1
      %p331 = scmp.eq.s32.totalorder %s36, 1
      %p332 = scmp.ne.s32.totalorder %s327, %s329
      %p333 = scmp.eq.s32.totalorder %s36, 0
      %p334 = por %p332, %p333
      %p335 = scmp.ne.s32.totalorder %s327, %s329
      %p336 = scmp.eq.s32.totalorder %s41, 1
      %p337 = por %p335, %p336
      %p338 = scmp.ne.s32.totalorder %s329, %s330
      %p339 = scmp.eq.s32.totalorder %s41, 0
      %p340 = por %p338, %p339
      %p341 = scmp.ne.s32.totalorder %s329, %s330
      %p342 = scmp.eq.s32.totalorder %s42, 1
      %p343 = por %p341, %p342
      %p345 = scmp.ne.s32.totalorder %s330, %s344
      %p346 = scmp.eq.s32.totalorder %s42, 0
      %p347 = por %p345, %p346
      %s349 = sadd.s32 %s348, 1
      %p352 = scmp.eq.s32.totalorder %s36, 1
      %p353 = scmp.ne.s32.totalorder %s348, %s350
      %p354 = scmp.eq.s32.totalorder %s36, 0
      %p355 = por %p353, %p354
      %p356 = scmp.ne.s32.totalorder %s348, %s350
      %p357 = scmp.eq.s32.totalorder %s41, 1
      %p358 = por %p356, %p357
      %p359 = scmp.ne.s32.totalorder %s350, %s351
      %p360 = scmp.eq.s32.totalorder %s41, 0
      %p361 = por %p359, %p360
      %p362 = scmp.ne.s32.totalorder %s350, %s351
      %p363 = scmp.eq.s32.totalorder %s42, 1
      %p364 = por %p362, %p363
      %p366 = scmp.ne.s32.totalorder %s351, %s365
      %p367 = scmp.eq.s32.totalorder %s42, 0
      %p368 = por %p366, %p367
      %s370 = sadd.s32 %s369, 1
      %p373 = scmp.eq.s32.totalorder %s36, 1
      %p374 = scmp.ne.s32.totalorder %s369, %s371
      %p375 = scmp.eq.s32.totalorder %s36, 0
      %p376 = por %p374, %p375
      %p377 = scmp.ne.s32.totalorder %s369, %s371
      %p378 = scmp.eq.s32.totalorder %s41, 1
      %p379 = por %p377, %p378
      %p380 = scmp.ne.s32.totalorder %s371, %s372
      %p381 = scmp.eq.s32.totalorder %s41, 0
      %p382 = por %p380, %p381
      %p383 = scmp.ne.s32.totalorder %s371, %s372
      %p384 = scmp.eq.s32.totalorder %s42, 1
      %p385 = por %p383, %p384
      %p387 = scmp.ne.s32.totalorder %s372, %s386
      %p388 = scmp.eq.s32.totalorder %s42, 0
      %p389 = por %p387, %p388
      %s391 = sadd.s32 %s390, 1
      %p394 = scmp.eq.s32.totalorder %s36, 1
      %p395 = scmp.ne.s32.totalorder %s390, %s392
      %p396 = scmp.eq.s32.totalorder %s36, 0
      %p397 = por %p395, %p396
      %p398 = scmp.ne.s32.totalorder %s390, %s392
      %p399 = scmp.eq.s32.totalorder %s41, 1
      %p400 = por %p398, %p399
      %p401 = scmp.ne.s32.totalorder %s392, %s393
      %p402 = scmp.eq.s32.totalorder %s41, 0
      %p403 = por %p401, %p402
      %p404 = scmp.ne.s32.totalorder %s392, %s393
      %p405 = scmp.eq.s32.totalorder %s42, 1
      %p406 = por %p404, %p405
      %p408 = scmp.ne.s32.totalorder %s393, %s407
      %p409 = scmp.eq.s32.totalorder %s42, 0
      %p410 = por %p408, %p409
      %s412 = sadd.s32 %s411, 1
      %p415 = scmp.eq.s32.totalorder %s36, 1
      %p416 = scmp.ne.s32.totalorder %s411, %s413
      %p417 = scmp.eq.s32.totalorder %s36, 0
      %p418 = por %p416, %p417
      %p419 = scmp.ne.s32.totalorder %s411, %s413
      %p420 = scmp.eq.s32.totalorder %s41, 1
      %p421 = por %p419, %p420
      %p422 = scmp.ne.s32.totalorder %s413, %s414
      %p423 = scmp.eq.s32.totalorder %s41, 0
      %p424 = por %p422, %p423
      %p425 = scmp.ne.s32.totalorder %s413, %s414
      %p426 = scmp.eq.s32.totalorder %s42, 1
      %p427 = por %p425, %p426
      %p429 = scmp.ne.s32.totalorder %s414, %s428
      %p430 = scmp.eq.s32.totalorder %s42, 0
      %p431 = por %p429, %p430
      %s433 = sadd.s32 %s432, 1
      %p436 = scmp.eq.s32.totalorder %s36, 1
      %p437 = scmp.ne.s32.totalorder %s432, %s434
      %p438 = scmp.eq.s32.totalorder %s36, 0
      %p439 = por %p437, %p438
      %p440 = scmp.ne.s32.totalorder %s432, %s434
      %p441 = scmp.eq.s32.totalorder %s41, 1
      %p442 = por %p440, %p441
      %p443 = scmp.ne.s32.totalorder %s434, %s435
      %p444 = scmp.eq.s32.totalorder %s41, 0
      %p445 = por %p443, %p444
      %p446 = scmp.ne.s32.totalorder %s434, %s435
      %p447 = scmp.eq.s32.totalorder %s42, 1
      %p448 = por %p446, %p447
      %p450 = scmp.ne.s32.totalorder %s435, %s449
      %p451 = scmp.eq.s32.totalorder %s42, 0
      %p452 = por %p450, %p451
      %s454 = sadd.s32 %s453, 1
      %p457 = scmp.eq.s32.totalorder %s36, 1
      %p458 = scmp.ne.s32.totalorder %s453, %s455
      %p459 = scmp.eq.s32.totalorder %s36, 0
      %p460 = por %p458, %p459
      %p461 = scmp.ne.s32.totalorder %s453, %s455
      %p462 = scmp.eq.s32.totalorder %s41, 1
      %p463 = por %p461, %p462
      %p464 = scmp.ne.s32.totalorder %s455, %s456
      %p465 = scmp.eq.s32.totalorder %s41, 0
      %p466 = por %p464, %p465
      %p467 = scmp.ne.s32.totalorder %s455, %s456
      %p468 = scmp.eq.s32.totalorder %s42, 1
      %p469 = por %p467, %p468
      %p471 = scmp.ne.s32.totalorder %s456, %s470
      %p472 = scmp.eq.s32.totalorder %s42, 0
      %p473 = por %p471, %p472
      %s475 = sadd.s32 %s474, 1
      %p478 = scmp.eq.s32.totalorder %s36, 1
      %p479 = scmp.ne.s32.totalorder %s474, %s476
      %p480 = scmp.eq.s32.totalorder %s36, 0
      %p481 = por %p479, %p480
      %p482 = scmp.ne.s32.totalorder %s474, %s476
      %p483 = scmp.eq.s32.totalorder %s41, 1
      %p484 = por %p482, %p483
      %p485 = scmp.ne.s32.totalorder %s476, %s477
      %p486 = scmp.eq.s32.totalorder %s41, 0
      %p487 = por %p485, %p486
      %p488 = scmp.ne.s32.totalorder %s476, %s477
      %p489 = scmp.eq.s32.totalorder %s42, 1
      %p490 = por %p488, %p489
      %p492 = scmp.ne.s32.totalorder %s477, %s491
      %p493 = scmp.eq.s32.totalorder %s42, 0
      %p494 = por %p492, %p493
      %s496 = sadd.s32 %s495, 1
      %p499 = scmp.eq.s32.totalorder %s36, 1
      %p500 = scmp.ne.s32.totalorder %s495, %s497
      %p501 = scmp.eq.s32.totalorder %s36, 0
      %p502 = por %p500, %p501
      %p503 = scmp.ne.s32.totalorder %s495, %s497
      %p504 = scmp.eq.s32.totalorder %s41, 1
      %p505 = por %p503, %p504
      %p506 = scmp.ne.s32.totalorder %s497, %s498
      %p507 = scmp.eq.s32.totalorder %s41, 0
      %p508 = por %p506, %p507
      %p509 = scmp.ne.s32.totalorder %s497, %s498
      %p510 = scmp.eq.s32.totalorder %s42, 1
      %p511 = por %p509, %p510
      %p513 = scmp.ne.s32.totalorder %s498, %s512
      %p514 = scmp.eq.s32.totalorder %s42, 0
      %p515 = por %p513, %p514
      %s517 = sadd.s32 %s516, 1
      %p520 = scmp.eq.s32.totalorder %s36, 1
      %p521 = scmp.ne.s32.totalorder %s516, %s518
      %p522 = scmp.eq.s32.totalorder %s36, 0
      %p523 = por %p521, %p522
      %p524 = scmp.ne.s32.totalorder %s516, %s518
      %p525 = scmp.eq.s32.totalorder %s41, 1
      %p526 = por %p524, %p525
      %p527 = scmp.ne.s32.totalorder %s518, %s519
      %p528 = scmp.eq.s32.totalorder %s41, 0
      %p529 = por %p527, %p528
      %p530 = scmp.ne.s32.totalorder %s518, %s519
      %p531 = scmp.eq.s32.totalorder %s42, 1
      %p532 = por %p530, %p531
      %p534 = scmp.ne.s32.totalorder %s519, %s533
      %p535 = scmp.eq.s32.totalorder %s42, 0
      %p536 = por %p534, %p535
      %s537 = ssub.s32 %s36, %s43
      %p538 = scmp.eq.s32.totalorder %s537, 0
      %s540 = sadd.s32 %s539, 1
      %s541 = scalar_select %p538, %s539, %s540
      %p544 = pneg %p538
      %p545 = scmp.eq.s32.totalorder %s36, 1
      %p546 = por %p544, %p545
      %p547 = scmp.ne.s32.totalorder %s539, %s542
      %p548 = scmp.eq.s32.totalorder %s36, 0
      %p549 = por %p547, %p548
      %p550 = scmp.ne.s32.totalorder %s539, %s542
      %p551 = scmp.eq.s32.totalorder %s41, 1
      %p552 = por %p550, %p551
      %p553 = scmp.ne.s32.totalorder %s542, %s543
      %p554 = scmp.eq.s32.totalorder %s41, 0
      %p555 = por %p553, %p554
      %p556 = scmp.ne.s32.totalorder %s542, %s543
      %p557 = scmp.eq.s32.totalorder %s42, 1
      %p558 = por %p556, %p557
      %p560 = scmp.ne.s32.totalorder %s543, %s559
      %p561 = scmp.eq.s32.totalorder %s42, 0
      %p562 = por %p560, %p561
      %p563 = scmp.le.s32.totalorder 1, %s36
      %p564 = scmp.lt.s32.totalorder %s36, 3
      %p565 = pnand %p563, %p564
      %p566 = pneg %p565
      // Predicated region
      $region9: #{tpu_custom_call.1} parent=5 // pred_check
        _
      $region10: #{tpu_custom_call.1} parent=5 // pred_check_branch
        %568 = sbr.rel (%p565) target = $region12
      $region11: #{tpu_custom_call.1} parent=5 // pred_region
        %s569 = ssub.s32 %s36, 1
        // Predicated region
        $region13: #{tpu_custom_call.1} parent=11 // pred_check
          %p570 = pneg %p109
        $region14: #{tpu_custom_call.1} parent=11 // pred_check_branch
          %572 = sbr.rel (%p570) target = $region16
        $region15: #{tpu_custom_call.1} parent=11 // pred_region
          _
        $region16: #{tpu_custom_call.1} parent=11 // pred_fallthru
          _
        // Predicated region
        $region17: #{tpu_custom_call.1} parent=11 // pred_check
          %p573 = pneg %p130
        $region18: #{tpu_custom_call.1} parent=11 // pred_check_branch
          %575 = sbr.rel (%p573) target = $region20
        $region19: #{tpu_custom_call.1} parent=11 // pred_region
          _
        $region20: #{tpu_custom_call.1} parent=11 // pred_fallthru
          _
        // Predicated region
        $region21: #{tpu_custom_call.1} parent=11 // pred_check
          %p576 = pneg %p151
        $region22: #{tpu_custom_call.1} parent=11 // pred_check_branch
          %578 = sbr.rel (%p576) target = $region24
        $region23: #{tpu_custom_call.1} parent=11 // pred_region
          _
        $region24: #{tpu_custom_call.1} parent=11 // pred_fallthru
          _
        // Predicated region
        $region25: #{tpu_custom_call.1} parent=11 // pred_check
          %p579 = pneg %p172
        $region26: #{tpu_custom_call.1} parent=11 // pred_check_branch
          %581 = sbr.rel (%p579) target = $region28
        $region27: #{tpu_custom_call.1} parent=11 // pred_region
          _
        $region28: #{tpu_custom_call.1} parent=11 // pred_fallthru
          _
        // Predicated region
        $region29: #{tpu_custom_call.1} parent=11 // pred_check
          %p582 = pneg %p193
        $region30: #{tpu_custom_call.1} parent=11 // pred_check_branch
          %584 = sbr.rel (%p582) target = $region32
        $region31: #{tpu_custom_call.1} parent=11 // pred_region
          _
        $region32: #{tpu_custom_call.1} parent=11 // pred_fallthru
          _
        // Predicated region
        $region33: #{tpu_custom_call.1} parent=11 // pred_check
          %p585 = pneg %p214
        $region34: #{tpu_custom_call.1} parent=11 // pred_check_branch
          %587 = sbr.rel (%p585) target = $region36
        $region35: #{tpu_custom_call.1} parent=11 // pred_region
          _
        $region36: #{tpu_custom_call.1} parent=11 // pred_fallthru
          _
        // Predicated region
        $region37: #{tpu_custom_call.1} parent=11 // pred_check
          %p588 = pneg %p235
        $region38: #{tpu_custom_call.1} parent=11 // pred_check_branch
          %590 = sbr.rel (%p588) target = $region40
        $region39: #{tpu_custom_call.1} parent=11 // pred_region
          _
        $region40: #{tpu_custom_call.1} parent=11 // pred_fallthru
          _
        // Predicated region
        $region41: #{tpu_custom_call.1} parent=11 // pred_check
          %p591 = pneg %p256
        $region42: #{tpu_custom_call.1} parent=11 // pred_check_branch
          %593 = sbr.rel (%p591) target = $region44
        $region43: #{tpu_custom_call.1} parent=11 // pred_region
          _
        $region44: #{tpu_custom_call.1} parent=11 // pred_fallthru
          _
        // Predicated region
        $region45: #{tpu_custom_call.1} parent=11 // pred_check
          %p594 = pneg %p277
        $region46: #{tpu_custom_call.1} parent=11 // pred_check_branch
          %596 = sbr.rel (%p594) target = $region48
        $region47: #{tpu_custom_call.1} parent=11 // pred_region
          %s598 = ssub.s32 16, 16
          %599 = vsyncadd [#allocation4], %s598
          %s601 = sshll.u32 [#allocation3], 4
          %s602 = int_to_ptr.vmem [resolvable:$true] %s601
          %604 = dma.hbm_to_vmem [thread:$0]  %s10, 16, %s602, [#allocation4]
        $region48: #{tpu_custom_call.1} parent=11 // pred_fallthru
          _
        // Predicated region
        $region49: #{tpu_custom_call.1} parent=11 // pred_check
          %p605 = pneg %p298
        $region50: #{tpu_custom_call.1} parent=11 // pred_check_branch
          %607 = sbr.rel (%p605) target = $region52
        $region51: #{tpu_custom_call.1} parent=11 // pred_region
          %s609 = ssub.s32 256, 256
          %610 = vsyncadd [#allocation7], %s609
          %s611 = sshll.u32 [#allocation6], 4
          %s612 = int_to_ptr.vmem [resolvable:$true] %s611
          %617 = dma.hbm_to_vmem [thread:$0]  %s11, 256, %s612, [#allocation7], 128, 128, 8
        $region52: #{tpu_custom_call.1} parent=11 // pred_fallthru
          _
        // Predicated region
        $region53: #{tpu_custom_call.1} parent=11 // pred_check
          %p618 = pneg %p319
        $region54: #{tpu_custom_call.1} parent=11 // pred_check_branch
          %620 = sbr.rel (%p618) target = $region56
        $region55: #{tpu_custom_call.1} parent=11 // pred_region
          %s622 = ssub.s32 16, 16
          %623 = vsyncadd [#allocation7], %s622
          %s625 = sshll.u32 [#allocation8], 4
          %s626 = int_to_ptr.vmem [resolvable:$true] %s625
          %628 = dma.hbm_to_vmem [thread:$0]  %s12, 16, %s626, [#allocation7]
        $region56: #{tpu_custom_call.1} parent=11 // pred_fallthru
          _
        // Predicated region
        $region57: #{tpu_custom_call.1} parent=11 // pred_check
          %p629 = pneg %p340
        $region58: #{tpu_custom_call.1} parent=11 // pred_check_branch
          %631 = sbr.rel (%p629) target = $region60
        $region59: #{tpu_custom_call.1} parent=11 // pred_region
          _
        $region60: #{tpu_custom_call.1} parent=11 // pred_fallthru
          _
        // Predicated region
        $region61: #{tpu_custom_call.1} parent=11 // pred_check
          %p632 = pneg %p361
        $region62: #{tpu_custom_call.1} parent=11 // pred_check_branch
          %634 = sbr.rel (%p632) target = $region64
        $region63: #{tpu_custom_call.1} parent=11 // pred_region
          %s636 = ssub.s32 512, 512
          %637 = vsyncadd [#allocation10], %s636
          %s638 = sshll.u32 [#allocation9], 4
          %s639 = int_to_ptr.vmem [resolvable:$true] %s638
          %644 = dma.hbm_to_vmem [thread:$0]  %s14, 512, %s639, [#allocation10], 128, 128, 8
        $region64: #{tpu_custom_call.1} parent=11 // pred_fallthru
          _
        // Predicated region
        $region65: #{tpu_custom_call.1} parent=11 // pred_check
          %p645 = pneg %p382
        $region66: #{tpu_custom_call.1} parent=11 // pred_check_branch
          %647 = sbr.rel (%p645) target = $region68
        $region67: #{tpu_custom_call.1} parent=11 // pred_region
          _
        $region68: #{tpu_custom_call.1} parent=11 // pred_fallthru
          _
        // Predicated region
        $region69: #{tpu_custom_call.1} parent=11 // pred_check
          %p648 = pneg %p403
        $region70: #{tpu_custom_call.1} parent=11 // pred_check_branch
          %650 = sbr.rel (%p648) target = $region72
        $region71: #{tpu_custom_call.1} parent=11 // pred_region
          _
        $region72: #{tpu_custom_call.1} parent=11 // pred_fallthru
          _
        // Predicated region
        $region73: #{tpu_custom_call.1} parent=11 // pred_check
          %p651 = pneg %p424
        $region74: #{tpu_custom_call.1} parent=11 // pred_check_branch
          %653 = sbr.rel (%p651) target = $region76
        $region75: #{tpu_custom_call.1} parent=11 // pred_region
          %s655 = ssub.s32 512, 512
          %656 = vsyncadd [#allocation10], %s655
          %s657 = sshll.u32 [#allocation11], 4
          %s658 = int_to_ptr.vmem [resolvable:$true] %s657
          %663 = dma.hbm_to_vmem [thread:$0]  %s17, 512, %s658, [#allocation10], 128, 128, 8
        $region76: #{tpu_custom_call.1} parent=11 // pred_fallthru
          _
        // Predicated region
        $region77: #{tpu_custom_call.1} parent=11 // pred_check
          %p664 = pneg %p445
        $region78: #{tpu_custom_call.1} parent=11 // pred_check_branch
          %666 = sbr.rel (%p664) target = $region80
        $region79: #{tpu_custom_call.1} parent=11 // pred_region
          %s668 = ssub.s32 16, 16
          %669 = vsyncadd [#allocation13], %s668
          %s671 = sshll.u32 [#allocation12], 4
          %s672 = int_to_ptr.vmem [resolvable:$true] %s671
          %674 = dma.hbm_to_vmem [thread:$0]  %s18, 16, %s672, [#allocation13]
        $region80: #{tpu_custom_call.1} parent=11 // pred_fallthru
          _
        // Predicated region
        $region81: #{tpu_custom_call.1} parent=11 // pred_check
          %p675 = pneg %p466
        $region82: #{tpu_custom_call.1} parent=11 // pred_check_branch
          %677 = sbr.rel (%p675) target = $region84
        $region83: #{tpu_custom_call.1} parent=11 // pred_region
          _
        $region84: #{tpu_custom_call.1} parent=11 // pred_fallthru
          _
        // Predicated region
        $region85: #{tpu_custom_call.1} parent=11 // pred_check
          %p678 = pneg %p487
        $region86: #{tpu_custom_call.1} parent=11 // pred_check_branch
          %680 = sbr.rel (%p678) target = $region88
        $region87: #{tpu_custom_call.1} parent=11 // pred_region
          _
        $region88: #{tpu_custom_call.1} parent=11 // pred_fallthru
          _
        // Predicated region
        $region89: #{tpu_custom_call.1} parent=11 // pred_check
          %p681 = pneg %p508
        $region90: #{tpu_custom_call.1} parent=11 // pred_check_branch
          %683 = sbr.rel (%p681) target = $region92
        $region91: #{tpu_custom_call.1} parent=11 // pred_region
          %s685 = ssub.s32 512, 512
          %686 = vsyncadd [#allocation13], %s685
          %s687 = sshll.u32 [#allocation14], 4
          %s688 = int_to_ptr.vmem [resolvable:$true] %s687
          %693 = dma.hbm_to_vmem [thread:$0]  %s21, 512, %s688, [#allocation13], 128, 128, 8
        $region92: #{tpu_custom_call.1} parent=11 // pred_fallthru
          _
        // Predicated region
        $region93: #{tpu_custom_call.1} parent=11 // pred_check
          %p694 = pneg %p529
        $region94: #{tpu_custom_call.1} parent=11 // pred_check_branch
          %696 = sbr.rel (%p694) target = $region96
        $region95: #{tpu_custom_call.1} parent=11 // pred_region
          _
        $region96: #{tpu_custom_call.1} parent=11 // pred_fallthru
          _
      $region12: #{tpu_custom_call.1} parent=5 // pred_fallthru
        _
      %p697 = scmp.lt.s32.totalorder %s36, 2
      // Predicated region
      $region97: #{tpu_custom_call.1} parent=5 // pred_check
        %p698 = pneg %p697
      $region98: #{tpu_custom_call.1} parent=5 // pred_check_branch
        %700 = sbr.rel (%p698) target = $region100
      $region99: #{tpu_custom_call.1} parent=5 // pred_region
        // Predicated region
        $region101: #{tpu_custom_call.1} parent=99 // pred_check
          %p701 = pneg %p56
        $region102: #{tpu_custom_call.1} parent=99 // pred_check_branch
          %703 = sbr.rel (%p701) target = $region104
        $region103: #{tpu_custom_call.1} parent=99 // pred_region
          %p704 = scmp.lt.s32.totalorder %s36, 1
          %s705 = scalar_select %p704, %s36, 1
          %s706 = smul.addr %s705, 8
          %s707 = smul.addr %s706, 8
          %s708 = scalar_lea.vmem %s0, %s707
        $region104: #{tpu_custom_call.1} parent=99 // pred_fallthru
          _
        // Predicated region
        $region105: #{tpu_custom_call.1} parent=99 // pred_check
          %p709 = pneg %p82
        $region106: #{tpu_custom_call.1} parent=99 // pred_check_branch
          %711 = sbr.rel (%p709) target = $region108
        $region107: #{tpu_custom_call.1} parent=99 // pred_region
          %p712 = scmp.lt.s32.totalorder %s36, 1
          %s713 = scalar_select %p712, %s36, 1
          %s714 = smul.addr %s713, 8
          %s715 = smul.addr %s714, 8
          %s716 = scalar_lea.vmem %s1, %s715
        $region108: #{tpu_custom_call.1} parent=99 // pred_fallthru
          _
      $region100: #{tpu_custom_call.1} parent=5 // pred_fallthru
        _
      %p717 = scmp.le.s32.totalorder 1, %s36
      %p718 = scmp.lt.s32.totalorder %s36, 3
      %p719 = pnand %p717, %p718
      %p720 = pneg %p719
      // Predicated region
      $region109: #{tpu_custom_call.1} parent=5 // pred_check
        _
      $region110: #{tpu_custom_call.1} parent=5 // pred_check_branch
        %722 = sbr.rel (%p719) target = $region112
      $region111: #{tpu_custom_call.1} parent=5 // pred_region
        %s723 = ssub.s32 %s36, 1
        // Predicated region
        $region113: #{tpu_custom_call.1} parent=111 // pred_check
          %p724 = pneg %p277
        $region114: #{tpu_custom_call.1} parent=111 // pred_check_branch
          %726 = sbr.rel (%p724) target = $region116
        $region115: #{tpu_custom_call.1} parent=111 // pred_region
          %727 = dma.done [#allocation4], 16
        $region116: #{tpu_custom_call.1} parent=111 // pred_fallthru
          _
        // Predicated region
        $region117: #{tpu_custom_call.1} parent=111 // pred_check
          %p728 = pneg %p298
        $region118: #{tpu_custom_call.1} parent=111 // pred_check_branch
          %730 = sbr.rel (%p728) target = $region120
        $region119: #{tpu_custom_call.1} parent=111 // pred_region
          %731 = dma.done [#allocation7], 256
        $region120: #{tpu_custom_call.1} parent=111 // pred_fallthru
          _
        // Predicated region
        $region121: #{tpu_custom_call.1} parent=111 // pred_check
          %p732 = pneg %p319
        $region122: #{tpu_custom_call.1} parent=111 // pred_check_branch
          %734 = sbr.rel (%p732) target = $region124
        $region123: #{tpu_custom_call.1} parent=111 // pred_region
          %735 = dma.done [#allocation7], 16
        $region124: #{tpu_custom_call.1} parent=111 // pred_fallthru
          _
        // Predicated region
        $region125: #{tpu_custom_call.1} parent=111 // pred_check
          %p736 = pneg %p361
        $region126: #{tpu_custom_call.1} parent=111 // pred_check_branch
          %738 = sbr.rel (%p736) target = $region128
        $region127: #{tpu_custom_call.1} parent=111 // pred_region
          %739 = dma.done [#allocation10], 512
        $region128: #{tpu_custom_call.1} parent=111 // pred_fallthru
          _
        // Predicated region
        $region129: #{tpu_custom_call.1} parent=111 // pred_check
          %p740 = pneg %p424
        $region130: #{tpu_custom_call.1} parent=111 // pred_check_branch
          %742 = sbr.rel (%p740) target = $region132
        $region131: #{tpu_custom_call.1} parent=111 // pred_region
          %743 = dma.done [#allocation10], 512
        $region132: #{tpu_custom_call.1} parent=111 // pred_fallthru
          _
        // Predicated region
        $region133: #{tpu_custom_call.1} parent=111 // pred_check
          %p744 = pneg %p445
        $region134: #{tpu_custom_call.1} parent=111 // pred_check_branch
          %746 = sbr.rel (%p744) target = $region136
        $region135: #{tpu_custom_call.1} parent=111 // pred_region
          %747 = dma.done [#allocation13], 16
        $region136: #{tpu_custom_call.1} parent=111 // pred_fallthru
          _
        // Predicated region
        $region137: #{tpu_custom_call.1} parent=111 // pred_check
          %p748 = pneg %p508
        $region138: #{tpu_custom_call.1} parent=111 // pred_check_branch
          %750 = sbr.rel (%p748) target = $region140
        $region139: #{tpu_custom_call.1} parent=111 // pred_region
          %751 = dma.done [#allocation13], 512
        $region140: #{tpu_custom_call.1} parent=111 // pred_fallthru
          _
        %p752 = scmp.lt.s32.totalorder %s41, 1
        %s753 = scalar_select %p752, %s41, 1
        %s754 = smul.addr %s753, 8
        %s755 = smul.addr %s754, 8
        %s756 = scalar_lea.vmem %s0, %s755
        %p757 = pneg %p62
        %p758 = pneg %p59
        %p759 = scmp.lt.s32.totalorder %s41, 1
        %s760 = scalar_select %p759, %s41, 1
        %s761 = smul.addr %s760, 8
        %s762 = smul.addr %s761, 8
        %s763 = scalar_lea.vmem %s1, %s762
        %p764 = pneg %p88
        %p765 = pneg %p85
        %p766 = pneg %p109
        %p767 = pneg %p106
        %p768 = pneg %p130
        %p769 = pneg %p127
        %p770 = pneg %p151
        %p771 = pneg %p148
        %p772 = pneg %p172
        %p773 = pneg %p169
        %p774 = pneg %p193
        %p775 = pneg %p190
        %p776 = pneg %p214
        %p777 = pneg %p211
        %p778 = pneg %p235
        %p779 = pneg %p232
        %p780 = pneg %p256
        %p781 = pneg %p253
        %p782 = pneg %p277
        %p783 = pneg %p274
        %p784 = pneg %p298
        %p785 = pneg %p295
        %p786 = pneg %p319
        %p787 = pneg %p316
        %p788 = pneg %p340
        %p789 = pneg %p337
        %p790 = pneg %p361
        %p791 = pneg %p358
        %p792 = pneg %p382
        %p793 = pneg %p379
        %p794 = pneg %p403
        %p795 = pneg %p400
        %p796 = pneg %p424
        %p797 = pneg %p421
        %p798 = pneg %p445
        %p799 = pneg %p442
        %p800 = pneg %p466
        %p801 = pneg %p463
        %p802 = pneg %p487
        %p803 = pneg %p484
        %p804 = pneg %p508
        %p805 = pneg %p505
        %p806 = pneg %p529
        %p807 = pneg %p526
        %p808 = pneg %p555
        %p809 = pneg %p552
        %s810 = sand.u32 %s542, 1
        %s811 = scalar_lea.sflag [#allocation5], %s810
        %s812 = sand.u32 %s542, 1
        %s813 = smul.addr %s812, 64
        %s814 = scalar_lea.vmem [#allocation15], %s813
        %p815 = scmp.lt.s32.totalorder %s41, 1
        %s816 = scalar_select %p815, %s41, 1
        %s817 = smul.addr %s816, 8
        %s818 = smul.addr %s817, 8
        %s819 = scalar_lea.vmem %s0, %s818
        %p820 = scmp.lt.s32.totalorder %s41, 1
        %s821 = scalar_select %p820, %s41, 1
        %s822 = smul.addr %s821, 8
        %s823 = smul.addr %s822, 8
        %s824 = scalar_lea.vmem %s1, %s823
        %825 = vst [vmem:[#allocation2] sm:$0xff] 0.0
        %826 = vst [vmem:[#allocation2 + $0x8] sm:$0xff] 0.0
        %827 = vst [vmem:[#allocation2 + $0x10] sm:$0xff] 0.0
        %828 = vst [vmem:[#allocation2 + $0x18] sm:$0xff] 0.0
        %s829 = scalar_lea.vmem [#allocation2], 544
        %830 = vst [vmem:[%s829] sm:$0xff] 0.0
        %831 = vst [vmem:[%s829 + $0x8] sm:$0xff] 0.0
        %832 = vst [vmem:[%s829 + $0x10] sm:$0xff] 0.0
        %833 = vst [vmem:[%s829 + $0x18] sm:$0xff] 0.0
        %s834 = scalar_lea.vmem [#allocation2], 32
        %835 = vst [vmem:[%s834] sm:$0xff] 0.0
        %836 = vst [vmem:[%s834 + $0x20] sm:$0xff] 0.0
        %837 = vst [vmem:[%s834 + $0x40] sm:$0xff] 0.0
        %838 = vst [vmem:[%s834 + $0x60] sm:$0xff] 0.0
        %839 = vst [vmem:[%s834 + $0x80] sm:$0xff] 0.0
        %840 = vst [vmem:[%s834 + $0xa0] sm:$0xff] 0.0
        %841 = vst [vmem:[%s834 + $0xc0] sm:$0xff] 0.0
        %842 = vst [vmem:[%s834 + $0xe0] sm:$0xff] 0.0
        %843 = vst [vmem:[%s834 + $0x100] sm:$0xff] 0.0
        %844 = vst [vmem:[%s834 + $0x120] sm:$0xff] 0.0
        %845 = vst [vmem:[%s834 + $0x140] sm:$0xff] 0.0
        %846 = vst [vmem:[%s834 + $0x160] sm:$0xff] 0.0
        %847 = vst [vmem:[%s834 + $0x180] sm:$0xff] 0.0
        %848 = vst [vmem:[%s834 + $0x1a0] sm:$0xff] 0.0
        %849 = vst [vmem:[%s834 + $0x1c0] sm:$0xff] 0.0
        %850 = vst [vmem:[%s834 + $0x1e0] sm:$0xff] 0.0
        %851 = vst [vmem:[%s834 + $0x18] sm:$0xff] 0.0
        %852 = vst [vmem:[%s834 + $0x38] sm:$0xff] 0.0
        %853 = vst [vmem:[%s834 + $0x58] sm:$0xff] 0.0
        %854 = vst [vmem:[%s834 + $0x78] sm:$0xff] 0.0
        %855 = vst [vmem:[%s834 + $0x98] sm:$0xff] 0.0
        %856 = vst [vmem:[%s834 + $0xb8] sm:$0xff] 0.0
        %857 = vst [vmem:[%s834 + $0xd8] sm:$0xff] 0.0
        %858 = vst [vmem:[%s834 + $0xf8] sm:$0xff] 0.0
        %859 = vst [vmem:[%s834 + $0x118] sm:$0xff] 0.0
        %860 = vst [vmem:[%s834 + $0x138] sm:$0xff] 0.0
        %861 = vst [vmem:[%s834 + $0x158] sm:$0xff] 0.0
        %862 = vst [vmem:[%s834 + $0x178] sm:$0xff] 0.0
        %863 = vst [vmem:[%s834 + $0x198] sm:$0xff] 0.0
        %864 = vst [vmem:[%s834 + $0x1b8] sm:$0xff] 0.0
        %865 = vst [vmem:[%s834 + $0x1d8] sm:$0xff] 0.0
        %866 = vst [vmem:[%s834 + $0x1f8] sm:$0xff] 0.0
        %v867 = vld [vmem:[%s819] sm:$0xff]
        %v868 = vld [vmem:[%s819 + $0x8] sm:$0xff]
        %v869 = vld [vmem:[%s819 + $0x10] sm:$0xff]
        %v870 = vld [vmem:[%s819 + $0x18] sm:$0xff]
        %v871 = vld [vmem:[%s819 + $0x20] sm:$0xff]
        %v872 = vld [vmem:[%s819 + $0x28] sm:$0xff]
        %v873 = vld [vmem:[%s819 + $0x30] sm:$0xff]
        %v874 = vld [vmem:[%s819 + $0x38] sm:$0xff]
        %v875 = vld [vmem:[%s824] sm:$0xff]
        %v876 = vld [vmem:[%s824 + $0x8] sm:$0xff]
        %v877 = vld [vmem:[%s824 + $0x10] sm:$0xff]
        %v878 = vld [vmem:[%s824 + $0x18] sm:$0xff]
        %v879 = vld [vmem:[%s824 + $0x20] sm:$0xff]
        %v880 = vld [vmem:[%s824 + $0x28] sm:$0xff]
        %v881 = vld [vmem:[%s824 + $0x30] sm:$0xff]
        %v882 = vld [vmem:[%s824 + $0x38] sm:$0xff]
        %v883 = vadd.f32 %v867, %v869
        %v884 = vadd.f32 %v883, %v871
        %v885 = vadd.f32 %v884, %v873
        %v886 = vrot.slane %v885, 4
        %v887 = vadd.f32 %v885, %v886
        %v888 = vrot.slane %v887, 2
        %v889 = vadd.f32 %v887, %v888
        %v890 = vrot.slane %v889, 1
        %v891 = vadd.f32 %v889, %v890
        %v892 = vadd.f32 %v868, %v870
        %v893 = vadd.f32 %v892, %v872
        %v894 = vadd.f32 %v893, %v874
        %v895 = vrot.slane %v894, 4
        %v896 = vadd.f32 %v894, %v895
        %v897 = vrot.slane %v896, 2
        %v898 = vadd.f32 %v896, %v897
        %v899 = vrot.slane %v898, 1
        %v900 = vadd.f32 %v898, %v899
        %v901 = vrcp.pop 32.0
        %v902 = vmul.f32 %v891, %v901
        %v903 = vmul.f32 %v900, %v901
        %v904 = vsub.f32 %v867, %v902
        %v905 = vsub.f32 %v868, %v903
        %v906 = vsub.f32 %v869, %v902
        %v907 = vsub.f32 %v870, %v903
        %v908 = vsub.f32 %v871, %v902
        %v909 = vsub.f32 %v872, %v903
        %v910 = vsub.f32 %v873, %v902
        %v911 = vsub.f32 %v874, %v903
        %v912 = vmul.f32 %v904, %v904
        %v913 = vmul.f32 %v905, %v905
        %v914 = vmul.f32 %v906, %v906
        %v915 = vmul.f32 %v907, %v907
        %v916 = vmul.f32 %v908, %v908
        %v917 = vmul.f32 %v909, %v909
        %v918 = vmul.f32 %v910, %v910
        %v919 = vmul.f32 %v911, %v911
        %v920 = vadd.f32 %v912, %v914
        %v921 = vadd.f32 %v920, %v916
        %v922 = vadd.f32 %v921, %v918
        %v923 = vrot.slane %v922, 4
        %v924 = vadd.f32 %v922, %v923
        %v925 = vrot.slane %v924, 2
        %v926 = vadd.f32 %v924, %v925
        %v927 = vrot.slane %v926, 1
        %v928 = vadd.f32 %v926, %v927
        %v929 = vadd.f32 %v913, %v915
        %v930 = vadd.f32 %v929, %v917
        %v931 = vadd.f32 %v930, %v919
        %v932 = vrot.slane %v931, 4
        %v933 = vadd.f32 %v931, %v932
        %v934 = vrot.slane %v933, 2
        %v935 = vadd.f32 %v933, %v934
        %v936 = vrot.slane %v935, 1
        %v937 = vadd.f32 %v935, %v936
        %v938 = vmul.f32 %v928, %v901
        %v939 = vmul.f32 %v937, %v901
        %v940 = vadd.f32 %v938, 1e-05
        %v941 = vadd.f32 %v939, 1e-05
        %v942 = vrsqrt.pop %v940
        %v943 = vrsqrt.pop %v941
        %v944 = vmul.f32 %v904, %v942
        %v945 = vmul.f32 %v905, %v943
        %v946 = vmul.f32 %v906, %v942
        %v947 = vmul.f32 %v907, %v943
        %v948 = vmul.f32 %v908, %v942
        %v949 = vmul.f32 %v909, %v943
        %v950 = vmul.f32 %v910, %v942
        %v951 = vmul.f32 %v911, %v943
        %v952 = vld [vmem:[%s2] sm:$0xff]
        %v953 = vld [vmem:[%s2 + $0x8] sm:$0xff]
        %v954 = vld [vmem:[%s2 + $0x10] sm:$0xff]
        %v955 = vld [vmem:[%s2 + $0x18] sm:$0xff]
        %957 = vset.pattern.permute.xlu0 0
        %958 = vperm.xlu0 %957, %v952
        %v959 = vpop.permute.xlu0 %958
        %962 = vset.pattern.permute.xlu0 0
        %963 = vperm.xlu0 %962, %v953
        %v964 = vpop.permute.xlu0 %963
        %967 = vset.pattern.permute.xlu0 0
        %968 = vperm.xlu0 %967, %v954
        %v969 = vpop.permute.xlu0 %968
        %972 = vset.pattern.permute.xlu0 0
        %973 = vperm.xlu0 %972, %v955
        %v974 = vpop.permute.xlu0 %973
        %v976 = vmul.f32 %v944, %v959
        %v977 = vmul.f32 %v945, %v959
        %v978 = vmul.f32 %v946, %v964
        %v979 = vmul.f32 %v947, %v964
        %v980 = vmul.f32 %v948, %v969
        %v981 = vmul.f32 %v949, %v969
        %v982 = vmul.f32 %v950, %v974
        %v983 = vmul.f32 %v951, %v974
        %v984 = vld [vmem:[%s3] sm:$0xff]
        %v985 = vld [vmem:[%s3 + $0x8] sm:$0xff]
        %v986 = vld [vmem:[%s3 + $0x10] sm:$0xff]
        %v987 = vld [vmem:[%s3 + $0x18] sm:$0xff]
        %989 = vset.pattern.permute.xlu0 0
        %990 = vperm.xlu0 %989, %v984
        %v991 = vpop.permute.xlu0 %990
        %994 = vset.pattern.permute.xlu0 0
        %995 = vperm.xlu0 %994, %v985
        %v996 = vpop.permute.xlu0 %995
        %999 = vset.pattern.permute.xlu0 0
        %1000 = vperm.xlu0 %999, %v986
        %v1001 = vpop.permute.xlu0 %1000
        %1004 = vset.pattern.permute.xlu0 0
        %1005 = vperm.xlu0 %1004, %v987
        %v1006 = vpop.permute.xlu0 %1005
        %v1008 = vadd.f32 %v976, %v991
        %v1009 = vadd.f32 %v977, %v991
        %v1010 = vadd.f32 %v978, %v996
        %v1011 = vadd.f32 %v979, %v996
        %v1012 = vadd.f32 %v980, %v1001
        %v1013 = vadd.f32 %v981, %v1001
        %v1014 = vadd.f32 %v982, %v1006
        %v1015 = vadd.f32 %v983, %v1006
        %v1016 = vadd.f32 %v875, %v877
        %v1017 = vadd.f32 %v1016, %v879
        %v1018 = vadd.f32 %v1017, %v881
        %v1019 = vrot.slane %v1018, 4
        %v1020 = vadd.f32 %v1018, %v1019
        %v1021 = vrot.slane %v1020, 2
        %v1022 = vadd.f32 %v1020, %v1021
        %v1023 = vrot.slane %v1022, 1
        %v1024 = vadd.f32 %v1022, %v1023
        %v1025 = vadd.f32 %v876, %v878
        %v1026 = vadd.f32 %v1025, %v880
        %v1027 = vadd.f32 %v1026, %v882
        %v1028 = vrot.slane %v1027, 4
        %v1029 = vadd.f32 %v1027, %v1028
        %v1030 = vrot.slane %v1029, 2
        %v1031 = vadd.f32 %v1029, %v1030
        %v1032 = vrot.slane %v1031, 1
        %v1033 = vadd.f32 %v1031, %v1032
        %v1034 = vmul.f32 %v1024, %v901
        %v1035 = vmul.f32 %v1033, %v901
        %v1036 = vsub.f32 %v875, %v1034
        %v1037 = vsub.f32 %v876, %v1035
        %v1038 = vsub.f32 %v877, %v1034
        %v1039 = vsub.f32 %v878, %v1035
        %v1040 = vsub.f32 %v879, %v1034
        %v1041 = vsub.f32 %v880, %v1035
        %v1042 = vsub.f32 %v881, %v1034
        %v1043 = vsub.f32 %v882, %v1035
        %v1044 = vmul.f32 %v1036, %v1036
        %v1045 = vmul.f32 %v1037, %v1037
        %v1046 = vmul.f32 %v1038, %v1038
        %v1047 = vmul.f32 %v1039, %v1039
        %v1048 = vmul.f32 %v1040, %v1040
        %v1049 = vmul.f32 %v1041, %v1041
        %v1050 = vmul.f32 %v1042, %v1042
        %v1051 = vmul.f32 %v1043, %v1043
        %v1052 = vadd.f32 %v1044, %v1046
        %v1053 = vadd.f32 %v1052, %v1048
        %v1054 = vadd.f32 %v1053, %v1050
        %v1055 = vrot.slane %v1054, 4
        %v1056 = vadd.f32 %v1054, %v1055
        %v1057 = vrot.slane %v1056, 2
        %v1058 = vadd.f32 %v1056, %v1057
        %v1059 = vrot.slane %v1058, 1
        %v1060 = vadd.f32 %v1058, %v1059
        %v1061 = vadd.f32 %v1045, %v1047
        %v1062 = vadd.f32 %v1061, %v1049
        %v1063 = vadd.f32 %v1062, %v1051
        %v1064 = vrot.slane %v1063, 4
        %v1065 = vadd.f32 %v1063, %v1064
        %v1066 = vrot.slane %v1065, 2
        %v1067 = vadd.f32 %v1065, %v1066
        %v1068 = vrot.slane %v1067, 1
        %v1069 = vadd.f32 %v1067, %v1068
        %v1070 = vmul.f32 %v1060, %v901
        %v1071 = vmul.f32 %v1069, %v901
        %v1072 = vadd.f32 %v1070, 1e-05
        %v1073 = vadd.f32 %v1071, 1e-05
        %v1074 = vrsqrt.pop %v1072
        %v1075 = vrsqrt.pop %v1073
        %v1076 = vmul.f32 %v1036, %v1074
        %v1077 = vmul.f32 %v1037, %v1075
        %v1078 = vmul.f32 %v1038, %v1074
        %v1079 = vmul.f32 %v1039, %v1075
        %v1080 = vmul.f32 %v1040, %v1074
        %v1081 = vmul.f32 %v1041, %v1075
        %v1082 = vmul.f32 %v1042, %v1074
        %v1083 = vmul.f32 %v1043, %v1075
        %v1084 = vld [vmem:[%s6] sm:$0xff]
        %v1085 = vld [vmem:[%s6 + $0x8] sm:$0xff]
        %v1086 = vld [vmem:[%s6 + $0x10] sm:$0xff]
        %v1087 = vld [vmem:[%s6 + $0x18] sm:$0xff]
        %1089 = vset.pattern.permute.xlu0 0
        %1090 = vperm.xlu0 %1089, %v1084
        %v1091 = vpop.permute.xlu0 %1090
        %1094 = vset.pattern.permute.xlu0 0
        %1095 = vperm.xlu0 %1094, %v1085
        %v1096 = vpop.permute.xlu0 %1095
        %1099 = vset.pattern.permute.xlu0 0
        %1100 = vperm.xlu0 %1099, %v1086
        %v1101 = vpop.permute.xlu0 %1100
        %1104 = vset.pattern.permute.xlu0 0
        %1105 = vperm.xlu0 %1104, %v1087
        %v1106 = vpop.permute.xlu0 %1105
        %v1108 = vmul.f32 %v1076, %v1091
        %v1109 = vmul.f32 %v1077, %v1091
        %v1110 = vmul.f32 %v1078, %v1096
        %v1111 = vmul.f32 %v1079, %v1096
        %v1112 = vmul.f32 %v1080, %v1101
        %v1113 = vmul.f32 %v1081, %v1101
        %v1114 = vmul.f32 %v1082, %v1106
        %v1115 = vmul.f32 %v1083, %v1106
        %v1116 = vld [vmem:[%s7] sm:$0xff]
        %v1117 = vld [vmem:[%s7 + $0x8] sm:$0xff]
        %v1118 = vld [vmem:[%s7 + $0x10] sm:$0xff]
        %v1119 = vld [vmem:[%s7 + $0x18] sm:$0xff]
        %1121 = vset.pattern.permute.xlu0 0
        %1122 = vperm.xlu0 %1121, %v1116
        %v1123 = vpop.permute.xlu0 %1122
        %1126 = vset.pattern.permute.xlu0 0
        %1127 = vperm.xlu0 %1126, %v1117
        %v1128 = vpop.permute.xlu0 %1127
        %1131 = vset.pattern.permute.xlu0 0
        %1132 = vperm.xlu0 %1131, %v1118
        %v1133 = vpop.permute.xlu0 %1132
        %1136 = vset.pattern.permute.xlu0 0
        %1137 = vperm.xlu0 %1136, %v1119
        %v1138 = vpop.permute.xlu0 %1137
        %v1140 = vadd.f32 %v1108, %v1123
        %v1141 = vadd.f32 %v1109, %v1123
        %v1142 = vadd.f32 %v1110, %v1128
        %v1143 = vadd.f32 %v1111, %v1128
        %v1144 = vadd.f32 %v1112, %v1133
        %v1145 = vadd.f32 %v1113, %v1133
        %v1146 = vadd.f32 %v1114, %v1138
        %v1147 = vadd.f32 %v1115, %v1138
        %v1148 = vld [vmem:[%s8] sm:$0xff]
        %v1149 = vld [vmem:[%s8 + $0x8] sm:$0xff]
        %v1150 = vld [vmem:[%s8 + $0x10] sm:$0xff]
        %v1151 = vld [vmem:[%s8 + $0x18] sm:$0xff]
        %v1152 = vld [vmem:[%s9] sm:$0xff]
        %v1153 = vld [vmem:[%s9 + $0x8] sm:$0xff]
        %v1154 = vld [vmem:[%s9 + $0x10] sm:$0xff]
        %v1155 = vld [vmem:[%s9 + $0x18] sm:$0xff]
        %1156 = vxpose.xlu0.b32.start [1/16] %v1140, 128
        %1157 = vxpose.xlu0.b32.cont [2/16] %v1142, 128
        %1158 = vxpose.xlu0.b32.cont [3/16] %v1144, 128
        %1159 = vxpose.xlu0.b32.cont [4/16] %v1146, 128
        %1160 = vxpose.xlu0.b32.cont [5/16] 0.0, 128
        %1161 = vxpose.xlu0.b32.cont [6/16] 0.0, 128
        %1162 = vxpose.xlu0.b32.cont [7/16] 0.0, 128
        %1163 = vxpose.xlu0.b32.cont [8/16] 0.0, 128
        %1164 = vxpose.xlu0.b32.cont [9/16] 0.0, 128
        %1165 = vxpose.xlu0.b32.cont [10/16] 0.0, 128
        %1166 = vxpose.xlu0.b32.cont [11/16] 0.0, 128
        %1167 = vxpose.xlu0.b32.cont [12/16] 0.0, 128
        %1168 = vxpose.xlu0.b32.cont [13/16] 0.0, 128
        %1169 = vxpose.xlu0.b32.cont [14/16] 0.0, 128
        %1170 = vxpose.xlu0.b32.cont [15/16] 0.0, 128
        %1171 = vxpose.xlu0.b32.end [16/16] 0.0, 128
        %v1172 = vpop.trf.xlu0
        %v1173 = vpop.trf.xlu0
        %v1174 = vpop.trf.xlu0
        %v1175 = vpop.trf.xlu0
        %v1176 = vpop.trf.xlu0
        %v1177 = vpop.trf.xlu0
        %v1178 = vpop.trf.xlu0
        %v1179 = vpop.trf.xlu0
        %v1180 = vpop.trf.xlu0
        %v1181 = vpop.trf.xlu0
        %v1182 = vpop.trf.xlu0
        %v1183 = vpop.trf.xlu0
        %v1184 = vpop.trf.xlu0
        %v1185 = vpop.trf.xlu0
        %v1186 = vpop.trf.xlu0
        %v1187 = vpop.trf.xlu0
        %1188 = vxpose.xlu0.b32.start [1/16] %v1141, 128
        %1189 = vxpose.xlu0.b32.cont [2/16] %v1143, 128
        %1190 = vxpose.xlu0.b32.cont [3/16] %v1145, 128
        %1191 = vxpose.xlu0.b32.cont [4/16] %v1147, 128
        %1192 = vxpose.xlu0.b32.cont [5/16] 0.0, 128
        %1193 = vxpose.xlu0.b32.cont [6/16] 0.0, 128
        %1194 = vxpose.xlu0.b32.cont [7/16] 0.0, 128
        %1195 = vxpose.xlu0.b32.cont [8/16] 0.0, 128
        %1196 = vxpose.xlu0.b32.cont [9/16] 0.0, 128
        %1197 = vxpose.xlu0.b32.cont [10/16] 0.0, 128
        %1198 = vxpose.xlu0.b32.cont [11/16] 0.0, 128
        %1199 = vxpose.xlu0.b32.cont [12/16] 0.0, 128
        %1200 = vxpose.xlu0.b32.cont [13/16] 0.0, 128
        %1201 = vxpose.xlu0.b32.cont [14/16] 0.0, 128
        %1202 = vxpose.xlu0.b32.cont [15/16] 0.0, 128
        %1203 = vxpose.xlu0.b32.end [16/16] 0.0, 128
        %v1204 = vpop.trf.xlu0
        %v1205 = vpop.trf.xlu0
        %v1206 = vpop.trf.xlu0
        %v1207 = vpop.trf.xlu0
        %v1208 = vpop.trf.xlu0
        %v1209 = vpop.trf.xlu0
        %v1210 = vpop.trf.xlu0
        %v1211 = vpop.trf.xlu0
        %v1212 = vpop.trf.xlu0
        %v1213 = vpop.trf.xlu0
        %v1214 = vpop.trf.xlu0
        %v1215 = vpop.trf.xlu0
        %v1216 = vpop.trf.xlu0
        %v1217 = vpop.trf.xlu0
        %v1218 = vpop.trf.xlu0
        %v1219 = vpop.trf.xlu0
        %vm1220 = vcmask 261120
        %v1222 = vsel %vm1220, %v1172, 0
        %v1225 = vsel %vm1220, %v1173, 0
        %v1228 = vsel %vm1220, %v1174, 0
        %v1231 = vsel %vm1220, %v1175, 0
        %v1234 = vsel %vm1220, %v1176, 0
        %v1237 = vsel %vm1220, %v1177, 0
        %v1240 = vsel %vm1220, %v1178, 0
        %v1243 = vsel %vm1220, %v1179, 0
        %v1246 = vsel %vm1220, %v1180, 0
        %v1249 = vsel %vm1220, %v1181, 0
        %v1252 = vsel %vm1220, %v1182, 0
        %v1255 = vsel %vm1220, %v1183, 0
        %v1258 = vsel %vm1220, %v1184, 0
        %v1261 = vsel %vm1220, %v1185, 0
        %v1264 = vsel %vm1220, %v1186, 0
        %v1267 = vsel %vm1220, %v1187, 0
        %v1270 = vsel %vm1220, %v1204, 0
        %v1273 = vsel %vm1220, %v1205, 0
        %v1276 = vsel %vm1220, %v1206, 0
        %v1279 = vsel %vm1220, %v1207, 0
        %v1282 = vsel %vm1220, %v1208, 0
        %v1285 = vsel %vm1220, %v1209, 0
        %v1288 = vsel %vm1220, %v1210, 0
        %v1291 = vsel %vm1220, %v1211, 0
        %v1294 = vsel %vm1220, %v1212, 0
        %v1297 = vsel %vm1220, %v1213, 0
        %v1300 = vsel %vm1220, %v1214, 0
        %v1303 = vsel %vm1220, %v1215, 0
        %v1306 = vsel %vm1220, %v1216, 0
        %v1309 = vsel %vm1220, %v1217, 0
        %v1312 = vsel %vm1220, %v1218, 0
        %v1315 = vsel %vm1220, %v1219, 0
        %1317 = vmatprep.subr.mxu0 0.0
        %1318 = vmatpush1.msra.mxu0 %v1152
        %1319 = vmatprep.subr.mxu0 0.0
        %1320 = vmatpush1.msra.mxu0 %v1153
        %1321 = vmatprep.subr.mxu0 0.0
        %1322 = vmatpush1.msra.mxu0 %v1154
        %1323 = vmatprep.subr.mxu0 0.0
        %1324 = vmatpush1.msra.mxu0 %v1155
        %1325 = vmatprep.subr.mxu0 0.0
        %1326 = vmatpush1.msra.mxu0 0.0
        %1327 = vmatprep.subr.mxu0 0.0
        %1328 = vmatpush1.msra.mxu0 0.0
        %1329 = vmatprep.subr.mxu0 0.0
        %1330 = vmatpush1.msra.mxu0 0.0
        %1331 = vmatprep.subr.mxu0 0.0
        %1332 = vmatpush1.msra.mxu0 0.0
        %1333 = vmatprep.subr.mxu0 0.0
        %1334 = vmatpush1.msra.mxu0 0.0
        %1335 = vmatprep.subr.mxu0 0.0
        %1336 = vmatpush1.msra.mxu0 0.0
        %1337 = vmatprep.subr.mxu0 0.0
        %1338 = vmatpush1.msra.mxu0 0.0
        %1339 = vmatprep.subr.mxu0 0.0
        %1340 = vmatpush1.msra.mxu0 0.0
        %1341 = vmatprep.subr.mxu0 0.0
        %1342 = vmatpush1.msra.mxu0 0.0
        %1343 = vmatprep.subr.mxu0 0.0
        %1344 = vmatpush1.msra.mxu0 0.0
        %1345 = vmatprep.subr.mxu0 0.0
        %1346 = vmatpush1.msra.mxu0 0.0
        %1347 = vmatprep.subr.mxu0 0.0
        %1348 = vmatpush1.msra.mxu0 0.0
        %1349 = vmatprep.subr.mxu0 0.0
        %1350 = vmatpush1.msra.mxu0 0.0
        %1351 = vmatprep.subr.mxu0 0.0
        %1352 = vmatpush1.msra.mxu0 0.0
        %1353 = vmatprep.subr.mxu0 0.0
        %1354 = vmatpush1.msra.mxu0 0.0
        %1355 = vmatprep.subr.mxu0 0.0
        %1356 = vmatpush1.msra.mxu0 0.0
        %1357 = vmatprep.subr.mxu0 0.0
        %1358 = vmatpush1.msra.mxu0 0.0
        %1359 = vmatprep.subr.mxu0 0.0
        %1360 = vmatpush1.msra.mxu0 0.0
        %1361 = vmatprep.subr.mxu0 0.0
        %1362 = vmatpush1.msra.mxu0 0.0
        %1363 = vmatprep.subr.mxu0 0.0
        %1364 = vmatpush1.msra.mxu0 0.0
        %1365 = vmatprep.subr.mxu0 0.0
        %1366 = vmatpush1.msra.mxu0 0.0
        %1367 = vmatprep.subr.mxu0 0.0
        %1368 = vmatpush1.msra.mxu0 0.0
        %1369 = vmatprep.subr.mxu0 0.0
        %1370 = vmatpush1.msra.mxu0 0.0
        %1371 = vmatprep.subr.mxu0 0.0
        %1372 = vmatpush1.msra.mxu0 0.0
        %1373 = vmatprep.subr.mxu0 0.0
        %1374 = vmatpush1.msra.mxu0 0.0
        %1375 = vmatprep.subr.mxu0 0.0
        %1376 = vmatpush1.msra.mxu0 0.0
        %1377 = vmatprep.subr.mxu0 0.0
        %1378 = vmatpush1.msra.mxu0 0.0
        %1379 = vmatprep.subr.mxu0 0.0
        %1380 = vmatpush1.msra.mxu0 0.0
        %1381 = vmatprep.mubr.f32.mxu0 0.0
        %1382 = vmatmul.mubr.f32.gmra.mrb[0].mxu0 %v1222
        %v1383 = vpop.f32.mrb[0].mxu0
        %v1384 = vadd.f32 0.0, %v1383
        %v1385 = vpop.f32.mrb[0].mxu0
        %1386 = vmatprep.mubr.f32.mxu0 0.0
        %1387 = vmatmul.mubr.f32.gmra.mrb[0].mxu0 %v1225
        %v1388 = vpop.f32.mrb[0].mxu0
        %v1389 = vadd.f32 0.0, %v1388
        %v1390 = vpop.f32.mrb[0].mxu0
        %1391 = vmatprep.mubr.f32.mxu0 0.0
        %1392 = vmatmul.mubr.f32.gmra.mrb[0].mxu0 %v1228
        %v1393 = vpop.f32.mrb[0].mxu0
        %v1394 = vadd.f32 0.0, %v1393
        %v1395 = vpop.f32.mrb[0].mxu0
        %1396 = vmatprep.mubr.f32.mxu0 0.0
        %1397 = vmatmul.mubr.f32.gmra.mrb[0].mxu0 %v1231
        %v1398 = vpop.f32.mrb[0].mxu0
        %v1399 = vadd.f32 0.0, %v1398
        %v1400 = vpop.f32.mrb[0].mxu0
        %1401 = vmatprep.mubr.f32.mxu0 0.0
        %1402 = vmatmul.mubr.f32.gmra.mrb[0].mxu0 %v1234
        %v1403 = vpop.f32.mrb[0].mxu0
        %v1404 = vadd.f32 0.0, %v1403
        %v1405 = vpop.f32.mrb[0].mxu0
        %1406 = vmatprep.mubr.f32.mxu0 0.0
        %1407 = vmatmul.mubr.f32.gmra.mrb[0].mxu0 %v1237
        %v1408 = vpop.f32.mrb[0].mxu0
        %v1409 = vadd.f32 0.0, %v1408
        %v1410 = vpop.f32.mrb[0].mxu0
        %1411 = vmatprep.mubr.f32.mxu0 0.0
        %1412 = vmatmul.mubr.f32.gmra.mrb[0].mxu0 %v1240
        %v1413 = vpop.f32.mrb[0].mxu0
        %v1414 = vadd.f32 0.0, %v1413
        %v1415 = vpop.f32.mrb[0].mxu0
        %1416 = vmatprep.mubr.f32.mxu0 0.0
        %1417 = vmatmul.mubr.f32.gmra.mrb[0].mxu0 %v1243
        %v1418 = vpop.f32.mrb[0].mxu0
        %v1419 = vadd.f32 0.0, %v1418
        %v1420 = vpop.f32.mrb[0].mxu0
        %1421 = vmatprep.mubr.f32.mxu0 0.0
        %1422 = vmatmul.mubr.f32.gmra.mrb[0].mxu0 %v1246
        %v1423 = vpop.f32.mrb[0].mxu0
        %v1424 = vadd.f32 0.0, %v1423
        %v1425 = vpop.f32.mrb[0].mxu0
        %1426 = vmatprep.mubr.f32.mxu0 0.0
        %1427 = vmatmul.mubr.f32.gmra.mrb[0].mxu0 %v1249
        %v1428 = vpop.f32.mrb[0].mxu0
        %v1429 = vadd.f32 0.0, %v1428
        %v1430 = vpop.f32.mrb[0].mxu0
        %1431 = vmatprep.mubr.f32.mxu0 0.0
        %1432 = vmatmul.mubr.f32.gmra.mrb[0].mxu0 %v1252
        %v1433 = vpop.f32.mrb[0].mxu0
        %v1434 = vadd.f32 0.0, %v1433
        %v1435 = vpop.f32.mrb[0].mxu0
        %1436 = vmatprep.mubr.f32.mxu0 0.0
        %1437 = vmatmul.mubr.f32.gmra.mrb[0].mxu0 %v1255
        %v1438 = vpop.f32.mrb[0].mxu0
        %v1439 = vadd.f32 0.0, %v1438
        %v1440 = vpop.f32.mrb[0].mxu0
        %1441 = vmatprep.mubr.f32.mxu0 0.0
        %1442 = vmatmul.mubr.f32.gmra.mrb[0].mxu0 %v1258
        %v1443 = vpop.f32.mrb[0].mxu0
        %v1444 = vadd.f32 0.0, %v1443
        %v1445 = vpop.f32.mrb[0].mxu0
        %1446 = vmatprep.mubr.f32.mxu0 0.0
        %1447 = vmatmul.mubr.f32.gmra.mrb[0].mxu0 %v1261
        %v1448 = vpop.f32.mrb[0].mxu0
        %v1449 = vadd.f32 0.0, %v1448
        %v1450 = vpop.f32.mrb[0].mxu0
        %1451 = vmatprep.mubr.f32.mxu0 0.0
        %1452 = vmatmul.mubr.f32.gmra.mrb[0].mxu0 %v1264
        %v1453 = vpop.f32.mrb[0].mxu0
        %v1454 = vadd.f32 0.0, %v1453
        %v1455 = vpop.f32.mrb[0].mxu0
        %1456 = vmatprep.mubr.f32.mxu0 0.0
        %1457 = vmatmul.mubr.f32.gmra.mrb[0].mxu0 %v1267
        %v1458 = vpop.f32.mrb[0].mxu0
        %v1459 = vadd.f32 0.0, %v1458
        %v1460 = vpop.f32.mrb[0].mxu0
        %1461 = vmatprep.mubr.f32.mxu0 0.0
        %1462 = vmatmul.mubr.f32.gmra.mrb[0].mxu0 %v1270
        %v1463 = vpop.f32.mrb[0].mxu0
        %v1464 = vadd.f32 0.0, %v1463
        %v1465 = vpop.f32.mrb[0].mxu0
        %1466 = vmatprep.mubr.f32.mxu0 0.0
        %1467 = vmatmul.mubr.f32.gmra.mrb[0].mxu0 %v1273
        %v1468 = vpop.f32.mrb[0].mxu0
        %v1469 = vadd.f32 0.0, %v1468
        %v1470 = vpop.f32.mrb[0].mxu0
        %1471 = vmatprep.mubr.f32.mxu0 0.0
        %1472 = vmatmul.mubr.f32.gmra.mrb[0].mxu0 %v1276
        %v1473 = vpop.f32.mrb[0].mxu0
        %v1474 = vadd.f32 0.0, %v1473
        %v1475 = vpop.f32.mrb[0].mxu0
        %1476 = vmatprep.mubr.f32.mxu0 0.0
        %1477 = vmatmul.mubr.f32.gmra.mrb[0].mxu0 %v1279
        %v1478 = vpop.f32.mrb[0].mxu0
        %v1479 = vadd.f32 0.0, %v1478
        %v1480 = vpop.f32.mrb[0].mxu0
        %1481 = vmatprep.mubr.f32.mxu0 0.0
        %1482 = vmatmul.mubr.f32.gmra.mrb[0].mxu0 %v1282
        %v1483 = vpop.f32.mrb[0].mxu0
        %v1484 = vadd.f32 0.0, %v1483
        %v1485 = vpop.f32.mrb[0].mxu0
        %1486 = vmatprep.mubr.f32.mxu0 0.0
        %1487 = vmatmul.mubr.f32.gmra.mrb[0].mxu0 %v1285
        %v1488 = vpop.f32.mrb[0].mxu0
        %v1489 = vadd.f32 0.0, %v1488
        %v1490 = vpop.f32.mrb[0].mxu0
        %1491 = vmatprep.mubr.f32.mxu0 0.0
        %1492 = vmatmul.mubr.f32.gmra.mrb[0].mxu0 %v1288
        %v1493 = vpop.f32.mrb[0].mxu0
        %v1494 = vadd.f32 0.0, %v1493
        %v1495 = vpop.f32.mrb[0].mxu0
        %1496 = vmatprep.mubr.f32.mxu0 0.0
        %1497 = vmatmul.mubr.f32.gmra.mrb[0].mxu0 %v1291
        %v1498 = vpop.f32.mrb[0].mxu0
        %v1499 = vadd.f32 0.0, %v1498
        %v1500 = vpop.f32.mrb[0].mxu0
        %1501 = vmatprep.mubr.f32.mxu0 0.0
        %1502 = vmatmul.mubr.f32.gmra.mrb[0].mxu0 %v1294
        %v1503 = vpop.f32.mrb[0].mxu0
        %v1504 = vadd.f32 0.0, %v1503
        %v1505 = vpop.f32.mrb[0].mxu0
        %1506 = vmatprep.mubr.f32.mxu0 0.0
        %1507 = vmatmul.mubr.f32.gmra.mrb[0].mxu0 %v1297
        %v1508 = vpop.f32.mrb[0].mxu0
        %v1509 = vadd.f32 0.0, %v1508
        %v1510 = vpop.f32.mrb[0].mxu0
        %1511 = vmatprep.mubr.f32.mxu0 0.0
        %1512 = vmatmul.mubr.f32.gmra.mrb[0].mxu0 %v1300
        %v1513 = vpop.f32.mrb[0].mxu0
        %v1514 = vadd.f32 0.0, %v1513
        %v1515 = vpop.f32.mrb[0].mxu0
        %1516 = vmatprep.mubr.f32.mxu0 0.0
        %1517 = vmatmul.mubr.f32.gmra.mrb[0].mxu0 %v1303
        %v1518 = vpop.f32.mrb[0].mxu0
        %v1519 = vadd.f32 0.0, %v1518
        %v1520 = vpop.f32.mrb[0].mxu0
        %1521 = vmatprep.mubr.f32.mxu0 0.0
        %1522 = vmatmul.mubr.f32.gmra.mrb[0].mxu0 %v1306
        %v1523 = vpop.f32.mrb[0].mxu0
        %v1524 = vadd.f32 0.0, %v1523
        %v1525 = vpop.f32.mrb[0].mxu0
        %1526 = vmatprep.mubr.f32.mxu0 0.0
        %1527 = vmatmul.mubr.f32.gmra.mrb[0].mxu0 %v1309
        %v1528 = vpop.f32.mrb[0].mxu0
        %v1529 = vadd.f32 0.0, %v1528
        %v1530 = vpop.f32.mrb[0].mxu0
        %1531 = vmatprep.mubr.f32.mxu0 0.0
        %1532 = vmatmul.mubr.f32.gmra.mrb[0].mxu0 %v1312
        %v1533 = vpop.f32.mrb[0].mxu0
        %v1534 = vadd.f32 0.0, %v1533
        %v1535 = vpop.f32.mrb[0].mxu0
        %1536 = vmatprep.mubr.f32.mxu0 0.0
        %1537 = vmatmul.mubr.f32.gmra.mrb[0].mxu0 %v1315
        %v1538 = vpop.f32.mrb[0].mxu0
        %v1539 = vadd.f32 0.0, %v1538
        %v1540 = vpop.f32.mrb[0].mxu0
        %1541 = vdwg.mxu0
        %1542 = vxpose.xlu0.b32.start [1/16] %v1008, 128
        %1543 = vxpose.xlu0.b32.cont [2/16] %v1010, 128
        %1544 = vxpose.xlu0.b32.cont [3/16] %v1012, 128
        %1545 = vxpose.xlu0.b32.cont [4/16] %v1014, 128
        %1546 = vxpose.xlu0.b32.cont [5/16] 0.0, 128
        %1547 = vxpose.xlu0.b32.cont [6/16] 0.0, 128
        %1548 = vxpose.xlu0.b32.cont [7/16] 0.0, 128
        %1549 = vxpose.xlu0.b32.cont [8/16] 0.0, 128
        %1550 = vxpose.xlu0.b32.cont [9/16] 0.0, 128
        %1551 = vxpose.xlu0.b32.cont [10/16] 0.0, 128
        %1552 = vxpose.xlu0.b32.cont [11/16] 0.0, 128
        %1553 = vxpose.xlu0.b32.cont [12/16] 0.0, 128
        %1554 = vxpose.xlu0.b32.cont [13/16] 0.0, 128
        %1555 = vxpose.xlu0.b32.cont [14/16] 0.0, 128
        %1556 = vxpose.xlu0.b32.cont [15/16] 0.0, 128
        %1557 = vxpose.xlu0.b32.end [16/16] 0.0, 128
        %v1558 = vpop.trf.xlu0
        %v1559 = vpop.trf.xlu0
        %v1560 = vpop.trf.xlu0
        %v1561 = vpop.trf.xlu0
        %v1562 = vpop.trf.xlu0
        %v1563 = vpop.trf.xlu0
        %v1564 = vpop.trf.xlu0
        %v1565 = vpop.trf.xlu0
        %v1566 = vpop.trf.xlu0
        %v1567 = vpop.trf.xlu0
        %v1568 = vpop.trf.xlu0
        %v1569 = vpop.trf.xlu0
        %v1570 = vpop.trf.xlu0
        %v1571 = vpop.trf.xlu0
        %v1572 = vpop.trf.xlu0
        %v1573 = vpop.trf.xlu0
        %1574 = vxpose.xlu0.b32.start [1/16] %v1009, 128
        %1575 = vxpose.xlu0.b32.cont [2/16] %v1011, 128
        %1576 = vxpose.xlu0.b32.cont [3/16] %v1013, 128
        %1577 = vxpose.xlu0.b32.cont [4/16] %v1015, 128
        %1578 = vxpose.xlu0.b32.cont [5/16] 0.0, 128
        %1579 = vxpose.xlu0.b32.cont [6/16] 0.0, 128
        %1580 = vxpose.xlu0.b32.cont [7/16] 0.0, 128
        %1581 = vxpose.xlu0.b32.cont [8/16] 0.0, 128
        %1582 = vxpose.xlu0.b32.cont [9/16] 0.0, 128
        %1583 = vxpose.xlu0.b32.cont [10/16] 0.0, 128
        %1584 = vxpose.xlu0.b32.cont [11/16] 0.0, 128
        %1585 = vxpose.xlu0.b32.cont [12/16] 0.0, 128
        %1586 = vxpose.xlu0.b32.cont [13/16] 0.0, 128
        %1587 = vxpose.xlu0.b32.cont [14/16] 0.0, 128
        %1588 = vxpose.xlu0.b32.cont [15/16] 0.0, 128
        %1589 = vxpose.xlu0.b32.end [16/16] 0.0, 128
        %v1590 = vpop.trf.xlu0
        %v1591 = vpop.trf.xlu0
        %v1592 = vpop.trf.xlu0
        %v1593 = vpop.trf.xlu0
        %v1594 = vpop.trf.xlu0
        %v1595 = vpop.trf.xlu0
        %v1596 = vpop.trf.xlu0
        %v1597 = vpop.trf.xlu0
        %v1598 = vpop.trf.xlu0
        %v1599 = vpop.trf.xlu0
        %v1600 = vpop.trf.xlu0
        %v1601 = vpop.trf.xlu0
        %v1602 = vpop.trf.xlu0
        %v1603 = vpop.trf.xlu0
        %v1604 = vpop.trf.xlu0
        %v1605 = vpop.trf.xlu0
        %v1607 = vsel %vm1220, %v1558, 0
        %v1610 = vsel %vm1220, %v1559, 0
        %v1613 = vsel %vm1220, %v1560, 0
        %v1616 = vsel %vm1220, %v1561, 0
        %v1619 = vsel %vm1220, %v1562, 0
        %v1622 = vsel %vm1220, %v1563, 0
        %v1625 = vsel %vm1220, %v1564, 0
        %v1628 = vsel %vm1220, %v1565, 0
        %v1631 = vsel %vm1220, %v1566, 0
        %v1634 = vsel %vm1220, %v1567, 0
        %v1637 = vsel %vm1220, %v1568, 0
        %v1640 = vsel %vm1220, %v1569, 0
        %v1643 = vsel %vm1220, %v1570, 0
        %v1646 = vsel %vm1220, %v1571, 0
        %v1649 = vsel %vm1220, %v1572, 0
        %v1652 = vsel %vm1220, %v1573, 0
        %v1655 = vsel %vm1220, %v1590, 0
        %v1658 = vsel %vm1220, %v1591, 0
        %v1661 = vsel %vm1220, %v1592, 0
        %v1664 = vsel %vm1220, %v1593, 0
        %v1667 = vsel %vm1220, %v1594, 0
        %v1670 = vsel %vm1220, %v1595, 0
        %v1673 = vsel %vm1220, %v1596, 0
        %v1676 = vsel %vm1220, %v1597, 0
        %v1679 = vsel %vm1220, %v1598, 0
        %v1682 = vsel %vm1220, %v1599, 0
        %v1685 = vsel %vm1220, %v1600, 0
        %v1688 = vsel %vm1220, %v1601, 0
        %v1691 = vsel %vm1220, %v1602, 0
        %v1694 = vsel %vm1220, %v1603, 0
        %v1697 = vsel %vm1220, %v1604, 0
        %v1700 = vsel %vm1220, %v1605, 0
        %1702 = vmatprep.subr.mxu0 0.0
        %1703 = vmatpush1.msra.mxu0 %v1148
        %1704 = vmatprep.subr.mxu0 0.0
        %1705 = vmatpush1.msra.mxu0 %v1149
        %1706 = vmatprep.subr.mxu0 0.0
        %1707 = vmatpush1.msra.mxu0 %v1150
        %1708 = vmatprep.subr.mxu0 0.0
        %1709 = vmatpush1.msra.mxu0 %v1151
        %1710 = vmatprep.subr.mxu0 0.0
        %1711 = vmatpush1.msra.mxu0 0.0
        %1712 = vmatprep.subr.mxu0 0.0
        %1713 = vmatpush1.msra.mxu0 0.0
        %1714 = vmatprep.subr.mxu0 0.0
        %1715 = vmatpush1.msra.mxu0 0.0
        %1716 = vmatprep.subr.mxu0 0.0
        %1717 = vmatpush1.msra.mxu0 0.0
        %1718 = vmatprep.subr.mxu0 0.0
        %1719 = vmatpush1.msra.mxu0 0.0
        %1720 = vmatprep.subr.mxu0 0.0
        %1721 = vmatpush1.msra.mxu0 0.0
        %1722 = vmatprep.subr.mxu0 0.0
        %1723 = vmatpush1.msra.mxu0 0.0
        %1724 = vmatprep.subr.mxu0 0.0
        %1725 = vmatpush1.msra.mxu0 0.0
        %1726 = vmatprep.subr.mxu0 0.0
        %1727 = vmatpush1.msra.mxu0 0.0
        %1728 = vmatprep.subr.mxu0 0.0
        %1729 = vmatpush1.msra.mxu0 0.0
        %1730 = vmatprep.subr.mxu0 0.0
        %1731 = vmatpush1.msra.mxu0 0.0
        %1732 = vmatprep.subr.mxu0 0.0
        %1733 = vmatpush1.msra.mxu0 0.0
        %1734 = vmatprep.subr.mxu0 0.0
        %1735 = vmatpush1.msra.mxu0 0.0
        %1736 = vmatprep.subr.mxu0 0.0
        %1737 = vmatpush1.msra.mxu0 0.0
        %1738 = vmatprep.subr.mxu0 0.0
        %1739 = vmatpush1.msra.mxu0 0.0
        %1740 = vmatprep.subr.mxu0 0.0
        %1741 = vmatpush1.msra.mxu0 0.0
        %1742 = vmatprep.subr.mxu0 0.0
        %1743 = vmatpush1.msra.mxu0 0.0
        %1744 = vmatprep.subr.mxu0 0.0
        %1745 = vmatpush1.msra.mxu0 0.0
        %1746 = vmatprep.subr.mxu0 0.0
        %1747 = vmatpush1.msra.mxu0 0.0
        %1748 = vmatprep.subr.mxu0 0.0
        %1749 = vmatpush1.msra.mxu0 0.0
        %1750 = vmatprep.subr.mxu0 0.0
        %1751 = vmatpush1.msra.mxu0 0.0
        %1752 = vmatprep.subr.mxu0 0.0
        %1753 = vmatpush1.msra.mxu0 0.0
        %1754 = vmatprep.subr.mxu0 0.0
        %1755 = vmatpush1.msra.mxu0 0.0
        %1756 = vmatprep.subr.mxu0 0.0
        %1757 = vmatpush1.msra.mxu0 0.0
        %1758 = vmatprep.subr.mxu0 0.0
        %1759 = vmatpush1.msra.mxu0 0.0
        %1760 = vmatprep.subr.mxu0 0.0
        %1761 = vmatpush1.msra.mxu0 0.0
        %1762 = vmatprep.subr.mxu0 0.0
        %1763 = vmatpush1.msra.mxu0 0.0
        %1764 = vmatprep.subr.mxu0 0.0
        %1765 = vmatpush1.msra.mxu0 0.0
        %1766 = vmatprep.mubr.f32.mxu0 0.0
        %1767 = vmatmul.mubr.f32.gmra.mrb[0].mxu0 %v1607
        %v1768 = vpop.f32.mrb[0].mxu0
        %v1769 = vadd.f32 %v1384, %v1768
        %v1770 = vpop.f32.mrb[0].mxu0
        %1771 = vmatprep.mubr.f32.mxu0 0.0
        %1772 = vmatmul.mubr.f32.gmra.mrb[0].mxu0 %v1610
        %v1773 = vpop.f32.mrb[0].mxu0
        %v1774 = vadd.f32 %v1389, %v1773
        %v1775 = vpop.f32.mrb[0].mxu0
        %1776 = vmatprep.mubr.f32.mxu0 0.0
        %1777 = vmatmul.mubr.f32.gmra.mrb[0].mxu0 %v1613
        %v1778 = vpop.f32.mrb[0].mxu0
        %v1779 = vadd.f32 %v1394, %v1778
        %v1780 = vpop.f32.mrb[0].mxu0
        %1781 = vmatprep.mubr.f32.mxu0 0.0
        %1782 = vmatmul.mubr.f32.gmra.mrb[0].mxu0 %v1616
        %v1783 = vpop.f32.mrb[0].mxu0
        %v1784 = vadd.f32 %v1399, %v1783
        %v1785 = vpop.f32.mrb[0].mxu0
        %1786 = vmatprep.mubr.f32.mxu0 0.0
        %1787 = vmatmul.mubr.f32.gmra.mrb[0].mxu0 %v1619
        %v1788 = vpop.f32.mrb[0].mxu0
        %v1789 = vadd.f32 %v1404, %v1788
        %v1790 = vpop.f32.mrb[0].mxu0
        %1791 = vmatprep.mubr.f32.mxu0 0.0
        %1792 = vmatmul.mubr.f32.gmra.mrb[0].mxu0 %v1622
        %v1793 = vpop.f32.mrb[0].mxu0
        %v1794 = vadd.f32 %v1409, %v1793
        %v1795 = vpop.f32.mrb[0].mxu0
        %1796 = vmatprep.mubr.f32.mxu0 0.0
        %1797 = vmatmul.mubr.f32.gmra.mrb[0].mxu0 %v1625
        %v1798 = vpop.f32.mrb[0].mxu0
        %v1799 = vadd.f32 %v1414, %v1798
        %v1800 = vpop.f32.mrb[0].mxu0
        %1801 = vmatprep.mubr.f32.mxu0 0.0
        %1802 = vmatmul.mubr.f32.gmra.mrb[0].mxu0 %v1628
        %v1803 = vpop.f32.mrb[0].mxu0
        %v1804 = vadd.f32 %v1419, %v1803
        %v1805 = vpop.f32.mrb[0].mxu0
        %1806 = vmatprep.mubr.f32.mxu0 0.0
        %1807 = vmatmul.mubr.f32.gmra.mrb[0].mxu0 %v1631
        %v1808 = vpop.f32.mrb[0].mxu0
        %v1809 = vadd.f32 %v1424, %v1808
        %v1810 = vpop.f32.mrb[0].mxu0
        %1811 = vmatprep.mubr.f32.mxu0 0.0
        %1812 = vmatmul.mubr.f32.gmra.mrb[0].mxu0 %v1634
        %v1813 = vpop.f32.mrb[0].mxu0
        %v1814 = vadd.f32 %v1429, %v1813
        %v1815 = vpop.f32.mrb[0].mxu0
        %1816 = vmatprep.mubr.f32.mxu0 0.0
        %1817 = vmatmul.mubr.f32.gmra.mrb[0].mxu0 %v1637
        %v1818 = vpop.f32.mrb[0].mxu0
        %v1819 = vadd.f32 %v1434, %v1818
        %v1820 = vpop.f32.mrb[0].mxu0
        %1821 = vmatprep.mubr.f32.mxu0 0.0
        %1822 = vmatmul.mubr.f32.gmra.mrb[0].mxu0 %v1640
        %v1823 = vpop.f32.mrb[0].mxu0
        %v1824 = vadd.f32 %v1439, %v1823
        %v1825 = vpop.f32.mrb[0].mxu0
        %1826 = vmatprep.mubr.f32.mxu0 0.0
        %1827 = vmatmul.mubr.f32.gmra.mrb[0].mxu0 %v1643
        %v1828 = vpop.f32.mrb[0].mxu0
        %v1829 = vadd.f32 %v1444, %v1828
        %v1830 = vpop.f32.mrb[0].mxu0
        %1831 = vmatprep.mubr.f32.mxu0 0.0
        %1832 = vmatmul.mubr.f32.gmra.mrb[0].mxu0 %v1646
        %v1833 = vpop.f32.mrb[0].mxu0
        %v1834 = vadd.f32 %v1449, %v1833
        %v1835 = vpop.f32.mrb[0].mxu0
        %1836 = vmatprep.mubr.f32.mxu0 0.0
        %1837 = vmatmul.mubr.f32.gmra.mrb[0].mxu0 %v1649
        %v1838 = vpop.f32.mrb[0].mxu0
        %v1839 = vadd.f32 %v1454, %v1838
        %v1840 = vpop.f32.mrb[0].mxu0
        %1841 = vmatprep.mubr.f32.mxu0 0.0
        %1842 = vmatmul.mubr.f32.gmra.mrb[0].mxu0 %v1652
        %v1843 = vpop.f32.mrb[0].mxu0
        %v1844 = vadd.f32 %v1459, %v1843
        %v1845 = vpop.f32.mrb[0].mxu0
        %1846 = vmatprep.mubr.f32.mxu0 0.0
        %1847 = vmatmul.mubr.f32.gmra.mrb[0].mxu0 %v1655
        %v1848 = vpop.f32.mrb[0].mxu0
        %v1849 = vadd.f32 %v1464, %v1848
        %v1850 = vpop.f32.mrb[0].mxu0
        %1851 = vmatprep.mubr.f32.mxu0 0.0
        %1852 = vmatmul.mubr.f32.gmra.mrb[0].mxu0 %v1658
        %v1853 = vpop.f32.mrb[0].mxu0
        %v1854 = vadd.f32 %v1469, %v1853
        %v1855 = vpop.f32.mrb[0].mxu0
        %1856 = vmatprep.mubr.f32.mxu0 0.0
        %1857 = vmatmul.mubr.f32.gmra.mrb[0].mxu0 %v1661
        %v1858 = vpop.f32.mrb[0].mxu0
        %v1859 = vadd.f32 %v1474, %v1858
        %v1860 = vpop.f32.mrb[0].mxu0
        %1861 = vmatprep.mubr.f32.mxu0 0.0
        %1862 = vmatmul.mubr.f32.gmra.mrb[0].mxu0 %v1664
        %v1863 = vpop.f32.mrb[0].mxu0
        %v1864 = vadd.f32 %v1479, %v1863
        %v1865 = vpop.f32.mrb[0].mxu0
        %1866 = vmatprep.mubr.f32.mxu0 0.0
        %1867 = vmatmul.mubr.f32.gmra.mrb[0].mxu0 %v1667
        %v1868 = vpop.f32.mrb[0].mxu0
        %v1869 = vadd.f32 %v1484, %v1868
        %v1870 = vpop.f32.mrb[0].mxu0
        %1871 = vmatprep.mubr.f32.mxu0 0.0
        %1872 = vmatmul.mubr.f32.gmra.mrb[0].mxu0 %v1670
        %v1873 = vpop.f32.mrb[0].mxu0
        %v1874 = vadd.f32 %v1489, %v1873
        %v1875 = vpop.f32.mrb[0].mxu0
        %1876 = vmatprep.mubr.f32.mxu0 0.0
        %1877 = vmatmul.mubr.f32.gmra.mrb[0].mxu0 %v1673
        %v1878 = vpop.f32.mrb[0].mxu0
        %v1879 = vadd.f32 %v1494, %v1878
        %v1880 = vpop.f32.mrb[0].mxu0
        %1881 = vmatprep.mubr.f32.mxu0 0.0
        %1882 = vmatmul.mubr.f32.gmra.mrb[0].mxu0 %v1676
        %v1883 = vpop.f32.mrb[0].mxu0
        %v1884 = vadd.f32 %v1499, %v1883
        %v1885 = vpop.f32.mrb[0].mxu0
        %1886 = vmatprep.mubr.f32.mxu0 0.0
        %1887 = vmatmul.mubr.f32.gmra.mrb[0].mxu0 %v1679
        %v1888 = vpop.f32.mrb[0].mxu0
        %v1889 = vadd.f32 %v1504, %v1888
        %v1890 = vpop.f32.mrb[0].mxu0
        %1891 = vmatprep.mubr.f32.mxu0 0.0
        %1892 = vmatmul.mubr.f32.gmra.mrb[0].mxu0 %v1682
        %v1893 = vpop.f32.mrb[0].mxu0
        %v1894 = vadd.f32 %v1509, %v1893
        %v1895 = vpop.f32.mrb[0].mxu0
        %1896 = vmatprep.mubr.f32.mxu0 0.0
        %1897 = vmatmul.mubr.f32.gmra.mrb[0].mxu0 %v1685
        %v1898 = vpop.f32.mrb[0].mxu0
        %v1899 = vadd.f32 %v1514, %v1898
        %v1900 = vpop.f32.mrb[0].mxu0
        %1901 = vmatprep.mubr.f32.mxu0 0.0
        %1902 = vmatmul.mubr.f32.gmra.mrb[0].mxu0 %v1688
        %v1903 = vpop.f32.mrb[0].mxu0
        %v1904 = vadd.f32 %v1519, %v1903
        %v1905 = vpop.f32.mrb[0].mxu0
        %1906 = vmatprep.mubr.f32.mxu0 0.0
        %1907 = vmatmul.mubr.f32.gmra.mrb[0].mxu0 %v1691
        %v1908 = vpop.f32.mrb[0].mxu0
        %v1909 = vadd.f32 %v1524, %v1908
        %v1910 = vpop.f32.mrb[0].mxu0
        %1911 = vmatprep.mubr.f32.mxu0 0.0
        %1912 = vmatmul.mubr.f32.gmra.mrb[0].mxu0 %v1694
        %v1913 = vpop.f32.mrb[0].mxu0
        %v1914 = vadd.f32 %v1529, %v1913
        %v1915 = vpop.f32.mrb[0].mxu0
        %1916 = vmatprep.mubr.f32.mxu0 0.0
        %1917 = vmatmul.mubr.f32.gmra.mrb[0].mxu0 %v1697
        %v1918 = vpop.f32.mrb[0].mxu0
        %v1919 = vadd.f32 %v1534, %v1918
        %v1920 = vpop.f32.mrb[0].mxu0
        %1921 = vmatprep.mubr.f32.mxu0 0.0
        %1922 = vmatmul.mubr.f32.gmra.mrb[0].mxu0 %v1700
        %v1923 = vpop.f32.mrb[0].mxu0
        %v1924 = vadd.f32 %v1539, %v1923
        %v1925 = vpop.f32.mrb[0].mxu0
        %1926 = vdwg.mxu0
        %v1927 = vld [vmem:[#allocation3] sm:$0x1]
        %v1929 = vlaneseq
        %v1930 = vshrl.u32 %v1929, 7
        %v1931 = vsub.s32 0, %v1930
        %v1932 = vrot.slane %v1927, %v1931
        %v1934 = vadd.f32 %v1769, %v1932
        %v1935 = vadd.f32 %v1774, %v1932
        %v1936 = vadd.f32 %v1779, %v1932
        %v1937 = vadd.f32 %v1784, %v1932
        %v1938 = vadd.f32 %v1789, %v1932
        %v1939 = vadd.f32 %v1794, %v1932
        %v1940 = vadd.f32 %v1799, %v1932
        %v1941 = vadd.f32 %v1804, %v1932
        %v1942 = vadd.f32 %v1809, %v1932
        %v1943 = vadd.f32 %v1814, %v1932
        %v1944 = vadd.f32 %v1819, %v1932
        %v1945 = vadd.f32 %v1824, %v1932
        %v1946 = vadd.f32 %v1829, %v1932
        %v1947 = vadd.f32 %v1834, %v1932
        %v1948 = vadd.f32 %v1839, %v1932
        %v1949 = vadd.f32 %v1844, %v1932
        %v1950 = vadd.f32 %v1849, %v1932
        %v1951 = vadd.f32 %v1854, %v1932
        %v1952 = vadd.f32 %v1859, %v1932
        %v1953 = vadd.f32 %v1864, %v1932
        %v1954 = vadd.f32 %v1869, %v1932
        %v1955 = vadd.f32 %v1874, %v1932
        %v1956 = vadd.f32 %v1879, %v1932
        %v1957 = vadd.f32 %v1884, %v1932
        %v1958 = vadd.f32 %v1889, %v1932
        %v1959 = vadd.f32 %v1894, %v1932
        %v1960 = vadd.f32 %v1899, %v1932
        %v1961 = vadd.f32 %v1904, %v1932
        %v1962 = vadd.f32 %v1909, %v1932
        %v1963 = vadd.f32 %v1914, %v1932
        %v1964 = vadd.f32 %v1919, %v1932
        %v1965 = vadd.f32 %v1924, %v1932
        %1966 = vst [vmem:[%s834 + $0x8] sm:$0xff] %v1934
        %1967 = vst [vmem:[%s834 + $0x10] sm:$0xff] %v1935
        %1968 = vst [vmem:[%s834 + $0x28] sm:$0xff] %v1936
        %1969 = vst [vmem:[%s834 + $0x30] sm:$0xff] %v1937
        %1970 = vst [vmem:[%s834 + $0x48] sm:$0xff] %v1938
        %1971 = vst [vmem:[%s834 + $0x50] sm:$0xff] %v1939
        %1972 = vst [vmem:[%s834 + $0x68] sm:$0xff] %v1940
        %1973 = vst [vmem:[%s834 + $0x70] sm:$0xff] %v1941
        %1974 = vst [vmem:[%s834 + $0x88] sm:$0xff] %v1942
        %1975 = vst [vmem:[%s834 + $0x90] sm:$0xff] %v1943
        %1976 = vst [vmem:[%s834 + $0xa8] sm:$0xff] %v1944
        %1977 = vst [vmem:[%s834 + $0xb0] sm:$0xff] %v1945
        %1978 = vst [vmem:[%s834 + $0xc8] sm:$0xff] %v1946
        %1979 = vst [vmem:[%s834 + $0xd0] sm:$0xff] %v1947
        %1980 = vst [vmem:[%s834 + $0xe8] sm:$0xff] %v1948
        %1981 = vst [vmem:[%s834 + $0xf0] sm:$0xff] %v1949
        %1982 = vst [vmem:[%s834 + $0x108] sm:$0xff] %v1950
        %1983 = vst [vmem:[%s834 + $0x110] sm:$0xff] %v1951
        %1984 = vst [vmem:[%s834 + $0x128] sm:$0xff] %v1952
        %1985 = vst [vmem:[%s834 + $0x130] sm:$0xff] %v1953
        %1986 = vst [vmem:[%s834 + $0x148] sm:$0xff] %v1954
        %1987 = vst [vmem:[%s834 + $0x150] sm:$0xff] %v1955
        %1988 = vst [vmem:[%s834 + $0x168] sm:$0xff] %v1956
        %1989 = vst [vmem:[%s834 + $0x170] sm:$0xff] %v1957
        %1990 = vst [vmem:[%s834 + $0x188] sm:$0xff] %v1958
        %1991 = vst [vmem:[%s834 + $0x190] sm:$0xff] %v1959
        %1992 = vst [vmem:[%s834 + $0x1a8] sm:$0xff] %v1960
        %1993 = vst [vmem:[%s834 + $0x1b0] sm:$0xff] %v1961
        %1994 = vst [vmem:[%s834 + $0x1c8] sm:$0xff] %v1962
        %1995 = vst [vmem:[%s834 + $0x1d0] sm:$0xff] %v1963
        %1996 = vst [vmem:[%s834 + $0x1e8] sm:$0xff] %v1964
        %1997 = vst [vmem:[%s834 + $0x1f0] sm:$0xff] %v1965
        %v1998 = vld [vmem:[#allocation2 + $0x7] sm:$0xff]
        %v1999 = vld [vmem:[#allocation2 + $0xf] sm:$0xff]
        %v2000 = vld [vmem:[#allocation2 + $0x27] sm:$0xff]
        %v2001 = vld [vmem:[#allocation2 + $0x2f] sm:$0xff]
        %v2002 = vld [vmem:[#allocation2 + $0x47] sm:$0xff]
        %v2003 = vld [vmem:[#allocation2 + $0x4f] sm:$0xff]
        %v2004 = vld [vmem:[#allocation2 + $0x67] sm:$0xff]
        %v2005 = vld [vmem:[#allocation2 + $0x6f] sm:$0xff]
        %v2006 = vld [vmem:[#allocation2 + $0x87] sm:$0xff]
        %v2007 = vld [vmem:[#allocation2 + $0x8f] sm:$0xff]
        %v2008 = vld [vmem:[#allocation2 + $0xa7] sm:$0xff]
        %v2009 = vld [vmem:[#allocation2 + $0xaf] sm:$0xff]
        %v2010 = vld [vmem:[#allocation2 + $0xc7] sm:$0xff]
        %v2011 = vld [vmem:[#allocation2 + $0xcf] sm:$0xff]
        %v2012 = vld [vmem:[#allocation2 + $0xe7] sm:$0xff]
        %v2013 = vld [vmem:[#allocation2 + $0xef] sm:$0xff]
        %v2014 = vld [vmem:[#allocation2 + $0x107] sm:$0xff]
        %v2015 = vld [vmem:[#allocation2 + $0x10f] sm:$0xff]
        %v2016 = vld [vmem:[#allocation2 + $0x127] sm:$0xff]
        %v2017 = vld [vmem:[#allocation2 + $0x12f] sm:$0xff]
        %v2018 = vld [vmem:[#allocation2 + $0x147] sm:$0xff]
        %v2019 = vld [vmem:[#allocation2 + $0x14f] sm:$0xff]
        %v2020 = vld [vmem:[#allocation2 + $0x167] sm:$0xff]
        %v2021 = vld [vmem:[#allocation2 + $0x16f] sm:$0xff]
        %v2022 = vld [vmem:[#allocation2 + $0x187] sm:$0xff]
        %v2023 = vld [vmem:[#allocation2 + $0x18f] sm:$0xff]
        %v2024 = vld [vmem:[#allocation2 + $0x1a7] sm:$0xff]
        %v2025 = vld [vmem:[#allocation2 + $0x1af] sm:$0xff]
        %v2026 = vld [vmem:[#allocation2 + $0x1c7] sm:$0xff]
        %v2027 = vld [vmem:[#allocation2 + $0x1cf] sm:$0xff]
        %v2028 = vld [vmem:[#allocation2 + $0x1e7] sm:$0xff]
        %v2029 = vld [vmem:[#allocation2 + $0x1ef] sm:$0xff]
        %v2030 = vld [vmem:[#allocation6] sm:$0x1]
        %v2031 = vlaneseq
        %v2032 = vshrl.u32 %v2031, 7
        %v2033 = vsub.s32 0, %v2032
        %v2034 = vrot.slane %v2030, %v2033
        %v2035 = vmul.f32 %v1998, %v2034
        %v2036 = vmul.f32 %v1999, %v2034
        %v2037 = vmul.f32 %v2000, %v2034
        %v2038 = vmul.f32 %v2001, %v2034
        %v2039 = vmul.f32 %v2002, %v2034
        %v2040 = vmul.f32 %v2003, %v2034
        %v2041 = vmul.f32 %v2004, %v2034
        %v2042 = vmul.f32 %v2005, %v2034
        %v2043 = vmul.f32 %v2006, %v2034
        %v2044 = vmul.f32 %v2007, %v2034
        %v2045 = vmul.f32 %v2008, %v2034
        %v2046 = vmul.f32 %v2009, %v2034
        %v2047 = vmul.f32 %v2010, %v2034
        %v2048 = vmul.f32 %v2011, %v2034
        %v2049 = vmul.f32 %v2012, %v2034
        %v2050 = vmul.f32 %v2013, %v2034
        %v2051 = vmul.f32 %v2014, %v2034
        %v2052 = vmul.f32 %v2015, %v2034
        %v2053 = vmul.f32 %v2016, %v2034
        %v2054 = vmul.f32 %v2017, %v2034
        %v2055 = vmul.f32 %v2018, %v2034
        %v2056 = vmul.f32 %v2019, %v2034
        %v2057 = vmul.f32 %v2020, %v2034
        %v2058 = vmul.f32 %v2021, %v2034
        %v2059 = vmul.f32 %v2022, %v2034
        %v2060 = vmul.f32 %v2023, %v2034
        %v2061 = vmul.f32 %v2024, %v2034
        %v2062 = vmul.f32 %v2025, %v2034
        %v2063 = vmul.f32 %v2026, %v2034
        %v2064 = vmul.f32 %v2027, %v2034
        %v2065 = vmul.f32 %v2028, %v2034
        %v2066 = vmul.f32 %v2029, %v2034
        %v2067 = vadd.f32 %v2035, 0.0
        %v2068 = vadd.f32 %v2036, 0.0
        %v2069 = vadd.f32 %v2037, 0.0
        %v2070 = vadd.f32 %v2038, 0.0
        %v2071 = vadd.f32 %v2039, 0.0
        %v2072 = vadd.f32 %v2040, 0.0
        %v2073 = vadd.f32 %v2041, 0.0
        %v2074 = vadd.f32 %v2042, 0.0
        %v2075 = vadd.f32 %v2043, 0.0
        %v2076 = vadd.f32 %v2044, 0.0
        %v2077 = vadd.f32 %v2045, 0.0
        %v2078 = vadd.f32 %v2046, 0.0
        %v2079 = vadd.f32 %v2047, 0.0
        %v2080 = vadd.f32 %v2048, 0.0
        %v2081 = vadd.f32 %v2049, 0.0
        %v2082 = vadd.f32 %v2050, 0.0
        %v2083 = vadd.f32 %v2051, 0.0
        %v2084 = vadd.f32 %v2052, 0.0
        %v2085 = vadd.f32 %v2053, 0.0
        %v2086 = vadd.f32 %v2054, 0.0
        %v2087 = vadd.f32 %v2055, 0.0
        %v2088 = vadd.f32 %v2056, 0.0
        %v2089 = vadd.f32 %v2057, 0.0
        %v2090 = vadd.f32 %v2058, 0.0
        %v2091 = vadd.f32 %v2059, 0.0
        %v2092 = vadd.f32 %v2060, 0.0
        %v2093 = vadd.f32 %v2061, 0.0
        %v2094 = vadd.f32 %v2062, 0.0
        %v2095 = vadd.f32 %v2063, 0.0
        %v2096 = vadd.f32 %v2064, 0.0
        %v2097 = vadd.f32 %v2065, 0.0
        %v2098 = vadd.f32 %v2066, 0.0
        %v2099 = vld [vmem:[#allocation2 + $0x8] sm:$0xff]
        %v2100 = vld [vmem:[#allocation2 + $0x10] sm:$0xff]
        %v2101 = vld [vmem:[#allocation2 + $0x28] sm:$0xff]
        %v2102 = vld [vmem:[#allocation2 + $0x30] sm:$0xff]
        %v2103 = vld [vmem:[#allocation2 + $0x48] sm:$0xff]
        %v2104 = vld [vmem:[#allocation2 + $0x50] sm:$0xff]
        %v2105 = vld [vmem:[#allocation2 + $0x68] sm:$0xff]
        %v2106 = vld [vmem:[#allocation2 + $0x70] sm:$0xff]
        %v2107 = vld [vmem:[#allocation2 + $0x88] sm:$0xff]
        %v2108 = vld [vmem:[#allocation2 + $0x90] sm:$0xff]
        %v2109 = vld [vmem:[#allocation2 + $0xa8] sm:$0xff]
        %v2110 = vld [vmem:[#allocation2 + $0xb0] sm:$0xff]
        %v2111 = vld [vmem:[#allocation2 + $0xc8] sm:$0xff]
        %v2112 = vld [vmem:[#allocation2 + $0xd0] sm:$0xff]
        %v2113 = vld [vmem:[#allocation2 + $0xe8] sm:$0xff]
        %v2114 = vld [vmem:[#allocation2 + $0xf0] sm:$0xff]
        %v2115 = vld [vmem:[#allocation2 + $0x108] sm:$0xff]
        %v2116 = vld [vmem:[#allocation2 + $0x110] sm:$0xff]
        %v2117 = vld [vmem:[#allocation2 + $0x128] sm:$0xff]
        %v2118 = vld [vmem:[#allocation2 + $0x130] sm:$0xff]
        %v2119 = vld [vmem:[#allocation2 + $0x148] sm:$0xff]
        %v2120 = vld [vmem:[#allocation2 + $0x150] sm:$0xff]
        %v2121 = vld [vmem:[#allocation2 + $0x168] sm:$0xff]
        %v2122 = vld [vmem:[#allocation2 + $0x170] sm:$0xff]
        %v2123 = vld [vmem:[#allocation2 + $0x188] sm:$0xff]
        %v2124 = vld [vmem:[#allocation2 + $0x190] sm:$0xff]
        %v2125 = vld [vmem:[#allocation2 + $0x1a8] sm:$0xff]
        %v2126 = vld [vmem:[#allocation2 + $0x1b0] sm:$0xff]
        %v2127 = vld [vmem:[#allocation2 + $0x1c8] sm:$0xff]
        %v2128 = vld [vmem:[#allocation2 + $0x1d0] sm:$0xff]
        %v2129 = vld [vmem:[#allocation2 + $0x1e8] sm:$0xff]
        %v2130 = vld [vmem:[#allocation2 + $0x1f0] sm:$0xff]
        %v2131 = vld [vmem:[#allocation6 + $0x1] sm:$0x1]
        %v2132 = vlaneseq
        %v2133 = vshrl.u32 %v2132, 7
        %v2134 = vsub.s32 0, %v2133
        %v2135 = vrot.slane %v2131, %v2134
        %v2136 = vmul.f32 %v2099, %v2135
        %v2137 = vmul.f32 %v2100, %v2135
        %v2138 = vmul.f32 %v2101, %v2135
        %v2139 = vmul.f32 %v2102, %v2135
        %v2140 = vmul.f32 %v2103, %v2135
        %v2141 = vmul.f32 %v2104, %v2135
        %v2142 = vmul.f32 %v2105, %v2135
        %v2143 = vmul.f32 %v2106, %v2135
        %v2144 = vmul.f32 %v2107, %v2135
        %v2145 = vmul.f32 %v2108, %v2135
        %v2146 = vmul.f32 %v2109, %v2135
        %v2147 = vmul.f32 %v2110, %v2135
        %v2148 = vmul.f32 %v2111, %v2135
        %v2149 = vmul.f32 %v2112, %v2135
        %v2150 = vmul.f32 %v2113, %v2135
        %v2151 = vmul.f32 %v2114, %v2135
        %v2152 = vmul.f32 %v2115, %v2135
        %v2153 = vmul.f32 %v2116, %v2135
        %v2154 = vmul.f32 %v2117, %v2135
        %v2155 = vmul.f32 %v2118, %v2135
        %v2156 = vmul.f32 %v2119, %v2135
        %v2157 = vmul.f32 %v2120, %v2135
        %v2158 = vmul.f32 %v2121, %v2135
        %v2159 = vmul.f32 %v2122, %v2135
        %v2160 = vmul.f32 %v2123, %v2135
        %v2161 = vmul.f32 %v2124, %v2135
        %v2162 = vmul.f32 %v2125, %v2135
        %v2163 = vmul.f32 %v2126, %v2135
        %v2164 = vmul.f32 %v2127, %v2135
        %v2165 = vmul.f32 %v2128, %v2135
        %v2166 = vmul.f32 %v2129, %v2135
        %v2167 = vmul.f32 %v2130, %v2135
        %v2168 = vadd.f32 %v2067, %v2136
        %v2169 = vadd.f32 %v2068, %v2137
        %v2170 = vadd.f32 %v2069, %v2138
        %v2171 = vadd.f32 %v2070, %v2139
        %v2172 = vadd.f32 %v2071, %v2140
        %v2173 = vadd.f32 %v2072, %v2141
        %v2174 = vadd.f32 %v2073, %v2142
        %v2175 = vadd.f32 %v2074, %v2143
        %v2176 = vadd.f32 %v2075, %v2144
        %v2177 = vadd.f32 %v2076, %v2145
        %v2178 = vadd.f32 %v2077, %v2146
        %v2179 = vadd.f32 %v2078, %v2147
        %v2180 = vadd.f32 %v2079, %v2148
        %v2181 = vadd.f32 %v2080, %v2149
        %v2182 = vadd.f32 %v2081, %v2150
        %v2183 = vadd.f32 %v2082, %v2151
        %v2184 = vadd.f32 %v2083, %v2152
        %v2185 = vadd.f32 %v2084, %v2153
        %v2186 = vadd.f32 %v2085, %v2154
        %v2187 = vadd.f32 %v2086, %v2155
        %v2188 = vadd.f32 %v2087, %v2156
        %v2189 = vadd.f32 %v2088, %v2157
        %v2190 = vadd.f32 %v2089, %v2158
        %v2191 = vadd.f32 %v2090, %v2159
        %v2192 = vadd.f32 %v2091, %v2160
        %v2193 = vadd.f32 %v2092, %v2161
        %v2194 = vadd.f32 %v2093, %v2162
        %v2195 = vadd.f32 %v2094, %v2163
        %v2196 = vadd.f32 %v2095, %v2164
        %v2197 = vadd.f32 %v2096, %v2165
        %v2198 = vadd.f32 %v2097, %v2166
        %v2199 = vadd.f32 %v2098, %v2167
        %v2200 = vld [vmem:[#allocation2 + $0x9] sm:$0xff]
        %v2201 = vld [vmem:[#allocation2 + $0x11] sm:$0xff]
        %v2202 = vld [vmem:[#allocation2 + $0x29] sm:$0xff]
        %v2203 = vld [vmem:[#allocation2 + $0x31] sm:$0xff]
        %v2204 = vld [vmem:[#allocation2 + $0x49] sm:$0xff]
        %v2205 = vld [vmem:[#allocation2 + $0x51] sm:$0xff]
        %v2206 = vld [vmem:[#allocation2 + $0x69] sm:$0xff]
        %v2207 = vld [vmem:[#allocation2 + $0x71] sm:$0xff]
        %v2208 = vld [vmem:[#allocation2 + $0x89] sm:$0xff]
        %v2209 = vld [vmem:[#allocation2 + $0x91] sm:$0xff]
        %v2210 = vld [vmem:[#allocation2 + $0xa9] sm:$0xff]
        %v2211 = vld [vmem:[#allocation2 + $0xb1] sm:$0xff]
        %v2212 = vld [vmem:[#allocation2 + $0xc9] sm:$0xff]
        %v2213 = vld [vmem:[#allocation2 + $0xd1] sm:$0xff]
        %v2214 = vld [vmem:[#allocation2 + $0xe9] sm:$0xff]
        %v2215 = vld [vmem:[#allocation2 + $0xf1] sm:$0xff]
        %v2216 = vld [vmem:[#allocation2 + $0x109] sm:$0xff]
        %v2217 = vld [vmem:[#allocation2 + $0x111] sm:$0xff]
        %v2218 = vld [vmem:[#allocation2 + $0x129] sm:$0xff]
        %v2219 = vld [vmem:[#allocation2 + $0x131] sm:$0xff]
        %v2220 = vld [vmem:[#allocation2 + $0x149] sm:$0xff]
        %v2221 = vld [vmem:[#allocation2 + $0x151] sm:$0xff]
        %v2222 = vld [vmem:[#allocation2 + $0x169] sm:$0xff]
        %v2223 = vld [vmem:[#allocation2 + $0x171] sm:$0xff]
        %v2224 = vld [vmem:[#allocation2 + $0x189] sm:$0xff]
        %v2225 = vld [vmem:[#allocation2 + $0x191] sm:$0xff]
        %v2226 = vld [vmem:[#allocation2 + $0x1a9] sm:$0xff]
        %v2227 = vld [vmem:[#allocation2 + $0x1b1] sm:$0xff]
        %v2228 = vld [vmem:[#allocation2 + $0x1c9] sm:$0xff]
        %v2229 = vld [vmem:[#allocation2 + $0x1d1] sm:$0xff]
        %v2230 = vld [vmem:[#allocation2 + $0x1e9] sm:$0xff]
        %v2231 = vld [vmem:[#allocation2 + $0x1f1] sm:$0xff]
        %v2232 = vld [vmem:[#allocation6 + $0x2] sm:$0x1]
        %v2233 = vlaneseq
        %v2234 = vshrl.u32 %v2233, 7
        %v2235 = vsub.s32 0, %v2234
        %v2236 = vrot.slane %v2232, %v2235
        %v2237 = vmul.f32 %v2200, %v2236
        %v2238 = vmul.f32 %v2201, %v2236
        %v2239 = vmul.f32 %v2202, %v2236
        %v2240 = vmul.f32 %v2203, %v2236
        %v2241 = vmul.f32 %v2204, %v2236
        %v2242 = vmul.f32 %v2205, %v2236
        %v2243 = vmul.f32 %v2206, %v2236
        %v2244 = vmul.f32 %v2207, %v2236
        %v2245 = vmul.f32 %v2208, %v2236
        %v2246 = vmul.f32 %v2209, %v2236
        %v2247 = vmul.f32 %v2210, %v2236
        %v2248 = vmul.f32 %v2211, %v2236
        %v2249 = vmul.f32 %v2212, %v2236
        %v2250 = vmul.f32 %v2213, %v2236
        %v2251 = vmul.f32 %v2214, %v2236
        %v2252 = vmul.f32 %v2215, %v2236
        %v2253 = vmul.f32 %v2216, %v2236
        %v2254 = vmul.f32 %v2217, %v2236
        %v2255 = vmul.f32 %v2218, %v2236
        %v2256 = vmul.f32 %v2219, %v2236
        %v2257 = vmul.f32 %v2220, %v2236
        %v2258 = vmul.f32 %v2221, %v2236
        %v2259 = vmul.f32 %v2222, %v2236
        %v2260 = vmul.f32 %v2223, %v2236
        %v2261 = vmul.f32 %v2224, %v2236
        %v2262 = vmul.f32 %v2225, %v2236
        %v2263 = vmul.f32 %v2226, %v2236
        %v2264 = vmul.f32 %v2227, %v2236
        %v2265 = vmul.f32 %v2228, %v2236
        %v2266 = vmul.f32 %v2229, %v2236
        %v2267 = vmul.f32 %v2230, %v2236
        %v2268 = vmul.f32 %v2231, %v2236
        %v2269 = vadd.f32 %v2168, %v2237
        %v2270 = vadd.f32 %v2169, %v2238
        %v2271 = vadd.f32 %v2170, %v2239
        %v2272 = vadd.f32 %v2171, %v2240
        %v2273 = vadd.f32 %v2172, %v2241
        %v2274 = vadd.f32 %v2173, %v2242
        %v2275 = vadd.f32 %v2174, %v2243
        %v2276 = vadd.f32 %v2175, %v2244
        %v2277 = vadd.f32 %v2176, %v2245
        %v2278 = vadd.f32 %v2177, %v2246
        %v2279 = vadd.f32 %v2178, %v2247
        %v2280 = vadd.f32 %v2179, %v2248
        %v2281 = vadd.f32 %v2180, %v2249
        %v2282 = vadd.f32 %v2181, %v2250
        %v2283 = vadd.f32 %v2182, %v2251
        %v2284 = vadd.f32 %v2183, %v2252
        %v2285 = vadd.f32 %v2184, %v2253
        %v2286 = vadd.f32 %v2185, %v2254
        %v2287 = vadd.f32 %v2186, %v2255
        %v2288 = vadd.f32 %v2187, %v2256
        %v2289 = vadd.f32 %v2188, %v2257
        %v2290 = vadd.f32 %v2189, %v2258
        %v2291 = vadd.f32 %v2190, %v2259
        %v2292 = vadd.f32 %v2191, %v2260
        %v2293 = vadd.f32 %v2192, %v2261
        %v2294 = vadd.f32 %v2193, %v2262
        %v2295 = vadd.f32 %v2194, %v2263
        %v2296 = vadd.f32 %v2195, %v2264
        %v2297 = vadd.f32 %v2196, %v2265
        %v2298 = vadd.f32 %v2197, %v2266
        %v2299 = vadd.f32 %v2198, %v2267
        %v2300 = vadd.f32 %v2199, %v2268
        %v2301 = vld [vmem:[%s834 + $0x7] sm:$0xff]
        %v2302 = vld [vmem:[%s834 + $0xf] sm:$0xff]
        %v2303 = vld [vmem:[%s834 + $0x27] sm:$0xff]
        %v2304 = vld [vmem:[%s834 + $0x2f] sm:$0xff]
        %v2305 = vld [vmem:[%s834 + $0x47] sm:$0xff]
        %v2306 = vld [vmem:[%s834 + $0x4f] sm:$0xff]
        %v2307 = vld [vmem:[%s834 + $0x67] sm:$0xff]
        %v2308 = vld [vmem:[%s834 + $0x6f] sm:$0xff]
        %v2309 = vld [vmem:[%s834 + $0x87] sm:$0xff]
        %v2310 = vld [vmem:[%s834 + $0x8f] sm:$0xff]
        %v2311 = vld [vmem:[%s834 + $0xa7] sm:$0xff]
        %v2312 = vld [vmem:[%s834 + $0xaf] sm:$0xff]
        %v2313 = vld [vmem:[%s834 + $0xc7] sm:$0xff]
        %v2314 = vld [vmem:[%s834 + $0xcf] sm:$0xff]
        %v2315 = vld [vmem:[%s834 + $0xe7] sm:$0xff]
        %v2316 = vld [vmem:[%s834 + $0xef] sm:$0xff]
        %v2317 = vld [vmem:[%s834 + $0x107] sm:$0xff]
        %v2318 = vld [vmem:[%s834 + $0x10f] sm:$0xff]
        %v2319 = vld [vmem:[%s834 + $0x127] sm:$0xff]
        %v2320 = vld [vmem:[%s834 + $0x12f] sm:$0xff]
        %v2321 = vld [vmem:[%s834 + $0x147] sm:$0xff]
        %v2322 = vld [vmem:[%s834 + $0x14f] sm:$0xff]
        %v2323 = vld [vmem:[%s834 + $0x167] sm:$0xff]
        %v2324 = vld [vmem:[%s834 + $0x16f] sm:$0xff]
        %v2325 = vld [vmem:[%s834 + $0x187] sm:$0xff]
        %v2326 = vld [vmem:[%s834 + $0x18f] sm:$0xff]
        %v2327 = vld [vmem:[%s834 + $0x1a7] sm:$0xff]
        %v2328 = vld [vmem:[%s834 + $0x1af] sm:$0xff]
        %v2329 = vld [vmem:[%s834 + $0x1c7] sm:$0xff]
        %v2330 = vld [vmem:[%s834 + $0x1cf] sm:$0xff]
        %v2331 = vld [vmem:[%s834 + $0x1e7] sm:$0xff]
        %v2332 = vld [vmem:[%s834 + $0x1ef] sm:$0xff]
        %v2333 = vld [vmem:[#allocation6 + $0x3] sm:$0x1]
        %v2334 = vlaneseq
        %v2335 = vshrl.u32 %v2334, 7
        %v2336 = vsub.s32 0, %v2335
        %v2337 = vrot.slane %v2333, %v2336
        %v2338 = vmul.f32 %v2301, %v2337
        %v2339 = vmul.f32 %v2302, %v2337
        %v2340 = vmul.f32 %v2303, %v2337
        %v2341 = vmul.f32 %v2304, %v2337
        %v2342 = vmul.f32 %v2305, %v2337
        %v2343 = vmul.f32 %v2306, %v2337
        %v2344 = vmul.f32 %v2307, %v2337
        %v2345 = vmul.f32 %v2308, %v2337
        %v2346 = vmul.f32 %v2309, %v2337
        %v2347 = vmul.f32 %v2310, %v2337
        %v2348 = vmul.f32 %v2311, %v2337
        %v2349 = vmul.f32 %v2312, %v2337
        %v2350 = vmul.f32 %v2313, %v2337
        %v2351 = vmul.f32 %v2314, %v2337
        %v2352 = vmul.f32 %v2315, %v2337
        %v2353 = vmul.f32 %v2316, %v2337
        %v2354 = vmul.f32 %v2317, %v2337
        %v2355 = vmul.f32 %v2318, %v2337
        %v2356 = vmul.f32 %v2319, %v2337
        %v2357 = vmul.f32 %v2320, %v2337
        %v2358 = vmul.f32 %v2321, %v2337
        %v2359 = vmul.f32 %v2322, %v2337
        %v2360 = vmul.f32 %v2323, %v2337
        %v2361 = vmul.f32 %v2324, %v2337
        %v2362 = vmul.f32 %v2325, %v2337
        %v2363 = vmul.f32 %v2326, %v2337
        %v2364 = vmul.f32 %v2327, %v2337
        %v2365 = vmul.f32 %v2328, %v2337
        %v2366 = vmul.f32 %v2329, %v2337
        %v2367 = vmul.f32 %v2330, %v2337
        %v2368 = vmul.f32 %v2331, %v2337
        %v2369 = vmul.f32 %v2332, %v2337
        %v2370 = vadd.f32 %v2269, %v2338
        %v2371 = vadd.f32 %v2270, %v2339
        %v2372 = vadd.f32 %v2271, %v2340
        %v2373 = vadd.f32 %v2272, %v2341
        %v2374 = vadd.f32 %v2273, %v2342
        %v2375 = vadd.f32 %v2274, %v2343
        %v2376 = vadd.f32 %v2275, %v2344
        %v2377 = vadd.f32 %v2276, %v2345
        %v2378 = vadd.f32 %v2277, %v2346
        %v2379 = vadd.f32 %v2278, %v2347
        %v2380 = vadd.f32 %v2279, %v2348
        %v2381 = vadd.f32 %v2280, %v2349
        %v2382 = vadd.f32 %v2281, %v2350
        %v2383 = vadd.f32 %v2282, %v2351
        %v2384 = vadd.f32 %v2283, %v2352
        %v2385 = vadd.f32 %v2284, %v2353
        %v2386 = vadd.f32 %v2285, %v2354
        %v2387 = vadd.f32 %v2286, %v2355
        %v2388 = vadd.f32 %v2287, %v2356
        %v2389 = vadd.f32 %v2288, %v2357
        %v2390 = vadd.f32 %v2289, %v2358
        %v2391 = vadd.f32 %v2290, %v2359
        %v2392 = vadd.f32 %v2291, %v2360
        %v2393 = vadd.f32 %v2292, %v2361
        %v2394 = vadd.f32 %v2293, %v2362
        %v2395 = vadd.f32 %v2294, %v2363
        %v2396 = vadd.f32 %v2295, %v2364
        %v2397 = vadd.f32 %v2296, %v2365
        %v2398 = vadd.f32 %v2297, %v2366
        %v2399 = vadd.f32 %v2298, %v2367
        %v2400 = vadd.f32 %v2299, %v2368
        %v2401 = vadd.f32 %v2300, %v2369
        %v2402 = vld [vmem:[%s834 + $0x8] sm:$0xff]
        %v2403 = vld [vmem:[%s834 + $0x10] sm:$0xff]
        %v2404 = vld [vmem:[%s834 + $0x28] sm:$0xff]
        %v2405 = vld [vmem:[%s834 + $0x30] sm:$0xff]
        %v2406 = vld [vmem:[%s834 + $0x48] sm:$0xff]
        %v2407 = vld [vmem:[%s834 + $0x50] sm:$0xff]
        %v2408 = vld [vmem:[%s834 + $0x68] sm:$0xff]
        %v2409 = vld [vmem:[%s834 + $0x70] sm:$0xff]
        %v2410 = vld [vmem:[%s834 + $0x88] sm:$0xff]
        %v2411 = vld [vmem:[%s834 + $0x90] sm:$0xff]
        %v2412 = vld [vmem:[%s834 + $0xa8] sm:$0xff]
        %v2413 = vld [vmem:[%s834 + $0xb0] sm:$0xff]
        %v2414 = vld [vmem:[%s834 + $0xc8] sm:$0xff]
        %v2415 = vld [vmem:[%s834 + $0xd0] sm:$0xff]
        %v2416 = vld [vmem:[%s834 + $0xe8] sm:$0xff]
        %v2417 = vld [vmem:[%s834 + $0xf0] sm:$0xff]
        %v2418 = vld [vmem:[%s834 + $0x108] sm:$0xff]
        %v2419 = vld [vmem:[%s834 + $0x110] sm:$0xff]
        %v2420 = vld [vmem:[%s834 + $0x128] sm:$0xff]
        %v2421 = vld [vmem:[%s834 + $0x130] sm:$0xff]
        %v2422 = vld [vmem:[%s834 + $0x148] sm:$0xff]
        %v2423 = vld [vmem:[%s834 + $0x150] sm:$0xff]
        %v2424 = vld [vmem:[%s834 + $0x168] sm:$0xff]
        %v2425 = vld [vmem:[%s834 + $0x170] sm:$0xff]
        %v2426 = vld [vmem:[%s834 + $0x188] sm:$0xff]
        %v2427 = vld [vmem:[%s834 + $0x190] sm:$0xff]
        %v2428 = vld [vmem:[%s834 + $0x1a8] sm:$0xff]
        %v2429 = vld [vmem:[%s834 + $0x1b0] sm:$0xff]
        %v2430 = vld [vmem:[%s834 + $0x1c8] sm:$0xff]
        %v2431 = vld [vmem:[%s834 + $0x1d0] sm:$0xff]
        %v2432 = vld [vmem:[%s834 + $0x1e8] sm:$0xff]
        %v2433 = vld [vmem:[%s834 + $0x1f0] sm:$0xff]
        %v2434 = vld [vmem:[#allocation6 + $0x4] sm:$0x1]
        %v2435 = vlaneseq
        %v2436 = vshrl.u32 %v2435, 7
        %v2437 = vsub.s32 0, %v2436
        %v2438 = vrot.slane %v2434, %v2437
        %v2439 = vmul.f32 %v2402, %v2438
        %v2440 = vmul.f32 %v2403, %v2438
        %v2441 = vmul.f32 %v2404, %v2438
        %v2442 = vmul.f32 %v2405, %v2438
        %v2443 = vmul.f32 %v2406, %v2438
        %v2444 = vmul.f32 %v2407, %v2438
        %v2445 = vmul.f32 %v2408, %v2438
        %v2446 = vmul.f32 %v2409, %v2438
        %v2447 = vmul.f32 %v2410, %v2438
        %v2448 = vmul.f32 %v2411, %v2438
        %v2449 = vmul.f32 %v2412, %v2438
        %v2450 = vmul.f32 %v2413, %v2438
        %v2451 = vmul.f32 %v2414, %v2438
        %v2452 = vmul.f32 %v2415, %v2438
        %v2453 = vmul.f32 %v2416, %v2438
        %v2454 = vmul.f32 %v2417, %v2438
        %v2455 = vmul.f32 %v2418, %v2438
        %v2456 = vmul.f32 %v2419, %v2438
        %v2457 = vmul.f32 %v2420, %v2438
        %v2458 = vmul.f32 %v2421, %v2438
        %v2459 = vmul.f32 %v2422, %v2438
        %v2460 = vmul.f32 %v2423, %v2438
        %v2461 = vmul.f32 %v2424, %v2438
        %v2462 = vmul.f32 %v2425, %v2438
        %v2463 = vmul.f32 %v2426, %v2438
        %v2464 = vmul.f32 %v2427, %v2438
        %v2465 = vmul.f32 %v2428, %v2438
        %v2466 = vmul.f32 %v2429, %v2438
        %v2467 = vmul.f32 %v2430, %v2438
        %v2468 = vmul.f32 %v2431, %v2438
        %v2469 = vmul.f32 %v2432, %v2438
        %v2470 = vmul.f32 %v2433, %v2438
        %v2471 = vadd.f32 %v2370, %v2439
        %v2472 = vadd.f32 %v2371, %v2440
        %v2473 = vadd.f32 %v2372, %v2441
        %v2474 = vadd.f32 %v2373, %v2442
        %v2475 = vadd.f32 %v2374, %v2443
        %v2476 = vadd.f32 %v2375, %v2444
        %v2477 = vadd.f32 %v2376, %v2445
        %v2478 = vadd.f32 %v2377, %v2446
        %v2479 = vadd.f32 %v2378, %v2447
        %v2480 = vadd.f32 %v2379, %v2448
        %v2481 = vadd.f32 %v2380, %v2449
        %v2482 = vadd.f32 %v2381, %v2450
        %v2483 = vadd.f32 %v2382, %v2451
        %v2484 = vadd.f32 %v2383, %v2452
        %v2485 = vadd.f32 %v2384, %v2453
        %v2486 = vadd.f32 %v2385, %v2454
        %v2487 = vadd.f32 %v2386, %v2455
        %v2488 = vadd.f32 %v2387, %v2456
        %v2489 = vadd.f32 %v2388, %v2457
        %v2490 = vadd.f32 %v2389, %v2458
        %v2491 = vadd.f32 %v2390, %v2459
        %v2492 = vadd.f32 %v2391, %v2460
        %v2493 = vadd.f32 %v2392, %v2461
        %v2494 = vadd.f32 %v2393, %v2462
        %v2495 = vadd.f32 %v2394, %v2463
        %v2496 = vadd.f32 %v2395, %v2464
        %v2497 = vadd.f32 %v2396, %v2465
        %v2498 = vadd.f32 %v2397, %v2466
        %v2499 = vadd.f32 %v2398, %v2467
        %v2500 = vadd.f32 %v2399, %v2468
        %v2501 = vadd.f32 %v2400, %v2469
        %v2502 = vadd.f32 %v2401, %v2470
        %v2503 = vld [vmem:[%s834 + $0x9] sm:$0xff]
        %v2504 = vld [vmem:[%s834 + $0x11] sm:$0xff]
        %v2505 = vld [vmem:[%s834 + $0x29] sm:$0xff]
        %v2506 = vld [vmem:[%s834 + $0x31] sm:$0xff]
        %v2507 = vld [vmem:[%s834 + $0x49] sm:$0xff]
        %v2508 = vld [vmem:[%s834 + $0x51] sm:$0xff]
        %v2509 = vld [vmem:[%s834 + $0x69] sm:$0xff]
        %v2510 = vld [vmem:[%s834 + $0x71] sm:$0xff]
        %v2511 = vld [vmem:[%s834 + $0x89] sm:$0xff]
        %v2512 = vld [vmem:[%s834 + $0x91] sm:$0xff]
        %v2513 = vld [vmem:[%s834 + $0xa9] sm:$0xff]
        %v2514 = vld [vmem:[%s834 + $0xb1] sm:$0xff]
        %v2515 = vld [vmem:[%s834 + $0xc9] sm:$0xff]
        %v2516 = vld [vmem:[%s834 + $0xd1] sm:$0xff]
        %v2517 = vld [vmem:[%s834 + $0xe9] sm:$0xff]
        %v2518 = vld [vmem:[%s834 + $0xf1] sm:$0xff]
        %v2519 = vld [vmem:[%s834 + $0x109] sm:$0xff]
        %v2520 = vld [vmem:[%s834 + $0x111] sm:$0xff]
        %v2521 = vld [vmem:[%s834 + $0x129] sm:$0xff]
        %v2522 = vld [vmem:[%s834 + $0x131] sm:$0xff]
        %v2523 = vld [vmem:[%s834 + $0x149] sm:$0xff]
        %v2524 = vld [vmem:[%s834 + $0x151] sm:$0xff]
        %v2525 = vld [vmem:[%s834 + $0x169] sm:$0xff]
        %v2526 = vld [vmem:[%s834 + $0x171] sm:$0xff]
        %v2527 = vld [vmem:[%s834 + $0x189] sm:$0xff]
        %v2528 = vld [vmem:[%s834 + $0x191] sm:$0xff]
        %v2529 = vld [vmem:[%s834 + $0x1a9] sm:$0xff]
        %v2530 = vld [vmem:[%s834 + $0x1b1] sm:$0xff]
        %v2531 = vld [vmem:[%s834 + $0x1c9] sm:$0xff]
        %v2532 = vld [vmem:[%s834 + $0x1d1] sm:$0xff]
        %v2533 = vld [vmem:[%s834 + $0x1e9] sm:$0xff]
        %v2534 = vld [vmem:[%s834 + $0x1f1] sm:$0xff]
        %v2535 = vld [vmem:[#allocation6 + $0x5] sm:$0x1]
        %v2536 = vlaneseq
        %v2537 = vshrl.u32 %v2536, 7
        %v2538 = vsub.s32 0, %v2537
        %v2539 = vrot.slane %v2535, %v2538
        %v2540 = vmul.f32 %v2503, %v2539
        %v2541 = vmul.f32 %v2504, %v2539
        %v2542 = vmul.f32 %v2505, %v2539
        %v2543 = vmul.f32 %v2506, %v2539
        %v2544 = vmul.f32 %v2507, %v2539
        %v2545 = vmul.f32 %v2508, %v2539
        %v2546 = vmul.f32 %v2509, %v2539
        %v2547 = vmul.f32 %v2510, %v2539
        %v2548 = vmul.f32 %v2511, %v2539
        %v2549 = vmul.f32 %v2512, %v2539
        %v2550 = vmul.f32 %v2513, %v2539
        %v2551 = vmul.f32 %v2514, %v2539
        %v2552 = vmul.f32 %v2515, %v2539
        %v2553 = vmul.f32 %v2516, %v2539
        %v2554 = vmul.f32 %v2517, %v2539
        %v2555 = vmul.f32 %v2518, %v2539
        %v2556 = vmul.f32 %v2519, %v2539
        %v2557 = vmul.f32 %v2520, %v2539
        %v2558 = vmul.f32 %v2521, %v2539
        %v2559 = vmul.f32 %v2522, %v2539
        %v2560 = vmul.f32 %v2523, %v2539
        %v2561 = vmul.f32 %v2524, %v2539
        %v2562 = vmul.f32 %v2525, %v2539
        %v2563 = vmul.f32 %v2526, %v2539
        %v2564 = vmul.f32 %v2527, %v2539
        %v2565 = vmul.f32 %v2528, %v2539
        %v2566 = vmul.f32 %v2529, %v2539
        %v2567 = vmul.f32 %v2530, %v2539
        %v2568 = vmul.f32 %v2531, %v2539
        %v2569 = vmul.f32 %v2532, %v2539
        %v2570 = vmul.f32 %v2533, %v2539
        %v2571 = vmul.f32 %v2534, %v2539
        %v2572 = vadd.f32 %v2471, %v2540
        %v2573 = vadd.f32 %v2472, %v2541
        %v2574 = vadd.f32 %v2473, %v2542
        %v2575 = vadd.f32 %v2474, %v2543
        %v2576 = vadd.f32 %v2475, %v2544
        %v2577 = vadd.f32 %v2476, %v2545
        %v2578 = vadd.f32 %v2477, %v2546
        %v2579 = vadd.f32 %v2478, %v2547
        %v2580 = vadd.f32 %v2479, %v2548
        %v2581 = vadd.f32 %v2480, %v2549
        %v2582 = vadd.f32 %v2481, %v2550
        %v2583 = vadd.f32 %v2482, %v2551
        %v2584 = vadd.f32 %v2483, %v2552
        %v2585 = vadd.f32 %v2484, %v2553
        %v2586 = vadd.f32 %v2485, %v2554
        %v2587 = vadd.f32 %v2486, %v2555
        %v2588 = vadd.f32 %v2487, %v2556
        %v2589 = vadd.f32 %v2488, %v2557
        %v2590 = vadd.f32 %v2489, %v2558
        %v2591 = vadd.f32 %v2490, %v2559
        %v2592 = vadd.f32 %v2491, %v2560
        %v2593 = vadd.f32 %v2492, %v2561
        %v2594 = vadd.f32 %v2493, %v2562
        %v2595 = vadd.f32 %v2494, %v2563
        %v2596 = vadd.f32 %v2495, %v2564
        %v2597 = vadd.f32 %v2496, %v2565
        %v2598 = vadd.f32 %v2497, %v2566
        %v2599 = vadd.f32 %v2498, %v2567
        %v2600 = vadd.f32 %v2499, %v2568
        %v2601 = vadd.f32 %v2500, %v2569
        %v2602 = vadd.f32 %v2501, %v2570
        %v2603 = vadd.f32 %v2502, %v2571
        %s2604 = scalar_lea.vmem [#allocation2], 64
        %v2605 = vld [vmem:[%s2604 + $0x7] sm:$0xff]
        %v2606 = vld [vmem:[%s2604 + $0xf] sm:$0xff]
        %v2607 = vld [vmem:[%s2604 + $0x27] sm:$0xff]
        %v2608 = vld [vmem:[%s2604 + $0x2f] sm:$0xff]
        %v2609 = vld [vmem:[%s2604 + $0x47] sm:$0xff]
        %v2610 = vld [vmem:[%s2604 + $0x4f] sm:$0xff]
        %v2611 = vld [vmem:[%s2604 + $0x67] sm:$0xff]
        %v2612 = vld [vmem:[%s2604 + $0x6f] sm:$0xff]
        %v2613 = vld [vmem:[%s2604 + $0x87] sm:$0xff]
        %v2614 = vld [vmem:[%s2604 + $0x8f] sm:$0xff]
        %v2615 = vld [vmem:[%s2604 + $0xa7] sm:$0xff]
        %v2616 = vld [vmem:[%s2604 + $0xaf] sm:$0xff]
        %v2617 = vld [vmem:[%s2604 + $0xc7] sm:$0xff]
        %v2618 = vld [vmem:[%s2604 + $0xcf] sm:$0xff]
        %v2619 = vld [vmem:[%s2604 + $0xe7] sm:$0xff]
        %v2620 = vld [vmem:[%s2604 + $0xef] sm:$0xff]
        %v2621 = vld [vmem:[%s2604 + $0x107] sm:$0xff]
        %v2622 = vld [vmem:[%s2604 + $0x10f] sm:$0xff]
        %v2623 = vld [vmem:[%s2604 + $0x127] sm:$0xff]
        %v2624 = vld [vmem:[%s2604 + $0x12f] sm:$0xff]
        %v2625 = vld [vmem:[%s2604 + $0x147] sm:$0xff]
        %v2626 = vld [vmem:[%s2604 + $0x14f] sm:$0xff]
        %v2627 = vld [vmem:[%s2604 + $0x167] sm:$0xff]
        %v2628 = vld [vmem:[%s2604 + $0x16f] sm:$0xff]
        %v2629 = vld [vmem:[%s2604 + $0x187] sm:$0xff]
        %v2630 = vld [vmem:[%s2604 + $0x18f] sm:$0xff]
        %v2631 = vld [vmem:[%s2604 + $0x1a7] sm:$0xff]
        %v2632 = vld [vmem:[%s2604 + $0x1af] sm:$0xff]
        %v2633 = vld [vmem:[%s2604 + $0x1c7] sm:$0xff]
        %v2634 = vld [vmem:[%s2604 + $0x1cf] sm:$0xff]
        %v2635 = vld [vmem:[%s2604 + $0x1e7] sm:$0xff]
        %v2636 = vld [vmem:[%s2604 + $0x1ef] sm:$0xff]
        %v2637 = vld [vmem:[#allocation6 + $0x6] sm:$0x1]
        %v2638 = vlaneseq
        %v2639 = vshrl.u32 %v2638, 7
        %v2640 = vsub.s32 0, %v2639
        %v2641 = vrot.slane %v2637, %v2640
        %v2642 = vmul.f32 %v2605, %v2641
        %v2643 = vmul.f32 %v2606, %v2641
        %v2644 = vmul.f32 %v2607, %v2641
        %v2645 = vmul.f32 %v2608, %v2641
        %v2646 = vmul.f32 %v2609, %v2641
        %v2647 = vmul.f32 %v2610, %v2641
        %v2648 = vmul.f32 %v2611, %v2641
        %v2649 = vmul.f32 %v2612, %v2641
        %v2650 = vmul.f32 %v2613, %v2641
        %v2651 = vmul.f32 %v2614, %v2641
        %v2652 = vmul.f32 %v2615, %v2641
        %v2653 = vmul.f32 %v2616, %v2641
        %v2654 = vmul.f32 %v2617, %v2641
        %v2655 = vmul.f32 %v2618, %v2641
        %v2656 = vmul.f32 %v2619, %v2641
        %v2657 = vmul.f32 %v2620, %v2641
        %v2658 = vmul.f32 %v2621, %v2641
        %v2659 = vmul.f32 %v2622, %v2641
        %v2660 = vmul.f32 %v2623, %v2641
        %v2661 = vmul.f32 %v2624, %v2641
        %v2662 = vmul.f32 %v2625, %v2641
        %v2663 = vmul.f32 %v2626, %v2641
        %v2664 = vmul.f32 %v2627, %v2641
        %v2665 = vmul.f32 %v2628, %v2641
        %v2666 = vmul.f32 %v2629, %v2641
        %v2667 = vmul.f32 %v2630, %v2641
        %v2668 = vmul.f32 %v2631, %v2641
        %v2669 = vmul.f32 %v2632, %v2641
        %v2670 = vmul.f32 %v2633, %v2641
        %v2671 = vmul.f32 %v2634, %v2641
        %v2672 = vmul.f32 %v2635, %v2641
        %v2673 = vmul.f32 %v2636, %v2641
        %v2674 = vadd.f32 %v2572, %v2642
        %v2675 = vadd.f32 %v2573, %v2643
        %v2676 = vadd.f32 %v2574, %v2644
        %v2677 = vadd.f32 %v2575, %v2645
        %v2678 = vadd.f32 %v2576, %v2646
        %v2679 = vadd.f32 %v2577, %v2647
        %v2680 = vadd.f32 %v2578, %v2648
        %v2681 = vadd.f32 %v2579, %v2649
        %v2682 = vadd.f32 %v2580, %v2650
        %v2683 = vadd.f32 %v2581, %v2651
        %v2684 = vadd.f32 %v2582, %v2652
        %v2685 = vadd.f32 %v2583, %v2653
        %v2686 = vadd.f32 %v2584, %v2654
        %v2687 = vadd.f32 %v2585, %v2655
        %v2688 = vadd.f32 %v2586, %v2656
        %v2689 = vadd.f32 %v2587, %v2657
        %v2690 = vadd.f32 %v2588, %v2658
        %v2691 = vadd.f32 %v2589, %v2659
        %v2692 = vadd.f32 %v2590, %v2660
        %v2693 = vadd.f32 %v2591, %v2661
        %v2694 = vadd.f32 %v2592, %v2662
        %v2695 = vadd.f32 %v2593, %v2663
        %v2696 = vadd.f32 %v2594, %v2664
        %v2697 = vadd.f32 %v2595, %v2665
        %v2698 = vadd.f32 %v2596, %v2666
        %v2699 = vadd.f32 %v2597, %v2667
        %v2700 = vadd.f32 %v2598, %v2668
        %v2701 = vadd.f32 %v2599, %v2669
        %v2702 = vadd.f32 %v2600, %v2670
        %v2703 = vadd.f32 %v2601, %v2671
        %v2704 = vadd.f32 %v2602, %v2672
        %v2705 = vadd.f32 %v2603, %v2673
        %v2706 = vld [vmem:[%s2604 + $0x8] sm:$0xff]
        %v2707 = vld [vmem:[%s2604 + $0x10] sm:$0xff]
        %v2708 = vld [vmem:[%s2604 + $0x28] sm:$0xff]
        %v2709 = vld [vmem:[%s2604 + $0x30] sm:$0xff]
        %v2710 = vld [vmem:[%s2604 + $0x48] sm:$0xff]
        %v2711 = vld [vmem:[%s2604 + $0x50] sm:$0xff]
        %v2712 = vld [vmem:[%s2604 + $0x68] sm:$0xff]
        %v2713 = vld [vmem:[%s2604 + $0x70] sm:$0xff]
        %v2714 = vld [vmem:[%s2604 + $0x88] sm:$0xff]
        %v2715 = vld [vmem:[%s2604 + $0x90] sm:$0xff]
        %v2716 = vld [vmem:[%s2604 + $0xa8] sm:$0xff]
        %v2717 = vld [vmem:[%s2604 + $0xb0] sm:$0xff]
        %v2718 = vld [vmem:[%s2604 + $0xc8] sm:$0xff]
        %v2719 = vld [vmem:[%s2604 + $0xd0] sm:$0xff]
        %v2720 = vld [vmem:[%s2604 + $0xe8] sm:$0xff]
        %v2721 = vld [vmem:[%s2604 + $0xf0] sm:$0xff]
        %v2722 = vld [vmem:[%s2604 + $0x108] sm:$0xff]
        %v2723 = vld [vmem:[%s2604 + $0x110] sm:$0xff]
        %v2724 = vld [vmem:[%s2604 + $0x128] sm:$0xff]
        %v2725 = vld [vmem:[%s2604 + $0x130] sm:$0xff]
        %v2726 = vld [vmem:[%s2604 + $0x148] sm:$0xff]
        %v2727 = vld [vmem:[%s2604 + $0x150] sm:$0xff]
        %v2728 = vld [vmem:[%s2604 + $0x168] sm:$0xff]
        %v2729 = vld [vmem:[%s2604 + $0x170] sm:$0xff]
        %v2730 = vld [vmem:[%s2604 + $0x188] sm:$0xff]
        %v2731 = vld [vmem:[%s2604 + $0x190] sm:$0xff]
        %v2732 = vld [vmem:[%s2604 + $0x1a8] sm:$0xff]
        %v2733 = vld [vmem:[%s2604 + $0x1b0] sm:$0xff]
        %v2734 = vld [vmem:[%s2604 + $0x1c8] sm:$0xff]
        %v2735 = vld [vmem:[%s2604 + $0x1d0] sm:$0xff]
        %v2736 = vld [vmem:[%s2604 + $0x1e8] sm:$0xff]
        %v2737 = vld [vmem:[%s2604 + $0x1f0] sm:$0xff]
        %v2738 = vld [vmem:[#allocation6 + $0x7] sm:$0x1]
        %v2739 = vlaneseq
        %v2740 = vshrl.u32 %v2739, 7
        %v2741 = vsub.s32 0, %v2740
        %v2742 = vrot.slane %v2738, %v2741
        %v2743 = vmul.f32 %v2706, %v2742
        %v2744 = vmul.f32 %v2707, %v2742
        %v2745 = vmul.f32 %v2708, %v2742
        %v2746 = vmul.f32 %v2709, %v2742
        %v2747 = vmul.f32 %v2710, %v2742
        %v2748 = vmul.f32 %v2711, %v2742
        %v2749 = vmul.f32 %v2712, %v2742
        %v2750 = vmul.f32 %v2713, %v2742
        %v2751 = vmul.f32 %v2714, %v2742
        %v2752 = vmul.f32 %v2715, %v2742
        %v2753 = vmul.f32 %v2716, %v2742
        %v2754 = vmul.f32 %v2717, %v2742
        %v2755 = vmul.f32 %v2718, %v2742
        %v2756 = vmul.f32 %v2719, %v2742
        %v2757 = vmul.f32 %v2720, %v2742
        %v2758 = vmul.f32 %v2721, %v2742
        %v2759 = vmul.f32 %v2722, %v2742
        %v2760 = vmul.f32 %v2723, %v2742
        %v2761 = vmul.f32 %v2724, %v2742
        %v2762 = vmul.f32 %v2725, %v2742
        %v2763 = vmul.f32 %v2726, %v2742
        %v2764 = vmul.f32 %v2727, %v2742
        %v2765 = vmul.f32 %v2728, %v2742
        %v2766 = vmul.f32 %v2729, %v2742
        %v2767 = vmul.f32 %v2730, %v2742
        %v2768 = vmul.f32 %v2731, %v2742
        %v2769 = vmul.f32 %v2732, %v2742
        %v2770 = vmul.f32 %v2733, %v2742
        %v2771 = vmul.f32 %v2734, %v2742
        %v2772 = vmul.f32 %v2735, %v2742
        %v2773 = vmul.f32 %v2736, %v2742
        %v2774 = vmul.f32 %v2737, %v2742
        %v2775 = vadd.f32 %v2674, %v2743
        %v2776 = vadd.f32 %v2675, %v2744
        %v2777 = vadd.f32 %v2676, %v2745
        %v2778 = vadd.f32 %v2677, %v2746
        %v2779 = vadd.f32 %v2678, %v2747
        %v2780 = vadd.f32 %v2679, %v2748
        %v2781 = vadd.f32 %v2680, %v2749
        %v2782 = vadd.f32 %v2681, %v2750
        %v2783 = vadd.f32 %v2682, %v2751
        %v2784 = vadd.f32 %v2683, %v2752
        %v2785 = vadd.f32 %v2684, %v2753
        %v2786 = vadd.f32 %v2685, %v2754
        %v2787 = vadd.f32 %v2686, %v2755
        %v2788 = vadd.f32 %v2687, %v2756
        %v2789 = vadd.f32 %v2688, %v2757
        %v2790 = vadd.f32 %v2689, %v2758
        %v2791 = vadd.f32 %v2690, %v2759
        %v2792 = vadd.f32 %v2691, %v2760
        %v2793 = vadd.f32 %v2692, %v2761
        %v2794 = vadd.f32 %v2693, %v2762
        %v2795 = vadd.f32 %v2694, %v2763
        %v2796 = vadd.f32 %v2695, %v2764
        %v2797 = vadd.f32 %v2696, %v2765
        %v2798 = vadd.f32 %v2697, %v2766
        %v2799 = vadd.f32 %v2698, %v2767
        %v2800 = vadd.f32 %v2699, %v2768
        %v2801 = vadd.f32 %v2700, %v2769
        %v2802 = vadd.f32 %v2701, %v2770
        %v2803 = vadd.f32 %v2702, %v2771
        %v2804 = vadd.f32 %v2703, %v2772
        %v2805 = vadd.f32 %v2704, %v2773
        %v2806 = vadd.f32 %v2705, %v2774
        %v2807 = vld [vmem:[%s2604 + $0x9] sm:$0xff]
        %v2808 = vld [vmem:[%s2604 + $0x11] sm:$0xff]
        %v2809 = vld [vmem:[%s2604 + $0x29] sm:$0xff]
        %v2810 = vld [vmem:[%s2604 + $0x31] sm:$0xff]
        %v2811 = vld [vmem:[%s2604 + $0x49] sm:$0xff]
        %v2812 = vld [vmem:[%s2604 + $0x51] sm:$0xff]
        %v2813 = vld [vmem:[%s2604 + $0x69] sm:$0xff]
        %v2814 = vld [vmem:[%s2604 + $0x71] sm:$0xff]
        %v2815 = vld [vmem:[%s2604 + $0x89] sm:$0xff]
        %v2816 = vld [vmem:[%s2604 + $0x91] sm:$0xff]
        %v2817 = vld [vmem:[%s2604 + $0xa9] sm:$0xff]
        %v2818 = vld [vmem:[%s2604 + $0xb1] sm:$0xff]
        %v2819 = vld [vmem:[%s2604 + $0xc9] sm:$0xff]
        %v2820 = vld [vmem:[%s2604 + $0xd1] sm:$0xff]
        %v2821 = vld [vmem:[%s2604 + $0xe9] sm:$0xff]
        %v2822 = vld [vmem:[%s2604 + $0xf1] sm:$0xff]
        %v2823 = vld [vmem:[%s2604 + $0x109] sm:$0xff]
        %v2824 = vld [vmem:[%s2604 + $0x111] sm:$0xff]
        %v2825 = vld [vmem:[%s2604 + $0x129] sm:$0xff]
        %v2826 = vld [vmem:[%s2604 + $0x131] sm:$0xff]
        %v2827 = vld [vmem:[%s2604 + $0x149] sm:$0xff]
        %v2828 = vld [vmem:[%s2604 + $0x151] sm:$0xff]
        %v2829 = vld [vmem:[%s2604 + $0x169] sm:$0xff]
        %v2830 = vld [vmem:[%s2604 + $0x171] sm:$0xff]
        %v2831 = vld [vmem:[%s2604 + $0x189] sm:$0xff]
        %v2832 = vld [vmem:[%s2604 + $0x191] sm:$0xff]
        %v2833 = vld [vmem:[%s2604 + $0x1a9] sm:$0xff]
        %v2834 = vld [vmem:[%s2604 + $0x1b1] sm:$0xff]
        %v2835 = vld [vmem:[%s2604 + $0x1c9] sm:$0xff]
        %v2836 = vld [vmem:[%s2604 + $0x1d1] sm:$0xff]
        %v2837 = vld [vmem:[%s2604 + $0x1e9] sm:$0xff]
        %v2838 = vld [vmem:[%s2604 + $0x1f1] sm:$0xff]
        %v2839 = vld [vmem:[#allocation6 + $0x8] sm:$0x1]
        %v2840 = vlaneseq
        %v2841 = vshrl.u32 %v2840, 7
        %v2842 = vsub.s32 0, %v2841
        %v2843 = vrot.slane %v2839, %v2842
        %v2844 = vmul.f32 %v2807, %v2843
        %v2845 = vmul.f32 %v2808, %v2843
        %v2846 = vmul.f32 %v2809, %v2843
        %v2847 = vmul.f32 %v2810, %v2843
        %v2848 = vmul.f32 %v2811, %v2843
        %v2849 = vmul.f32 %v2812, %v2843
        %v2850 = vmul.f32 %v2813, %v2843
        %v2851 = vmul.f32 %v2814, %v2843
        %v2852 = vmul.f32 %v2815, %v2843
        %v2853 = vmul.f32 %v2816, %v2843
        %v2854 = vmul.f32 %v2817, %v2843
        %v2855 = vmul.f32 %v2818, %v2843
        %v2856 = vmul.f32 %v2819, %v2843
        %v2857 = vmul.f32 %v2820, %v2843
        %v2858 = vmul.f32 %v2821, %v2843
        %v2859 = vmul.f32 %v2822, %v2843
        %v2860 = vmul.f32 %v2823, %v2843
        %v2861 = vmul.f32 %v2824, %v2843
        %v2862 = vmul.f32 %v2825, %v2843
        %v2863 = vmul.f32 %v2826, %v2843
        %v2864 = vmul.f32 %v2827, %v2843
        %v2865 = vmul.f32 %v2828, %v2843
        %v2866 = vmul.f32 %v2829, %v2843
        %v2867 = vmul.f32 %v2830, %v2843
        %v2868 = vmul.f32 %v2831, %v2843
        %v2869 = vmul.f32 %v2832, %v2843
        %v2870 = vmul.f32 %v2833, %v2843
        %v2871 = vmul.f32 %v2834, %v2843
        %v2872 = vmul.f32 %v2835, %v2843
        %v2873 = vmul.f32 %v2836, %v2843
        %v2874 = vmul.f32 %v2837, %v2843
        %v2875 = vmul.f32 %v2838, %v2843
        %v2876 = vadd.f32 %v2775, %v2844
        %v2877 = vadd.f32 %v2776, %v2845
        %v2878 = vadd.f32 %v2777, %v2846
        %v2879 = vadd.f32 %v2778, %v2847
        %v2880 = vadd.f32 %v2779, %v2848
        %v2881 = vadd.f32 %v2780, %v2849
        %v2882 = vadd.f32 %v2781, %v2850
        %v2883 = vadd.f32 %v2782, %v2851
        %v2884 = vadd.f32 %v2783, %v2852
        %v2885 = vadd.f32 %v2784, %v2853
        %v2886 = vadd.f32 %v2785, %v2854
        %v2887 = vadd.f32 %v2786, %v2855
        %v2888 = vadd.f32 %v2787, %v2856
        %v2889 = vadd.f32 %v2788, %v2857
        %v2890 = vadd.f32 %v2789, %v2858
        %v2891 = vadd.f32 %v2790, %v2859
        %v2892 = vadd.f32 %v2791, %v2860
        %v2893 = vadd.f32 %v2792, %v2861
        %v2894 = vadd.f32 %v2793, %v2862
        %v2895 = vadd.f32 %v2794, %v2863
        %v2896 = vadd.f32 %v2795, %v2864
        %v2897 = vadd.f32 %v2796, %v2865
        %v2898 = vadd.f32 %v2797, %v2866
        %v2899 = vadd.f32 %v2798, %v2867
        %v2900 = vadd.f32 %v2799, %v2868
        %v2901 = vadd.f32 %v2800, %v2869
        %v2902 = vadd.f32 %v2801, %v2870
        %v2903 = vadd.f32 %v2802, %v2871
        %v2904 = vadd.f32 %v2803, %v2872
        %v2905 = vadd.f32 %v2804, %v2873
        %v2906 = vadd.f32 %v2805, %v2874
        %v2907 = vadd.f32 %v2806, %v2875
        %v2908 = vld [vmem:[#allocation8] sm:$0x1]
        %v2910 = vlaneseq
        %v2911 = vshrl.u32 %v2910, 7
        %v2912 = vsub.s32 0, %v2911
        %v2913 = vrot.slane %v2908, %v2912
        %v2915 = vadd.f32 %v2876, %v2913
        %v2916 = vadd.f32 %v2877, %v2913
        %v2917 = vadd.f32 %v2878, %v2913
        %v2918 = vadd.f32 %v2879, %v2913
        %v2919 = vadd.f32 %v2880, %v2913
        %v2920 = vadd.f32 %v2881, %v2913
        %v2921 = vadd.f32 %v2882, %v2913
        %v2922 = vadd.f32 %v2883, %v2913
        %v2923 = vadd.f32 %v2884, %v2913
        %v2924 = vadd.f32 %v2885, %v2913
        %v2925 = vadd.f32 %v2886, %v2913
        %v2926 = vadd.f32 %v2887, %v2913
        %v2927 = vadd.f32 %v2888, %v2913
        %v2928 = vadd.f32 %v2889, %v2913
        %v2929 = vadd.f32 %v2890, %v2913
        %v2930 = vadd.f32 %v2891, %v2913
        %v2931 = vadd.f32 %v2892, %v2913
        %v2932 = vadd.f32 %v2893, %v2913
        %v2933 = vadd.f32 %v2894, %v2913
        %v2934 = vadd.f32 %v2895, %v2913
        %v2935 = vadd.f32 %v2896, %v2913
        %v2936 = vadd.f32 %v2897, %v2913
        %v2937 = vadd.f32 %v2898, %v2913
        %v2938 = vadd.f32 %v2899, %v2913
        %v2939 = vadd.f32 %v2900, %v2913
        %v2940 = vadd.f32 %v2901, %v2913
        %v2941 = vadd.f32 %v2902, %v2913
        %v2942 = vadd.f32 %v2903, %v2913
        %v2943 = vadd.f32 %v2904, %v2913
        %v2944 = vadd.f32 %v2905, %v2913
        %v2945 = vadd.f32 %v2906, %v2913
        %v2946 = vadd.f32 %v2907, %v2913
        %v2947 = vmul.f32 %v2915, %v2915
        %v2948 = vmul.f32 %v2916, %v2916
        %v2949 = vmul.f32 %v2917, %v2917
        %v2950 = vmul.f32 %v2918, %v2918
        %v2951 = vmul.f32 %v2919, %v2919
        %v2952 = vmul.f32 %v2920, %v2920
        %v2953 = vmul.f32 %v2921, %v2921
        %v2954 = vmul.f32 %v2922, %v2922
        %v2955 = vmul.f32 %v2923, %v2923
        %v2956 = vmul.f32 %v2924, %v2924
        %v2957 = vmul.f32 %v2925, %v2925
        %v2958 = vmul.f32 %v2926, %v2926
        %v2959 = vmul.f32 %v2927, %v2927
        %v2960 = vmul.f32 %v2928, %v2928
        %v2961 = vmul.f32 %v2929, %v2929
        %v2962 = vmul.f32 %v2930, %v2930
        %v2963 = vmul.f32 %v2931, %v2931
        %v2964 = vmul.f32 %v2932, %v2932
        %v2965 = vmul.f32 %v2933, %v2933
        %v2966 = vmul.f32 %v2934, %v2934
        %v2967 = vmul.f32 %v2935, %v2935
        %v2968 = vmul.f32 %v2936, %v2936
        %v2969 = vmul.f32 %v2937, %v2937
        %v2970 = vmul.f32 %v2938, %v2938
        %v2971 = vmul.f32 %v2939, %v2939
        %v2972 = vmul.f32 %v2940, %v2940
        %v2973 = vmul.f32 %v2941, %v2941
        %v2974 = vmul.f32 %v2942, %v2942
        %v2975 = vmul.f32 %v2943, %v2943
        %v2976 = vmul.f32 %v2944, %v2944
        %v2977 = vmul.f32 %v2945, %v2945
        %v2978 = vmul.f32 %v2946, %v2946
        %vm2979 = vcmask 785920
        %v2980 = vsel %vm2979, %v2947, 0.0
        %v2981 = vsel %vm2979, %v2948, 0.0
        %v2982 = vadd.f32 %v2980, %v2981
        %v2983 = vsel %vm2979, %v2949, 0.0
        %v2984 = vadd.f32 %v2982, %v2983
        %v2985 = vsel %vm2979, %v2950, 0.0
        %v2986 = vadd.f32 %v2984, %v2985
        %v2987 = vsel %vm2979, %v2951, 0.0
        %v2988 = vadd.f32 %v2986, %v2987
        %v2989 = vsel %vm2979, %v2952, 0.0
        %v2990 = vadd.f32 %v2988, %v2989
        %v2991 = vsel %vm2979, %v2953, 0.0
        %v2992 = vadd.f32 %v2990, %v2991
        %v2993 = vsel %vm2979, %v2954, 0.0
        %v2994 = vadd.f32 %v2992, %v2993
        %v2995 = vsel %vm2979, %v2955, 0.0
        %v2996 = vadd.f32 %v2994, %v2995
        %v2997 = vsel %vm2979, %v2956, 0.0
        %v2998 = vadd.f32 %v2996, %v2997
        %v2999 = vsel %vm2979, %v2957, 0.0
        %v3000 = vadd.f32 %v2998, %v2999
        %v3001 = vsel %vm2979, %v2958, 0.0
        %v3002 = vadd.f32 %v3000, %v3001
        %v3003 = vsel %vm2979, %v2959, 0.0
        %v3004 = vadd.f32 %v3002, %v3003
        %v3005 = vsel %vm2979, %v2960, 0.0
        %v3006 = vadd.f32 %v3004, %v3005
        %v3007 = vsel %vm2979, %v2961, 0.0
        %v3008 = vadd.f32 %v3006, %v3007
        %v3009 = vsel %vm2979, %v2962, 0.0
        %v3010 = vadd.f32 %v3008, %v3009
        %v3011 = vsel %vm2979, %v2963, 0.0
        %v3012 = vadd.f32 %v3010, %v3011
        %v3013 = vsel %vm2979, %v2964, 0.0
        %v3014 = vadd.f32 %v3012, %v3013
        %v3015 = vsel %vm2979, %v2965, 0.0
        %v3016 = vadd.f32 %v3014, %v3015
        %v3017 = vsel %vm2979, %v2966, 0.0
        %v3018 = vadd.f32 %v3016, %v3017
        %v3019 = vsel %vm2979, %v2967, 0.0
        %v3020 = vadd.f32 %v3018, %v3019
        %v3021 = vsel %vm2979, %v2968, 0.0
        %v3022 = vadd.f32 %v3020, %v3021
        %v3023 = vsel %vm2979, %v2969, 0.0
        %v3024 = vadd.f32 %v3022, %v3023
        %v3025 = vsel %vm2979, %v2970, 0.0
        %v3026 = vadd.f32 %v3024, %v3025
        %v3027 = vsel %vm2979, %v2971, 0.0
        %v3028 = vadd.f32 %v3026, %v3027
        %v3029 = vsel %vm2979, %v2972, 0.0
        %v3030 = vadd.f32 %v3028, %v3029
        %v3031 = vsel %vm2979, %v2973, 0.0
        %v3032 = vadd.f32 %v3030, %v3031
        %v3033 = vsel %vm2979, %v2974, 0.0
        %v3034 = vadd.f32 %v3032, %v3033
        %v3035 = vsel %vm2979, %v2975, 0.0
        %v3036 = vadd.f32 %v3034, %v3035
        %v3037 = vsel %vm2979, %v2976, 0.0
        %v3038 = vadd.f32 %v3036, %v3037
        %v3039 = vsel %vm2979, %v2977, 0.0
        %v3040 = vadd.f32 %v3038, %v3039
        %v3041 = vsel %vm2979, %v2978, 0.0
        %v3042 = vadd.f32 %v3040, %v3041
        %v3043 = vrot.slane %v3042, 4
        %v3044 = vadd.f32 %v3042, %v3043
        %v3045 = vrot.slane %v3044, 2
        %v3046 = vadd.f32 %v3044, %v3045
        %v3047 = vrot.slane %v3046, 1
        %v3048 = vadd.f32 %v3046, %v3047
        %v3049 = vmax.f32 %v3048, 1e-24
        %v3050 = vrsqrt.pop %v3049
        %v3051 = vmul.f32 %v2915, %v3050
        %v3052 = vmul.f32 %v2916, %v3050
        %v3053 = vmul.f32 %v2917, %v3050
        %v3054 = vmul.f32 %v2918, %v3050
        %v3055 = vmul.f32 %v2919, %v3050
        %v3056 = vmul.f32 %v2920, %v3050
        %v3057 = vmul.f32 %v2921, %v3050
        %v3058 = vmul.f32 %v2922, %v3050
        %v3059 = vmul.f32 %v2923, %v3050
        %v3060 = vmul.f32 %v2924, %v3050
        %v3061 = vmul.f32 %v2925, %v3050
        %v3062 = vmul.f32 %v2926, %v3050
        %v3063 = vmul.f32 %v2927, %v3050
        %v3064 = vmul.f32 %v2928, %v3050
        %v3065 = vmul.f32 %v2929, %v3050
        %v3066 = vmul.f32 %v2930, %v3050
        %v3067 = vmul.f32 %v2931, %v3050
        %v3068 = vmul.f32 %v2932, %v3050
        %v3069 = vmul.f32 %v2933, %v3050
        %v3070 = vmul.f32 %v2934, %v3050
        %v3071 = vmul.f32 %v2935, %v3050
        %v3072 = vmul.f32 %v2936, %v3050
        %v3073 = vmul.f32 %v2937, %v3050
        %v3074 = vmul.f32 %v2938, %v3050
        %v3075 = vmul.f32 %v2939, %v3050
        %v3076 = vmul.f32 %v2940, %v3050
        %v3077 = vmul.f32 %v2941, %v3050
        %v3078 = vmul.f32 %v2942, %v3050
        %v3079 = vmul.f32 %v2943, %v3050
        %v3080 = vmul.f32 %v2944, %v3050
        %v3081 = vmul.f32 %v2945, %v3050
        %v3082 = vmul.f32 %v2946, %v3050
        %v3083 = vsel %vm1220, %v2947, 0.0
        %v3084 = vsel %vm1220, %v2948, 0.0
        %v3085 = vadd.f32 %v3083, %v3084
        %v3086 = vsel %vm1220, %v2949, 0.0
        %v3087 = vadd.f32 %v3085, %v3086
        %v3088 = vsel %vm1220, %v2950, 0.0
        %v3089 = vadd.f32 %v3087, %v3088
        %v3090 = vsel %vm1220, %v2951, 0.0
        %v3091 = vadd.f32 %v3089, %v3090
        %v3092 = vsel %vm1220, %v2952, 0.0
        %v3093 = vadd.f32 %v3091, %v3092
        %v3094 = vsel %vm1220, %v2953, 0.0
        %v3095 = vadd.f32 %v3093, %v3094
        %v3096 = vsel %vm1220, %v2954, 0.0
        %v3097 = vadd.f32 %v3095, %v3096
        %v3098 = vsel %vm1220, %v2955, 0.0
        %v3099 = vadd.f32 %v3097, %v3098
        %v3100 = vsel %vm1220, %v2956, 0.0
        %v3101 = vadd.f32 %v3099, %v3100
        %v3102 = vsel %vm1220, %v2957, 0.0
        %v3103 = vadd.f32 %v3101, %v3102
        %v3104 = vsel %vm1220, %v2958, 0.0
        %v3105 = vadd.f32 %v3103, %v3104
        %v3106 = vsel %vm1220, %v2959, 0.0
        %v3107 = vadd.f32 %v3105, %v3106
        %v3108 = vsel %vm1220, %v2960, 0.0
        %v3109 = vadd.f32 %v3107, %v3108
        %v3110 = vsel %vm1220, %v2961, 0.0
        %v3111 = vadd.f32 %v3109, %v3110
        %v3112 = vsel %vm1220, %v2962, 0.0
        %v3113 = vadd.f32 %v3111, %v3112
        %v3114 = vsel %vm1220, %v2963, 0.0
        %v3115 = vadd.f32 %v3113, %v3114
        %v3116 = vsel %vm1220, %v2964, 0.0
        %v3117 = vadd.f32 %v3115, %v3116
        %v3118 = vsel %vm1220, %v2965, 0.0
        %v3119 = vadd.f32 %v3117, %v3118
        %v3120 = vsel %vm1220, %v2966, 0.0
        %v3121 = vadd.f32 %v3119, %v3120
        %v3122 = vsel %vm1220, %v2967, 0.0
        %v3123 = vadd.f32 %v3121, %v3122
        %v3124 = vsel %vm1220, %v2968, 0.0
        %v3125 = vadd.f32 %v3123, %v3124
        %v3126 = vsel %vm1220, %v2969, 0.0
        %v3127 = vadd.f32 %v3125, %v3126
        %v3128 = vsel %vm1220, %v2970, 0.0
        %v3129 = vadd.f32 %v3127, %v3128
        %v3130 = vsel %vm1220, %v2971, 0.0
        %v3131 = vadd.f32 %v3129, %v3130
        %v3132 = vsel %vm1220, %v2972, 0.0
        %v3133 = vadd.f32 %v3131, %v3132
        %v3134 = vsel %vm1220, %v2973, 0.0
        %v3135 = vadd.f32 %v3133, %v3134
        %v3136 = vsel %vm1220, %v2974, 0.0
        %v3137 = vadd.f32 %v3135, %v3136
        %v3138 = vsel %vm1220, %v2975, 0.0
        %v3139 = vadd.f32 %v3137, %v3138
        %v3140 = vsel %vm1220, %v2976, 0.0
        %v3141 = vadd.f32 %v3139, %v3140
        %v3142 = vsel %vm1220, %v2977, 0.0
        %v3143 = vadd.f32 %v3141, %v3142
        %v3144 = vsel %vm1220, %v2978, 0.0
        %v3145 = vadd.f32 %v3143, %v3144
        %v3146 = vrot.slane %v3145, 4
        %v3147 = vadd.f32 %v3145, %v3146
        %v3148 = vrot.slane %v3147, 2
        %v3149 = vadd.f32 %v3147, %v3148
        %v3150 = vrot.slane %v3149, 1
        %v3151 = vadd.f32 %v3149, %v3150
        %v3152 = vmax.f32 %v3151, 1e-24
        %v3153 = vrsqrt.pop %v3152
        %v3154 = vmul.f32 %v2915, %v3153
        %v3155 = vmul.f32 %v2916, %v3153
        %v3156 = vmul.f32 %v2917, %v3153
        %v3157 = vmul.f32 %v2918, %v3153
        %v3158 = vmul.f32 %v2919, %v3153
        %v3159 = vmul.f32 %v2920, %v3153
        %v3160 = vmul.f32 %v2921, %v3153
        %v3161 = vmul.f32 %v2922, %v3153
        %v3162 = vmul.f32 %v2923, %v3153
        %v3163 = vmul.f32 %v2924, %v3153
        %v3164 = vmul.f32 %v2925, %v3153
        %v3165 = vmul.f32 %v2926, %v3153
        %v3166 = vmul.f32 %v2927, %v3153
        %v3167 = vmul.f32 %v2928, %v3153
        %v3168 = vmul.f32 %v2929, %v3153
        %v3169 = vmul.f32 %v2930, %v3153
        %v3170 = vmul.f32 %v2931, %v3153
        %v3171 = vmul.f32 %v2932, %v3153
        %v3172 = vmul.f32 %v2933, %v3153
        %v3173 = vmul.f32 %v2934, %v3153
        %v3174 = vmul.f32 %v2935, %v3153
        %v3175 = vmul.f32 %v2936, %v3153
        %v3176 = vmul.f32 %v2937, %v3153
        %v3177 = vmul.f32 %v2938, %v3153
        %v3178 = vmul.f32 %v2939, %v3153
        %v3179 = vmul.f32 %v2940, %v3153
        %v3180 = vmul.f32 %v2941, %v3153
        %v3181 = vmul.f32 %v2942, %v3153
        %v3182 = vmul.f32 %v2943, %v3153
        %v3183 = vmul.f32 %v2944, %v3153
        %v3184 = vmul.f32 %v2945, %v3153
        %v3185 = vmul.f32 %v2946, %v3153
        %3218 = vrot.lane.b32.xlu0 %v3051, 64
        %v3219 = vpop.permute.xlu0 %3218
        %3220 = vrot.lane.b32.xlu0 %v3052, 64
        %v3221 = vpop.permute.xlu0 %3220
        %3222 = vrot.lane.b32.xlu0 %v3053, 64
        %v3223 = vpop.permute.xlu0 %3222
        %3224 = vrot.lane.b32.xlu0 %v3054, 64
        %v3225 = vpop.permute.xlu0 %3224
        %3226 = vrot.lane.b32.xlu0 %v3055, 64
        %v3227 = vpop.permute.xlu0 %3226
        %3228 = vrot.lane.b32.xlu0 %v3056, 64
        %v3229 = vpop.permute.xlu0 %3228
        %3230 = vrot.lane.b32.xlu0 %v3057, 64
        %v3231 = vpop.permute.xlu0 %3230
        %3232 = vrot.lane.b32.xlu0 %v3058, 64
        %v3233 = vpop.permute.xlu0 %3232
        %3234 = vrot.lane.b32.xlu0 %v3059, 64
        %v3235 = vpop.permute.xlu0 %3234
        %3236 = vrot.lane.b32.xlu0 %v3060, 64
        %v3237 = vpop.permute.xlu0 %3236
        %3238 = vrot.lane.b32.xlu0 %v3061, 64
        %v3239 = vpop.permute.xlu0 %3238
        %3240 = vrot.lane.b32.xlu0 %v3062, 64
        %v3241 = vpop.permute.xlu0 %3240
        %3242 = vrot.lane.b32.xlu0 %v3063, 64
        %v3243 = vpop.permute.xlu0 %3242
        %3244 = vrot.lane.b32.xlu0 %v3064, 64
        %v3245 = vpop.permute.xlu0 %3244
        %3246 = vrot.lane.b32.xlu0 %v3065, 64
        %v3247 = vpop.permute.xlu0 %3246
        %3248 = vrot.lane.b32.xlu0 %v3066, 64
        %v3249 = vpop.permute.xlu0 %3248
        %3250 = vrot.lane.b32.xlu0 %v3067, 64
        %v3251 = vpop.permute.xlu0 %3250
        %3252 = vrot.lane.b32.xlu0 %v3068, 64
        %v3253 = vpop.permute.xlu0 %3252
        %3254 = vrot.lane.b32.xlu0 %v3069, 64
        %v3255 = vpop.permute.xlu0 %3254
        %3256 = vrot.lane.b32.xlu0 %v3070, 64
        %v3257 = vpop.permute.xlu0 %3256
        %3258 = vrot.lane.b32.xlu0 %v3071, 64
        %v3259 = vpop.permute.xlu0 %3258
        %3260 = vrot.lane.b32.xlu0 %v3072, 64
        %v3261 = vpop.permute.xlu0 %3260
        %3262 = vrot.lane.b32.xlu0 %v3073, 64
        %v3263 = vpop.permute.xlu0 %3262
        %3264 = vrot.lane.b32.xlu0 %v3074, 64
        %v3265 = vpop.permute.xlu0 %3264
        %3266 = vrot.lane.b32.xlu0 %v3075, 64
        %v3267 = vpop.permute.xlu0 %3266
        %3268 = vrot.lane.b32.xlu0 %v3076, 64
        %v3269 = vpop.permute.xlu0 %3268
        %3270 = vrot.lane.b32.xlu0 %v3077, 64
        %v3271 = vpop.permute.xlu0 %3270
        %3272 = vrot.lane.b32.xlu0 %v3078, 64
        %v3273 = vpop.permute.xlu0 %3272
        %3274 = vrot.lane.b32.xlu0 %v3079, 64
        %v3275 = vpop.permute.xlu0 %3274
        %3276 = vrot.lane.b32.xlu0 %v3080, 64
        %v3277 = vpop.permute.xlu0 %3276
        %3278 = vrot.lane.b32.xlu0 %v3081, 64
        %v3279 = vpop.permute.xlu0 %3278
        %3280 = vrot.lane.b32.xlu0 %v3082, 64
        %v3281 = vpop.permute.xlu0 %3280
        %3314 = vxpose.xlu0.b32.start [1/16] %v3219, 128
        %3315 = vxpose.xlu0.b32.cont [2/16] %v3221, 128
        %3316 = vxpose.xlu0.b32.cont [3/16] %v3223, 128
        %3317 = vxpose.xlu0.b32.cont [4/16] %v3225, 128
        %3318 = vxpose.xlu0.b32.cont [5/16] %v3227, 128
        %3319 = vxpose.xlu0.b32.cont [6/16] %v3229, 128
        %3320 = vxpose.xlu0.b32.cont [7/16] %v3231, 128
        %3321 = vxpose.xlu0.b32.cont [8/16] %v3233, 128
        %3322 = vxpose.xlu0.b32.cont [9/16] %v3235, 128
        %3323 = vxpose.xlu0.b32.cont [10/16] %v3237, 128
        %3324 = vxpose.xlu0.b32.cont [11/16] %v3239, 128
        %3325 = vxpose.xlu0.b32.cont [12/16] %v3241, 128
        %3326 = vxpose.xlu0.b32.cont [13/16] %v3243, 128
        %3327 = vxpose.xlu0.b32.cont [14/16] %v3245, 128
        %3328 = vxpose.xlu0.b32.cont [15/16] %v3247, 128
        %3329 = vxpose.xlu0.b32.end [16/16] %v3249, 128
        %v3330 = vpop.trf.xlu0
        %v3331 = vpop.trf.xlu0
        %v3332 = vpop.trf.xlu0
        %v3333 = vpop.trf.xlu0
        %v3334 = vpop.trf.xlu0
        %v3335 = vpop.trf.xlu0
        %v3336 = vpop.trf.xlu0
        %v3337 = vpop.trf.xlu0
        %v3338 = vpop.trf.xlu0
        %v3339 = vpop.trf.xlu0
        %v3340 = vpop.trf.xlu0
        %v3341 = vpop.trf.xlu0
        %v3342 = vpop.trf.xlu0
        %v3343 = vpop.trf.xlu0
        %v3344 = vpop.trf.xlu0
        %v3345 = vpop.trf.xlu0
        %3346 = vxpose.xlu0.b32.start [1/16] %v3251, 128
        %3347 = vxpose.xlu0.b32.cont [2/16] %v3253, 128
        %3348 = vxpose.xlu0.b32.cont [3/16] %v3255, 128
        %3349 = vxpose.xlu0.b32.cont [4/16] %v3257, 128
        %3350 = vxpose.xlu0.b32.cont [5/16] %v3259, 128
        %3351 = vxpose.xlu0.b32.cont [6/16] %v3261, 128
        %3352 = vxpose.xlu0.b32.cont [7/16] %v3263, 128
        %3353 = vxpose.xlu0.b32.cont [8/16] %v3265, 128
        %3354 = vxpose.xlu0.b32.cont [9/16] %v3267, 128
        %3355 = vxpose.xlu0.b32.cont [10/16] %v3269, 128
        %3356 = vxpose.xlu0.b32.cont [11/16] %v3271, 128
        %3357 = vxpose.xlu0.b32.cont [12/16] %v3273, 128
        %3358 = vxpose.xlu0.b32.cont [13/16] %v3275, 128
        %3359 = vxpose.xlu0.b32.cont [14/16] %v3277, 128
        %3360 = vxpose.xlu0.b32.cont [15/16] %v3279, 128
        %3361 = vxpose.xlu0.b32.end [16/16] %v3281, 128
        %v3362 = vpop.trf.xlu0
        %v3363 = vpop.trf.xlu0
        %v3364 = vpop.trf.xlu0
        %v3365 = vpop.trf.xlu0
        %v3366 = vpop.trf.xlu0
        %v3367 = vpop.trf.xlu0
        %v3368 = vpop.trf.xlu0
        %v3369 = vpop.trf.xlu0
        %v3370 = vpop.trf.xlu0
        %v3371 = vpop.trf.xlu0
        %v3372 = vpop.trf.xlu0
        %v3373 = vpop.trf.xlu0
        %v3374 = vpop.trf.xlu0
        %v3375 = vpop.trf.xlu0
        %v3376 = vpop.trf.xlu0
        %v3377 = vpop.trf.xlu0
        %3378 = vmatprep.subr.mxu0 0.0
        %3379 = vmatpush1.msra.mxu0 %v3154
        %3380 = vmatprep.subr.mxu0 0.0
        %3381 = vmatpush1.msra.mxu0 %v3155
        %3382 = vmatprep.subr.mxu0 0.0
        %3383 = vmatpush1.msra.mxu0 %v3156
        %3384 = vmatprep.subr.mxu0 0.0
        %3385 = vmatpush1.msra.mxu0 %v3157
        %3386 = vmatprep.subr.mxu0 0.0
        %3387 = vmatpush1.msra.mxu0 %v3158
        %3388 = vmatprep.subr.mxu0 0.0
        %3389 = vmatpush1.msra.mxu0 %v3159
        %3390 = vmatprep.subr.mxu0 0.0
        %3391 = vmatpush1.msra.mxu0 %v3160
        %3392 = vmatprep.subr.mxu0 0.0
        %3393 = vmatpush1.msra.mxu0 %v3161
        %3394 = vmatprep.subr.mxu0 0.0
        %3395 = vmatpush1.msra.mxu0 %v3162
        %3396 = vmatprep.subr.mxu0 0.0
        %3397 = vmatpush1.msra.mxu0 %v3163
        %3398 = vmatprep.subr.mxu0 0.0
        %3399 = vmatpush1.msra.mxu0 %v3164
        %3400 = vmatprep.subr.mxu0 0.0
        %3401 = vmatpush1.msra.mxu0 %v3165
        %3402 = vmatprep.subr.mxu0 0.0
        %3403 = vmatpush1.msra.mxu0 %v3166
        %3404 = vmatprep.subr.mxu0 0.0
        %3405 = vmatpush1.msra.mxu0 %v3167
        %3406 = vmatprep.subr.mxu0 0.0
        %3407 = vmatpush1.msra.mxu0 %v3168
        %3408 = vmatprep.subr.mxu0 0.0
        %3409 = vmatpush1.msra.mxu0 %v3169
        %3410 = vmatprep.subr.mxu0 0.0
        %3411 = vmatpush1.msra.mxu0 %v3170
        %3412 = vmatprep.subr.mxu0 0.0
        %3413 = vmatpush1.msra.mxu0 %v3171
        %3414 = vmatprep.subr.mxu0 0.0
        %3415 = vmatpush1.msra.mxu0 %v3172
        %3416 = vmatprep.subr.mxu0 0.0
        %3417 = vmatpush1.msra.mxu0 %v3173
        %3418 = vmatprep.subr.mxu0 0.0
        %3419 = vmatpush1.msra.mxu0 %v3174
        %3420 = vmatprep.subr.mxu0 0.0
        %3421 = vmatpush1.msra.mxu0 %v3175
        %3422 = vmatprep.subr.mxu0 0.0
        %3423 = vmatpush1.msra.mxu0 %v3176
        %3424 = vmatprep.subr.mxu0 0.0
        %3425 = vmatpush1.msra.mxu0 %v3177
        %3426 = vmatprep.subr.mxu0 0.0
        %3427 = vmatpush1.msra.mxu0 %v3178
        %3428 = vmatprep.subr.mxu0 0.0
        %3429 = vmatpush1.msra.mxu0 %v3179
        %3430 = vmatprep.subr.mxu0 0.0
        %3431 = vmatpush1.msra.mxu0 %v3180
        %3432 = vmatprep.subr.mxu0 0.0
        %3433 = vmatpush1.msra.mxu0 %v3181
        %3434 = vmatprep.subr.mxu0 0.0
        %3435 = vmatpush1.msra.mxu0 %v3182
        %3436 = vmatprep.subr.mxu0 0.0
        %3437 = vmatpush1.msra.mxu0 %v3183
        %3438 = vmatprep.subr.mxu0 0.0
        %3439 = vmatpush1.msra.mxu0 %v3184
        %3440 = vmatprep.subr.mxu0 0.0
        %3441 = vmatpush1.msra.mxu0 %v3185
        %3442 = vmatprep.mubr.f32.mxu0 %v3362
        %3443 = vmatmul.mubr.f32.gmra.mrb[0].mxu0 %v3330
        %v3444 = vpop.f32.mrb[0].mxu0
        %v3445 = vadd.f32 0.0, %v3444
        %v3446 = vpop.f32.mrb[0].mxu0
        %3447 = vmatprep.mubr.f32.mxu0 %v3363
        %3448 = vmatmul.mubr.f32.gmra.mrb[0].mxu0 %v3331
        %v3449 = vpop.f32.mrb[0].mxu0
        %v3450 = vadd.f32 0.0, %v3449
        %v3451 = vpop.f32.mrb[0].mxu0
        %3452 = vmatprep.mubr.f32.mxu0 %v3364
        %3453 = vmatmul.mubr.f32.gmra.mrb[0].mxu0 %v3332
        %v3454 = vpop.f32.mrb[0].mxu0
        %v3455 = vadd.f32 0.0, %v3454
        %v3456 = vpop.f32.mrb[0].mxu0
        %3457 = vmatprep.mubr.f32.mxu0 %v3365
        %3458 = vmatmul.mubr.f32.gmra.mrb[0].mxu0 %v3333
        %v3459 = vpop.f32.mrb[0].mxu0
        %v3460 = vadd.f32 0.0, %v3459
        %v3461 = vpop.f32.mrb[0].mxu0
        %3462 = vdwg.mxu0
        %v3463 = vld [vmem:[%s13] sm:$0xff]
        %v3464 = vld [vmem:[%s13 + $0x8] sm:$0xff]
        %v3465 = vld [vmem:[%s13 + $0x10] sm:$0xff]
        %v3466 = vld [vmem:[%s13 + $0x18] sm:$0xff]
        %3468 = vset.pattern.permute.xlu0 0
        %3469 = vperm.xlu0 %3468, %v3463
        %v3470 = vpop.permute.xlu0 %3469
        %3473 = vset.pattern.permute.xlu0 0
        %3474 = vperm.xlu0 %3473, %v3464
        %v3475 = vpop.permute.xlu0 %3474
        %3478 = vset.pattern.permute.xlu0 0
        %3479 = vperm.xlu0 %3478, %v3465
        %v3480 = vpop.permute.xlu0 %3479
        %3483 = vset.pattern.permute.xlu0 0
        %3484 = vperm.xlu0 %3483, %v3466
        %v3485 = vpop.permute.xlu0 %3484
        %v3487 = vmul.f32 %v3445, %v3470
        %v3488 = vmul.f32 %v3450, %v3475
        %v3489 = vmul.f32 %v3455, %v3480
        %v3490 = vmul.f32 %v3460, %v3485
        %v3491 = vld [vmem:[#allocation9] sm:$0xff]
        %v3492 = vld [vmem:[#allocation9 + $0x8] sm:$0xff]
        %v3493 = vld [vmem:[#allocation9 + $0x10] sm:$0xff]
        %v3494 = vld [vmem:[#allocation9 + $0x18] sm:$0xff]
        %v3495 = vadd.f32 %v3487, %v3491
        %v3496 = vadd.f32 %v3488, %v3492
        %v3497 = vadd.f32 %v3489, %v3493
        %v3498 = vadd.f32 %v3490, %v3494
        %v3499 = vsel %vm1220, %v3495, -inf
        %3500 = vmax.xlane.f32.xlu0 %v3499
        %v3501 = vpop.xlane.xlu0 %3500
        %v3502 = vsel %vm1220, %v3496, -inf
        %3503 = vmax.xlane.f32.xlu0 %v3502
        %v3504 = vpop.xlane.xlu0 %3503
        %v3505 = vsel %vm1220, %v3497, -inf
        %3506 = vmax.xlane.f32.xlu0 %v3505
        %v3507 = vpop.xlane.xlu0 %3506
        %v3508 = vsel %vm1220, %v3498, -inf
        %3509 = vmax.xlane.f32.xlu0 %v3508
        %v3510 = vpop.xlane.xlu0 %3509
        %v3511 = vsub.f32 %v3495, %v3501
        %v3512 = vsub.f32 %v3496, %v3504
        %v3513 = vsub.f32 %v3497, %v3507
        %v3514 = vsub.f32 %v3498, %v3510
        %v3515 = vmul.f32 %v3511, 1.442695
        %v3516 = vpow.pop %v3515
        %v3517 = vmul.f32 %v3512, 1.442695
        %v3518 = vpow.pop %v3517
        %v3519 = vmul.f32 %v3513, 1.442695
        %v3520 = vpow.pop %v3519
        %v3521 = vmul.f32 %v3514, 1.442695
        %v3522 = vpow.pop %v3521
        %v3523 = vsel %vm1220, %v3516, 0.0
        %3524 = vadd.xlane.f32.xlu0 %v3523
        %v3525 = vpop.xlane.xlu0 %3524
        %v3526 = vsel %vm1220, %v3518, 0.0
        %3527 = vadd.xlane.f32.xlu0 %v3526
        %v3528 = vpop.xlane.xlu0 %3527
        %v3529 = vsel %vm1220, %v3520, 0.0
        %3530 = vadd.xlane.f32.xlu0 %v3529
        %v3531 = vpop.xlane.xlu0 %3530
        %v3532 = vsel %vm1220, %v3522, 0.0
        %3533 = vadd.xlane.f32.xlu0 %v3532
        %v3534 = vpop.xlane.xlu0 %3533
        %v3535 = vrcp.pop %v3525
        %v3536 = vmul.f32 %v3516, %v3535
        %v3537 = vrcp.pop %v3528
        %v3538 = vmul.f32 %v3518, %v3537
        %v3539 = vrcp.pop %v3531
        %v3540 = vmul.f32 %v3520, %v3539
        %v3541 = vrcp.pop %v3534
        %v3542 = vmul.f32 %v3522, %v3541
        %3575 = vrot.lane.b32.xlu0 %v2915, 96
        %v3576 = vpop.permute.xlu0 %3575
        %3577 = vrot.lane.b32.xlu0 %v2916, 96
        %v3578 = vpop.permute.xlu0 %3577
        %3579 = vrot.lane.b32.xlu0 %v2917, 96
        %v3580 = vpop.permute.xlu0 %3579
        %3581 = vrot.lane.b32.xlu0 %v2918, 96
        %v3582 = vpop.permute.xlu0 %3581
        %3583 = vrot.lane.b32.xlu0 %v2919, 96
        %v3584 = vpop.permute.xlu0 %3583
        %3585 = vrot.lane.b32.xlu0 %v2920, 96
        %v3586 = vpop.permute.xlu0 %3585
        %3587 = vrot.lane.b32.xlu0 %v2921, 96
        %v3588 = vpop.permute.xlu0 %3587
        %3589 = vrot.lane.b32.xlu0 %v2922, 96
        %v3590 = vpop.permute.xlu0 %3589
        %3591 = vrot.lane.b32.xlu0 %v2923, 96
        %v3592 = vpop.permute.xlu0 %3591
        %3593 = vrot.lane.b32.xlu0 %v2924, 96
        %v3594 = vpop.permute.xlu0 %3593
        %3595 = vrot.lane.b32.xlu0 %v2925, 96
        %v3596 = vpop.permute.xlu0 %3595
        %3597 = vrot.lane.b32.xlu0 %v2926, 96
        %v3598 = vpop.permute.xlu0 %3597
        %3599 = vrot.lane.b32.xlu0 %v2927, 96
        %v3600 = vpop.permute.xlu0 %3599
        %3601 = vrot.lane.b32.xlu0 %v2928, 96
        %v3602 = vpop.permute.xlu0 %3601
        %3603 = vrot.lane.b32.xlu0 %v2929, 96
        %v3604 = vpop.permute.xlu0 %3603
        %3605 = vrot.lane.b32.xlu0 %v2930, 96
        %v3606 = vpop.permute.xlu0 %3605
        %3607 = vrot.lane.b32.xlu0 %v2931, 96
        %v3608 = vpop.permute.xlu0 %3607
        %3609 = vrot.lane.b32.xlu0 %v2932, 96
        %v3610 = vpop.permute.xlu0 %3609
        %3611 = vrot.lane.b32.xlu0 %v2933, 96
        %v3612 = vpop.permute.xlu0 %3611
        %3613 = vrot.lane.b32.xlu0 %v2934, 96
        %v3614 = vpop.permute.xlu0 %3613
        %3615 = vrot.lane.b32.xlu0 %v2935, 96
        %v3616 = vpop.permute.xlu0 %3615
        %3617 = vrot.lane.b32.xlu0 %v2936, 96
        %v3618 = vpop.permute.xlu0 %3617
        %3619 = vrot.lane.b32.xlu0 %v2937, 96
        %v3620 = vpop.permute.xlu0 %3619
        %3621 = vrot.lane.b32.xlu0 %v2938, 96
        %v3622 = vpop.permute.xlu0 %3621
        %3623 = vrot.lane.b32.xlu0 %v2939, 96
        %v3624 = vpop.permute.xlu0 %3623
        %3625 = vrot.lane.b32.xlu0 %v2940, 96
        %v3626 = vpop.permute.xlu0 %3625
        %3627 = vrot.lane.b32.xlu0 %v2941, 96
        %v3628 = vpop.permute.xlu0 %3627
        %3629 = vrot.lane.b32.xlu0 %v2942, 96
        %v3630 = vpop.permute.xlu0 %3629
        %3631 = vrot.lane.b32.xlu0 %v2943, 96
        %v3632 = vpop.permute.xlu0 %3631
        %3633 = vrot.lane.b32.xlu0 %v2944, 96
        %v3634 = vpop.permute.xlu0 %3633
        %3635 = vrot.lane.b32.xlu0 %v2945, 96
        %v3636 = vpop.permute.xlu0 %3635
        %3637 = vrot.lane.b32.xlu0 %v2946, 96
        %v3638 = vpop.permute.xlu0 %3637
        %v3639 = vsel %vm1220, %v3576, 0
        %v3641 = vsel %vm1220, %v3578, 0
        %v3643 = vsel %vm1220, %v3580, 0
        %v3645 = vsel %vm1220, %v3582, 0
        %v3647 = vsel %vm1220, %v3584, 0
        %v3649 = vsel %vm1220, %v3586, 0
        %v3651 = vsel %vm1220, %v3588, 0
        %v3653 = vsel %vm1220, %v3590, 0
        %v3655 = vsel %vm1220, %v3592, 0
        %v3657 = vsel %vm1220, %v3594, 0
        %v3659 = vsel %vm1220, %v3596, 0
        %v3661 = vsel %vm1220, %v3598, 0
        %v3663 = vsel %vm1220, %v3600, 0
        %v3665 = vsel %vm1220, %v3602, 0
        %v3667 = vsel %vm1220, %v3604, 0
        %v3669 = vsel %vm1220, %v3606, 0
        %v3671 = vsel %vm1220, %v3608, 0
        %v3673 = vsel %vm1220, %v3610, 0
        %v3675 = vsel %vm1220, %v3612, 0
        %v3677 = vsel %vm1220, %v3614, 0
        %v3679 = vsel %vm1220, %v3616, 0
        %v3681 = vsel %vm1220, %v3618, 0
        %v3683 = vsel %vm1220, %v3620, 0
        %v3685 = vsel %vm1220, %v3622, 0
        %v3687 = vsel %vm1220, %v3624, 0
        %v3689 = vsel %vm1220, %v3626, 0
        %v3691 = vsel %vm1220, %v3628, 0
        %v3693 = vsel %vm1220, %v3630, 0
        %v3695 = vsel %vm1220, %v3632, 0
        %v3697 = vsel %vm1220, %v3634, 0
        %v3699 = vsel %vm1220, %v3636, 0
        %v3701 = vsel %vm1220, %v3638, 0
        %v3704 = vsel %vm1220, %v3536, 0
        %v3707 = vsel %vm1220, %v3538, 0
        %v3710 = vsel %vm1220, %v3540, 0
        %v3713 = vsel %vm1220, %v3542, 0
        %3715 = vmatprep.subr.mxu0 0.0
        %3716 = vmatpush1.xpose.msra.mxu0 %v3704
        %3717 = vmatprep.subr.mxu0 0.0
        %3718 = vmatpush1.xpose.msra.mxu0 %v3707
        %3719 = vmatprep.subr.mxu0 0.0
        %3720 = vmatpush1.xpose.msra.mxu0 %v3710
        %3721 = vmatprep.subr.mxu0 0.0
        %3722 = vmatpush1.xpose.msra.mxu0 %v3713
        %3723 = vmatprep.subr.mxu0 0.0
        %3724 = vmatpush1.xpose.msra.mxu0 0.0
        %3725 = vmatprep.subr.mxu0 0.0
        %3726 = vmatpush1.xpose.msra.mxu0 0.0
        %3727 = vmatprep.subr.mxu0 0.0
        %3728 = vmatpush1.xpose.msra.mxu0 0.0
        %3729 = vmatprep.subr.mxu0 0.0
        %3730 = vmatpush1.xpose.msra.mxu0 0.0
        %3731 = vmatprep.subr.mxu0 0.0
        %3732 = vmatpush1.xpose.msra.mxu0 0.0
        %3733 = vmatprep.subr.mxu0 0.0
        %3734 = vmatpush1.xpose.msra.mxu0 0.0
        %3735 = vmatprep.subr.mxu0 0.0
        %3736 = vmatpush1.xpose.msra.mxu0 0.0
        %3737 = vmatprep.subr.mxu0 0.0
        %3738 = vmatpush1.xpose.msra.mxu0 0.0
        %3739 = vmatprep.subr.mxu0 0.0
        %3740 = vmatpush1.xpose.msra.mxu0 0.0
        %3741 = vmatprep.subr.mxu0 0.0
        %3742 = vmatpush1.xpose.msra.mxu0 0.0
        %3743 = vmatprep.subr.mxu0 0.0
        %3744 = vmatpush1.xpose.msra.mxu0 0.0
        %3745 = vmatprep.subr.mxu0 0.0
        %3746 = vmatpush1.xpose.msra.mxu0 0.0
        %3747 = vmatprep.subr.mxu0 0.0
        %3748 = vmatpush1.xpose.msra.mxu0 0.0
        %3749 = vmatprep.subr.mxu0 0.0
        %3750 = vmatpush1.xpose.msra.mxu0 0.0
        %3751 = vmatprep.subr.mxu0 0.0
        %3752 = vmatpush1.xpose.msra.mxu0 0.0
        %3753 = vmatprep.subr.mxu0 0.0
        %3754 = vmatpush1.xpose.msra.mxu0 0.0
        %3755 = vmatprep.subr.mxu0 0.0
        %3756 = vmatpush1.xpose.msra.mxu0 0.0
        %3757 = vmatprep.subr.mxu0 0.0
        %3758 = vmatpush1.xpose.msra.mxu0 0.0
        %3759 = vmatprep.subr.mxu0 0.0
        %3760 = vmatpush1.xpose.msra.mxu0 0.0
        %3761 = vmatprep.subr.mxu0 0.0
        %3762 = vmatpush1.xpose.msra.mxu0 0.0
        %3763 = vmatprep.subr.mxu0 0.0
        %3764 = vmatpush1.xpose.msra.mxu0 0.0
        %3765 = vmatprep.subr.mxu0 0.0
        %3766 = vmatpush1.xpose.msra.mxu0 0.0
        %3767 = vmatprep.subr.mxu0 0.0
        %3768 = vmatpush1.xpose.msra.mxu0 0.0
        %3769 = vmatprep.subr.mxu0 0.0
        %3770 = vmatpush1.xpose.msra.mxu0 0.0
        %3771 = vmatprep.subr.mxu0 0.0
        %3772 = vmatpush1.xpose.msra.mxu0 0.0
        %3773 = vmatprep.subr.mxu0 0.0
        %3774 = vmatpush1.xpose.msra.mxu0 0.0
        %3775 = vmatprep.subr.mxu0 0.0
        %3776 = vmatpush1.xpose.msra.mxu0 0.0
        %3777 = vmatprep.subr.mxu0 0.0
        %3778 = vmatpush1.xpose.msra.mxu0 0.0
        %3779 = vmatprep.mubr.f32.mxu0 0.0
        %3780 = vmatmul.mubr.f32.gmra.mrb[0].mxu0 %v3639
        %v3781 = vpop.f32.mrb[0].mxu0
        %v3782 = vadd.f32 0.0, %v3781
        %v3783 = vpop.f32.mrb[0].mxu0
        %3784 = vmatprep.mubr.f32.mxu0 0.0
        %3785 = vmatmul.mubr.f32.gmra.mrb[0].mxu0 %v3641
        %v3786 = vpop.f32.mrb[0].mxu0
        %v3787 = vadd.f32 0.0, %v3786
        %v3788 = vpop.f32.mrb[0].mxu0
        %3789 = vmatprep.mubr.f32.mxu0 0.0
        %3790 = vmatmul.mubr.f32.gmra.mrb[0].mxu0 %v3643
        %v3791 = vpop.f32.mrb[0].mxu0
        %v3792 = vadd.f32 0.0, %v3791
        %v3793 = vpop.f32.mrb[0].mxu0
        %3794 = vmatprep.mubr.f32.mxu0 0.0
        %3795 = vmatmul.mubr.f32.gmra.mrb[0].mxu0 %v3645
        %v3796 = vpop.f32.mrb[0].mxu0
        %v3797 = vadd.f32 0.0, %v3796
        %v3798 = vpop.f32.mrb[0].mxu0
        %3799 = vmatprep.mubr.f32.mxu0 0.0
        %3800 = vmatmul.mubr.f32.gmra.mrb[0].mxu0 %v3647
        %v3801 = vpop.f32.mrb[0].mxu0
        %v3802 = vadd.f32 0.0, %v3801
        %v3803 = vpop.f32.mrb[0].mxu0
        %3804 = vmatprep.mubr.f32.mxu0 0.0
        %3805 = vmatmul.mubr.f32.gmra.mrb[0].mxu0 %v3649
        %v3806 = vpop.f32.mrb[0].mxu0
        %v3807 = vadd.f32 0.0, %v3806
        %v3808 = vpop.f32.mrb[0].mxu0
        %3809 = vmatprep.mubr.f32.mxu0 0.0
        %3810 = vmatmul.mubr.f32.gmra.mrb[0].mxu0 %v3651
        %v3811 = vpop.f32.mrb[0].mxu0
        %v3812 = vadd.f32 0.0, %v3811
        %v3813 = vpop.f32.mrb[0].mxu0
        %3814 = vmatprep.mubr.f32.mxu0 0.0
        %3815 = vmatmul.mubr.f32.gmra.mrb[0].mxu0 %v3653
        %v3816 = vpop.f32.mrb[0].mxu0
        %v3817 = vadd.f32 0.0, %v3816
        %v3818 = vpop.f32.mrb[0].mxu0
        %3819 = vmatprep.mubr.f32.mxu0 0.0
        %3820 = vmatmul.mubr.f32.gmra.mrb[0].mxu0 %v3655
        %v3821 = vpop.f32.mrb[0].mxu0
        %v3822 = vadd.f32 0.0, %v3821
        %v3823 = vpop.f32.mrb[0].mxu0
        %3824 = vmatprep.mubr.f32.mxu0 0.0
        %3825 = vmatmul.mubr.f32.gmra.mrb[0].mxu0 %v3657
        %v3826 = vpop.f32.mrb[0].mxu0
        %v3827 = vadd.f32 0.0, %v3826
        %v3828 = vpop.f32.mrb[0].mxu0
        %3829 = vmatprep.mubr.f32.mxu0 0.0
        %3830 = vmatmul.mubr.f32.gmra.mrb[0].mxu0 %v3659
        %v3831 = vpop.f32.mrb[0].mxu0
        %v3832 = vadd.f32 0.0, %v3831
        %v3833 = vpop.f32.mrb[0].mxu0
        %3834 = vmatprep.mubr.f32.mxu0 0.0
        %3835 = vmatmul.mubr.f32.gmra.mrb[0].mxu0 %v3661
        %v3836 = vpop.f32.mrb[0].mxu0
        %v3837 = vadd.f32 0.0, %v3836
        %v3838 = vpop.f32.mrb[0].mxu0
        %3839 = vmatprep.mubr.f32.mxu0 0.0
        %3840 = vmatmul.mubr.f32.gmra.mrb[0].mxu0 %v3663
        %v3841 = vpop.f32.mrb[0].mxu0
        %v3842 = vadd.f32 0.0, %v3841
        %v3843 = vpop.f32.mrb[0].mxu0
        %3844 = vmatprep.mubr.f32.mxu0 0.0
        %3845 = vmatmul.mubr.f32.gmra.mrb[0].mxu0 %v3665
        %v3846 = vpop.f32.mrb[0].mxu0
        %v3847 = vadd.f32 0.0, %v3846
        %v3848 = vpop.f32.mrb[0].mxu0
        %3849 = vmatprep.mubr.f32.mxu0 0.0
        %3850 = vmatmul.mubr.f32.gmra.mrb[0].mxu0 %v3667
        %v3851 = vpop.f32.mrb[0].mxu0
        %v3852 = vadd.f32 0.0, %v3851
        %v3853 = vpop.f32.mrb[0].mxu0
        %3854 = vmatprep.mubr.f32.mxu0 0.0
        %3855 = vmatmul.mubr.f32.gmra.mrb[0].mxu0 %v3669
        %v3856 = vpop.f32.mrb[0].mxu0
        %v3857 = vadd.f32 0.0, %v3856
        %v3858 = vpop.f32.mrb[0].mxu0
        %3859 = vmatprep.mubr.f32.mxu0 0.0
        %3860 = vmatmul.mubr.f32.gmra.mrb[0].mxu0 %v3671
        %v3861 = vpop.f32.mrb[0].mxu0
        %v3862 = vadd.f32 0.0, %v3861
        %v3863 = vpop.f32.mrb[0].mxu0
        %3864 = vmatprep.mubr.f32.mxu0 0.0
        %3865 = vmatmul.mubr.f32.gmra.mrb[0].mxu0 %v3673
        %v3866 = vpop.f32.mrb[0].mxu0
        %v3867 = vadd.f32 0.0, %v3866
        %v3868 = vpop.f32.mrb[0].mxu0
        %3869 = vmatprep.mubr.f32.mxu0 0.0
        %3870 = vmatmul.mubr.f32.gmra.mrb[0].mxu0 %v3675
        %v3871 = vpop.f32.mrb[0].mxu0
        %v3872 = vadd.f32 0.0, %v3871
        %v3873 = vpop.f32.mrb[0].mxu0
        %3874 = vmatprep.mubr.f32.mxu0 0.0
        %3875 = vmatmul.mubr.f32.gmra.mrb[0].mxu0 %v3677
        %v3876 = vpop.f32.mrb[0].mxu0
        %v3877 = vadd.f32 0.0, %v3876
        %v3878 = vpop.f32.mrb[0].mxu0
        %3879 = vmatprep.mubr.f32.mxu0 0.0
        %3880 = vmatmul.mubr.f32.gmra.mrb[0].mxu0 %v3679
        %v3881 = vpop.f32.mrb[0].mxu0
        %v3882 = vadd.f32 0.0, %v3881
        %v3883 = vpop.f32.mrb[0].mxu0
        %3884 = vmatprep.mubr.f32.mxu0 0.0
        %3885 = vmatmul.mubr.f32.gmra.mrb[0].mxu0 %v3681
        %v3886 = vpop.f32.mrb[0].mxu0
        %v3887 = vadd.f32 0.0, %v3886
        %v3888 = vpop.f32.mrb[0].mxu0
        %3889 = vmatprep.mubr.f32.mxu0 0.0
        %3890 = vmatmul.mubr.f32.gmra.mrb[0].mxu0 %v3683
        %v3891 = vpop.f32.mrb[0].mxu0
        %v3892 = vadd.f32 0.0, %v3891
        %v3893 = vpop.f32.mrb[0].mxu0
        %3894 = vmatprep.mubr.f32.mxu0 0.0
        %3895 = vmatmul.mubr.f32.gmra.mrb[0].mxu0 %v3685
        %v3896 = vpop.f32.mrb[0].mxu0
        %v3897 = vadd.f32 0.0, %v3896
        %v3898 = vpop.f32.mrb[0].mxu0
        %3899 = vmatprep.mubr.f32.mxu0 0.0
        %3900 = vmatmul.mubr.f32.gmra.mrb[0].mxu0 %v3687
        %v3901 = vpop.f32.mrb[0].mxu0
        %v3902 = vadd.f32 0.0, %v3901
        %v3903 = vpop.f32.mrb[0].mxu0
        %3904 = vmatprep.mubr.f32.mxu0 0.0
        %3905 = vmatmul.mubr.f32.gmra.mrb[0].mxu0 %v3689
        %v3906 = vpop.f32.mrb[0].mxu0
        %v3907 = vadd.f32 0.0, %v3906
        %v3908 = vpop.f32.mrb[0].mxu0
        %3909 = vmatprep.mubr.f32.mxu0 0.0
        %3910 = vmatmul.mubr.f32.gmra.mrb[0].mxu0 %v3691
        %v3911 = vpop.f32.mrb[0].mxu0
        %v3912 = vadd.f32 0.0, %v3911
        %v3913 = vpop.f32.mrb[0].mxu0
        %3914 = vmatprep.mubr.f32.mxu0 0.0
        %3915 = vmatmul.mubr.f32.gmra.mrb[0].mxu0 %v3693
        %v3916 = vpop.f32.mrb[0].mxu0
        %v3917 = vadd.f32 0.0, %v3916
        %v3918 = vpop.f32.mrb[0].mxu0
        %3919 = vmatprep.mubr.f32.mxu0 0.0
        %3920 = vmatmul.mubr.f32.gmra.mrb[0].mxu0 %v3695
        %v3921 = vpop.f32.mrb[0].mxu0
        %v3922 = vadd.f32 0.0, %v3921
        %v3923 = vpop.f32.mrb[0].mxu0
        %3924 = vmatprep.mubr.f32.mxu0 0.0
        %3925 = vmatmul.mubr.f32.gmra.mrb[0].mxu0 %v3697
        %v3926 = vpop.f32.mrb[0].mxu0
        %v3927 = vadd.f32 0.0, %v3926
        %v3928 = vpop.f32.mrb[0].mxu0
        %3929 = vmatprep.mubr.f32.mxu0 0.0
        %3930 = vmatmul.mubr.f32.gmra.mrb[0].mxu0 %v3699
        %v3931 = vpop.f32.mrb[0].mxu0
        %v3932 = vadd.f32 0.0, %v3931
        %v3933 = vpop.f32.mrb[0].mxu0
        %3934 = vmatprep.mubr.f32.mxu0 0.0
        %3935 = vmatmul.mubr.f32.gmra.mrb[0].mxu0 %v3701
        %v3936 = vpop.f32.mrb[0].mxu0
        %v3937 = vadd.f32 0.0, %v3936
        %v3938 = vpop.f32.mrb[0].mxu0
        %3939 = vdwg.mxu0
        %v3940 = vld [vmem:[%s15] sm:$0xff]
        %v3941 = vld [vmem:[%s15 + $0x8] sm:$0xff]
        %v3942 = vld [vmem:[%s15 + $0x10] sm:$0xff]
        %v3943 = vld [vmem:[%s15 + $0x18] sm:$0xff]
        %v3945 = vsel %vm1220, %v3940, 0
        %v3948 = vsel %vm1220, %v3941, 0
        %v3951 = vsel %vm1220, %v3942, 0
        %v3954 = vsel %vm1220, %v3943, 0
        %v3957 = vsel %vm1220, %v3782, 0
        %v3960 = vsel %vm1220, %v3787, 0
        %v3963 = vsel %vm1220, %v3792, 0
        %v3966 = vsel %vm1220, %v3797, 0
        %v3969 = vsel %vm1220, %v3802, 0
        %v3972 = vsel %vm1220, %v3807, 0
        %v3975 = vsel %vm1220, %v3812, 0
        %v3978 = vsel %vm1220, %v3817, 0
        %v3981 = vsel %vm1220, %v3822, 0
        %v3984 = vsel %vm1220, %v3827, 0
        %v3987 = vsel %vm1220, %v3832, 0
        %v3990 = vsel %vm1220, %v3837, 0
        %v3993 = vsel %vm1220, %v3842, 0
        %v3996 = vsel %vm1220, %v3847, 0
        %v3999 = vsel %vm1220, %v3852, 0
        %v4002 = vsel %vm1220, %v3857, 0
        %v4005 = vsel %vm1220, %v3862, 0
        %v4008 = vsel %vm1220, %v3867, 0
        %v4011 = vsel %vm1220, %v3872, 0
        %v4014 = vsel %vm1220, %v3877, 0
        %v4017 = vsel %vm1220, %v3882, 0
        %v4020 = vsel %vm1220, %v3887, 0
        %v4023 = vsel %vm1220, %v3892, 0
        %v4026 = vsel %vm1220, %v3897, 0
        %v4029 = vsel %vm1220, %v3902, 0
        %v4032 = vsel %vm1220, %v3907, 0
        %v4035 = vsel %vm1220, %v3912, 0
        %v4038 = vsel %vm1220, %v3917, 0
        %v4041 = vsel %vm1220, %v3922, 0
        %v4044 = vsel %vm1220, %v3927, 0
        %v4047 = vsel %vm1220, %v3932, 0
        %v4050 = vsel %vm1220, %v3937, 0
        %4052 = vmatprep.subr.mxu0 0.0
        %4053 = vmatpush1.xpose.msra.mxu0 %v3957
        %4054 = vmatprep.subr.mxu0 0.0
        %4055 = vmatpush1.xpose.msra.mxu0 %v3960
        %4056 = vmatprep.subr.mxu0 0.0
        %4057 = vmatpush1.xpose.msra.mxu0 %v3963
        %4058 = vmatprep.subr.mxu0 0.0
        %4059 = vmatpush1.xpose.msra.mxu0 %v3966
        %4060 = vmatprep.subr.mxu0 0.0
        %4061 = vmatpush1.xpose.msra.mxu0 %v3969
        %4062 = vmatprep.subr.mxu0 0.0
        %4063 = vmatpush1.xpose.msra.mxu0 %v3972
        %4064 = vmatprep.subr.mxu0 0.0
        %4065 = vmatpush1.xpose.msra.mxu0 %v3975
        %4066 = vmatprep.subr.mxu0 0.0
        %4067 = vmatpush1.xpose.msra.mxu0 %v3978
        %4068 = vmatprep.subr.mxu0 0.0
        %4069 = vmatpush1.xpose.msra.mxu0 %v3981
        %4070 = vmatprep.subr.mxu0 0.0
        %4071 = vmatpush1.xpose.msra.mxu0 %v3984
        %4072 = vmatprep.subr.mxu0 0.0
        %4073 = vmatpush1.xpose.msra.mxu0 %v3987
        %4074 = vmatprep.subr.mxu0 0.0
        %4075 = vmatpush1.xpose.msra.mxu0 %v3990
        %4076 = vmatprep.subr.mxu0 0.0
        %4077 = vmatpush1.xpose.msra.mxu0 %v3993
        %4078 = vmatprep.subr.mxu0 0.0
        %4079 = vmatpush1.xpose.msra.mxu0 %v3996
        %4080 = vmatprep.subr.mxu0 0.0
        %4081 = vmatpush1.xpose.msra.mxu0 %v3999
        %4082 = vmatprep.subr.mxu0 0.0
        %4083 = vmatpush1.xpose.msra.mxu0 %v4002
        %4084 = vmatprep.subr.mxu0 0.0
        %4085 = vmatpush1.xpose.msra.mxu0 %v4005
        %4086 = vmatprep.subr.mxu0 0.0
        %4087 = vmatpush1.xpose.msra.mxu0 %v4008
        %4088 = vmatprep.subr.mxu0 0.0
        %4089 = vmatpush1.xpose.msra.mxu0 %v4011
        %4090 = vmatprep.subr.mxu0 0.0
        %4091 = vmatpush1.xpose.msra.mxu0 %v4014
        %4092 = vmatprep.subr.mxu0 0.0
        %4093 = vmatpush1.xpose.msra.mxu0 %v4017
        %4094 = vmatprep.subr.mxu0 0.0
        %4095 = vmatpush1.xpose.msra.mxu0 %v4020
        %4096 = vmatprep.subr.mxu0 0.0
        %4097 = vmatpush1.xpose.msra.mxu0 %v4023
        %4098 = vmatprep.subr.mxu0 0.0
        %4099 = vmatpush1.xpose.msra.mxu0 %v4026
        %4100 = vmatprep.subr.mxu0 0.0
        %4101 = vmatpush1.xpose.msra.mxu0 %v4029
        %4102 = vmatprep.subr.mxu0 0.0
        %4103 = vmatpush1.xpose.msra.mxu0 %v4032
        %4104 = vmatprep.subr.mxu0 0.0
        %4105 = vmatpush1.xpose.msra.mxu0 %v4035
        %4106 = vmatprep.subr.mxu0 0.0
        %4107 = vmatpush1.xpose.msra.mxu0 %v4038
        %4108 = vmatprep.subr.mxu0 0.0
        %4109 = vmatpush1.xpose.msra.mxu0 %v4041
        %4110 = vmatprep.subr.mxu0 0.0
        %4111 = vmatpush1.xpose.msra.mxu0 %v4044
        %4112 = vmatprep.subr.mxu0 0.0
        %4113 = vmatpush1.xpose.msra.mxu0 %v4047
        %4114 = vmatprep.subr.mxu0 0.0
        %4115 = vmatpush1.xpose.msra.mxu0 %v4050
        %4116 = vmatprep.mubr.f32.mxu0 0.0
        %4117 = vmatmul.mubr.f32.gmra.mrb[0].mxu0 %v3945
        %v4118 = vpop.f32.mrb[0].mxu0
        %v4119 = vadd.f32 0.0, %v4118
        %v4120 = vpop.f32.mrb[0].mxu0
        %v4121 = vadd.f32 0.0, %v4120
        %4122 = vmatprep.mubr.f32.mxu0 0.0
        %4123 = vmatmul.mubr.f32.gmra.mrb[0].mxu0 %v3948
        %v4124 = vpop.f32.mrb[0].mxu0
        %v4125 = vadd.f32 0.0, %v4124
        %v4126 = vpop.f32.mrb[0].mxu0
        %v4127 = vadd.f32 0.0, %v4126
        %4128 = vmatprep.mubr.f32.mxu0 0.0
        %4129 = vmatmul.mubr.f32.gmra.mrb[0].mxu0 %v3951
        %v4130 = vpop.f32.mrb[0].mxu0
        %v4131 = vadd.f32 0.0, %v4130
        %v4132 = vpop.f32.mrb[0].mxu0
        %v4133 = vadd.f32 0.0, %v4132
        %4134 = vmatprep.mubr.f32.mxu0 0.0
        %4135 = vmatmul.mubr.f32.gmra.mrb[0].mxu0 %v3954
        %v4136 = vpop.f32.mrb[0].mxu0
        %v4137 = vadd.f32 0.0, %v4136
        %v4138 = vpop.f32.mrb[0].mxu0
        %v4139 = vadd.f32 0.0, %v4138
        %4140 = vdwg.mxu0
        %v4141 = vadd.f32 %v867, %v4119
        %v4142 = vadd.f32 %v868, %v4121
        %v4143 = vadd.f32 %v869, %v4125
        %v4144 = vadd.f32 %v870, %v4127
        %v4145 = vadd.f32 %v871, %v4131
        %v4146 = vadd.f32 %v872, %v4133
        %v4147 = vadd.f32 %v873, %v4137
        %v4148 = vadd.f32 %v874, %v4139
        %v4149 = vld [vmem:[%s16] sm:$0xff]
        %v4150 = vld [vmem:[%s16 + $0x8] sm:$0xff]
        %v4151 = vld [vmem:[%s16 + $0x10] sm:$0xff]
        %v4152 = vld [vmem:[%s16 + $0x18] sm:$0xff]
        %4154 = vset.pattern.permute.xlu0 0
        %4155 = vperm.xlu0 %4154, %v4149
        %v4156 = vpop.permute.xlu0 %4155
        %4159 = vset.pattern.permute.xlu0 0
        %4160 = vperm.xlu0 %4159, %v4150
        %v4161 = vpop.permute.xlu0 %4160
        %4164 = vset.pattern.permute.xlu0 0
        %4165 = vperm.xlu0 %4164, %v4151
        %v4166 = vpop.permute.xlu0 %4165
        %4169 = vset.pattern.permute.xlu0 0
        %4170 = vperm.xlu0 %4169, %v4152
        %v4171 = vpop.permute.xlu0 %4170
        %v4173 = vadd.f32 %v4141, %v4156
        %v4174 = vadd.f32 %v4142, %v4156
        %v4175 = vadd.f32 %v4143, %v4161
        %v4176 = vadd.f32 %v4144, %v4161
        %v4177 = vadd.f32 %v4145, %v4166
        %v4178 = vadd.f32 %v4146, %v4166
        %v4179 = vadd.f32 %v4147, %v4171
        %v4180 = vadd.f32 %v4148, %v4171
        %v4181 = vadd.f32 %v4173, %v4175
        %v4182 = vadd.f32 %v4181, %v4177
        %v4183 = vadd.f32 %v4182, %v4179
        %v4184 = vrot.slane %v4183, 4
        %v4185 = vadd.f32 %v4183, %v4184
        %v4186 = vrot.slane %v4185, 2
        %v4187 = vadd.f32 %v4185, %v4186
        %v4188 = vrot.slane %v4187, 1
        %v4189 = vadd.f32 %v4187, %v4188
        %v4190 = vadd.f32 %v4174, %v4176
        %v4191 = vadd.f32 %v4190, %v4178
        %v4192 = vadd.f32 %v4191, %v4180
        %v4193 = vrot.slane %v4192, 4
        %v4194 = vadd.f32 %v4192, %v4193
        %v4195 = vrot.slane %v4194, 2
        %v4196 = vadd.f32 %v4194, %v4195
        %v4197 = vrot.slane %v4196, 1
        %v4198 = vadd.f32 %v4196, %v4197
        %v4199 = vmul.f32 %v4189, %v901
        %v4200 = vmul.f32 %v4198, %v901
        %v4201 = vsub.f32 %v4173, %v4199
        %v4202 = vsub.f32 %v4174, %v4200
        %v4203 = vsub.f32 %v4175, %v4199
        %v4204 = vsub.f32 %v4176, %v4200
        %v4205 = vsub.f32 %v4177, %v4199
        %v4206 = vsub.f32 %v4178, %v4200
        %v4207 = vsub.f32 %v4179, %v4199
        %v4208 = vsub.f32 %v4180, %v4200
        %v4209 = vmul.f32 %v4201, %v4201
        %v4210 = vmul.f32 %v4202, %v4202
        %v4211 = vmul.f32 %v4203, %v4203
        %v4212 = vmul.f32 %v4204, %v4204
        %v4213 = vmul.f32 %v4205, %v4205
        %v4214 = vmul.f32 %v4206, %v4206
        %v4215 = vmul.f32 %v4207, %v4207
        %v4216 = vmul.f32 %v4208, %v4208
        %v4217 = vadd.f32 %v4209, %v4211
        %v4218 = vadd.f32 %v4217, %v4213
        %v4219 = vadd.f32 %v4218, %v4215
        %v4220 = vrot.slane %v4219, 4
        %v4221 = vadd.f32 %v4219, %v4220
        %v4222 = vrot.slane %v4221, 2
        %v4223 = vadd.f32 %v4221, %v4222
        %v4224 = vrot.slane %v4223, 1
        %v4225 = vadd.f32 %v4223, %v4224
        %v4226 = vadd.f32 %v4210, %v4212
        %v4227 = vadd.f32 %v4226, %v4214
        %v4228 = vadd.f32 %v4227, %v4216
        %v4229 = vrot.slane %v4228, 4
        %v4230 = vadd.f32 %v4228, %v4229
        %v4231 = vrot.slane %v4230, 2
        %v4232 = vadd.f32 %v4230, %v4231
        %v4233 = vrot.slane %v4232, 1
        %v4234 = vadd.f32 %v4232, %v4233
        %v4235 = vmul.f32 %v4225, %v901
        %v4236 = vmul.f32 %v4234, %v901
        %v4237 = vadd.f32 %v4235, 1e-05
        %v4238 = vadd.f32 %v4236, 1e-05
        %v4239 = vrsqrt.pop %v4237
        %v4240 = vrsqrt.pop %v4238
        %v4241 = vmul.f32 %v4201, %v4239
        %v4242 = vmul.f32 %v4202, %v4240
        %v4243 = vmul.f32 %v4203, %v4239
        %v4244 = vmul.f32 %v4204, %v4240
        %v4245 = vmul.f32 %v4205, %v4239
        %v4246 = vmul.f32 %v4206, %v4240
        %v4247 = vmul.f32 %v4207, %v4239
        %v4248 = vmul.f32 %v4208, %v4240
        %v4249 = vld [vmem:[%s4] sm:$0xff]
        %v4250 = vld [vmem:[%s4 + $0x8] sm:$0xff]
        %v4251 = vld [vmem:[%s4 + $0x10] sm:$0xff]
        %v4252 = vld [vmem:[%s4 + $0x18] sm:$0xff]
        %4254 = vset.pattern.permute.xlu0 0
        %4255 = vperm.xlu0 %4254, %v4249
        %v4256 = vpop.permute.xlu0 %4255
        %4259 = vset.pattern.permute.xlu0 0
        %4260 = vperm.xlu0 %4259, %v4250
        %v4261 = vpop.permute.xlu0 %4260
        %4264 = vset.pattern.permute.xlu0 0
        %4265 = vperm.xlu0 %4264, %v4251
        %v4266 = vpop.permute.xlu0 %4265
        %4269 = vset.pattern.permute.xlu0 0
        %4270 = vperm.xlu0 %4269, %v4252
        %v4271 = vpop.permute.xlu0 %4270
        %v4273 = vmul.f32 %v4241, %v4256
        %v4274 = vmul.f32 %v4242, %v4256
        %v4275 = vmul.f32 %v4243, %v4261
        %v4276 = vmul.f32 %v4244, %v4261
        %v4277 = vmul.f32 %v4245, %v4266
        %v4278 = vmul.f32 %v4246, %v4266
        %v4279 = vmul.f32 %v4247, %v4271
        %v4280 = vmul.f32 %v4248, %v4271
        %v4281 = vld [vmem:[%s5] sm:$0xff]
        %v4282 = vld [vmem:[%s5 + $0x8] sm:$0xff]
        %v4283 = vld [vmem:[%s5 + $0x10] sm:$0xff]
        %v4284 = vld [vmem:[%s5 + $0x18] sm:$0xff]
        %4286 = vset.pattern.permute.xlu0 0
        %4287 = vperm.xlu0 %4286, %v4281
        %v4288 = vpop.permute.xlu0 %4287
        %4291 = vset.pattern.permute.xlu0 0
        %4292 = vperm.xlu0 %4291, %v4282
        %v4293 = vpop.permute.xlu0 %4292
        %4296 = vset.pattern.permute.xlu0 0
        %4297 = vperm.xlu0 %4296, %v4283
        %v4298 = vpop.permute.xlu0 %4297
        %4301 = vset.pattern.permute.xlu0 0
        %4302 = vperm.xlu0 %4301, %v4284
        %v4303 = vpop.permute.xlu0 %4302
        %v4305 = vadd.f32 %v4273, %v4288
        %v4306 = vadd.f32 %v4274, %v4288
        %v4307 = vadd.f32 %v4275, %v4293
        %v4308 = vadd.f32 %v4276, %v4293
        %v4309 = vadd.f32 %v4277, %v4298
        %v4310 = vadd.f32 %v4278, %v4298
        %v4311 = vadd.f32 %v4279, %v4303
        %v4312 = vadd.f32 %v4280, %v4303
        %v4313 = vld [vmem:[#allocation11] sm:$0xff]
        %v4314 = vld [vmem:[#allocation11 + $0x8] sm:$0xff]
        %v4315 = vld [vmem:[#allocation11 + $0x10] sm:$0xff]
        %v4316 = vld [vmem:[#allocation11 + $0x18] sm:$0xff]
        %v4317 = vld [vmem:[#allocation12] sm:$0x1]
        %v4319 = vlaneseq
        %v4320 = vshrl.u32 %v4319, 7
        %v4321 = vsub.s32 0, %v4320
        %v4322 = vrot.slane %v4317, %v4321
        %4324 = vxpose.xlu0.b32.start [1/16] %v4305, 128
        %4325 = vxpose.xlu0.b32.cont [2/16] %v4307, 128
        %4326 = vxpose.xlu0.b32.cont [3/16] %v4309, 128
        %4327 = vxpose.xlu0.b32.cont [4/16] %v4311, 128
        %4328 = vxpose.xlu0.b32.cont [5/16] 0.0, 128
        %4329 = vxpose.xlu0.b32.cont [6/16] 0.0, 128
        %4330 = vxpose.xlu0.b32.cont [7/16] 0.0, 128
        %4331 = vxpose.xlu0.b32.cont [8/16] 0.0, 128
        %4332 = vxpose.xlu0.b32.cont [9/16] 0.0, 128
        %4333 = vxpose.xlu0.b32.cont [10/16] 0.0, 128
        %4334 = vxpose.xlu0.b32.cont [11/16] 0.0, 128
        %4335 = vxpose.xlu0.b32.cont [12/16] 0.0, 128
        %4336 = vxpose.xlu0.b32.cont [13/16] 0.0, 128
        %4337 = vxpose.xlu0.b32.cont [14/16] 0.0, 128
        %4338 = vxpose.xlu0.b32.cont [15/16] 0.0, 128
        %4339 = vxpose.xlu0.b32.end [16/16] 0.0, 128
        %v4340 = vpop.trf.xlu0
        %v4341 = vpop.trf.xlu0
        %v4342 = vpop.trf.xlu0
        %v4343 = vpop.trf.xlu0
        %v4344 = vpop.trf.xlu0
        %v4345 = vpop.trf.xlu0
        %v4346 = vpop.trf.xlu0
        %v4347 = vpop.trf.xlu0
        %v4348 = vpop.trf.xlu0
        %v4349 = vpop.trf.xlu0
        %v4350 = vpop.trf.xlu0
        %v4351 = vpop.trf.xlu0
        %v4352 = vpop.trf.xlu0
        %v4353 = vpop.trf.xlu0
        %v4354 = vpop.trf.xlu0
        %v4355 = vpop.trf.xlu0
        %4356 = vxpose.xlu0.b32.start [1/16] %v4306, 128
        %4357 = vxpose.xlu0.b32.cont [2/16] %v4308, 128
        %4358 = vxpose.xlu0.b32.cont [3/16] %v4310, 128
        %4359 = vxpose.xlu0.b32.cont [4/16] %v4312, 128
        %4360 = vxpose.xlu0.b32.cont [5/16] 0.0, 128
        %4361 = vxpose.xlu0.b32.cont [6/16] 0.0, 128
        %4362 = vxpose.xlu0.b32.cont [7/16] 0.0, 128
        %4363 = vxpose.xlu0.b32.cont [8/16] 0.0, 128
        %4364 = vxpose.xlu0.b32.cont [9/16] 0.0, 128
        %4365 = vxpose.xlu0.b32.cont [10/16] 0.0, 128
        %4366 = vxpose.xlu0.b32.cont [11/16] 0.0, 128
        %4367 = vxpose.xlu0.b32.cont [12/16] 0.0, 128
        %4368 = vxpose.xlu0.b32.cont [13/16] 0.0, 128
        %4369 = vxpose.xlu0.b32.cont [14/16] 0.0, 128
        %4370 = vxpose.xlu0.b32.cont [15/16] 0.0, 128
        %4371 = vxpose.xlu0.b32.end [16/16] 0.0, 128
        %v4372 = vpop.trf.xlu0
        %v4373 = vpop.trf.xlu0
        %v4374 = vpop.trf.xlu0
        %v4375 = vpop.trf.xlu0
        %v4376 = vpop.trf.xlu0
        %v4377 = vpop.trf.xlu0
        %v4378 = vpop.trf.xlu0
        %v4379 = vpop.trf.xlu0
        %v4380 = vpop.trf.xlu0
        %v4381 = vpop.trf.xlu0
        %v4382 = vpop.trf.xlu0
        %v4383 = vpop.trf.xlu0
        %v4384 = vpop.trf.xlu0
        %v4385 = vpop.trf.xlu0
        %v4386 = vpop.trf.xlu0
        %v4387 = vpop.trf.xlu0
        %v4389 = vsel %vm1220, %v4340, 0
        %v4392 = vsel %vm1220, %v4341, 0
        %v4395 = vsel %vm1220, %v4342, 0
        %v4398 = vsel %vm1220, %v4343, 0
        %v4401 = vsel %vm1220, %v4344, 0
        %v4404 = vsel %vm1220, %v4345, 0
        %v4407 = vsel %vm1220, %v4346, 0
        %v4410 = vsel %vm1220, %v4347, 0
        %v4413 = vsel %vm1220, %v4348, 0
        %v4416 = vsel %vm1220, %v4349, 0
        %v4419 = vsel %vm1220, %v4350, 0
        %v4422 = vsel %vm1220, %v4351, 0
        %v4425 = vsel %vm1220, %v4352, 0
        %v4428 = vsel %vm1220, %v4353, 0
        %v4431 = vsel %vm1220, %v4354, 0
        %v4434 = vsel %vm1220, %v4355, 0
        %v4437 = vsel %vm1220, %v4372, 0
        %v4440 = vsel %vm1220, %v4373, 0
        %v4443 = vsel %vm1220, %v4374, 0
        %v4446 = vsel %vm1220, %v4375, 0
        %v4449 = vsel %vm1220, %v4376, 0
        %v4452 = vsel %vm1220, %v4377, 0
        %v4455 = vsel %vm1220, %v4378, 0
        %v4458 = vsel %vm1220, %v4379, 0
        %v4461 = vsel %vm1220, %v4380, 0
        %v4464 = vsel %vm1220, %v4381, 0
        %v4467 = vsel %vm1220, %v4382, 0
        %v4470 = vsel %vm1220, %v4383, 0
        %v4473 = vsel %vm1220, %v4384, 0
        %v4476 = vsel %vm1220, %v4385, 0
        %v4479 = vsel %vm1220, %v4386, 0
        %v4482 = vsel %vm1220, %v4387, 0
        %4484 = vmatprep.subr.mxu0 0.0
        %4485 = vmatpush1.msra.mxu0 %v4313
        %4486 = vmatprep.subr.mxu0 0.0
        %4487 = vmatpush1.msra.mxu0 %v4314
        %4488 = vmatprep.subr.mxu0 0.0
        %4489 = vmatpush1.msra.mxu0 %v4315
        %4490 = vmatprep.subr.mxu0 0.0
        %4491 = vmatpush1.msra.mxu0 %v4316
        %4492 = vmatprep.subr.mxu0 0.0
        %4493 = vmatpush1.msra.mxu0 0.0
        %4494 = vmatprep.subr.mxu0 0.0
        %4495 = vmatpush1.msra.mxu0 0.0
        %4496 = vmatprep.subr.mxu0 0.0
        %4497 = vmatpush1.msra.mxu0 0.0
        %4498 = vmatprep.subr.mxu0 0.0
        %4499 = vmatpush1.msra.mxu0 0.0
        %4500 = vmatprep.subr.mxu0 0.0
        %4501 = vmatpush1.msra.mxu0 0.0
        %4502 = vmatprep.subr.mxu0 0.0
        %4503 = vmatpush1.msra.mxu0 0.0
        %4504 = vmatprep.subr.mxu0 0.0
        %4505 = vmatpush1.msra.mxu0 0.0
        %4506 = vmatprep.subr.mxu0 0.0
        %4507 = vmatpush1.msra.mxu0 0.0
        %4508 = vmatprep.subr.mxu0 0.0
        %4509 = vmatpush1.msra.mxu0 0.0
        %4510 = vmatprep.subr.mxu0 0.0
        %4511 = vmatpush1.msra.mxu0 0.0
        %4512 = vmatprep.subr.mxu0 0.0
        %4513 = vmatpush1.msra.mxu0 0.0
        %4514 = vmatprep.subr.mxu0 0.0
        %4515 = vmatpush1.msra.mxu0 0.0
        %4516 = vmatprep.subr.mxu0 0.0
        %4517 = vmatpush1.msra.mxu0 0.0
        %4518 = vmatprep.subr.mxu0 0.0
        %4519 = vmatpush1.msra.mxu0 0.0
        %4520 = vmatprep.subr.mxu0 0.0
        %4521 = vmatpush1.msra.mxu0 0.0
        %4522 = vmatprep.subr.mxu0 0.0
        %4523 = vmatpush1.msra.mxu0 0.0
        %4524 = vmatprep.subr.mxu0 0.0
        %4525 = vmatpush1.msra.mxu0 0.0
        %4526 = vmatprep.subr.mxu0 0.0
        %4527 = vmatpush1.msra.mxu0 0.0
        %4528 = vmatprep.subr.mxu0 0.0
        %4529 = vmatpush1.msra.mxu0 0.0
        %4530 = vmatprep.subr.mxu0 0.0
        %4531 = vmatpush1.msra.mxu0 0.0
        %4532 = vmatprep.subr.mxu0 0.0
        %4533 = vmatpush1.msra.mxu0 0.0
        %4534 = vmatprep.subr.mxu0 0.0
        %4535 = vmatpush1.msra.mxu0 0.0
        %4536 = vmatprep.subr.mxu0 0.0
        %4537 = vmatpush1.msra.mxu0 0.0
        %4538 = vmatprep.subr.mxu0 0.0
        %4539 = vmatpush1.msra.mxu0 0.0
        %4540 = vmatprep.subr.mxu0 0.0
        %4541 = vmatpush1.msra.mxu0 0.0
        %4542 = vmatprep.subr.mxu0 0.0
        %4543 = vmatpush1.msra.mxu0 0.0
        %4544 = vmatprep.subr.mxu0 0.0
        %4545 = vmatpush1.msra.mxu0 0.0
        %4546 = vmatprep.subr.mxu0 0.0
        %4547 = vmatpush1.msra.mxu0 0.0
        %4548 = vmatprep.mubr.f32.mxu0 0.0
        %4549 = vmatmul.mubr.f32.gmra.mrb[0].mxu0 %v4389
        %v4550 = vpop.f32.mrb[0].mxu0
        %v4551 = vadd.f32 %v4322, %v4550
        %v4552 = vpop.f32.mrb[0].mxu0
        %4553 = vmatprep.mubr.f32.mxu0 0.0
        %4554 = vmatmul.mubr.f32.gmra.mrb[0].mxu0 %v4392
        %v4555 = vpop.f32.mrb[0].mxu0
        %v4556 = vadd.f32 %v4322, %v4555
        %v4557 = vpop.f32.mrb[0].mxu0
        %4558 = vmatprep.mubr.f32.mxu0 0.0
        %4559 = vmatmul.mubr.f32.gmra.mrb[0].mxu0 %v4395
        %v4560 = vpop.f32.mrb[0].mxu0
        %v4561 = vadd.f32 %v4322, %v4560
        %v4562 = vpop.f32.mrb[0].mxu0
        %4563 = vmatprep.mubr.f32.mxu0 0.0
        %4564 = vmatmul.mubr.f32.gmra.mrb[0].mxu0 %v4398
        %v4565 = vpop.f32.mrb[0].mxu0
        %v4566 = vadd.f32 %v4322, %v4565
        %v4567 = vpop.f32.mrb[0].mxu0
        %4568 = vmatprep.mubr.f32.mxu0 0.0
        %4569 = vmatmul.mubr.f32.gmra.mrb[0].mxu0 %v4401
        %v4570 = vpop.f32.mrb[0].mxu0
        %v4571 = vadd.f32 %v4322, %v4570
        %v4572 = vpop.f32.mrb[0].mxu0
        %4573 = vmatprep.mubr.f32.mxu0 0.0
        %4574 = vmatmul.mubr.f32.gmra.mrb[0].mxu0 %v4404
        %v4575 = vpop.f32.mrb[0].mxu0
        %v4576 = vadd.f32 %v4322, %v4575
        %v4577 = vpop.f32.mrb[0].mxu0
        %4578 = vmatprep.mubr.f32.mxu0 0.0
        %4579 = vmatmul.mubr.f32.gmra.mrb[0].mxu0 %v4407
        %v4580 = vpop.f32.mrb[0].mxu0
        %v4581 = vadd.f32 %v4322, %v4580
        %v4582 = vpop.f32.mrb[0].mxu0
        %4583 = vmatprep.mubr.f32.mxu0 0.0
        %4584 = vmatmul.mubr.f32.gmra.mrb[0].mxu0 %v4410
        %v4585 = vpop.f32.mrb[0].mxu0
        %v4586 = vadd.f32 %v4322, %v4585
        %v4587 = vpop.f32.mrb[0].mxu0
        %4588 = vmatprep.mubr.f32.mxu0 0.0
        %4589 = vmatmul.mubr.f32.gmra.mrb[0].mxu0 %v4413
        %v4590 = vpop.f32.mrb[0].mxu0
        %v4591 = vadd.f32 %v4322, %v4590
        %v4592 = vpop.f32.mrb[0].mxu0
        %4593 = vmatprep.mubr.f32.mxu0 0.0
        %4594 = vmatmul.mubr.f32.gmra.mrb[0].mxu0 %v4416
        %v4595 = vpop.f32.mrb[0].mxu0
        %v4596 = vadd.f32 %v4322, %v4595
        %v4597 = vpop.f32.mrb[0].mxu0
        %4598 = vmatprep.mubr.f32.mxu0 0.0
        %4599 = vmatmul.mubr.f32.gmra.mrb[0].mxu0 %v4419
        %v4600 = vpop.f32.mrb[0].mxu0
        %v4601 = vadd.f32 %v4322, %v4600
        %v4602 = vpop.f32.mrb[0].mxu0
        %4603 = vmatprep.mubr.f32.mxu0 0.0
        %4604 = vmatmul.mubr.f32.gmra.mrb[0].mxu0 %v4422
        %v4605 = vpop.f32.mrb[0].mxu0
        %v4606 = vadd.f32 %v4322, %v4605
        %v4607 = vpop.f32.mrb[0].mxu0
        %4608 = vmatprep.mubr.f32.mxu0 0.0
        %4609 = vmatmul.mubr.f32.gmra.mrb[0].mxu0 %v4425
        %v4610 = vpop.f32.mrb[0].mxu0
        %v4611 = vadd.f32 %v4322, %v4610
        %v4612 = vpop.f32.mrb[0].mxu0
        %4613 = vmatprep.mubr.f32.mxu0 0.0
        %4614 = vmatmul.mubr.f32.gmra.mrb[0].mxu0 %v4428
        %v4615 = vpop.f32.mrb[0].mxu0
        %v4616 = vadd.f32 %v4322, %v4615
        %v4617 = vpop.f32.mrb[0].mxu0
        %4618 = vmatprep.mubr.f32.mxu0 0.0
        %4619 = vmatmul.mubr.f32.gmra.mrb[0].mxu0 %v4431
        %v4620 = vpop.f32.mrb[0].mxu0
        %v4621 = vadd.f32 %v4322, %v4620
        %v4622 = vpop.f32.mrb[0].mxu0
        %4623 = vmatprep.mubr.f32.mxu0 0.0
        %4624 = vmatmul.mubr.f32.gmra.mrb[0].mxu0 %v4434
        %v4625 = vpop.f32.mrb[0].mxu0
        %v4626 = vadd.f32 %v4322, %v4625
        %v4627 = vpop.f32.mrb[0].mxu0
        %4628 = vmatprep.mubr.f32.mxu0 0.0
        %4629 = vmatmul.mubr.f32.gmra.mrb[0].mxu0 %v4437
        %v4630 = vpop.f32.mrb[0].mxu0
        %v4631 = vadd.f32 %v4322, %v4630
        %v4632 = vpop.f32.mrb[0].mxu0
        %4633 = vmatprep.mubr.f32.mxu0 0.0
        %4634 = vmatmul.mubr.f32.gmra.mrb[0].mxu0 %v4440
        %v4635 = vpop.f32.mrb[0].mxu0
        %v4636 = vadd.f32 %v4322, %v4635
        %v4637 = vpop.f32.mrb[0].mxu0
        %4638 = vmatprep.mubr.f32.mxu0 0.0
        %4639 = vmatmul.mubr.f32.gmra.mrb[0].mxu0 %v4443
        %v4640 = vpop.f32.mrb[0].mxu0
        %v4641 = vadd.f32 %v4322, %v4640
        %v4642 = vpop.f32.mrb[0].mxu0
        %4643 = vmatprep.mubr.f32.mxu0 0.0
        %4644 = vmatmul.mubr.f32.gmra.mrb[0].mxu0 %v4446
        %v4645 = vpop.f32.mrb[0].mxu0
        %v4646 = vadd.f32 %v4322, %v4645
        %v4647 = vpop.f32.mrb[0].mxu0
        %4648 = vmatprep.mubr.f32.mxu0 0.0
        %4649 = vmatmul.mubr.f32.gmra.mrb[0].mxu0 %v4449
        %v4650 = vpop.f32.mrb[0].mxu0
        %v4651 = vadd.f32 %v4322, %v4650
        %v4652 = vpop.f32.mrb[0].mxu0
        %4653 = vmatprep.mubr.f32.mxu0 0.0
        %4654 = vmatmul.mubr.f32.gmra.mrb[0].mxu0 %v4452
        %v4655 = vpop.f32.mrb[0].mxu0
        %v4656 = vadd.f32 %v4322, %v4655
        %v4657 = vpop.f32.mrb[0].mxu0
        %4658 = vmatprep.mubr.f32.mxu0 0.0
        %4659 = vmatmul.mubr.f32.gmra.mrb[0].mxu0 %v4455
        %v4660 = vpop.f32.mrb[0].mxu0
        %v4661 = vadd.f32 %v4322, %v4660
        %v4662 = vpop.f32.mrb[0].mxu0
        %4663 = vmatprep.mubr.f32.mxu0 0.0
        %4664 = vmatmul.mubr.f32.gmra.mrb[0].mxu0 %v4458
        %v4665 = vpop.f32.mrb[0].mxu0
        %v4666 = vadd.f32 %v4322, %v4665
        %v4667 = vpop.f32.mrb[0].mxu0
        %4668 = vmatprep.mubr.f32.mxu0 0.0
        %4669 = vmatmul.mubr.f32.gmra.mrb[0].mxu0 %v4461
        %v4670 = vpop.f32.mrb[0].mxu0
        %v4671 = vadd.f32 %v4322, %v4670
        %v4672 = vpop.f32.mrb[0].mxu0
        %4673 = vmatprep.mubr.f32.mxu0 0.0
        %4674 = vmatmul.mubr.f32.gmra.mrb[0].mxu0 %v4464
        %v4675 = vpop.f32.mrb[0].mxu0
        %v4676 = vadd.f32 %v4322, %v4675
        %v4677 = vpop.f32.mrb[0].mxu0
        %4678 = vmatprep.mubr.f32.mxu0 0.0
        %4679 = vmatmul.mubr.f32.gmra.mrb[0].mxu0 %v4467
        %v4680 = vpop.f32.mrb[0].mxu0
        %v4681 = vadd.f32 %v4322, %v4680
        %v4682 = vpop.f32.mrb[0].mxu0
        %4683 = vmatprep.mubr.f32.mxu0 0.0
        %4684 = vmatmul.mubr.f32.gmra.mrb[0].mxu0 %v4470
        %v4685 = vpop.f32.mrb[0].mxu0
        %v4686 = vadd.f32 %v4322, %v4685
        %v4687 = vpop.f32.mrb[0].mxu0
        %4688 = vmatprep.mubr.f32.mxu0 0.0
        %4689 = vmatmul.mubr.f32.gmra.mrb[0].mxu0 %v4473
        %v4690 = vpop.f32.mrb[0].mxu0
        %v4691 = vadd.f32 %v4322, %v4690
        %v4692 = vpop.f32.mrb[0].mxu0
        %4693 = vmatprep.mubr.f32.mxu0 0.0
        %4694 = vmatmul.mubr.f32.gmra.mrb[0].mxu0 %v4476
        %v4695 = vpop.f32.mrb[0].mxu0
        %v4696 = vadd.f32 %v4322, %v4695
        %v4697 = vpop.f32.mrb[0].mxu0
        %4698 = vmatprep.mubr.f32.mxu0 0.0
        %4699 = vmatmul.mubr.f32.gmra.mrb[0].mxu0 %v4479
        %v4700 = vpop.f32.mrb[0].mxu0
        %v4701 = vadd.f32 %v4322, %v4700
        %v4702 = vpop.f32.mrb[0].mxu0
        %4703 = vmatprep.mubr.f32.mxu0 0.0
        %4704 = vmatmul.mubr.f32.gmra.mrb[0].mxu0 %v4482
        %v4705 = vpop.f32.mrb[0].mxu0
        %v4706 = vadd.f32 %v4322, %v4705
        %v4707 = vpop.f32.mrb[0].mxu0
        %4708 = vdwg.mxu0
        %4709 = vst [vmem:[%s834 + $0x8] sm:$0xff] %v4551
        %4710 = vst [vmem:[%s834 + $0x10] sm:$0xff] %v4556
        %4711 = vst [vmem:[%s834 + $0x28] sm:$0xff] %v4561
        %4712 = vst [vmem:[%s834 + $0x30] sm:$0xff] %v4566
        %4713 = vst [vmem:[%s834 + $0x48] sm:$0xff] %v4571
        %4714 = vst [vmem:[%s834 + $0x50] sm:$0xff] %v4576
        %4715 = vst [vmem:[%s834 + $0x68] sm:$0xff] %v4581
        %4716 = vst [vmem:[%s834 + $0x70] sm:$0xff] %v4586
        %4717 = vst [vmem:[%s834 + $0x88] sm:$0xff] %v4591
        %4718 = vst [vmem:[%s834 + $0x90] sm:$0xff] %v4596
        %4719 = vst [vmem:[%s834 + $0xa8] sm:$0xff] %v4601
        %4720 = vst [vmem:[%s834 + $0xb0] sm:$0xff] %v4606
        %4721 = vst [vmem:[%s834 + $0xc8] sm:$0xff] %v4611
        %4722 = vst [vmem:[%s834 + $0xd0] sm:$0xff] %v4616
        %4723 = vst [vmem:[%s834 + $0xe8] sm:$0xff] %v4621
        %4724 = vst [vmem:[%s834 + $0xf0] sm:$0xff] %v4626
        %4725 = vst [vmem:[%s834 + $0x108] sm:$0xff] %v4631
        %4726 = vst [vmem:[%s834 + $0x110] sm:$0xff] %v4636
        %4727 = vst [vmem:[%s834 + $0x128] sm:$0xff] %v4641
        %4728 = vst [vmem:[%s834 + $0x130] sm:$0xff] %v4646
        %4729 = vst [vmem:[%s834 + $0x148] sm:$0xff] %v4651
        %4730 = vst [vmem:[%s834 + $0x150] sm:$0xff] %v4656
        %4731 = vst [vmem:[%s834 + $0x168] sm:$0xff] %v4661
        %4732 = vst [vmem:[%s834 + $0x170] sm:$0xff] %v4666
        %4733 = vst [vmem:[%s834 + $0x188] sm:$0xff] %v4671
        %4734 = vst [vmem:[%s834 + $0x190] sm:$0xff] %v4676
        %4735 = vst [vmem:[%s834 + $0x1a8] sm:$0xff] %v4681
        %4736 = vst [vmem:[%s834 + $0x1b0] sm:$0xff] %v4686
        %4737 = vst [vmem:[%s834 + $0x1c8] sm:$0xff] %v4691
        %4738 = vst [vmem:[%s834 + $0x1d0] sm:$0xff] %v4696
        %4739 = vst [vmem:[%s834 + $0x1e8] sm:$0xff] %v4701
        %4740 = vst [vmem:[%s834 + $0x1f0] sm:$0xff] %v4706
        %v4741 = vld [vmem:[#allocation2 + $0x7] sm:$0xff]
        %v4742 = vld [vmem:[#allocation2 + $0xf] sm:$0xff]
        %v4743 = vld [vmem:[#allocation2 + $0x27] sm:$0xff]
        %v4744 = vld [vmem:[#allocation2 + $0x2f] sm:$0xff]
        %v4745 = vld [vmem:[#allocation2 + $0x47] sm:$0xff]
        %v4746 = vld [vmem:[#allocation2 + $0x4f] sm:$0xff]
        %v4747 = vld [vmem:[#allocation2 + $0x67] sm:$0xff]
        %v4748 = vld [vmem:[#allocation2 + $0x6f] sm:$0xff]
        %v4749 = vld [vmem:[#allocation2 + $0x87] sm:$0xff]
        %v4750 = vld [vmem:[#allocation2 + $0x8f] sm:$0xff]
        %v4751 = vld [vmem:[#allocation2 + $0xa7] sm:$0xff]
        %v4752 = vld [vmem:[#allocation2 + $0xaf] sm:$0xff]
        %v4753 = vld [vmem:[#allocation2 + $0xc7] sm:$0xff]
        %v4754 = vld [vmem:[#allocation2 + $0xcf] sm:$0xff]
        %v4755 = vld [vmem:[#allocation2 + $0xe7] sm:$0xff]
        %v4756 = vld [vmem:[#allocation2 + $0xef] sm:$0xff]
        %v4757 = vld [vmem:[#allocation2 + $0x107] sm:$0xff]
        %v4758 = vld [vmem:[#allocation2 + $0x10f] sm:$0xff]
        %v4759 = vld [vmem:[#allocation2 + $0x127] sm:$0xff]
        %v4760 = vld [vmem:[#allocation2 + $0x12f] sm:$0xff]
        %v4761 = vld [vmem:[#allocation2 + $0x147] sm:$0xff]
        %v4762 = vld [vmem:[#allocation2 + $0x14f] sm:$0xff]
        %v4763 = vld [vmem:[#allocation2 + $0x167] sm:$0xff]
        %v4764 = vld [vmem:[#allocation2 + $0x16f] sm:$0xff]
        %v4765 = vld [vmem:[#allocation2 + $0x187] sm:$0xff]
        %v4766 = vld [vmem:[#allocation2 + $0x18f] sm:$0xff]
        %v4767 = vld [vmem:[#allocation2 + $0x1a7] sm:$0xff]
        %v4768 = vld [vmem:[#allocation2 + $0x1af] sm:$0xff]
        %v4769 = vld [vmem:[#allocation2 + $0x1c7] sm:$0xff]
        %v4770 = vld [vmem:[#allocation2 + $0x1cf] sm:$0xff]
        %v4771 = vld [vmem:[#allocation2 + $0x1e7] sm:$0xff]
        %v4772 = vld [vmem:[#allocation2 + $0x1ef] sm:$0xff]
        %v4773 = vld [vmem:[%s19] sm:$0x1]
        %v4774 = vlaneseq
        %v4775 = vshrl.u32 %v4774, 7
        %v4776 = vsub.s32 0, %v4775
        %v4777 = vrot.slane %v4773, %v4776
        %v4778 = vmul.f32 %v4741, %v4777
        %v4779 = vmul.f32 %v4742, %v4777
        %v4780 = vmul.f32 %v4743, %v4777
        %v4781 = vmul.f32 %v4744, %v4777
        %v4782 = vmul.f32 %v4745, %v4777
        %v4783 = vmul.f32 %v4746, %v4777
        %v4784 = vmul.f32 %v4747, %v4777
        %v4785 = vmul.f32 %v4748, %v4777
        %v4786 = vmul.f32 %v4749, %v4777
        %v4787 = vmul.f32 %v4750, %v4777
        %v4788 = vmul.f32 %v4751, %v4777
        %v4789 = vmul.f32 %v4752, %v4777
        %v4790 = vmul.f32 %v4753, %v4777
        %v4791 = vmul.f32 %v4754, %v4777
        %v4792 = vmul.f32 %v4755, %v4777
        %v4793 = vmul.f32 %v4756, %v4777
        %v4794 = vmul.f32 %v4757, %v4777
        %v4795 = vmul.f32 %v4758, %v4777
        %v4796 = vmul.f32 %v4759, %v4777
        %v4797 = vmul.f32 %v4760, %v4777
        %v4798 = vmul.f32 %v4761, %v4777
        %v4799 = vmul.f32 %v4762, %v4777
        %v4800 = vmul.f32 %v4763, %v4777
        %v4801 = vmul.f32 %v4764, %v4777
        %v4802 = vmul.f32 %v4765, %v4777
        %v4803 = vmul.f32 %v4766, %v4777
        %v4804 = vmul.f32 %v4767, %v4777
        %v4805 = vmul.f32 %v4768, %v4777
        %v4806 = vmul.f32 %v4769, %v4777
        %v4807 = vmul.f32 %v4770, %v4777
        %v4808 = vmul.f32 %v4771, %v4777
        %v4809 = vmul.f32 %v4772, %v4777
        %v4810 = vadd.f32 %v4778, 0.0
        %v4811 = vadd.f32 %v4779, 0.0
        %v4812 = vadd.f32 %v4780, 0.0
        %v4813 = vadd.f32 %v4781, 0.0
        %v4814 = vadd.f32 %v4782, 0.0
        %v4815 = vadd.f32 %v4783, 0.0
        %v4816 = vadd.f32 %v4784, 0.0
        %v4817 = vadd.f32 %v4785, 0.0
        %v4818 = vadd.f32 %v4786, 0.0
        %v4819 = vadd.f32 %v4787, 0.0
        %v4820 = vadd.f32 %v4788, 0.0
        %v4821 = vadd.f32 %v4789, 0.0
        %v4822 = vadd.f32 %v4790, 0.0
        %v4823 = vadd.f32 %v4791, 0.0
        %v4824 = vadd.f32 %v4792, 0.0
        %v4825 = vadd.f32 %v4793, 0.0
        %v4826 = vadd.f32 %v4794, 0.0
        %v4827 = vadd.f32 %v4795, 0.0
        %v4828 = vadd.f32 %v4796, 0.0
        %v4829 = vadd.f32 %v4797, 0.0
        %v4830 = vadd.f32 %v4798, 0.0
        %v4831 = vadd.f32 %v4799, 0.0
        %v4832 = vadd.f32 %v4800, 0.0
        %v4833 = vadd.f32 %v4801, 0.0
        %v4834 = vadd.f32 %v4802, 0.0
        %v4835 = vadd.f32 %v4803, 0.0
        %v4836 = vadd.f32 %v4804, 0.0
        %v4837 = vadd.f32 %v4805, 0.0
        %v4838 = vadd.f32 %v4806, 0.0
        %v4839 = vadd.f32 %v4807, 0.0
        %v4840 = vadd.f32 %v4808, 0.0
        %v4841 = vadd.f32 %v4809, 0.0
        %v4842 = vld [vmem:[#allocation2 + $0x8] sm:$0xff]
        %v4843 = vld [vmem:[#allocation2 + $0x10] sm:$0xff]
        %v4844 = vld [vmem:[#allocation2 + $0x28] sm:$0xff]
        %v4845 = vld [vmem:[#allocation2 + $0x30] sm:$0xff]
        %v4846 = vld [vmem:[#allocation2 + $0x48] sm:$0xff]
        %v4847 = vld [vmem:[#allocation2 + $0x50] sm:$0xff]
        %v4848 = vld [vmem:[#allocation2 + $0x68] sm:$0xff]
        %v4849 = vld [vmem:[#allocation2 + $0x70] sm:$0xff]
        %v4850 = vld [vmem:[#allocation2 + $0x88] sm:$0xff]
        %v4851 = vld [vmem:[#allocation2 + $0x90] sm:$0xff]
        %v4852 = vld [vmem:[#allocation2 + $0xa8] sm:$0xff]
        %v4853 = vld [vmem:[#allocation2 + $0xb0] sm:$0xff]
        %v4854 = vld [vmem:[#allocation2 + $0xc8] sm:$0xff]
        %v4855 = vld [vmem:[#allocation2 + $0xd0] sm:$0xff]
        %v4856 = vld [vmem:[#allocation2 + $0xe8] sm:$0xff]
        %v4857 = vld [vmem:[#allocation2 + $0xf0] sm:$0xff]
        %v4858 = vld [vmem:[#allocation2 + $0x108] sm:$0xff]
        %v4859 = vld [vmem:[#allocation2 + $0x110] sm:$0xff]
        %v4860 = vld [vmem:[#allocation2 + $0x128] sm:$0xff]
        %v4861 = vld [vmem:[#allocation2 + $0x130] sm:$0xff]
        %v4862 = vld [vmem:[#allocation2 + $0x148] sm:$0xff]
        %v4863 = vld [vmem:[#allocation2 + $0x150] sm:$0xff]
        %v4864 = vld [vmem:[#allocation2 + $0x168] sm:$0xff]
        %v4865 = vld [vmem:[#allocation2 + $0x170] sm:$0xff]
        %v4866 = vld [vmem:[#allocation2 + $0x188] sm:$0xff]
        %v4867 = vld [vmem:[#allocation2 + $0x190] sm:$0xff]
        %v4868 = vld [vmem:[#allocation2 + $0x1a8] sm:$0xff]
        %v4869 = vld [vmem:[#allocation2 + $0x1b0] sm:$0xff]
        %v4870 = vld [vmem:[#allocation2 + $0x1c8] sm:$0xff]
        %v4871 = vld [vmem:[#allocation2 + $0x1d0] sm:$0xff]
        %v4872 = vld [vmem:[#allocation2 + $0x1e8] sm:$0xff]
        %v4873 = vld [vmem:[#allocation2 + $0x1f0] sm:$0xff]
        %v4874 = vld [vmem:[%s19 + $0x1] sm:$0x1]
        %v4875 = vlaneseq
        %v4876 = vshrl.u32 %v4875, 7
        %v4877 = vsub.s32 0, %v4876
        %v4878 = vrot.slane %v4874, %v4877
        %v4879 = vmul.f32 %v4842, %v4878
        %v4880 = vmul.f32 %v4843, %v4878
        %v4881 = vmul.f32 %v4844, %v4878
        %v4882 = vmul.f32 %v4845, %v4878
        %v4883 = vmul.f32 %v4846, %v4878
        %v4884 = vmul.f32 %v4847, %v4878
        %v4885 = vmul.f32 %v4848, %v4878
        %v4886 = vmul.f32 %v4849, %v4878
        %v4887 = vmul.f32 %v4850, %v4878
        %v4888 = vmul.f32 %v4851, %v4878
        %v4889 = vmul.f32 %v4852, %v4878
        %v4890 = vmul.f32 %v4853, %v4878
        %v4891 = vmul.f32 %v4854, %v4878
        %v4892 = vmul.f32 %v4855, %v4878
        %v4893 = vmul.f32 %v4856, %v4878
        %v4894 = vmul.f32 %v4857, %v4878
        %v4895 = vmul.f32 %v4858, %v4878
        %v4896 = vmul.f32 %v4859, %v4878
        %v4897 = vmul.f32 %v4860, %v4878
        %v4898 = vmul.f32 %v4861, %v4878
        %v4899 = vmul.f32 %v4862, %v4878
        %v4900 = vmul.f32 %v4863, %v4878
        %v4901 = vmul.f32 %v4864, %v4878
        %v4902 = vmul.f32 %v4865, %v4878
        %v4903 = vmul.f32 %v4866, %v4878
        %v4904 = vmul.f32 %v4867, %v4878
        %v4905 = vmul.f32 %v4868, %v4878
        %v4906 = vmul.f32 %v4869, %v4878
        %v4907 = vmul.f32 %v4870, %v4878
        %v4908 = vmul.f32 %v4871, %v4878
        %v4909 = vmul.f32 %v4872, %v4878
        %v4910 = vmul.f32 %v4873, %v4878
        %v4911 = vadd.f32 %v4810, %v4879
        %v4912 = vadd.f32 %v4811, %v4880
        %v4913 = vadd.f32 %v4812, %v4881
        %v4914 = vadd.f32 %v4813, %v4882
        %v4915 = vadd.f32 %v4814, %v4883
        %v4916 = vadd.f32 %v4815, %v4884
        %v4917 = vadd.f32 %v4816, %v4885
        %v4918 = vadd.f32 %v4817, %v4886
        %v4919 = vadd.f32 %v4818, %v4887
        %v4920 = vadd.f32 %v4819, %v4888
        %v4921 = vadd.f32 %v4820, %v4889
        %v4922 = vadd.f32 %v4821, %v4890
        %v4923 = vadd.f32 %v4822, %v4891
        %v4924 = vadd.f32 %v4823, %v4892
        %v4925 = vadd.f32 %v4824, %v4893
        %v4926 = vadd.f32 %v4825, %v4894
        %v4927 = vadd.f32 %v4826, %v4895
        %v4928 = vadd.f32 %v4827, %v4896
        %v4929 = vadd.f32 %v4828, %v4897
        %v4930 = vadd.f32 %v4829, %v4898
        %v4931 = vadd.f32 %v4830, %v4899
        %v4932 = vadd.f32 %v4831, %v4900
        %v4933 = vadd.f32 %v4832, %v4901
        %v4934 = vadd.f32 %v4833, %v4902
        %v4935 = vadd.f32 %v4834, %v4903
        %v4936 = vadd.f32 %v4835, %v4904
        %v4937 = vadd.f32 %v4836, %v4905
        %v4938 = vadd.f32 %v4837, %v4906
        %v4939 = vadd.f32 %v4838, %v4907
        %v4940 = vadd.f32 %v4839, %v4908
        %v4941 = vadd.f32 %v4840, %v4909
        %v4942 = vadd.f32 %v4841, %v4910
        %v4943 = vld [vmem:[#allocation2 + $0x9] sm:$0xff]
        %v4944 = vld [vmem:[#allocation2 + $0x11] sm:$0xff]
        %v4945 = vld [vmem:[#allocation2 + $0x29] sm:$0xff]
        %v4946 = vld [vmem:[#allocation2 + $0x31] sm:$0xff]
        %v4947 = vld [vmem:[#allocation2 + $0x49] sm:$0xff]
        %v4948 = vld [vmem:[#allocation2 + $0x51] sm:$0xff]
        %v4949 = vld [vmem:[#allocation2 + $0x69] sm:$0xff]
        %v4950 = vld [vmem:[#allocation2 + $0x71] sm:$0xff]
        %v4951 = vld [vmem:[#allocation2 + $0x89] sm:$0xff]
        %v4952 = vld [vmem:[#allocation2 + $0x91] sm:$0xff]
        %v4953 = vld [vmem:[#allocation2 + $0xa9] sm:$0xff]
        %v4954 = vld [vmem:[#allocation2 + $0xb1] sm:$0xff]
        %v4955 = vld [vmem:[#allocation2 + $0xc9] sm:$0xff]
        %v4956 = vld [vmem:[#allocation2 + $0xd1] sm:$0xff]
        %v4957 = vld [vmem:[#allocation2 + $0xe9] sm:$0xff]
        %v4958 = vld [vmem:[#allocation2 + $0xf1] sm:$0xff]
        %v4959 = vld [vmem:[#allocation2 + $0x109] sm:$0xff]
        %v4960 = vld [vmem:[#allocation2 + $0x111] sm:$0xff]
        %v4961 = vld [vmem:[#allocation2 + $0x129] sm:$0xff]
        %v4962 = vld [vmem:[#allocation2 + $0x131] sm:$0xff]
        %v4963 = vld [vmem:[#allocation2 + $0x149] sm:$0xff]
        %v4964 = vld [vmem:[#allocation2 + $0x151] sm:$0xff]
        %v4965 = vld [vmem:[#allocation2 + $0x169] sm:$0xff]
        %v4966 = vld [vmem:[#allocation2 + $0x171] sm:$0xff]
        %v4967 = vld [vmem:[#allocation2 + $0x189] sm:$0xff]
        %v4968 = vld [vmem:[#allocation2 + $0x191] sm:$0xff]
        %v4969 = vld [vmem:[#allocation2 + $0x1a9] sm:$0xff]
        %v4970 = vld [vmem:[#allocation2 + $0x1b1] sm:$0xff]
        %v4971 = vld [vmem:[#allocation2 + $0x1c9] sm:$0xff]
        %v4972 = vld [vmem:[#allocation2 + $0x1d1] sm:$0xff]
        %v4973 = vld [vmem:[#allocation2 + $0x1e9] sm:$0xff]
        %v4974 = vld [vmem:[#allocation2 + $0x1f1] sm:$0xff]
        %v4975 = vld [vmem:[%s19 + $0x2] sm:$0x1]
        %v4976 = vlaneseq
        %v4977 = vshrl.u32 %v4976, 7
        %v4978 = vsub.s32 0, %v4977
        %v4979 = vrot.slane %v4975, %v4978
        %v4980 = vmul.f32 %v4943, %v4979
        %v4981 = vmul.f32 %v4944, %v4979
        %v4982 = vmul.f32 %v4945, %v4979
        %v4983 = vmul.f32 %v4946, %v4979
        %v4984 = vmul.f32 %v4947, %v4979
        %v4985 = vmul.f32 %v4948, %v4979
        %v4986 = vmul.f32 %v4949, %v4979
        %v4987 = vmul.f32 %v4950, %v4979
        %v4988 = vmul.f32 %v4951, %v4979
        %v4989 = vmul.f32 %v4952, %v4979
        %v4990 = vmul.f32 %v4953, %v4979
        %v4991 = vmul.f32 %v4954, %v4979
        %v4992 = vmul.f32 %v4955, %v4979
        %v4993 = vmul.f32 %v4956, %v4979
        %v4994 = vmul.f32 %v4957, %v4979
        %v4995 = vmul.f32 %v4958, %v4979
        %v4996 = vmul.f32 %v4959, %v4979
        %v4997 = vmul.f32 %v4960, %v4979
        %v4998 = vmul.f32 %v4961, %v4979
        %v4999 = vmul.f32 %v4962, %v4979
        %v5000 = vmul.f32 %v4963, %v4979
        %v5001 = vmul.f32 %v4964, %v4979
        %v5002 = vmul.f32 %v4965, %v4979
        %v5003 = vmul.f32 %v4966, %v4979
        %v5004 = vmul.f32 %v4967, %v4979
        %v5005 = vmul.f32 %v4968, %v4979
        %v5006 = vmul.f32 %v4969, %v4979
        %v5007 = vmul.f32 %v4970, %v4979
        %v5008 = vmul.f32 %v4971, %v4979
        %v5009 = vmul.f32 %v4972, %v4979
        %v5010 = vmul.f32 %v4973, %v4979
        %v5011 = vmul.f32 %v4974, %v4979
        %v5012 = vadd.f32 %v4911, %v4980
        %v5013 = vadd.f32 %v4912, %v4981
        %v5014 = vadd.f32 %v4913, %v4982
        %v5015 = vadd.f32 %v4914, %v4983
        %v5016 = vadd.f32 %v4915, %v4984
        %v5017 = vadd.f32 %v4916, %v4985
        %v5018 = vadd.f32 %v4917, %v4986
        %v5019 = vadd.f32 %v4918, %v4987
        %v5020 = vadd.f32 %v4919, %v4988
        %v5021 = vadd.f32 %v4920, %v4989
        %v5022 = vadd.f32 %v4921, %v4990
        %v5023 = vadd.f32 %v4922, %v4991
        %v5024 = vadd.f32 %v4923, %v4992
        %v5025 = vadd.f32 %v4924, %v4993
        %v5026 = vadd.f32 %v4925, %v4994
        %v5027 = vadd.f32 %v4926, %v4995
        %v5028 = vadd.f32 %v4927, %v4996
        %v5029 = vadd.f32 %v4928, %v4997
        %v5030 = vadd.f32 %v4929, %v4998
        %v5031 = vadd.f32 %v4930, %v4999
        %v5032 = vadd.f32 %v4931, %v5000
        %v5033 = vadd.f32 %v4932, %v5001
        %v5034 = vadd.f32 %v4933, %v5002
        %v5035 = vadd.f32 %v4934, %v5003
        %v5036 = vadd.f32 %v4935, %v5004
        %v5037 = vadd.f32 %v4936, %v5005
        %v5038 = vadd.f32 %v4937, %v5006
        %v5039 = vadd.f32 %v4938, %v5007
        %v5040 = vadd.f32 %v4939, %v5008
        %v5041 = vadd.f32 %v4940, %v5009
        %v5042 = vadd.f32 %v4941, %v5010
        %v5043 = vadd.f32 %v4942, %v5011
        %v5044 = vld [vmem:[%s834 + $0x7] sm:$0xff]
        %v5045 = vld [vmem:[%s834 + $0xf] sm:$0xff]
        %v5046 = vld [vmem:[%s834 + $0x27] sm:$0xff]
        %v5047 = vld [vmem:[%s834 + $0x2f] sm:$0xff]
        %v5048 = vld [vmem:[%s834 + $0x47] sm:$0xff]
        %v5049 = vld [vmem:[%s834 + $0x4f] sm:$0xff]
        %v5050 = vld [vmem:[%s834 + $0x67] sm:$0xff]
        %v5051 = vld [vmem:[%s834 + $0x6f] sm:$0xff]
        %v5052 = vld [vmem:[%s834 + $0x87] sm:$0xff]
        %v5053 = vld [vmem:[%s834 + $0x8f] sm:$0xff]
        %v5054 = vld [vmem:[%s834 + $0xa7] sm:$0xff]
        %v5055 = vld [vmem:[%s834 + $0xaf] sm:$0xff]
        %v5056 = vld [vmem:[%s834 + $0xc7] sm:$0xff]
        %v5057 = vld [vmem:[%s834 + $0xcf] sm:$0xff]
        %v5058 = vld [vmem:[%s834 + $0xe7] sm:$0xff]
        %v5059 = vld [vmem:[%s834 + $0xef] sm:$0xff]
        %v5060 = vld [vmem:[%s834 + $0x107] sm:$0xff]
        %v5061 = vld [vmem:[%s834 + $0x10f] sm:$0xff]
        %v5062 = vld [vmem:[%s834 + $0x127] sm:$0xff]
        %v5063 = vld [vmem:[%s834 + $0x12f] sm:$0xff]
        %v5064 = vld [vmem:[%s834 + $0x147] sm:$0xff]
        %v5065 = vld [vmem:[%s834 + $0x14f] sm:$0xff]
        %v5066 = vld [vmem:[%s834 + $0x167] sm:$0xff]
        %v5067 = vld [vmem:[%s834 + $0x16f] sm:$0xff]
        %v5068 = vld [vmem:[%s834 + $0x187] sm:$0xff]
        %v5069 = vld [vmem:[%s834 + $0x18f] sm:$0xff]
        %v5070 = vld [vmem:[%s834 + $0x1a7] sm:$0xff]
        %v5071 = vld [vmem:[%s834 + $0x1af] sm:$0xff]
        %v5072 = vld [vmem:[%s834 + $0x1c7] sm:$0xff]
        %v5073 = vld [vmem:[%s834 + $0x1cf] sm:$0xff]
        %v5074 = vld [vmem:[%s834 + $0x1e7] sm:$0xff]
        %v5075 = vld [vmem:[%s834 + $0x1ef] sm:$0xff]
        %v5076 = vld [vmem:[%s19 + $0x3] sm:$0x1]
        %v5077 = vlaneseq
        %v5078 = vshrl.u32 %v5077, 7
        %v5079 = vsub.s32 0, %v5078
        %v5080 = vrot.slane %v5076, %v5079
        %v5081 = vmul.f32 %v5044, %v5080
        %v5082 = vmul.f32 %v5045, %v5080
        %v5083 = vmul.f32 %v5046, %v5080
        %v5084 = vmul.f32 %v5047, %v5080
        %v5085 = vmul.f32 %v5048, %v5080
        %v5086 = vmul.f32 %v5049, %v5080
        %v5087 = vmul.f32 %v5050, %v5080
        %v5088 = vmul.f32 %v5051, %v5080
        %v5089 = vmul.f32 %v5052, %v5080
        %v5090 = vmul.f32 %v5053, %v5080
        %v5091 = vmul.f32 %v5054, %v5080
        %v5092 = vmul.f32 %v5055, %v5080
        %v5093 = vmul.f32 %v5056, %v5080
        %v5094 = vmul.f32 %v5057, %v5080
        %v5095 = vmul.f32 %v5058, %v5080
        %v5096 = vmul.f32 %v5059, %v5080
        %v5097 = vmul.f32 %v5060, %v5080
        %v5098 = vmul.f32 %v5061, %v5080
        %v5099 = vmul.f32 %v5062, %v5080
        %v5100 = vmul.f32 %v5063, %v5080
        %v5101 = vmul.f32 %v5064, %v5080
        %v5102 = vmul.f32 %v5065, %v5080
        %v5103 = vmul.f32 %v5066, %v5080
        %v5104 = vmul.f32 %v5067, %v5080
        %v5105 = vmul.f32 %v5068, %v5080
        %v5106 = vmul.f32 %v5069, %v5080
        %v5107 = vmul.f32 %v5070, %v5080
        %v5108 = vmul.f32 %v5071, %v5080
        %v5109 = vmul.f32 %v5072, %v5080
        %v5110 = vmul.f32 %v5073, %v5080
        %v5111 = vmul.f32 %v5074, %v5080
        %v5112 = vmul.f32 %v5075, %v5080
        %v5113 = vadd.f32 %v5012, %v5081
        %v5114 = vadd.f32 %v5013, %v5082
        %v5115 = vadd.f32 %v5014, %v5083
        %v5116 = vadd.f32 %v5015, %v5084
        %v5117 = vadd.f32 %v5016, %v5085
        %v5118 = vadd.f32 %v5017, %v5086
        %v5119 = vadd.f32 %v5018, %v5087
        %v5120 = vadd.f32 %v5019, %v5088
        %v5121 = vadd.f32 %v5020, %v5089
        %v5122 = vadd.f32 %v5021, %v5090
        %v5123 = vadd.f32 %v5022, %v5091
        %v5124 = vadd.f32 %v5023, %v5092
        %v5125 = vadd.f32 %v5024, %v5093
        %v5126 = vadd.f32 %v5025, %v5094
        %v5127 = vadd.f32 %v5026, %v5095
        %v5128 = vadd.f32 %v5027, %v5096
        %v5129 = vadd.f32 %v5028, %v5097
        %v5130 = vadd.f32 %v5029, %v5098
        %v5131 = vadd.f32 %v5030, %v5099
        %v5132 = vadd.f32 %v5031, %v5100
        %v5133 = vadd.f32 %v5032, %v5101
        %v5134 = vadd.f32 %v5033, %v5102
        %v5135 = vadd.f32 %v5034, %v5103
        %v5136 = vadd.f32 %v5035, %v5104
        %v5137 = vadd.f32 %v5036, %v5105
        %v5138 = vadd.f32 %v5037, %v5106
        %v5139 = vadd.f32 %v5038, %v5107
        %v5140 = vadd.f32 %v5039, %v5108
        %v5141 = vadd.f32 %v5040, %v5109
        %v5142 = vadd.f32 %v5041, %v5110
        %v5143 = vadd.f32 %v5042, %v5111
        %v5144 = vadd.f32 %v5043, %v5112
        %v5145 = vld [vmem:[%s834 + $0x8] sm:$0xff]
        %v5146 = vld [vmem:[%s834 + $0x10] sm:$0xff]
        %v5147 = vld [vmem:[%s834 + $0x28] sm:$0xff]
        %v5148 = vld [vmem:[%s834 + $0x30] sm:$0xff]
        %v5149 = vld [vmem:[%s834 + $0x48] sm:$0xff]
        %v5150 = vld [vmem:[%s834 + $0x50] sm:$0xff]
        %v5151 = vld [vmem:[%s834 + $0x68] sm:$0xff]
        %v5152 = vld [vmem:[%s834 + $0x70] sm:$0xff]
        %v5153 = vld [vmem:[%s834 + $0x88] sm:$0xff]
        %v5154 = vld [vmem:[%s834 + $0x90] sm:$0xff]
        %v5155 = vld [vmem:[%s834 + $0xa8] sm:$0xff]
        %v5156 = vld [vmem:[%s834 + $0xb0] sm:$0xff]
        %v5157 = vld [vmem:[%s834 + $0xc8] sm:$0xff]
        %v5158 = vld [vmem:[%s834 + $0xd0] sm:$0xff]
        %v5159 = vld [vmem:[%s834 + $0xe8] sm:$0xff]
        %v5160 = vld [vmem:[%s834 + $0xf0] sm:$0xff]
        %v5161 = vld [vmem:[%s834 + $0x108] sm:$0xff]
        %v5162 = vld [vmem:[%s834 + $0x110] sm:$0xff]
        %v5163 = vld [vmem:[%s834 + $0x128] sm:$0xff]
        %v5164 = vld [vmem:[%s834 + $0x130] sm:$0xff]
        %v5165 = vld [vmem:[%s834 + $0x148] sm:$0xff]
        %v5166 = vld [vmem:[%s834 + $0x150] sm:$0xff]
        %v5167 = vld [vmem:[%s834 + $0x168] sm:$0xff]
        %v5168 = vld [vmem:[%s834 + $0x170] sm:$0xff]
        %v5169 = vld [vmem:[%s834 + $0x188] sm:$0xff]
        %v5170 = vld [vmem:[%s834 + $0x190] sm:$0xff]
        %v5171 = vld [vmem:[%s834 + $0x1a8] sm:$0xff]
        %v5172 = vld [vmem:[%s834 + $0x1b0] sm:$0xff]
        %v5173 = vld [vmem:[%s834 + $0x1c8] sm:$0xff]
        %v5174 = vld [vmem:[%s834 + $0x1d0] sm:$0xff]
        %v5175 = vld [vmem:[%s834 + $0x1e8] sm:$0xff]
        %v5176 = vld [vmem:[%s834 + $0x1f0] sm:$0xff]
        %v5177 = vld [vmem:[%s19 + $0x4] sm:$0x1]
        %v5178 = vlaneseq
        %v5179 = vshrl.u32 %v5178, 7
        %v5180 = vsub.s32 0, %v5179
        %v5181 = vrot.slane %v5177, %v5180
        %v5182 = vmul.f32 %v5145, %v5181
        %v5183 = vmul.f32 %v5146, %v5181
        %v5184 = vmul.f32 %v5147, %v5181
        %v5185 = vmul.f32 %v5148, %v5181
        %v5186 = vmul.f32 %v5149, %v5181
        %v5187 = vmul.f32 %v5150, %v5181
        %v5188 = vmul.f32 %v5151, %v5181
        %v5189 = vmul.f32 %v5152, %v5181
        %v5190 = vmul.f32 %v5153, %v5181
        %v5191 = vmul.f32 %v5154, %v5181
        %v5192 = vmul.f32 %v5155, %v5181
        %v5193 = vmul.f32 %v5156, %v5181
        %v5194 = vmul.f32 %v5157, %v5181
        %v5195 = vmul.f32 %v5158, %v5181
        %v5196 = vmul.f32 %v5159, %v5181
        %v5197 = vmul.f32 %v5160, %v5181
        %v5198 = vmul.f32 %v5161, %v5181
        %v5199 = vmul.f32 %v5162, %v5181
        %v5200 = vmul.f32 %v5163, %v5181
        %v5201 = vmul.f32 %v5164, %v5181
        %v5202 = vmul.f32 %v5165, %v5181
        %v5203 = vmul.f32 %v5166, %v5181
        %v5204 = vmul.f32 %v5167, %v5181
        %v5205 = vmul.f32 %v5168, %v5181
        %v5206 = vmul.f32 %v5169, %v5181
        %v5207 = vmul.f32 %v5170, %v5181
        %v5208 = vmul.f32 %v5171, %v5181
        %v5209 = vmul.f32 %v5172, %v5181
        %v5210 = vmul.f32 %v5173, %v5181
        %v5211 = vmul.f32 %v5174, %v5181
        %v5212 = vmul.f32 %v5175, %v5181
        %v5213 = vmul.f32 %v5176, %v5181
        %v5214 = vadd.f32 %v5113, %v5182
        %v5215 = vadd.f32 %v5114, %v5183
        %v5216 = vadd.f32 %v5115, %v5184
        %v5217 = vadd.f32 %v5116, %v5185
        %v5218 = vadd.f32 %v5117, %v5186
        %v5219 = vadd.f32 %v5118, %v5187
        %v5220 = vadd.f32 %v5119, %v5188
        %v5221 = vadd.f32 %v5120, %v5189
        %v5222 = vadd.f32 %v5121, %v5190
        %v5223 = vadd.f32 %v5122, %v5191
        %v5224 = vadd.f32 %v5123, %v5192
        %v5225 = vadd.f32 %v5124, %v5193
        %v5226 = vadd.f32 %v5125, %v5194
        %v5227 = vadd.f32 %v5126, %v5195
        %v5228 = vadd.f32 %v5127, %v5196
        %v5229 = vadd.f32 %v5128, %v5197
        %v5230 = vadd.f32 %v5129, %v5198
        %v5231 = vadd.f32 %v5130, %v5199
        %v5232 = vadd.f32 %v5131, %v5200
        %v5233 = vadd.f32 %v5132, %v5201
        %v5234 = vadd.f32 %v5133, %v5202
        %v5235 = vadd.f32 %v5134, %v5203
        %v5236 = vadd.f32 %v5135, %v5204
        %v5237 = vadd.f32 %v5136, %v5205
        %v5238 = vadd.f32 %v5137, %v5206
        %v5239 = vadd.f32 %v5138, %v5207
        %v5240 = vadd.f32 %v5139, %v5208
        %v5241 = vadd.f32 %v5140, %v5209
        %v5242 = vadd.f32 %v5141, %v5210
        %v5243 = vadd.f32 %v5142, %v5211
        %v5244 = vadd.f32 %v5143, %v5212
        %v5245 = vadd.f32 %v5144, %v5213
        %v5246 = vld [vmem:[%s834 + $0x9] sm:$0xff]
        %v5247 = vld [vmem:[%s834 + $0x11] sm:$0xff]
        %v5248 = vld [vmem:[%s834 + $0x29] sm:$0xff]
        %v5249 = vld [vmem:[%s834 + $0x31] sm:$0xff]
        %v5250 = vld [vmem:[%s834 + $0x49] sm:$0xff]
        %v5251 = vld [vmem:[%s834 + $0x51] sm:$0xff]
        %v5252 = vld [vmem:[%s834 + $0x69] sm:$0xff]
        %v5253 = vld [vmem:[%s834 + $0x71] sm:$0xff]
        %v5254 = vld [vmem:[%s834 + $0x89] sm:$0xff]
        %v5255 = vld [vmem:[%s834 + $0x91] sm:$0xff]
        %v5256 = vld [vmem:[%s834 + $0xa9] sm:$0xff]
        %v5257 = vld [vmem:[%s834 + $0xb1] sm:$0xff]
        %v5258 = vld [vmem:[%s834 + $0xc9] sm:$0xff]
        %v5259 = vld [vmem:[%s834 + $0xd1] sm:$0xff]
        %v5260 = vld [vmem:[%s834 + $0xe9] sm:$0xff]
        %v5261 = vld [vmem:[%s834 + $0xf1] sm:$0xff]
        %v5262 = vld [vmem:[%s834 + $0x109] sm:$0xff]
        %v5263 = vld [vmem:[%s834 + $0x111] sm:$0xff]
        %v5264 = vld [vmem:[%s834 + $0x129] sm:$0xff]
        %v5265 = vld [vmem:[%s834 + $0x131] sm:$0xff]
        %v5266 = vld [vmem:[%s834 + $0x149] sm:$0xff]
        %v5267 = vld [vmem:[%s834 + $0x151] sm:$0xff]
        %v5268 = vld [vmem:[%s834 + $0x169] sm:$0xff]
        %v5269 = vld [vmem:[%s834 + $0x171] sm:$0xff]
        %v5270 = vld [vmem:[%s834 + $0x189] sm:$0xff]
        %v5271 = vld [vmem:[%s834 + $0x191] sm:$0xff]
        %v5272 = vld [vmem:[%s834 + $0x1a9] sm:$0xff]
        %v5273 = vld [vmem:[%s834 + $0x1b1] sm:$0xff]
        %v5274 = vld [vmem:[%s834 + $0x1c9] sm:$0xff]
        %v5275 = vld [vmem:[%s834 + $0x1d1] sm:$0xff]
        %v5276 = vld [vmem:[%s834 + $0x1e9] sm:$0xff]
        %v5277 = vld [vmem:[%s834 + $0x1f1] sm:$0xff]
        %v5278 = vld [vmem:[%s19 + $0x5] sm:$0x1]
        %v5279 = vlaneseq
        %v5280 = vshrl.u32 %v5279, 7
        %v5281 = vsub.s32 0, %v5280
        %v5282 = vrot.slane %v5278, %v5281
        %v5283 = vmul.f32 %v5246, %v5282
        %v5284 = vmul.f32 %v5247, %v5282
        %v5285 = vmul.f32 %v5248, %v5282
        %v5286 = vmul.f32 %v5249, %v5282
        %v5287 = vmul.f32 %v5250, %v5282
        %v5288 = vmul.f32 %v5251, %v5282
        %v5289 = vmul.f32 %v5252, %v5282
        %v5290 = vmul.f32 %v5253, %v5282
        %v5291 = vmul.f32 %v5254, %v5282
        %v5292 = vmul.f32 %v5255, %v5282
        %v5293 = vmul.f32 %v5256, %v5282
        %v5294 = vmul.f32 %v5257, %v5282
        %v5295 = vmul.f32 %v5258, %v5282
        %v5296 = vmul.f32 %v5259, %v5282
        %v5297 = vmul.f32 %v5260, %v5282
        %v5298 = vmul.f32 %v5261, %v5282
        %v5299 = vmul.f32 %v5262, %v5282
        %v5300 = vmul.f32 %v5263, %v5282
        %v5301 = vmul.f32 %v5264, %v5282
        %v5302 = vmul.f32 %v5265, %v5282
        %v5303 = vmul.f32 %v5266, %v5282
        %v5304 = vmul.f32 %v5267, %v5282
        %v5305 = vmul.f32 %v5268, %v5282
        %v5306 = vmul.f32 %v5269, %v5282
        %v5307 = vmul.f32 %v5270, %v5282
        %v5308 = vmul.f32 %v5271, %v5282
        %v5309 = vmul.f32 %v5272, %v5282
        %v5310 = vmul.f32 %v5273, %v5282
        %v5311 = vmul.f32 %v5274, %v5282
        %v5312 = vmul.f32 %v5275, %v5282
        %v5313 = vmul.f32 %v5276, %v5282
        %v5314 = vmul.f32 %v5277, %v5282
        %v5315 = vadd.f32 %v5214, %v5283
        %v5316 = vadd.f32 %v5215, %v5284
        %v5317 = vadd.f32 %v5216, %v5285
        %v5318 = vadd.f32 %v5217, %v5286
        %v5319 = vadd.f32 %v5218, %v5287
        %v5320 = vadd.f32 %v5219, %v5288
        %v5321 = vadd.f32 %v5220, %v5289
        %v5322 = vadd.f32 %v5221, %v5290
        %v5323 = vadd.f32 %v5222, %v5291
        %v5324 = vadd.f32 %v5223, %v5292
        %v5325 = vadd.f32 %v5224, %v5293
        %v5326 = vadd.f32 %v5225, %v5294
        %v5327 = vadd.f32 %v5226, %v5295
        %v5328 = vadd.f32 %v5227, %v5296
        %v5329 = vadd.f32 %v5228, %v5297
        %v5330 = vadd.f32 %v5229, %v5298
        %v5331 = vadd.f32 %v5230, %v5299
        %v5332 = vadd.f32 %v5231, %v5300
        %v5333 = vadd.f32 %v5232, %v5301
        %v5334 = vadd.f32 %v5233, %v5302
        %v5335 = vadd.f32 %v5234, %v5303
        %v5336 = vadd.f32 %v5235, %v5304
        %v5337 = vadd.f32 %v5236, %v5305
        %v5338 = vadd.f32 %v5237, %v5306
        %v5339 = vadd.f32 %v5238, %v5307
        %v5340 = vadd.f32 %v5239, %v5308
        %v5341 = vadd.f32 %v5240, %v5309
        %v5342 = vadd.f32 %v5241, %v5310
        %v5343 = vadd.f32 %v5242, %v5311
        %v5344 = vadd.f32 %v5243, %v5312
        %v5345 = vadd.f32 %v5244, %v5313
        %v5346 = vadd.f32 %v5245, %v5314
        %v5347 = vld [vmem:[%s2604 + $0x7] sm:$0xff]
        %v5348 = vld [vmem:[%s2604 + $0xf] sm:$0xff]
        %v5349 = vld [vmem:[%s2604 + $0x27] sm:$0xff]
        %v5350 = vld [vmem:[%s2604 + $0x2f] sm:$0xff]
        %v5351 = vld [vmem:[%s2604 + $0x47] sm:$0xff]
        %v5352 = vld [vmem:[%s2604 + $0x4f] sm:$0xff]
        %v5353 = vld [vmem:[%s2604 + $0x67] sm:$0xff]
        %v5354 = vld [vmem:[%s2604 + $0x6f] sm:$0xff]
        %v5355 = vld [vmem:[%s2604 + $0x87] sm:$0xff]
        %v5356 = vld [vmem:[%s2604 + $0x8f] sm:$0xff]
        %v5357 = vld [vmem:[%s2604 + $0xa7] sm:$0xff]
        %v5358 = vld [vmem:[%s2604 + $0xaf] sm:$0xff]
        %v5359 = vld [vmem:[%s2604 + $0xc7] sm:$0xff]
        %v5360 = vld [vmem:[%s2604 + $0xcf] sm:$0xff]
        %v5361 = vld [vmem:[%s2604 + $0xe7] sm:$0xff]
        %v5362 = vld [vmem:[%s2604 + $0xef] sm:$0xff]
        %v5363 = vld [vmem:[%s2604 + $0x107] sm:$0xff]
        %v5364 = vld [vmem:[%s2604 + $0x10f] sm:$0xff]
        %v5365 = vld [vmem:[%s2604 + $0x127] sm:$0xff]
        %v5366 = vld [vmem:[%s2604 + $0x12f] sm:$0xff]
        %v5367 = vld [vmem:[%s2604 + $0x147] sm:$0xff]
        %v5368 = vld [vmem:[%s2604 + $0x14f] sm:$0xff]
        %v5369 = vld [vmem:[%s2604 + $0x167] sm:$0xff]
        %v5370 = vld [vmem:[%s2604 + $0x16f] sm:$0xff]
        %v5371 = vld [vmem:[%s2604 + $0x187] sm:$0xff]
        %v5372 = vld [vmem:[%s2604 + $0x18f] sm:$0xff]
        %v5373 = vld [vmem:[%s2604 + $0x1a7] sm:$0xff]
        %v5374 = vld [vmem:[%s2604 + $0x1af] sm:$0xff]
        %v5375 = vld [vmem:[%s2604 + $0x1c7] sm:$0xff]
        %v5376 = vld [vmem:[%s2604 + $0x1cf] sm:$0xff]
        %v5377 = vld [vmem:[%s2604 + $0x1e7] sm:$0xff]
        %v5378 = vld [vmem:[%s2604 + $0x1ef] sm:$0xff]
        %v5379 = vld [vmem:[%s19 + $0x6] sm:$0x1]
        %v5380 = vlaneseq
        %v5381 = vshrl.u32 %v5380, 7
        %v5382 = vsub.s32 0, %v5381
        %v5383 = vrot.slane %v5379, %v5382
        %v5384 = vmul.f32 %v5347, %v5383
        %v5385 = vmul.f32 %v5348, %v5383
        %v5386 = vmul.f32 %v5349, %v5383
        %v5387 = vmul.f32 %v5350, %v5383
        %v5388 = vmul.f32 %v5351, %v5383
        %v5389 = vmul.f32 %v5352, %v5383
        %v5390 = vmul.f32 %v5353, %v5383
        %v5391 = vmul.f32 %v5354, %v5383
        %v5392 = vmul.f32 %v5355, %v5383
        %v5393 = vmul.f32 %v5356, %v5383
        %v5394 = vmul.f32 %v5357, %v5383
        %v5395 = vmul.f32 %v5358, %v5383
        %v5396 = vmul.f32 %v5359, %v5383
        %v5397 = vmul.f32 %v5360, %v5383
        %v5398 = vmul.f32 %v5361, %v5383
        %v5399 = vmul.f32 %v5362, %v5383
        %v5400 = vmul.f32 %v5363, %v5383
        %v5401 = vmul.f32 %v5364, %v5383
        %v5402 = vmul.f32 %v5365, %v5383
        %v5403 = vmul.f32 %v5366, %v5383
        %v5404 = vmul.f32 %v5367, %v5383
        %v5405 = vmul.f32 %v5368, %v5383
        %v5406 = vmul.f32 %v5369, %v5383
        %v5407 = vmul.f32 %v5370, %v5383
        %v5408 = vmul.f32 %v5371, %v5383
        %v5409 = vmul.f32 %v5372, %v5383
        %v5410 = vmul.f32 %v5373, %v5383
        %v5411 = vmul.f32 %v5374, %v5383
        %v5412 = vmul.f32 %v5375, %v5383
        %v5413 = vmul.f32 %v5376, %v5383
        %v5414 = vmul.f32 %v5377, %v5383
        %v5415 = vmul.f32 %v5378, %v5383
        %v5416 = vadd.f32 %v5315, %v5384
        %v5417 = vadd.f32 %v5316, %v5385
        %v5418 = vadd.f32 %v5317, %v5386
        %v5419 = vadd.f32 %v5318, %v5387
        %v5420 = vadd.f32 %v5319, %v5388
        %v5421 = vadd.f32 %v5320, %v5389
        %v5422 = vadd.f32 %v5321, %v5390
        %v5423 = vadd.f32 %v5322, %v5391
        %v5424 = vadd.f32 %v5323, %v5392
        %v5425 = vadd.f32 %v5324, %v5393
        %v5426 = vadd.f32 %v5325, %v5394
        %v5427 = vadd.f32 %v5326, %v5395
        %v5428 = vadd.f32 %v5327, %v5396
        %v5429 = vadd.f32 %v5328, %v5397
        %v5430 = vadd.f32 %v5329, %v5398
        %v5431 = vadd.f32 %v5330, %v5399
        %v5432 = vadd.f32 %v5331, %v5400
        %v5433 = vadd.f32 %v5332, %v5401
        %v5434 = vadd.f32 %v5333, %v5402
        %v5435 = vadd.f32 %v5334, %v5403
        %v5436 = vadd.f32 %v5335, %v5404
        %v5437 = vadd.f32 %v5336, %v5405
        %v5438 = vadd.f32 %v5337, %v5406
        %v5439 = vadd.f32 %v5338, %v5407
        %v5440 = vadd.f32 %v5339, %v5408
        %v5441 = vadd.f32 %v5340, %v5409
        %v5442 = vadd.f32 %v5341, %v5410
        %v5443 = vadd.f32 %v5342, %v5411
        %v5444 = vadd.f32 %v5343, %v5412
        %v5445 = vadd.f32 %v5344, %v5413
        %v5446 = vadd.f32 %v5345, %v5414
        %v5447 = vadd.f32 %v5346, %v5415
        %v5448 = vld [vmem:[%s2604 + $0x8] sm:$0xff]
        %v5449 = vld [vmem:[%s2604 + $0x10] sm:$0xff]
        %v5450 = vld [vmem:[%s2604 + $0x28] sm:$0xff]
        %v5451 = vld [vmem:[%s2604 + $0x30] sm:$0xff]
        %v5452 = vld [vmem:[%s2604 + $0x48] sm:$0xff]
        %v5453 = vld [vmem:[%s2604 + $0x50] sm:$0xff]
        %v5454 = vld [vmem:[%s2604 + $0x68] sm:$0xff]
        %v5455 = vld [vmem:[%s2604 + $0x70] sm:$0xff]
        %v5456 = vld [vmem:[%s2604 + $0x88] sm:$0xff]
        %v5457 = vld [vmem:[%s2604 + $0x90] sm:$0xff]
        %v5458 = vld [vmem:[%s2604 + $0xa8] sm:$0xff]
        %v5459 = vld [vmem:[%s2604 + $0xb0] sm:$0xff]
        %v5460 = vld [vmem:[%s2604 + $0xc8] sm:$0xff]
        %v5461 = vld [vmem:[%s2604 + $0xd0] sm:$0xff]
        %v5462 = vld [vmem:[%s2604 + $0xe8] sm:$0xff]
        %v5463 = vld [vmem:[%s2604 + $0xf0] sm:$0xff]
        %v5464 = vld [vmem:[%s2604 + $0x108] sm:$0xff]
        %v5465 = vld [vmem:[%s2604 + $0x110] sm:$0xff]
        %v5466 = vld [vmem:[%s2604 + $0x128] sm:$0xff]
        %v5467 = vld [vmem:[%s2604 + $0x130] sm:$0xff]
        %v5468 = vld [vmem:[%s2604 + $0x148] sm:$0xff]
        %v5469 = vld [vmem:[%s2604 + $0x150] sm:$0xff]
        %v5470 = vld [vmem:[%s2604 + $0x168] sm:$0xff]
        %v5471 = vld [vmem:[%s2604 + $0x170] sm:$0xff]
        %v5472 = vld [vmem:[%s2604 + $0x188] sm:$0xff]
        %v5473 = vld [vmem:[%s2604 + $0x190] sm:$0xff]
        %v5474 = vld [vmem:[%s2604 + $0x1a8] sm:$0xff]
        %v5475 = vld [vmem:[%s2604 + $0x1b0] sm:$0xff]
        %v5476 = vld [vmem:[%s2604 + $0x1c8] sm:$0xff]
        %v5477 = vld [vmem:[%s2604 + $0x1d0] sm:$0xff]
        %v5478 = vld [vmem:[%s2604 + $0x1e8] sm:$0xff]
        %v5479 = vld [vmem:[%s2604 + $0x1f0] sm:$0xff]
        %v5480 = vld [vmem:[%s19 + $0x7] sm:$0x1]
        %v5481 = vlaneseq
        %v5482 = vshrl.u32 %v5481, 7
        %v5483 = vsub.s32 0, %v5482
        %v5484 = vrot.slane %v5480, %v5483
        %v5485 = vmul.f32 %v5448, %v5484
        %v5486 = vmul.f32 %v5449, %v5484
        %v5487 = vmul.f32 %v5450, %v5484
        %v5488 = vmul.f32 %v5451, %v5484
        %v5489 = vmul.f32 %v5452, %v5484
        %v5490 = vmul.f32 %v5453, %v5484
        %v5491 = vmul.f32 %v5454, %v5484
        %v5492 = vmul.f32 %v5455, %v5484
        %v5493 = vmul.f32 %v5456, %v5484
        %v5494 = vmul.f32 %v5457, %v5484
        %v5495 = vmul.f32 %v5458, %v5484
        %v5496 = vmul.f32 %v5459, %v5484
        %v5497 = vmul.f32 %v5460, %v5484
        %v5498 = vmul.f32 %v5461, %v5484
        %v5499 = vmul.f32 %v5462, %v5484
        %v5500 = vmul.f32 %v5463, %v5484
        %v5501 = vmul.f32 %v5464, %v5484
        %v5502 = vmul.f32 %v5465, %v5484
        %v5503 = vmul.f32 %v5466, %v5484
        %v5504 = vmul.f32 %v5467, %v5484
        %v5505 = vmul.f32 %v5468, %v5484
        %v5506 = vmul.f32 %v5469, %v5484
        %v5507 = vmul.f32 %v5470, %v5484
        %v5508 = vmul.f32 %v5471, %v5484
        %v5509 = vmul.f32 %v5472, %v5484
        %v5510 = vmul.f32 %v5473, %v5484
        %v5511 = vmul.f32 %v5474, %v5484
        %v5512 = vmul.f32 %v5475, %v5484
        %v5513 = vmul.f32 %v5476, %v5484
        %v5514 = vmul.f32 %v5477, %v5484
        %v5515 = vmul.f32 %v5478, %v5484
        %v5516 = vmul.f32 %v5479, %v5484
        %v5517 = vadd.f32 %v5416, %v5485
        %v5518 = vadd.f32 %v5417, %v5486
        %v5519 = vadd.f32 %v5418, %v5487
        %v5520 = vadd.f32 %v5419, %v5488
        %v5521 = vadd.f32 %v5420, %v5489
        %v5522 = vadd.f32 %v5421, %v5490
        %v5523 = vadd.f32 %v5422, %v5491
        %v5524 = vadd.f32 %v5423, %v5492
        %v5525 = vadd.f32 %v5424, %v5493
        %v5526 = vadd.f32 %v5425, %v5494
        %v5527 = vadd.f32 %v5426, %v5495
        %v5528 = vadd.f32 %v5427, %v5496
        %v5529 = vadd.f32 %v5428, %v5497
        %v5530 = vadd.f32 %v5429, %v5498
        %v5531 = vadd.f32 %v5430, %v5499
        %v5532 = vadd.f32 %v5431, %v5500
        %v5533 = vadd.f32 %v5432, %v5501
        %v5534 = vadd.f32 %v5433, %v5502
        %v5535 = vadd.f32 %v5434, %v5503
        %v5536 = vadd.f32 %v5435, %v5504
        %v5537 = vadd.f32 %v5436, %v5505
        %v5538 = vadd.f32 %v5437, %v5506
        %v5539 = vadd.f32 %v5438, %v5507
        %v5540 = vadd.f32 %v5439, %v5508
        %v5541 = vadd.f32 %v5440, %v5509
        %v5542 = vadd.f32 %v5441, %v5510
        %v5543 = vadd.f32 %v5442, %v5511
        %v5544 = vadd.f32 %v5443, %v5512
        %v5545 = vadd.f32 %v5444, %v5513
        %v5546 = vadd.f32 %v5445, %v5514
        %v5547 = vadd.f32 %v5446, %v5515
        %v5548 = vadd.f32 %v5447, %v5516
        %v5549 = vld [vmem:[%s2604 + $0x9] sm:$0xff]
        %v5550 = vld [vmem:[%s2604 + $0x11] sm:$0xff]
        %v5551 = vld [vmem:[%s2604 + $0x29] sm:$0xff]
        %v5552 = vld [vmem:[%s2604 + $0x31] sm:$0xff]
        %v5553 = vld [vmem:[%s2604 + $0x49] sm:$0xff]
        %v5554 = vld [vmem:[%s2604 + $0x51] sm:$0xff]
        %v5555 = vld [vmem:[%s2604 + $0x69] sm:$0xff]
        %v5556 = vld [vmem:[%s2604 + $0x71] sm:$0xff]
        %v5557 = vld [vmem:[%s2604 + $0x89] sm:$0xff]
        %v5558 = vld [vmem:[%s2604 + $0x91] sm:$0xff]
        %v5559 = vld [vmem:[%s2604 + $0xa9] sm:$0xff]
        %v5560 = vld [vmem:[%s2604 + $0xb1] sm:$0xff]
        %v5561 = vld [vmem:[%s2604 + $0xc9] sm:$0xff]
        %v5562 = vld [vmem:[%s2604 + $0xd1] sm:$0xff]
        %v5563 = vld [vmem:[%s2604 + $0xe9] sm:$0xff]
        %v5564 = vld [vmem:[%s2604 + $0xf1] sm:$0xff]
        %v5565 = vld [vmem:[%s2604 + $0x109] sm:$0xff]
        %v5566 = vld [vmem:[%s2604 + $0x111] sm:$0xff]
        %v5567 = vld [vmem:[%s2604 + $0x129] sm:$0xff]
        %v5568 = vld [vmem:[%s2604 + $0x131] sm:$0xff]
        %v5569 = vld [vmem:[%s2604 + $0x149] sm:$0xff]
        %v5570 = vld [vmem:[%s2604 + $0x151] sm:$0xff]
        %v5571 = vld [vmem:[%s2604 + $0x169] sm:$0xff]
        %v5572 = vld [vmem:[%s2604 + $0x171] sm:$0xff]
        %v5573 = vld [vmem:[%s2604 + $0x189] sm:$0xff]
        %v5574 = vld [vmem:[%s2604 + $0x191] sm:$0xff]
        %v5575 = vld [vmem:[%s2604 + $0x1a9] sm:$0xff]
        %v5576 = vld [vmem:[%s2604 + $0x1b1] sm:$0xff]
        %v5577 = vld [vmem:[%s2604 + $0x1c9] sm:$0xff]
        %v5578 = vld [vmem:[%s2604 + $0x1d1] sm:$0xff]
        %v5579 = vld [vmem:[%s2604 + $0x1e9] sm:$0xff]
        %v5580 = vld [vmem:[%s2604 + $0x1f1] sm:$0xff]
        %v5581 = vld [vmem:[%s19 + $0x8] sm:$0x1]
        %v5582 = vlaneseq
        %v5583 = vshrl.u32 %v5582, 7
        %v5584 = vsub.s32 0, %v5583
        %v5585 = vrot.slane %v5581, %v5584
        %v5586 = vmul.f32 %v5549, %v5585
        %v5587 = vmul.f32 %v5550, %v5585
        %v5588 = vmul.f32 %v5551, %v5585
        %v5589 = vmul.f32 %v5552, %v5585
        %v5590 = vmul.f32 %v5553, %v5585
        %v5591 = vmul.f32 %v5554, %v5585
        %v5592 = vmul.f32 %v5555, %v5585
        %v5593 = vmul.f32 %v5556, %v5585
        %v5594 = vmul.f32 %v5557, %v5585
        %v5595 = vmul.f32 %v5558, %v5585
        %v5596 = vmul.f32 %v5559, %v5585
        %v5597 = vmul.f32 %v5560, %v5585
        %v5598 = vmul.f32 %v5561, %v5585
        %v5599 = vmul.f32 %v5562, %v5585
        %v5600 = vmul.f32 %v5563, %v5585
        %v5601 = vmul.f32 %v5564, %v5585
        %v5602 = vmul.f32 %v5565, %v5585
        %v5603 = vmul.f32 %v5566, %v5585
        %v5604 = vmul.f32 %v5567, %v5585
        %v5605 = vmul.f32 %v5568, %v5585
        %v5606 = vmul.f32 %v5569, %v5585
        %v5607 = vmul.f32 %v5570, %v5585
        %v5608 = vmul.f32 %v5571, %v5585
        %v5609 = vmul.f32 %v5572, %v5585
        %v5610 = vmul.f32 %v5573, %v5585
        %v5611 = vmul.f32 %v5574, %v5585
        %v5612 = vmul.f32 %v5575, %v5585
        %v5613 = vmul.f32 %v5576, %v5585
        %v5614 = vmul.f32 %v5577, %v5585
        %v5615 = vmul.f32 %v5578, %v5585
        %v5616 = vmul.f32 %v5579, %v5585
        %v5617 = vmul.f32 %v5580, %v5585
        %v5618 = vadd.f32 %v5517, %v5586
        %v5619 = vadd.f32 %v5518, %v5587
        %v5620 = vadd.f32 %v5519, %v5588
        %v5621 = vadd.f32 %v5520, %v5589
        %v5622 = vadd.f32 %v5521, %v5590
        %v5623 = vadd.f32 %v5522, %v5591
        %v5624 = vadd.f32 %v5523, %v5592
        %v5625 = vadd.f32 %v5524, %v5593
        %v5626 = vadd.f32 %v5525, %v5594
        %v5627 = vadd.f32 %v5526, %v5595
        %v5628 = vadd.f32 %v5527, %v5596
        %v5629 = vadd.f32 %v5528, %v5597
        %v5630 = vadd.f32 %v5529, %v5598
        %v5631 = vadd.f32 %v5530, %v5599
        %v5632 = vadd.f32 %v5531, %v5600
        %v5633 = vadd.f32 %v5532, %v5601
        %v5634 = vadd.f32 %v5533, %v5602
        %v5635 = vadd.f32 %v5534, %v5603
        %v5636 = vadd.f32 %v5535, %v5604
        %v5637 = vadd.f32 %v5536, %v5605
        %v5638 = vadd.f32 %v5537, %v5606
        %v5639 = vadd.f32 %v5538, %v5607
        %v5640 = vadd.f32 %v5539, %v5608
        %v5641 = vadd.f32 %v5540, %v5609
        %v5642 = vadd.f32 %v5541, %v5610
        %v5643 = vadd.f32 %v5542, %v5611
        %v5644 = vadd.f32 %v5543, %v5612
        %v5645 = vadd.f32 %v5544, %v5613
        %v5646 = vadd.f32 %v5545, %v5614
        %v5647 = vadd.f32 %v5546, %v5615
        %v5648 = vadd.f32 %v5547, %v5616
        %v5649 = vadd.f32 %v5548, %v5617
        %v5650 = vld [vmem:[%s20] sm:$0x1]
        %v5652 = vlaneseq
        %v5653 = vshrl.u32 %v5652, 7
        %v5654 = vsub.s32 0, %v5653
        %v5655 = vrot.slane %v5650, %v5654
        %v5657 = vadd.f32 %v5618, %v5655
        %v5658 = vadd.f32 %v5619, %v5655
        %v5659 = vadd.f32 %v5620, %v5655
        %v5660 = vadd.f32 %v5621, %v5655
        %v5661 = vadd.f32 %v5622, %v5655
        %v5662 = vadd.f32 %v5623, %v5655
        %v5663 = vadd.f32 %v5624, %v5655
        %v5664 = vadd.f32 %v5625, %v5655
        %v5665 = vadd.f32 %v5626, %v5655
        %v5666 = vadd.f32 %v5627, %v5655
        %v5667 = vadd.f32 %v5628, %v5655
        %v5668 = vadd.f32 %v5629, %v5655
        %v5669 = vadd.f32 %v5630, %v5655
        %v5670 = vadd.f32 %v5631, %v5655
        %v5671 = vadd.f32 %v5632, %v5655
        %v5672 = vadd.f32 %v5633, %v5655
        %v5673 = vadd.f32 %v5634, %v5655
        %v5674 = vadd.f32 %v5635, %v5655
        %v5675 = vadd.f32 %v5636, %v5655
        %v5676 = vadd.f32 %v5637, %v5655
        %v5677 = vadd.f32 %v5638, %v5655
        %v5678 = vadd.f32 %v5639, %v5655
        %v5679 = vadd.f32 %v5640, %v5655
        %v5680 = vadd.f32 %v5641, %v5655
        %v5681 = vadd.f32 %v5642, %v5655
        %v5682 = vadd.f32 %v5643, %v5655
        %v5683 = vadd.f32 %v5644, %v5655
        %v5684 = vadd.f32 %v5645, %v5655
        %v5685 = vadd.f32 %v5646, %v5655
        %v5686 = vadd.f32 %v5647, %v5655
        %v5687 = vadd.f32 %v5648, %v5655
        %v5688 = vadd.f32 %v5649, %v5655
        %v5689 = vmul.f32 %v5657, 0.5
        %v5690 = vmul.f32 %v5658, 0.5
        %v5691 = vmul.f32 %v5659, 0.5
        %v5692 = vmul.f32 %v5660, 0.5
        %v5693 = vmul.f32 %v5661, 0.5
        %v5694 = vmul.f32 %v5662, 0.5
        %v5695 = vmul.f32 %v5663, 0.5
        %v5696 = vmul.f32 %v5664, 0.5
        %v5697 = vmul.f32 %v5665, 0.5
        %v5698 = vmul.f32 %v5666, 0.5
        %v5699 = vmul.f32 %v5667, 0.5
        %v5700 = vmul.f32 %v5668, 0.5
        %v5701 = vmul.f32 %v5669, 0.5
        %v5702 = vmul.f32 %v5670, 0.5
        %v5703 = vmul.f32 %v5671, 0.5
        %v5704 = vmul.f32 %v5672, 0.5
        %v5705 = vmul.f32 %v5673, 0.5
        %v5706 = vmul.f32 %v5674, 0.5
        %v5707 = vmul.f32 %v5675, 0.5
        %v5708 = vmul.f32 %v5676, 0.5
        %v5709 = vmul.f32 %v5677, 0.5
        %v5710 = vmul.f32 %v5678, 0.5
        %v5711 = vmul.f32 %v5679, 0.5
        %v5712 = vmul.f32 %v5680, 0.5
        %v5713 = vmul.f32 %v5681, 0.5
        %v5714 = vmul.f32 %v5682, 0.5
        %v5715 = vmul.f32 %v5683, 0.5
        %v5716 = vmul.f32 %v5684, 0.5
        %v5717 = vmul.f32 %v5685, 0.5
        %v5718 = vmul.f32 %v5686, 0.5
        %v5719 = vmul.f32 %v5687, 0.5
        %v5720 = vmul.f32 %v5688, 0.5
        %v5721 = vmul.f32 %v5657, 0.70710677
        %v5722 = vmul.f32 %v5658, 0.70710677
        %v5723 = vmul.f32 %v5659, 0.70710677
        %v5724 = vmul.f32 %v5660, 0.70710677
        %v5725 = vmul.f32 %v5661, 0.70710677
        %v5726 = vmul.f32 %v5662, 0.70710677
        %v5727 = vmul.f32 %v5663, 0.70710677
        %v5728 = vmul.f32 %v5664, 0.70710677
        %v5729 = vmul.f32 %v5665, 0.70710677
        %v5730 = vmul.f32 %v5666, 0.70710677
        %v5731 = vmul.f32 %v5667, 0.70710677
        %v5732 = vmul.f32 %v5668, 0.70710677
        %v5733 = vmul.f32 %v5669, 0.70710677
        %v5734 = vmul.f32 %v5670, 0.70710677
        %v5735 = vmul.f32 %v5671, 0.70710677
        %v5736 = vmul.f32 %v5672, 0.70710677
        %v5737 = vmul.f32 %v5673, 0.70710677
        %v5738 = vmul.f32 %v5674, 0.70710677
        %v5739 = vmul.f32 %v5675, 0.70710677
        %v5740 = vmul.f32 %v5676, 0.70710677
        %v5741 = vmul.f32 %v5677, 0.70710677
        %v5742 = vmul.f32 %v5678, 0.70710677
        %v5743 = vmul.f32 %v5679, 0.70710677
        %v5744 = vmul.f32 %v5680, 0.70710677
        %v5745 = vmul.f32 %v5681, 0.70710677
        %v5746 = vmul.f32 %v5682, 0.70710677
        %v5747 = vmul.f32 %v5683, 0.70710677
        %v5748 = vmul.f32 %v5684, 0.70710677
        %v5749 = vmul.f32 %v5685, 0.70710677
        %v5750 = vmul.f32 %v5686, 0.70710677
        %v5751 = vmul.f32 %v5687, 0.70710677
        %v5752 = vmul.f32 %v5688, 0.70710677
        %v5753 = verf.f32.pop %v5721
        %v5754 = verf.f32.pop %v5722
        %v5755 = verf.f32.pop %v5723
        %v5756 = verf.f32.pop %v5724
        %v5757 = verf.f32.pop %v5725
        %v5758 = verf.f32.pop %v5726
        %v5759 = verf.f32.pop %v5727
        %v5760 = verf.f32.pop %v5728
        %v5761 = verf.f32.pop %v5729
        %v5762 = verf.f32.pop %v5730
        %v5763 = verf.f32.pop %v5731
        %v5764 = verf.f32.pop %v5732
        %v5765 = verf.f32.pop %v5733
        %v5766 = verf.f32.pop %v5734
        %v5767 = verf.f32.pop %v5735
        %v5768 = verf.f32.pop %v5736
        %v5769 = verf.f32.pop %v5737
        %v5770 = verf.f32.pop %v5738
        %v5771 = verf.f32.pop %v5739
        %v5772 = verf.f32.pop %v5740
        %v5773 = verf.f32.pop %v5741
        %v5774 = verf.f32.pop %v5742
        %v5775 = verf.f32.pop %v5743
        %v5776 = verf.f32.pop %v5744
        %v5777 = verf.f32.pop %v5745
        %v5778 = verf.f32.pop %v5746
        %v5779 = verf.f32.pop %v5747
        %v5780 = verf.f32.pop %v5748
        %v5781 = verf.f32.pop %v5749
        %v5782 = verf.f32.pop %v5750
        %v5783 = verf.f32.pop %v5751
        %v5784 = verf.f32.pop %v5752
        %v5785 = vadd.f32 %v5753, 1.0
        %v5786 = vadd.f32 %v5754, 1.0
        %v5787 = vadd.f32 %v5755, 1.0
        %v5788 = vadd.f32 %v5756, 1.0
        %v5789 = vadd.f32 %v5757, 1.0
        %v5790 = vadd.f32 %v5758, 1.0
        %v5791 = vadd.f32 %v5759, 1.0
        %v5792 = vadd.f32 %v5760, 1.0
        %v5793 = vadd.f32 %v5761, 1.0
        %v5794 = vadd.f32 %v5762, 1.0
        %v5795 = vadd.f32 %v5763, 1.0
        %v5796 = vadd.f32 %v5764, 1.0
        %v5797 = vadd.f32 %v5765, 1.0
        %v5798 = vadd.f32 %v5766, 1.0
        %v5799 = vadd.f32 %v5767, 1.0
        %v5800 = vadd.f32 %v5768, 1.0
        %v5801 = vadd.f32 %v5769, 1.0
        %v5802 = vadd.f32 %v5770, 1.0
        %v5803 = vadd.f32 %v5771, 1.0
        %v5804 = vadd.f32 %v5772, 1.0
        %v5805 = vadd.f32 %v5773, 1.0
        %v5806 = vadd.f32 %v5774, 1.0
        %v5807 = vadd.f32 %v5775, 1.0
        %v5808 = vadd.f32 %v5776, 1.0
        %v5809 = vadd.f32 %v5777, 1.0
        %v5810 = vadd.f32 %v5778, 1.0
        %v5811 = vadd.f32 %v5779, 1.0
        %v5812 = vadd.f32 %v5780, 1.0
        %v5813 = vadd.f32 %v5781, 1.0
        %v5814 = vadd.f32 %v5782, 1.0
        %v5815 = vadd.f32 %v5783, 1.0
        %v5816 = vadd.f32 %v5784, 1.0
        %v5817 = vmul.f32 %v5689, %v5785
        %v5818 = vmul.f32 %v5690, %v5786
        %v5819 = vmul.f32 %v5691, %v5787
        %v5820 = vmul.f32 %v5692, %v5788
        %v5821 = vmul.f32 %v5693, %v5789
        %v5822 = vmul.f32 %v5694, %v5790
        %v5823 = vmul.f32 %v5695, %v5791
        %v5824 = vmul.f32 %v5696, %v5792
        %v5825 = vmul.f32 %v5697, %v5793
        %v5826 = vmul.f32 %v5698, %v5794
        %v5827 = vmul.f32 %v5699, %v5795
        %v5828 = vmul.f32 %v5700, %v5796
        %v5829 = vmul.f32 %v5701, %v5797
        %v5830 = vmul.f32 %v5702, %v5798
        %v5831 = vmul.f32 %v5703, %v5799
        %v5832 = vmul.f32 %v5704, %v5800
        %v5833 = vmul.f32 %v5705, %v5801
        %v5834 = vmul.f32 %v5706, %v5802
        %v5835 = vmul.f32 %v5707, %v5803
        %v5836 = vmul.f32 %v5708, %v5804
        %v5837 = vmul.f32 %v5709, %v5805
        %v5838 = vmul.f32 %v5710, %v5806
        %v5839 = vmul.f32 %v5711, %v5807
        %v5840 = vmul.f32 %v5712, %v5808
        %v5841 = vmul.f32 %v5713, %v5809
        %v5842 = vmul.f32 %v5714, %v5810
        %v5843 = vmul.f32 %v5715, %v5811
        %v5844 = vmul.f32 %v5716, %v5812
        %v5845 = vmul.f32 %v5717, %v5813
        %v5846 = vmul.f32 %v5718, %v5814
        %v5847 = vmul.f32 %v5719, %v5815
        %v5848 = vmul.f32 %v5720, %v5816
        %5881 = vrot.lane.b32.xlu0 %v5657, 64
        %v5882 = vpop.permute.xlu0 %5881
        %5883 = vrot.lane.b32.xlu0 %v5658, 64
        %v5884 = vpop.permute.xlu0 %5883
        %5885 = vrot.lane.b32.xlu0 %v5659, 64
        %v5886 = vpop.permute.xlu0 %5885
        %5887 = vrot.lane.b32.xlu0 %v5660, 64
        %v5888 = vpop.permute.xlu0 %5887
        %5889 = vrot.lane.b32.xlu0 %v5661, 64
        %v5890 = vpop.permute.xlu0 %5889
        %5891 = vrot.lane.b32.xlu0 %v5662, 64
        %v5892 = vpop.permute.xlu0 %5891
        %5893 = vrot.lane.b32.xlu0 %v5663, 64
        %v5894 = vpop.permute.xlu0 %5893
        %5895 = vrot.lane.b32.xlu0 %v5664, 64
        %v5896 = vpop.permute.xlu0 %5895
        %5897 = vrot.lane.b32.xlu0 %v5665, 64
        %v5898 = vpop.permute.xlu0 %5897
        %5899 = vrot.lane.b32.xlu0 %v5666, 64
        %v5900 = vpop.permute.xlu0 %5899
        %5901 = vrot.lane.b32.xlu0 %v5667, 64
        %v5902 = vpop.permute.xlu0 %5901
        %5903 = vrot.lane.b32.xlu0 %v5668, 64
        %v5904 = vpop.permute.xlu0 %5903
        %5905 = vrot.lane.b32.xlu0 %v5669, 64
        %v5906 = vpop.permute.xlu0 %5905
        %5907 = vrot.lane.b32.xlu0 %v5670, 64
        %v5908 = vpop.permute.xlu0 %5907
        %5909 = vrot.lane.b32.xlu0 %v5671, 64
        %v5910 = vpop.permute.xlu0 %5909
        %5911 = vrot.lane.b32.xlu0 %v5672, 64
        %v5912 = vpop.permute.xlu0 %5911
        %5913 = vrot.lane.b32.xlu0 %v5673, 64
        %v5914 = vpop.permute.xlu0 %5913
        %5915 = vrot.lane.b32.xlu0 %v5674, 64
        %v5916 = vpop.permute.xlu0 %5915
        %5917 = vrot.lane.b32.xlu0 %v5675, 64
        %v5918 = vpop.permute.xlu0 %5917
        %5919 = vrot.lane.b32.xlu0 %v5676, 64
        %v5920 = vpop.permute.xlu0 %5919
        %5921 = vrot.lane.b32.xlu0 %v5677, 64
        %v5922 = vpop.permute.xlu0 %5921
        %5923 = vrot.lane.b32.xlu0 %v5678, 64
        %v5924 = vpop.permute.xlu0 %5923
        %5925 = vrot.lane.b32.xlu0 %v5679, 64
        %v5926 = vpop.permute.xlu0 %5925
        %5927 = vrot.lane.b32.xlu0 %v5680, 64
        %v5928 = vpop.permute.xlu0 %5927
        %5929 = vrot.lane.b32.xlu0 %v5681, 64
        %v5930 = vpop.permute.xlu0 %5929
        %5931 = vrot.lane.b32.xlu0 %v5682, 64
        %v5932 = vpop.permute.xlu0 %5931
        %5933 = vrot.lane.b32.xlu0 %v5683, 64
        %v5934 = vpop.permute.xlu0 %5933
        %5935 = vrot.lane.b32.xlu0 %v5684, 64
        %v5936 = vpop.permute.xlu0 %5935
        %5937 = vrot.lane.b32.xlu0 %v5685, 64
        %v5938 = vpop.permute.xlu0 %5937
        %5939 = vrot.lane.b32.xlu0 %v5686, 64
        %v5940 = vpop.permute.xlu0 %5939
        %5941 = vrot.lane.b32.xlu0 %v5687, 64
        %v5942 = vpop.permute.xlu0 %5941
        %5943 = vrot.lane.b32.xlu0 %v5688, 64
        %v5944 = vpop.permute.xlu0 %5943
        %v5977 = vmul.f32 %v5817, %v5882
        %v5978 = vmul.f32 %v5818, %v5884
        %v5979 = vmul.f32 %v5819, %v5886
        %v5980 = vmul.f32 %v5820, %v5888
        %v5981 = vmul.f32 %v5821, %v5890
        %v5982 = vmul.f32 %v5822, %v5892
        %v5983 = vmul.f32 %v5823, %v5894
        %v5984 = vmul.f32 %v5824, %v5896
        %v5985 = vmul.f32 %v5825, %v5898
        %v5986 = vmul.f32 %v5826, %v5900
        %v5987 = vmul.f32 %v5827, %v5902
        %v5988 = vmul.f32 %v5828, %v5904
        %v5989 = vmul.f32 %v5829, %v5906
        %v5990 = vmul.f32 %v5830, %v5908
        %v5991 = vmul.f32 %v5831, %v5910
        %v5992 = vmul.f32 %v5832, %v5912
        %v5993 = vmul.f32 %v5833, %v5914
        %v5994 = vmul.f32 %v5834, %v5916
        %v5995 = vmul.f32 %v5835, %v5918
        %v5996 = vmul.f32 %v5836, %v5920
        %v5997 = vmul.f32 %v5837, %v5922
        %v5998 = vmul.f32 %v5838, %v5924
        %v5999 = vmul.f32 %v5839, %v5926
        %v6000 = vmul.f32 %v5840, %v5928
        %v6001 = vmul.f32 %v5841, %v5930
        %v6002 = vmul.f32 %v5842, %v5932
        %v6003 = vmul.f32 %v5843, %v5934
        %v6004 = vmul.f32 %v5844, %v5936
        %v6005 = vmul.f32 %v5845, %v5938
        %v6006 = vmul.f32 %v5846, %v5940
        %v6007 = vmul.f32 %v5847, %v5942
        %v6008 = vmul.f32 %v5848, %v5944
        %v6009 = vld [vmem:[#allocation14] sm:$0xff]
        %v6010 = vld [vmem:[#allocation14 + $0x8] sm:$0xff]
        %v6011 = vld [vmem:[#allocation14 + $0x10] sm:$0xff]
        %v6012 = vld [vmem:[#allocation14 + $0x18] sm:$0xff]
        %vm6013 = vcmask 523264
        %v6015 = vsel %vm6013, %v6009, 0
        %v6018 = vsel %vm6013, %v6010, 0
        %v6021 = vsel %vm6013, %v6011, 0
        %v6024 = vsel %vm6013, %v6012, 0
        %v6027 = vsel %vm6013, %v5977, 0
        %v6030 = vsel %vm6013, %v5978, 0
        %v6033 = vsel %vm6013, %v5979, 0
        %v6036 = vsel %vm6013, %v5980, 0
        %v6039 = vsel %vm6013, %v5981, 0
        %v6042 = vsel %vm6013, %v5982, 0
        %v6045 = vsel %vm6013, %v5983, 0
        %v6048 = vsel %vm6013, %v5984, 0
        %v6051 = vsel %vm6013, %v5985, 0
        %v6054 = vsel %vm6013, %v5986, 0
        %v6057 = vsel %vm6013, %v5987, 0
        %v6060 = vsel %vm6013, %v5988, 0
        %v6063 = vsel %vm6013, %v5989, 0
        %v6066 = vsel %vm6013, %v5990, 0
        %v6069 = vsel %vm6013, %v5991, 0
        %v6072 = vsel %vm6013, %v5992, 0
        %v6075 = vsel %vm6013, %v5993, 0
        %v6078 = vsel %vm6013, %v5994, 0
        %v6081 = vsel %vm6013, %v5995, 0
        %v6084 = vsel %vm6013, %v5996, 0
        %v6087 = vsel %vm6013, %v5997, 0
        %v6090 = vsel %vm6013, %v5998, 0
        %v6093 = vsel %vm6013, %v5999, 0
        %v6096 = vsel %vm6013, %v6000, 0
        %v6099 = vsel %vm6013, %v6001, 0
        %v6102 = vsel %vm6013, %v6002, 0
        %v6105 = vsel %vm6013, %v6003, 0
        %v6108 = vsel %vm6013, %v6004, 0
        %v6111 = vsel %vm6013, %v6005, 0
        %v6114 = vsel %vm6013, %v6006, 0
        %v6117 = vsel %vm6013, %v6007, 0
        %v6120 = vsel %vm6013, %v6008, 0
        %6122 = vmatprep.subr.mxu0 0.0
        %6123 = vmatpush1.xpose.msra.mxu0 %v6027
        %6124 = vmatprep.subr.mxu0 0.0
        %6125 = vmatpush1.xpose.msra.mxu0 %v6030
        %6126 = vmatprep.subr.mxu0 0.0
        %6127 = vmatpush1.xpose.msra.mxu0 %v6033
        %6128 = vmatprep.subr.mxu0 0.0
        %6129 = vmatpush1.xpose.msra.mxu0 %v6036
        %6130 = vmatprep.subr.mxu0 0.0
        %6131 = vmatpush1.xpose.msra.mxu0 %v6039
        %6132 = vmatprep.subr.mxu0 0.0
        %6133 = vmatpush1.xpose.msra.mxu0 %v6042
        %6134 = vmatprep.subr.mxu0 0.0
        %6135 = vmatpush1.xpose.msra.mxu0 %v6045
        %6136 = vmatprep.subr.mxu0 0.0
        %6137 = vmatpush1.xpose.msra.mxu0 %v6048
        %6138 = vmatprep.subr.mxu0 0.0
        %6139 = vmatpush1.xpose.msra.mxu0 %v6051
        %6140 = vmatprep.subr.mxu0 0.0
        %6141 = vmatpush1.xpose.msra.mxu0 %v6054
        %6142 = vmatprep.subr.mxu0 0.0
        %6143 = vmatpush1.xpose.msra.mxu0 %v6057
        %6144 = vmatprep.subr.mxu0 0.0
        %6145 = vmatpush1.xpose.msra.mxu0 %v6060
        %6146 = vmatprep.subr.mxu0 0.0
        %6147 = vmatpush1.xpose.msra.mxu0 %v6063
        %6148 = vmatprep.subr.mxu0 0.0
        %6149 = vmatpush1.xpose.msra.mxu0 %v6066
        %6150 = vmatprep.subr.mxu0 0.0
        %6151 = vmatpush1.xpose.msra.mxu0 %v6069
        %6152 = vmatprep.subr.mxu0 0.0
        %6153 = vmatpush1.xpose.msra.mxu0 %v6072
        %6154 = vmatprep.subr.mxu0 0.0
        %6155 = vmatpush1.xpose.msra.mxu0 %v6075
        %6156 = vmatprep.subr.mxu0 0.0
        %6157 = vmatpush1.xpose.msra.mxu0 %v6078
        %6158 = vmatprep.subr.mxu0 0.0
        %6159 = vmatpush1.xpose.msra.mxu0 %v6081
        %6160 = vmatprep.subr.mxu0 0.0
        %6161 = vmatpush1.xpose.msra.mxu0 %v6084
        %6162 = vmatprep.subr.mxu0 0.0
        %6163 = vmatpush1.xpose.msra.mxu0 %v6087
        %6164 = vmatprep.subr.mxu0 0.0
        %6165 = vmatpush1.xpose.msra.mxu0 %v6090
        %6166 = vmatprep.subr.mxu0 0.0
        %6167 = vmatpush1.xpose.msra.mxu0 %v6093
        %6168 = vmatprep.subr.mxu0 0.0
        %6169 = vmatpush1.xpose.msra.mxu0 %v6096
        %6170 = vmatprep.subr.mxu0 0.0
        %6171 = vmatpush1.xpose.msra.mxu0 %v6099
        %6172 = vmatprep.subr.mxu0 0.0
        %6173 = vmatpush1.xpose.msra.mxu0 %v6102
        %6174 = vmatprep.subr.mxu0 0.0
        %6175 = vmatpush1.xpose.msra.mxu0 %v6105
        %6176 = vmatprep.subr.mxu0 0.0
        %6177 = vmatpush1.xpose.msra.mxu0 %v6108
        %6178 = vmatprep.subr.mxu0 0.0
        %6179 = vmatpush1.xpose.msra.mxu0 %v6111
        %6180 = vmatprep.subr.mxu0 0.0
        %6181 = vmatpush1.xpose.msra.mxu0 %v6114
        %6182 = vmatprep.subr.mxu0 0.0
        %6183 = vmatpush1.xpose.msra.mxu0 %v6117
        %6184 = vmatprep.subr.mxu0 0.0
        %6185 = vmatpush1.xpose.msra.mxu0 %v6120
        %6186 = vmatprep.mubr.f32.mxu0 0.0
        %6187 = vmatmul.mubr.f32.gmra.mrb[0].mxu0 %v6015
        %v6188 = vpop.f32.mrb[0].mxu0
        %v6189 = vadd.f32 0.0, %v6188
        %v6190 = vpop.f32.mrb[0].mxu0
        %v6191 = vadd.f32 0.0, %v6190
        %6192 = vmatprep.mubr.f32.mxu0 0.0
        %6193 = vmatmul.mubr.f32.gmra.mrb[0].mxu0 %v6018
        %v6194 = vpop.f32.mrb[0].mxu0
        %v6195 = vadd.f32 0.0, %v6194
        %v6196 = vpop.f32.mrb[0].mxu0
        %v6197 = vadd.f32 0.0, %v6196
        %6198 = vmatprep.mubr.f32.mxu0 0.0
        %6199 = vmatmul.mubr.f32.gmra.mrb[0].mxu0 %v6021
        %v6200 = vpop.f32.mrb[0].mxu0
        %v6201 = vadd.f32 0.0, %v6200
        %v6202 = vpop.f32.mrb[0].mxu0
        %v6203 = vadd.f32 0.0, %v6202
        %6204 = vmatprep.mubr.f32.mxu0 0.0
        %6205 = vmatmul.mubr.f32.gmra.mrb[0].mxu0 %v6024
        %v6206 = vpop.f32.mrb[0].mxu0
        %v6207 = vadd.f32 0.0, %v6206
        %v6208 = vpop.f32.mrb[0].mxu0
        %v6209 = vadd.f32 0.0, %v6208
        %6210 = vdwg.mxu0
        %v6211 = vadd.f32 %v4173, %v6189
        %v6212 = vadd.f32 %v4174, %v6191
        %v6213 = vadd.f32 %v4175, %v6195
        %v6214 = vadd.f32 %v4176, %v6197
        %v6215 = vadd.f32 %v4177, %v6201
        %v6216 = vadd.f32 %v4178, %v6203
        %v6217 = vadd.f32 %v4179, %v6207
        %v6218 = vadd.f32 %v4180, %v6209
        %v6219 = vld [vmem:[%s22] sm:$0xff]
        %v6220 = vld [vmem:[%s22 + $0x8] sm:$0xff]
        %v6221 = vld [vmem:[%s22 + $0x10] sm:$0xff]
        %v6222 = vld [vmem:[%s22 + $0x18] sm:$0xff]
        %6224 = vset.pattern.permute.xlu0 0
        %6225 = vperm.xlu0 %6224, %v6219
        %v6226 = vpop.permute.xlu0 %6225
        %6229 = vset.pattern.permute.xlu0 0
        %6230 = vperm.xlu0 %6229, %v6220
        %v6231 = vpop.permute.xlu0 %6230
        %6234 = vset.pattern.permute.xlu0 0
        %6235 = vperm.xlu0 %6234, %v6221
        %v6236 = vpop.permute.xlu0 %6235
        %6239 = vset.pattern.permute.xlu0 0
        %6240 = vperm.xlu0 %6239, %v6222
        %v6241 = vpop.permute.xlu0 %6240
        %v6243 = vadd.f32 %v6211, %v6226
        %v6244 = vadd.f32 %v6212, %v6226
        %v6245 = vadd.f32 %v6213, %v6231
        %v6246 = vadd.f32 %v6214, %v6231
        %v6247 = vadd.f32 %v6215, %v6236
        %v6248 = vadd.f32 %v6216, %v6236
        %v6249 = vadd.f32 %v6217, %v6241
        %v6250 = vadd.f32 %v6218, %v6241
        %6251 = vst [vmem:[%s814] sm:$0xff] %v6243
        %6252 = vst [vmem:[%s814 + $0x8] sm:$0xff] %v6244
        %6253 = vst [vmem:[%s814 + $0x10] sm:$0xff] %v6245
        %6254 = vst [vmem:[%s814 + $0x18] sm:$0xff] %v6246
        %6255 = vst [vmem:[%s814 + $0x20] sm:$0xff] %v6247
        %6256 = vst [vmem:[%s814 + $0x28] sm:$0xff] %v6248
        %6257 = vst [vmem:[%s814 + $0x30] sm:$0xff] %v6249
        %6258 = vst [vmem:[%s814 + $0x38] sm:$0xff] %v6250
        %s6259 = sand.u32 %s542, 1
        %s6260 = scalar_lea.sflag [#allocation5], %s6259
        %s6261 = sand.u32 %s542, 1
        %s6262 = smul.addr %s6261, 64
        %s6263 = scalar_lea.vmem [#allocation15], %s6262
        // Predicated region
        $region141: #{tpu_custom_call.1} parent=111 // pred_check
          %p6264 = pneg %p552
        $region142: #{tpu_custom_call.1} parent=111 // pred_check_branch
          %6266 = sbr.rel (%p6264) target = $region144
        $region143: #{tpu_custom_call.1} parent=111 // pred_region
          %s6268 = ssub.s32 1024, 1024
          %6269 = vsyncadd %s6260, %s6268
          %s6270 = smul.addr %s41, 8
          %s6271 = smul.addr %s6270, 128
          %s6272 = scalar_lea.hbm %s23, %s6271
          %s6273 = sshll.u32 %s6263, 4
          %s6274 = int_to_ptr.vmem [resolvable:$true] %s6273
          %6279 = dma.vmem_to_hbm [thread:$0]  %s6274, 1024, %s6272, %s6260, 256, 256, 16
        $region144: #{tpu_custom_call.1} parent=111 // pred_fallthru
          _
      $region112: #{tpu_custom_call.1} parent=5 // pred_fallthru
        _
      %p6280 = scmp.le.s32.totalorder 2, %s36
      // Predicated region
      $region145: #{tpu_custom_call.1} parent=5 // pred_check
        %p6281 = pneg %p6280
      $region146: #{tpu_custom_call.1} parent=5 // pred_check_branch
        %6283 = sbr.rel (%p6281) target = $region148
      $region147: #{tpu_custom_call.1} parent=5 // pred_region
        %s6284 = ssub.s32 %s36, 2
        // Predicated region
        $region149: #{tpu_custom_call.1} parent=147 // pred_check
          %p6285 = pneg %p558
        $region150: #{tpu_custom_call.1} parent=147 // pred_check_branch
          %6287 = sbr.rel (%p6285) target = $region152
        $region151: #{tpu_custom_call.1} parent=147 // pred_region
          %s6288 = sand.u32 %s543, 1
          %s6289 = scalar_lea.sflag [#allocation5], %s6288
          %s6290 = sand.u32 %s543, 1
          %s6291 = smul.addr %s6290, 64
          %s6292 = scalar_lea.vmem [#allocation15], %s6291
          %6293 = dma.done %s6289, 1024
        $region152: #{tpu_custom_call.1} parent=147 // pred_fallthru
          _
      $region148: #{tpu_custom_call.1} parent=5 // pred_fallthru
        _
    $region6: #{tpu_custom_call.1} parent=1 // loop_footer
      %s40 = sadd.s32 1, %s36
    $region7: #{tpu_custom_call.1} parent=1 // loop_footer_branch
      %35 = sbr.rel target = $region3
    $region8: #{tpu_custom_call.1} parent=1 // loop_exit
      _
    %6294 = vsyncpa [#allocation4], 1
    %s6295 = scalar_lea.sflag [#allocation4], 1
    %6296 = vsyncpa %s6295, 1
    %6297 = vsyncpa [#allocation7], 1
    %6298 = vsyncpa [#allocation10], 1
    %6299 = vsyncpa [#allocation13], 1
    %6300 = vsyncpa [#allocation5], 1
    %s6301 = scalar_lea.sflag [#allocation5], 1
    %6302 = vsyncpa %s6301, 1

</llo_original>
